<compile_context>
chip_gen: v7x
topology: tpu7x:2x2x1
jax: 0.10.0
libtpu: 0.0.40
codegen_flags: <defaults>
</compile_context>

<pallas_src>
import jax
import jax.numpy as jnp
from jax import lax
from jax.experimental import pallas as pl
from jax.experimental.pallas import tpu as pltpu

CP = 128  # lane-dense padded output-channel width for every Pallas layer


# ----------------------------- Pallas kernel --------------------------------

def _make_layer_kernel(m_true, m_pad):
    """Fused (patches @ W + bias) -> BatchNorm2d(train) -> Tanh kernel.

    Runs as a single block: the per-channel mean/var reduction over all
    N*H_out*W_out rows happens in VMEM right after the dot.  When the row
    count was padded to a sublane multiple (m_pad > m_true), the padded rows
    are masked out of the batch statistics so they stay unbiased.
    """
    inv_m = 1.0 / float(m_true)

    def kernel(x_ref, w_ref, b_ref, g_ref, beta_ref, o_ref):
        y = jnp.dot(x_ref[...], w_ref[...], preferred_element_type=jnp.float32)
        y = y + b_ref[...]                                     # (m_pad, CP)
        if m_pad == m_true:
            mean = jnp.mean(y, axis=0, keepdims=True)
            cen = y - mean
            var = jnp.mean(cen * cen, axis=0, keepdims=True)
        else:
            row = lax.broadcasted_iota(jnp.int32, (m_pad, CP), 0)
            mask = (row < m_true).astype(jnp.float32)
            mean = jnp.sum(y * mask, axis=0, keepdims=True) * inv_m
            cen = y - mean
            var = jnp.sum(cen * cen * mask, axis=0, keepdims=True) * inv_m
        inv = lax.rsqrt(var + 1e-5)
        o_ref[...] = jnp.tanh(cen * inv * g_ref[...] + beta_ref[...])

    return kernel


# ------------------------------- wrappers ------------------------------------

def _round_up(x, m):
    return (x + m - 1) // m * m


def _fused_layer(patches, w_pad, b_pad, g_pad, beta_pad):
    """patches: (M, K) f32 -> lane-dense (M, CP) tanh(BN(patches @ W + b))."""
    m, k = patches.shape
    k_pad = w_pad.shape[0]                 # true K rounded up to a multiple of 8
    m_pad = _round_up(m, 8)
    if (m_pad, k_pad) != (m, k):
        patches = jnp.pad(patches, ((0, m_pad - m), (0, k_pad - k)))
    vmem = pl.BlockSpec(memory_space=pltpu.MemorySpace.VMEM)
    out = pl.pallas_call(
        _make_layer_kernel(m, m_pad),
        out_shape=jax.ShapeDtypeStruct((m_pad, CP), jnp.float32),
        in_specs=[vmem, vmem, vmem, vmem, vmem],
        out_specs=vmem,
    )(patches, w_pad, b_pad, g_pad, beta_pad)
    return out[:m]


def im2col(x, kh, kw, stride, pad):
    """x: (N,H,W,C) -> (N*Ho*Wo, kh*kw*C) patches, feature order (kh, kw, cin)."""
    x = jnp.pad(x, ((0, 0), (pad, pad), (pad, pad), (0, 0)))
    n, h, w, c = x.shape
    ho = (h - kh) // stride + 1
    wo = (w - kw) // stride + 1
    views = []
    for i in range(kh):
        for j in range(kw):
            views.append(
                x[:, i:i + stride * (ho - 1) + 1:stride,
                     j:j + stride * (wo - 1) + 1:stride, :])
    p = jnp.stack(views, axis=3)                       # (N, Ho, Wo, kh*kw, C)
    return p.reshape(n * ho * wo, kh * kw * c), n, ho, wo


def conv_bn_tanh(x, lp, kh, kw, stride, pad):
    """Conv2d + BatchNorm2d(train) + Tanh, one fused Pallas call.

    x is NHWC with the true input-channel count; returns NHWC with the channel
    dim lane-padded to CP (channels >= cout are exactly 0).
    """
    patches, n, ho, wo = im2col(x, kh, kw, stride, pad)
    y = _fused_layer(patches, lp["w"], lp["b"], lp["g"], lp["beta"])
    return y.reshape(n, ho, wo, CP)


def dilate(x, stride):
    if stride == 1:
        return x
    n, h, w, c = x.shape
    out = jnp.zeros((n, (h - 1) * stride + 1, (w - 1) * stride + 1, c), x.dtype)
    return out.at[:, ::stride, ::stride, :].set(x)


def deconv_bn_tanh(x, lp, kh, kw, stride, pad):
    """ConvTranspose2d + BatchNorm2d(train) + Tanh.

    Weights are stored in the equivalent-conv layout (kh, kw, cin, cout), i.e.
    the spatially flipped, channel-transposed ConvTranspose2d weight, so
    conv_transpose(x, s, p) == conv(dilate(x, s), pad=k-1-p, stride=1).
    """
    # TODO(synk): replace dilate+conv with a stride^2 sub-pixel decomposition
    # so the MXU stops multiplying the structural zeros of the dilated input.
    return conv_bn_tanh(dilate(x, stride), lp, kh, kw, 1, kh - 1 - pad)


def maxpool2d(x, k, stride):
    """MaxPool2d on a lane-dense NHWC activation (plain jnp; XLA fuses it)."""
    n, h, w, c = x.shape
    ho = (h - k) // stride + 1
    wo = (w - k) // stride + 1
    out = None
    for i in range(k):
        for j in range(k):
            v = x[:, i:i + stride * (ho - 1) + 1:stride,
                     j:j + stride * (wo - 1) + 1:stride, :]
            out = v if out is None else jnp.maximum(out, v)
    return out


# -------------------------------- model --------------------------------------

def _layer_params(wkey, bkey, kh, kw, cin, cout):
    """Init one conv layer and pre-pad it once to the lane-dense kernel layout."""
    k_feat = kh * kw * cin
    k_pad = _round_up(k_feat, 8)
    w = (jax.random.normal(wkey, (kh, kw, cin, cout), jnp.float32)
         / jnp.sqrt(float(k_feat)))
    b = 0.1 * jax.random.normal(bkey, (cout,), jnp.float32)
    # Padded output channels get zero weight/bias/gamma/beta, so they stay
    # exactly 0 through the fused BN + Tanh epilogue.
    w_pad = jnp.zeros((k_pad, CP), jnp.float32).at[:k_feat, :cout].set(
        w.reshape(k_feat, cout))
    b_pad = jnp.zeros((1, CP), jnp.float32).at[0, :cout].set(b)
    g_pad = jnp.zeros((1, CP), jnp.float32).at[0, :cout].set(1.0)
    beta_pad = jnp.zeros((1, CP), jnp.float32)
    return {"w": w_pad, "b": b_pad, "g": g_pad, "beta": beta_pad}


def init_params(key):
    ks = jax.random.split(key, 10)
    return {
        # encoder: Conv2d(3,16,3,s=3,p=1)+BN(16); Conv2d(16,4,3,s=2,p=1)+BN(4)
        "c1": _layer_params(ks[0], ks[1], 3, 3, 3, 16),
        "c2": _layer_params(ks[2], ks[3], 3, 3, 16, 4),
        # decoder (ConvTranspose2d weights kept in equivalent-conv layout):
        # (4->16, k3, s2), (16->8, k5, s3, p1), (8->3, k2, s2, p1)
        "d1": _layer_params(ks[4], ks[5], 3, 3, 4, 16),
        "d2": _layer_params(ks[6], ks[7], 5, 5, 16, 8),
        "d3": _layer_params(ks[8], ks[9], 2, 2, 8, 3),
    }


@jax.jit
def cnnae_forward(x_nchw, p):
    x = jnp.transpose(x_nchw, (0, 2, 3, 1))              # NCHW -> NHWC
    # conv1 block: Conv2d(3,16,3,s=3,p=1) + BN + Tanh + MaxPool2d(2, 2)
    h = conv_bn_tanh(x, p["c1"], 3, 3, 3, 1)             # (N,16,16,CP)
    fm = maxpool2d(h, 2, 2)                              # (N, 8, 8,CP)
    # conv2 block: Conv2d(16,4,3,s=2,p=1) + BN + Tanh + MaxPool2d(2, 1)
    h = conv_bn_tanh(fm[..., :16], p["c2"], 3, 3, 2, 1)  # (N, 4, 4,CP)
    enc = maxpool2d(h, 2, 1)                             # (N, 3, 3,CP)
    # decoder
    d = deconv_bn_tanh(enc[..., :4], p["d1"], 3, 3, 2, 0)   # (N, 7, 7,CP)
    d = deconv_bn_tanh(d[..., :16], p["d2"], 5, 5, 3, 1)    # (N,21,21,CP)
    dec = deconv_bn_tanh(d[..., :8], p["d3"], 2, 2, 2, 1)   # (N,40,40,CP)

    def to_nchw(t, c):
        return jnp.transpose(t[..., :c], (0, 3, 1, 2))

    return to_nchw(fm, 16), to_nchw(enc, 4), to_nchw(dec, 3)


if __name__ == "__main__":
    key = jax.random.PRNGKey(0)
    pkey, xkey = jax.random.split(key)
    params = init_params(pkey)
    x = jax.random.normal(xkey, (2, 3, 48, 48), jnp.float32)  # NCHW, like PyTorch

    feature_map, encode, decode = cnnae_forward(x, params)
    jax.block_until_ready((feature_map, encode, decode))

    assert feature_map.shape == (2, 16, 8, 8), feature_map.shape
    assert encode.shape == (2, 4, 3, 3), encode.shape
    assert decode.shape == (2, 3, 40, 40), decode.shape
    assert bool(jnp.all(jnp.isfinite(decode)))
    print("KERNEL_OK")
</pallas_src>

<mosaic_0001>
module attributes {stable_mosaic.version = 11 : i64} {
  func.func @kernel(%arg0: memref<512x32xf32, #tpu.memory_space<vmem>>, %arg1: memref<32x128xf32, #tpu.memory_space<vmem>>, %arg2: memref<1x128xf32, #tpu.memory_space<vmem>>, %arg3: memref<1x128xf32, #tpu.memory_space<vmem>>, %arg4: memref<1x128xf32, #tpu.memory_space<vmem>>, %arg5: memref<512x128xf32, #tpu.memory_space<vmem>>) attributes {dimension_semantics = [], scalar_prefetch = 0 : i64, scratch_operands = 0 : i64, tpu.core_type = #tpu.core_type<tc>} {
    %c0 = arith.constant 0 : index
    %c0_0 = arith.constant 0 : index
    %0 = vector.load %arg0[%c0, %c0_0] : memref<512x32xf32, #tpu.memory_space<vmem>>, vector<512x32xf32>
    %c0_1 = arith.constant 0 : index
    %c0_2 = arith.constant 0 : index
    %1 = vector.load %arg1[%c0_1, %c0_2] : memref<32x128xf32, #tpu.memory_space<vmem>>, vector<32x128xf32>
    %cst = arith.constant dense<0.000000e+00> : vector<512x128xf32>
    %2 = tpu.matmul %0, %1, %cst {dimension_numbers = #tpu.dot_dimension_numbers<[1], [0], [0], [1], [0, 0, 1, 1], [], []>} : vector<512x32xf32>, vector<32x128xf32>, vector<512x128xf32> -> vector<512x128xf32>
    %c0_3 = arith.constant 0 : index
    %c0_4 = arith.constant 0 : index
    %3 = vector.load %arg2[%c0_3, %c0_4] : memref<1x128xf32, #tpu.memory_space<vmem>>, vector<1x128xf32>
    %4 = vector.broadcast %3 : vector<1x128xf32> to vector<512x128xf32>
    %5 = arith.addf %2, %4 : vector<512x128xf32>
    %cst_5 = arith.constant dense<0.000000e+00> : vector<128xf32>
    %6 = vector.multi_reduction <add>, %5, %cst_5 [0] : vector<512x128xf32> to vector<128xf32>
    %7 = vector.shape_cast %6 : vector<128xf32> to vector<1x128xf32>
    %cst_6 = arith.constant 5.120000e+02 : f32
    %8 = vector.broadcast %cst_6 : f32 to vector<1x128xf32>
    %9 = arith.divf %7, %8 : vector<1x128xf32>
    %10 = vector.broadcast %9 : vector<1x128xf32> to vector<512x128xf32>
    %11 = arith.subf %5, %10 : vector<512x128xf32>
    %12 = arith.mulf %11, %11 : vector<512x128xf32>
    %cst_7 = arith.constant dense<0.000000e+00> : vector<128xf32>
    %13 = vector.multi_reduction <add>, %12, %cst_7 [0] : vector<512x128xf32> to vector<128xf32>
    %14 = vector.shape_cast %13 : vector<128xf32> to vector<1x128xf32>
    %cst_8 = arith.constant 5.120000e+02 : f32
    %15 = vector.broadcast %cst_8 : f32 to vector<1x128xf32>
    %16 = arith.divf %14, %15 : vector<1x128xf32>
    %cst_9 = arith.constant 9.99999974E-6 : f32
    %17 = vector.broadcast %cst_9 : f32 to vector<1x128xf32>
    %18 = arith.addf %16, %17 : vector<1x128xf32>
    %19 = math.rsqrt %18 : vector<1x128xf32>
    %20 = vector.broadcast %19 : vector<1x128xf32> to vector<512x128xf32>
    %21 = arith.mulf %11, %20 : vector<512x128xf32>
    %c0_10 = arith.constant 0 : index
    %c0_11 = arith.constant 0 : index
    %22 = vector.load %arg3[%c0_10, %c0_11] : memref<1x128xf32, #tpu.memory_space<vmem>>, vector<1x128xf32>
    %23 = vector.broadcast %22 : vector<1x128xf32> to vector<512x128xf32>
    %24 = arith.mulf %21, %23 : vector<512x128xf32>
    %c0_12 = arith.constant 0 : index
    %c0_13 = arith.constant 0 : index
    %25 = vector.load %arg4[%c0_12, %c0_13] : memref<1x128xf32, #tpu.memory_space<vmem>>, vector<1x128xf32>
    %26 = vector.broadcast %25 : vector<1x128xf32> to vector<512x128xf32>
    %27 = arith.addf %24, %26 : vector<512x128xf32>
    %28 = math.tanh %27 : vector<512x128xf32>
    %c0_14 = arith.constant 0 : index
    %c0_15 = arith.constant 0 : index
    %29 = vector.load %arg5[%c0_14, %c0_15] : memref<512x128xf32, #tpu.memory_space<vmem>>, vector<512x128xf32>
    tpu.vector_store %arg5[%c0_14, %c0_15], %28 {strides = array<i32>} : memref<512x128xf32, #tpu.memory_space<vmem>>, vector<512x128xf32>,
    return
  }
}

module attributes {stable_mosaic.version = 11 : i64} {
  func.func @kernel(%arg0: memref<32x144xf32, #tpu.memory_space<vmem>>, %arg1: memref<144x128xf32, #tpu.memory_space<vmem>>, %arg2: memref<1x128xf32, #tpu.memory_space<vmem>>, %arg3: memref<1x128xf32, #tpu.memory_space<vmem>>, %arg4: memref<1x128xf32, #tpu.memory_space<vmem>>, %arg5: memref<32x128xf32, #tpu.memory_space<vmem>>) attributes {dimension_semantics = [], scalar_prefetch = 0 : i64, scratch_operands = 0 : i64, tpu.core_type = #tpu.core_type<tc>} {
    %c0 = arith.constant 0 : index
    %c0_0 = arith.constant 0 : index
    %0 = vector.load %arg0[%c0, %c0_0] : memref<32x144xf32, #tpu.memory_space<vmem>>, vector<32x144xf32>
    %c0_1 = arith.constant 0 : index
    %c0_2 = arith.constant 0 : index
    %1 = vector.load %arg1[%c0_1, %c0_2] : memref<144x128xf32, #tpu.memory_space<vmem>>, vector<144x128xf32>
    %cst = arith.constant dense<0.000000e+00> : vector<32x128xf32>
    %2 = tpu.matmul %0, %1, %cst {dimension_numbers = #tpu.dot_dimension_numbers<[1], [0], [0], [1], [0, 0, 1, 1], [], []>} : vector<32x144xf32>, vector<144x128xf32>, vector<32x128xf32> -> vector<32x128xf32>
    %c0_3 = arith.constant 0 : index
    %c0_4 = arith.constant 0 : index
    %3 = vector.load %arg2[%c0_3, %c0_4] : memref<1x128xf32, #tpu.memory_space<vmem>>, vector<1x128xf32>
    %4 = vector.broadcast %3 : vector<1x128xf32> to vector<32x128xf32>
    %5 = arith.addf %2, %4 : vector<32x128xf32>
    %cst_5 = arith.constant dense<0.000000e+00> : vector<128xf32>
    %6 = vector.multi_reduction <add>, %5, %cst_5 [0] : vector<32x128xf32> to vector<128xf32>
    %7 = vector.shape_cast %6 : vector<128xf32> to vector<1x128xf32>
    %cst_6 = arith.constant 3.200000e+01 : f32
    %8 = vector.broadcast %cst_6 : f32 to vector<1x128xf32>
    %9 = arith.divf %7, %8 : vector<1x128xf32>
    %10 = vector.broadcast %9 : vector<1x128xf32> to vector<32x128xf32>
    %11 = arith.subf %5, %10 : vector<32x128xf32>
    %12 = arith.mulf %11, %11 : vector<32x128xf32>
    %cst_7 = arith.constant dense<0.000000e+00> : vector<128xf32>
    %13 = vector.multi_reduction <add>, %12, %cst_7 [0] : vector<32x128xf32> to vector<128xf32>
    %14 = vector.shape_cast %13 : vector<128xf32> to vector<1x128xf32>
    %cst_8 = arith.constant 3.200000e+01 : f32
    %15 = vector.broadcast %cst_8 : f32 to vector<1x128xf32>
    %16 = arith.divf %14, %15 : vector<1x128xf32>
    %cst_9 = arith.constant 9.99999974E-6 : f32
    %17 = vector.broadcast %cst_9 : f32 to vector<1x128xf32>
    %18 = arith.addf %16, %17 : vector<1x128xf32>
    %19 = math.rsqrt %18 : vector<1x128xf32>
    %20 = vector.broadcast %19 : vector<1x128xf32> to vector<32x128xf32>
    %21 = arith.mulf %11, %20 : vector<32x128xf32>
    %c0_10 = arith.constant 0 : index
    %c0_11 = arith.constant 0 : index
    %22 = vector.load %arg3[%c0_10, %c0_11] : memref<1x128xf32, #tpu.memory_space<vmem>>, vector<1x128xf32>
    %23 = vector.broadcast %22 : vector<1x128xf32> to vector<32x128xf32>
    %24 = arith.mulf %21, %23 : vector<32x128xf32>
    %c0_12 = arith.constant 0 : index
    %c0_13 = arith.constant 0 : index
    %25 = vector.load %arg4[%c0_12, %c0_13] : memref<1x128xf32, #tpu.memory_space<vmem>>, vector<1x128xf32>
    %26 = vector.broadcast %25 : vector<1x128xf32> to vector<32x128xf32>
    %27 = arith.addf %24, %26 : vector<32x128xf32>
    %28 = math.tanh %27 : vector<32x128xf32>
    %c0_14 = arith.constant 0 : index
    %c0_15 = arith.constant 0 : index
    %29 = vector.load %arg5[%c0_14, %c0_15] : memref<32x128xf32, #tpu.memory_space<vmem>>, vector<32x128xf32>
    tpu.vector_store %arg5[%c0_14, %c0_15], %28 {strides = array<i32>} : memref<32x128xf32, #tpu.memory_space<vmem>>, vector<32x128xf32>,
    return
  }
}

module attributes {stable_mosaic.version = 11 : i64} {
  func.func @kernel(%arg0: memref<104x40xf32, #tpu.memory_space<vmem>>, %arg1: memref<40x128xf32, #tpu.memory_space<vmem>>, %arg2: memref<1x128xf32, #tpu.memory_space<vmem>>, %arg3: memref<1x128xf32, #tpu.memory_space<vmem>>, %arg4: memref<1x128xf32, #tpu.memory_space<vmem>>, %arg5: memref<104x128xf32, #tpu.memory_space<vmem>>) attributes {dimension_semantics = [], scalar_prefetch = 0 : i64, scratch_operands = 0 : i64, tpu.core_type = #tpu.core_type<tc>} {
    %c0 = arith.constant 0 : index
    %c0_0 = arith.constant 0 : index
    %0 = vector.load %arg0[%c0, %c0_0] : memref<104x40xf32, #tpu.memory_space<vmem>>, vector<104x40xf32>
    %c0_1 = arith.constant 0 : index
    %c0_2 = arith.constant 0 : index
    %1 = vector.load %arg1[%c0_1, %c0_2] : memref<40x128xf32, #tpu.memory_space<vmem>>, vector<40x128xf32>
    %cst = arith.constant dense<0.000000e+00> : vector<104x128xf32>
    %2 = tpu.matmul %0, %1, %cst {dimension_numbers = #tpu.dot_dimension_numbers<[1], [0], [0], [1], [0, 0, 1, 1], [], []>} : vector<104x40xf32>, vector<40x128xf32>, vector<104x128xf32> -> vector<104x128xf32>
    %c0_3 = arith.constant 0 : index
    %c0_4 = arith.constant 0 : index
    %3 = vector.load %arg2[%c0_3, %c0_4] : memref<1x128xf32, #tpu.memory_space<vmem>>, vector<1x128xf32>
    %4 = vector.broadcast %3 : vector<1x128xf32> to vector<104x128xf32>
    %5 = arith.addf %2, %4 : vector<104x128xf32>
    %6 = tpu.iota {dimensions = array<i32: 0>} : vector<104x128xi32>
    %c98_i32 = arith.constant 98 : i32
    %7 = vector.broadcast %c98_i32 : i32 to vector<104x128xi32>
    %8 = arith.cmpi slt, %6, %7 : vector<104x128xi32>
    %9 = arith.extui %8 : vector<104x128xi1> to vector<104x128xi32>
    %10 = arith.sitofp %9 : vector<104x128xi32> to vector<104x128xf32>
    %11 = arith.mulf %5, %10 : vector<104x128xf32>
    %cst_5 = arith.constant dense<0.000000e+00> : vector<128xf32>
    %12 = vector.multi_reduction <add>, %11, %cst_5 [0] : vector<104x128xf32> to vector<128xf32>
    %13 = vector.shape_cast %12 : vector<128xf32> to vector<1x128xf32>
    %cst_6 = arith.constant 0.0102040814 : f32
    %14 = vector.broadcast %cst_6 : f32 to vector<1x128xf32>
    %15 = arith.mulf %13, %14 : vector<1x128xf32>
    %16 = vector.broadcast %15 : vector<1x128xf32> to vector<104x128xf32>
    %17 = arith.subf %5, %16 : vector<104x128xf32>
    %18 = arith.mulf %17, %17 : vector<104x128xf32>
    %19 = arith.mulf %18, %10 : vector<104x128xf32>
    %cst_7 = arith.constant dense<0.000000e+00> : vector<128xf32>
    %20 = vector.multi_reduction <add>, %19, %cst_7 [0] : vector<104x128xf32> to vector<128xf32>
    %21 = vector.shape_cast %20 : vector<128xf32> to vector<1x128xf32>
    %cst_8 = arith.constant 0.0102040814 : f32
    %22 = vector.broadcast %cst_8 : f32 to vector<1x128xf32>
    %23 = arith.mulf %21, %22 : vector<1x128xf32>
    %cst_9 = arith.constant 9.99999974E-6 : f32
    %24 = vector.broadcast %cst_9 : f32 to vector<1x128xf32>
    %25 = arith.addf %23, %24 : vector<1x128xf32>
    %26 = math.rsqrt %25 : vector<1x128xf32>
    %27 = vector.broadcast %26 : vector<1x128xf32> to vector<104x128xf32>
    %28 = arith.mulf %17, %27 : vector<104x128xf32>
    %c0_10 = arith.constant 0 : index
    %c0_11 = arith.constant 0 : index
    %29 = vector.load %arg3[%c0_10, %c0_11] : memref<1x128xf32, #tpu.memory_space<vmem>>, vector<1x128xf32>
    %30 = vector.broadcast %29 : vector<1x128xf32> to vector<104x128xf32>
    %31 = arith.mulf %28, %30 : vector<104x128xf32>
    %c0_12 = arith.constant 0 : index
    %c0_13 = arith.constant 0 : index
    %32 = vector.load %arg4[%c0_12, %c0_13] : memref<1x128xf32, #tpu.memory_space<vmem>>, vector<1x128xf32>
    %33 = vector.broadcast %32 : vector<1x128xf32> to vector<104x128xf32>
    %34 = arith.addf %31, %33 : vector<104x128xf32>
    %35 = math.tanh %34 : vector<104x128xf32>
    %c0_14 = arith.constant 0 : index
    %c0_15 = arith.constant 0 : index
    %36 = vector.load %arg5[%c0_14, %c0_15] : memref<104x128xf32, #tpu.memory_space<vmem>>, vector<104x128xf32>
    tpu.vector_store %arg5[%c0_14, %c0_15], %35 {strides = array<i32>} : memref<104x128xf32, #tpu.memory_space<vmem>>, vector<104x128xf32>,
    return
  }
}

module attributes {stable_mosaic.version = 11 : i64} {
  func.func @kernel(%arg0: memref<888x400xf32, #tpu.memory_space<vmem>>, %arg1: memref<400x128xf32, #tpu.memory_space<vmem>>, %arg2: memref<1x128xf32, #tpu.memory_space<vmem>>, %arg3: memref<1x128xf32, #tpu.memory_space<vmem>>, %arg4: memref<1x128xf32, #tpu.memory_space<vmem>>, %arg5: memref<888x128xf32, #tpu.memory_space<vmem>>) attributes {dimension_semantics = [], scalar_prefetch = 0 : i64, scratch_operands = 0 : i64, tpu.core_type = #tpu.core_type<tc>} {
    %c0 = arith.constant 0 : index
    %c0_0 = arith.constant 0 : index
    %0 = vector.load %arg0[%c0, %c0_0] : memref<888x400xf32, #tpu.memory_space<vmem>>, vector<888x400xf32>
    %c0_1 = arith.constant 0 : index
    %c0_2 = arith.constant 0 : index
    %1 = vector.load %arg1[%c0_1, %c0_2] : memref<400x128xf32, #tpu.memory_space<vmem>>, vector<400x128xf32>
    %cst = arith.constant dense<0.000000e+00> : vector<888x128xf32>
    %2 = tpu.matmul %0, %1, %cst {dimension_numbers = #tpu.dot_dimension_numbers<[1], [0], [0], [1], [0, 0, 1, 1], [], []>} : vector<888x400xf32>, vector<400x128xf32>, vector<888x128xf32> -> vector<888x128xf32>
    %c0_3 = arith.constant 0 : index
    %c0_4 = arith.constant 0 : index
    %3 = vector.load %arg2[%c0_3, %c0_4] : memref<1x128xf32, #tpu.memory_space<vmem>>, vector<1x128xf32>
    %4 = vector.broadcast %3 : vector<1x128xf32> to vector<888x128xf32>
    %5 = arith.addf %2, %4 : vector<888x128xf32>
    %6 = tpu.iota {dimensions = array<i32: 0>} : vector<888x128xi32>
    %c882_i32 = arith.constant 882 : i32
    %7 = vector.broadcast %c882_i32 : i32 to vector<888x128xi32>
    %8 = arith.cmpi slt, %6, %7 : vector<888x128xi32>
    %9 = arith.extui %8 : vector<888x128xi1> to vector<888x128xi32>
    %10 = arith.sitofp %9 : vector<888x128xi32> to vector<888x128xf32>
    %11 = arith.mulf %5, %10 : vector<888x128xf32>
    %cst_5 = arith.constant dense<0.000000e+00> : vector<128xf32>
    %12 = vector.multi_reduction <add>, %11, %cst_5 [0] : vector<888x128xf32> to vector<128xf32>
    %13 = vector.shape_cast %12 : vector<128xf32> to vector<1x128xf32>
    %cst_6 = arith.constant 0.00113378686 : f32
    %14 = vector.broadcast %cst_6 : f32 to vector<1x128xf32>
    %15 = arith.mulf %13, %14 : vector<1x128xf32>
    %16 = vector.broadcast %15 : vector<1x128xf32> to vector<888x128xf32>
    %17 = arith.subf %5, %16 : vector<888x128xf32>
    %18 = arith.mulf %17, %17 : vector<888x128xf32>
    %19 = arith.mulf %18, %10 : vector<888x128xf32>
    %cst_7 = arith.constant dense<0.000000e+00> : vector<128xf32>
    %20 = vector.multi_reduction <add>, %19, %cst_7 [0] : vector<888x128xf32> to vector<128xf32>
    %21 = vector.shape_cast %20 : vector<128xf32> to vector<1x128xf32>
    %cst_8 = arith.constant 0.00113378686 : f32
    %22 = vector.broadcast %cst_8 : f32 to vector<1x128xf32>
    %23 = arith.mulf %21, %22 : vector<1x128xf32>
    %cst_9 = arith.constant 9.99999974E-6 : f32
    %24 = vector.broadcast %cst_9 : f32 to vector<1x128xf32>
    %25 = arith.addf %23, %24 : vector<1x128xf32>
    %26 = math.rsqrt %25 : vector<1x128xf32>
    %27 = vector.broadcast %26 : vector<1x128xf32> to vector<888x128xf32>
    %28 = arith.mulf %17, %27 : vector<888x128xf32>
    %c0_10 = arith.constant 0 : index
    %c0_11 = arith.constant 0 : index
    %29 = vector.load %arg3[%c0_10, %c0_11] : memref<1x128xf32, #tpu.memory_space<vmem>>, vector<1x128xf32>
    %30 = vector.broadcast %29 : vector<1x128xf32> to vector<888x128xf32>
    %31 = arith.mulf %28, %30 : vector<888x128xf32>
    %c0_12 = arith.constant 0 : index
    %c0_13 = arith.constant 0 : index
    %32 = vector.load %arg4[%c0_12, %c0_13] : memref<1x128xf32, #tpu.memory_space<vmem>>, vector<1x128xf32>
    %33 = vector.broadcast %32 : vector<1x128xf32> to vector<888x128xf32>
    %34 = arith.addf %31, %33 : vector<888x128xf32>
    %35 = math.tanh %34 : vector<888x128xf32>
    %c0_14 = arith.constant 0 : index
    %c0_15 = arith.constant 0 : index
    %36 = vector.load %arg5[%c0_14, %c0_15] : memref<888x128xf32, #tpu.memory_space<vmem>>, vector<888x128xf32>
    tpu.vector_store %arg5[%c0_14, %c0_15], %35 {strides = array<i32>} : memref<888x128xf32, #tpu.memory_space<vmem>>, vector<888x128xf32>,
    return
  }
}

module attributes {stable_mosaic.version = 11 : i64} {
  func.func @kernel(%arg0: memref<3200x32xf32, #tpu.memory_space<vmem>>, %arg1: memref<32x128xf32, #tpu.memory_space<vmem>>, %arg2: memref<1x128xf32, #tpu.memory_space<vmem>>, %arg3: memref<1x128xf32, #tpu.memory_space<vmem>>, %arg4: memref<1x128xf32, #tpu.memory_space<vmem>>, %arg5: memref<3200x128xf32, #tpu.memory_space<vmem>>) attributes {dimension_semantics = [], scalar_prefetch = 0 : i64, scratch_operands = 0 : i64, tpu.core_type = #tpu.core_type<tc>} {
    %c0 = arith.constant 0 : index
    %c0_0 = arith.constant 0 : index
    %0 = vector.load %arg0[%c0, %c0_0] : memref<3200x32xf32, #tpu.memory_space<vmem>>, vector<3200x32xf32>
    %c0_1 = arith.constant 0 : index
    %c0_2 = arith.constant 0 : index
    %1 = vector.load %arg1[%c0_1, %c0_2] : memref<32x128xf32, #tpu.memory_space<vmem>>, vector<32x128xf32>
    %cst = arith.constant dense<0.000000e+00> : vector<3200x128xf32>
    %2 = tpu.matmul %0, %1, %cst {dimension_numbers = #tpu.dot_dimension_numbers<[1], [0], [0], [1], [0, 0, 1, 1], [], []>} : vector<3200x32xf32>, vector<32x128xf32>, vector<3200x128xf32> -> vector<3200x128xf32>
    %c0_3 = arith.constant 0 : index
    %c0_4 = arith.constant 0 : index
    %3 = vector.load %arg2[%c0_3, %c0_4] : memref<1x128xf32, #tpu.memory_space<vmem>>, vector<1x128xf32>
    %4 = vector.broadcast %3 : vector<1x128xf32> to vector<3200x128xf32>
    %5 = arith.addf %2, %4 : vector<3200x128xf32>
    %cst_5 = arith.constant dense<0.000000e+00> : vector<128xf32>
    %6 = vector.multi_reduction <add>, %5, %cst_5 [0] : vector<3200x128xf32> to vector<128xf32>
    %7 = vector.shape_cast %6 : vector<128xf32> to vector<1x128xf32>
    %cst_6 = arith.constant 3.200000e+03 : f32
    %8 = vector.broadcast %cst_6 : f32 to vector<1x128xf32>
    %9 = arith.divf %7, %8 : vector<1x128xf32>
    %10 = vector.broadcast %9 : vector<1x128xf32> to vector<3200x128xf32>
    %11 = arith.subf %5, %10 : vector<3200x128xf32>
    %12 = arith.mulf %11, %11 : vector<3200x128xf32>
    %cst_7 = arith.constant dense<0.000000e+00> : vector<128xf32>
    %13 = vector.multi_reduction <add>, %12, %cst_7 [0] : vector<3200x128xf32> to vector<128xf32>
    %14 = vector.shape_cast %13 : vector<128xf32> to vector<1x128xf32>
    %cst_8 = arith.constant 3.200000e+03 : f32
    %15 = vector.broadcast %cst_8 : f32 to vector<1x128xf32>
    %16 = arith.divf %14, %15 : vector<1x128xf32>
    %cst_9 = arith.constant 9.99999974E-6 : f32
    %17 = vector.broadcast %cst_9 : f32 to vector<1x128xf32>
    %18 = arith.addf %16, %17 : vector<1x128xf32>
    %19 = math.rsqrt %18 : vector<1x128xf32>
    %20 = vector.broadcast %19 : vector<1x128xf32> to vector<3200x128xf32>
    %21 = arith.mulf %11, %20 : vector<3200x128xf32>
    %c0_10 = arith.constant 0 : index
    %c0_11 = arith.constant 0 : index
    %22 = vector.load %arg3[%c0_10, %c0_11] : memref<1x128xf32, #tpu.memory_space<vmem>>, vector<1x128xf32>
    %23 = vector.broadcast %22 : vector<1x128xf32> to vector<3200x128xf32>
    %24 = arith.mulf %21, %23 : vector<3200x128xf32>
    %c0_12 = arith.constant 0 : index
    %c0_13 = arith.constant 0 : index
    %25 = vector.load %arg4[%c0_12, %c0_13] : memref<1x128xf32, #tpu.memory_space<vmem>>, vector<1x128xf32>
    %26 = vector.broadcast %25 : vector<1x128xf32> to vector<3200x128xf32>
    %27 = arith.addf %24, %26 : vector<3200x128xf32>
    %28 = math.tanh %27 : vector<3200x128xf32>
    %c0_14 = arith.constant 0 : index
    %c0_15 = arith.constant 0 : index
    %29 = vector.load %arg5[%c0_14, %c0_15] : memref<3200x128xf32, #tpu.memory_space<vmem>>, vector<3200x128xf32>
    tpu.vector_store %arg5[%c0_14, %c0_15], %28 {strides = array<i32>} : memref<3200x128xf32, #tpu.memory_space<vmem>>, vector<3200x128xf32>,
    return
  }
}

</mosaic_0001>

<llo_original>
// kernel: cnnae_forward.5
$region0: #{cnnae_forward.5}
  #allocation0 [shape = 'u32[]', space=smem, size = 0x4, offset = 0x4, fixed_abs, tag = 'smem constant byte address 0x4 - core index']
  #allocation1 [shape = 'u32[144,128]{1,0:T(1,128)}', space=vmem, size = 0x12000, scoped, tag = 'internal scratch']
  %s0 = inlined_call_operand.vmem [shape: f32[512,32], index: 0, kind: input, shape index: {}]
  %s1 = inlined_call_operand.hbm [shape: f32[32,128], index: 1, kind: input, shape index: {}]
  %s2 = inlined_call_operand.hbm [shape: f32[1,128], index: 2, kind: input, shape index: {}]
  %s3 = inlined_call_operand.hbm [shape: f32[1,128], index: 3, kind: input, shape index: {}]
  %s4 = inlined_call_operand.hbm [shape: f32[1,128], index: 4, kind: input, shape index: {}]
  %s5 = inlined_call_operand.vmem [shape: f32[512,128], index: 5, kind: output, shape index: {}]
  %s6 = sld [smem:[#allocation0]]
  $region46: #{cnnae_forward.5} parent=0
    _
  %s8 = ssub.s32 1, %s6
  %s9 = scalar_select 0, %s8, %s6
  $region1: #{cnnae_forward.5} parent=0
    #allocation2 [shape = 'u8[16384]{0}', space=vmem, size = 0x4000, scoped, tag = 'input window, operand 1, single buffered']
    #allocation3 [shape = 's32[1]{0}', space=sflag, size = 0x4, scoped, tag = 'scoped memory for cnnae_forward.5']
    #allocation4 [shape = 'u8[512]{0}', space=vmem, size = 0x400, scoped, tag = 'input window, operand 2, single buffered']
    #allocation5 [shape = 's32[1]{0}', space=sflag, size = 0x4, scoped, tag = 'scoped memory for cnnae_forward.5']
    #allocation6 [shape = 'u8[512]{0}', space=vmem, size = 0x400, scoped, tag = 'input window, operand 3, single buffered']
    #allocation7 [shape = 'u8[512]{0}', space=vmem, size = 0x400, scoped, tag = 'input window, operand 4, single buffered']
    #allocation8 [shape = 's32[1]{0}', space=sflag, size = 0x4, scoped, tag = 'scoped memory for cnnae_forward.5']
    %10 = vsyncpa [#allocation3], 0
    %11 = vsyncpa [#allocation5], 0
    %12 = vsyncpa [#allocation8], 0
    // Predicated region
    $region2: #{cnnae_forward.5} parent=1 // pred_check
      _
    $region3: #{cnnae_forward.5} parent=1 // pred_check_branch
      %14 = sbr.rel (0) target = $region5
    $region4: #{cnnae_forward.5} parent=1 // pred_region
      _
    $region5: #{cnnae_forward.5} parent=1 // pred_fallthru
      _
    // Predicated region
    $region6: #{cnnae_forward.5} parent=1 // pred_check
      _
    $region7: #{cnnae_forward.5} parent=1 // pred_check_branch
      %16 = sbr.rel (0) target = $region9
    $region8: #{cnnae_forward.5} parent=1 // pred_region
      %s18 = ssub.s32 512, 512
      %19 = vsyncadd [#allocation3], %s18
      %s20 = sshll.u32 [#allocation2], 4
      %s21 = int_to_ptr.vmem [resolvable:$true] %s20
      %26 = dma.hbm_to_vmem [thread:$0]  %s1, 512, %s21, [#allocation3], 128, 128, 8
    $region9: #{cnnae_forward.5} parent=1 // pred_fallthru
      _
    // Predicated region
    $region10: #{cnnae_forward.5} parent=1 // pred_check
      _
    $region11: #{cnnae_forward.5} parent=1 // pred_check_branch
      %28 = sbr.rel (0) target = $region13
    $region12: #{cnnae_forward.5} parent=1 // pred_region
      %s30 = ssub.s32 16, 16
      %31 = vsyncadd [#allocation5], %s30
      %s33 = sshll.u32 [#allocation4], 4
      %s34 = int_to_ptr.vmem [resolvable:$true] %s33
      %36 = dma.hbm_to_vmem [thread:$0]  %s2, 16, %s34, [#allocation5]
    $region13: #{cnnae_forward.5} parent=1 // pred_fallthru
      _
    // Predicated region
    $region14: #{cnnae_forward.5} parent=1 // pred_check
      _
    $region15: #{cnnae_forward.5} parent=1 // pred_check_branch
      %38 = sbr.rel (0) target = $region17
    $region16: #{cnnae_forward.5} parent=1 // pred_region
      %s40 = ssub.s32 16, 16
      %41 = vsyncadd [#allocation5], %s40
      %s43 = sshll.u32 [#allocation6], 4
      %s44 = int_to_ptr.vmem [resolvable:$true] %s43
      %46 = dma.hbm_to_vmem [thread:$0]  %s3, 16, %s44, [#allocation5]
    $region17: #{cnnae_forward.5} parent=1 // pred_fallthru
      _
    // Predicated region
    $region18: #{cnnae_forward.5} parent=1 // pred_check
      _
    $region19: #{cnnae_forward.5} parent=1 // pred_check_branch
      %48 = sbr.rel (0) target = $region21
    $region20: #{cnnae_forward.5} parent=1 // pred_region
      %s50 = ssub.s32 16, 16
      %51 = vsyncadd [#allocation8], %s50
      %s53 = sshll.u32 [#allocation7], 4
      %s54 = int_to_ptr.vmem [resolvable:$true] %s53
      %56 = dma.hbm_to_vmem [thread:$0]  %s4, 16, %s54, [#allocation8]
    $region21: #{cnnae_forward.5} parent=1 // pred_fallthru
      _
    // Predicated region
    $region22: #{cnnae_forward.5} parent=1 // pred_check
      _
    $region23: #{cnnae_forward.5} parent=1 // pred_check_branch
      %58 = sbr.rel (0) target = $region25
    $region24: #{cnnae_forward.5} parent=1 // pred_region
      %59 = dma.done [#allocation3], 512
    $region25: #{cnnae_forward.5} parent=1 // pred_fallthru
      _
    // Predicated region
    $region26: #{cnnae_forward.5} parent=1 // pred_check
      _
    $region27: #{cnnae_forward.5} parent=1 // pred_check_branch
      %61 = sbr.rel (0) target = $region29
    $region28: #{cnnae_forward.5} parent=1 // pred_region
      %62 = dma.done [#allocation5], 16
    $region29: #{cnnae_forward.5} parent=1 // pred_fallthru
      _
    // Predicated region
    $region30: #{cnnae_forward.5} parent=1 // pred_check
      _
    $region31: #{cnnae_forward.5} parent=1 // pred_check_branch
      %64 = sbr.rel (0) target = $region33
    $region32: #{cnnae_forward.5} parent=1 // pred_region
      %65 = dma.done [#allocation5], 16
    $region33: #{cnnae_forward.5} parent=1 // pred_fallthru
      _
    // Predicated region
    $region34: #{cnnae_forward.5} parent=1 // pred_check
      _
    $region35: #{cnnae_forward.5} parent=1 // pred_check_branch
      %67 = sbr.rel (0) target = $region37
    $region36: #{cnnae_forward.5} parent=1 // pred_region
      %68 = dma.done [#allocation8], 16
    $region37: #{cnnae_forward.5} parent=1 // pred_fallthru
      _
    %v69 = vld [vmem:[%s0] sm:$0xff]
    %v70 = vld [vmem:[%s0 + $0x8] sm:$0xff]
    %v71 = vld [vmem:[%s0 + $0x10] sm:$0xff]
    %v72 = vld [vmem:[%s0 + $0x18] sm:$0xff]
    %v73 = vld [vmem:[%s0 + $0x20] sm:$0xff]
    %v74 = vld [vmem:[%s0 + $0x28] sm:$0xff]
    %v75 = vld [vmem:[%s0 + $0x30] sm:$0xff]
    %v76 = vld [vmem:[%s0 + $0x38] sm:$0xff]
    %v77 = vld [vmem:[%s0 + $0x40] sm:$0xff]
    %v78 = vld [vmem:[%s0 + $0x48] sm:$0xff]
    %v79 = vld [vmem:[%s0 + $0x50] sm:$0xff]
    %v80 = vld [vmem:[%s0 + $0x58] sm:$0xff]
    %v81 = vld [vmem:[%s0 + $0x60] sm:$0xff]
    %v82 = vld [vmem:[%s0 + $0x68] sm:$0xff]
    %v83 = vld [vmem:[%s0 + $0x70] sm:$0xff]
    %v84 = vld [vmem:[%s0 + $0x78] sm:$0xff]
    %v85 = vld [vmem:[%s0 + $0x80] sm:$0xff]
    %v86 = vld [vmem:[%s0 + $0x88] sm:$0xff]
    %v87 = vld [vmem:[%s0 + $0x90] sm:$0xff]
    %v88 = vld [vmem:[%s0 + $0x98] sm:$0xff]
    %v89 = vld [vmem:[%s0 + $0xa0] sm:$0xff]
    %v90 = vld [vmem:[%s0 + $0xa8] sm:$0xff]
    %v91 = vld [vmem:[%s0 + $0xb0] sm:$0xff]
    %v92 = vld [vmem:[%s0 + $0xb8] sm:$0xff]
    %v93 = vld [vmem:[%s0 + $0xc0] sm:$0xff]
    %v94 = vld [vmem:[%s0 + $0xc8] sm:$0xff]
    %v95 = vld [vmem:[%s0 + $0xd0] sm:$0xff]
    %v96 = vld [vmem:[%s0 + $0xd8] sm:$0xff]
    %v97 = vld [vmem:[%s0 + $0xe0] sm:$0xff]
    %v98 = vld [vmem:[%s0 + $0xe8] sm:$0xff]
    %v99 = vld [vmem:[%s0 + $0xf0] sm:$0xff]
    %v100 = vld [vmem:[%s0 + $0xf8] sm:$0xff]
    %v101 = vld [vmem:[%s0 + $0x100] sm:$0xff]
    %v102 = vld [vmem:[%s0 + $0x108] sm:$0xff]
    %v103 = vld [vmem:[%s0 + $0x110] sm:$0xff]
    %v104 = vld [vmem:[%s0 + $0x118] sm:$0xff]
    %v105 = vld [vmem:[%s0 + $0x120] sm:$0xff]
    %v106 = vld [vmem:[%s0 + $0x128] sm:$0xff]
    %v107 = vld [vmem:[%s0 + $0x130] sm:$0xff]
    %v108 = vld [vmem:[%s0 + $0x138] sm:$0xff]
    %v109 = vld [vmem:[%s0 + $0x140] sm:$0xff]
    %v110 = vld [vmem:[%s0 + $0x148] sm:$0xff]
    %v111 = vld [vmem:[%s0 + $0x150] sm:$0xff]
    %v112 = vld [vmem:[%s0 + $0x158] sm:$0xff]
    %v113 = vld [vmem:[%s0 + $0x160] sm:$0xff]
    %v114 = vld [vmem:[%s0 + $0x168] sm:$0xff]
    %v115 = vld [vmem:[%s0 + $0x170] sm:$0xff]
    %v116 = vld [vmem:[%s0 + $0x178] sm:$0xff]
    %v117 = vld [vmem:[%s0 + $0x180] sm:$0xff]
    %v118 = vld [vmem:[%s0 + $0x188] sm:$0xff]
    %v119 = vld [vmem:[%s0 + $0x190] sm:$0xff]
    %v120 = vld [vmem:[%s0 + $0x198] sm:$0xff]
    %v121 = vld [vmem:[%s0 + $0x1a0] sm:$0xff]
    %v122 = vld [vmem:[%s0 + $0x1a8] sm:$0xff]
    %v123 = vld [vmem:[%s0 + $0x1b0] sm:$0xff]
    %v124 = vld [vmem:[%s0 + $0x1b8] sm:$0xff]
    %v125 = vld [vmem:[%s0 + $0x1c0] sm:$0xff]
    %v126 = vld [vmem:[%s0 + $0x1c8] sm:$0xff]
    %v127 = vld [vmem:[%s0 + $0x1d0] sm:$0xff]
    %v128 = vld [vmem:[%s0 + $0x1d8] sm:$0xff]
    %v129 = vld [vmem:[%s0 + $0x1e0] sm:$0xff]
    %v130 = vld [vmem:[%s0 + $0x1e8] sm:$0xff]
    %v131 = vld [vmem:[%s0 + $0x1f0] sm:$0xff]
    %v132 = vld [vmem:[%s0 + $0x1f8] sm:$0xff]
    %v133 = vld [vmem:[#allocation2] sm:$0xff]
    %v134 = vld [vmem:[#allocation2 + $0x8] sm:$0xff]
    %v135 = vld [vmem:[#allocation2 + $0x10] sm:$0xff]
    %v136 = vld [vmem:[#allocation2 + $0x18] sm:$0xff]
    %v137 = vld [vmem:[#allocation4] sm:$0x1]
    %v139 = vlaneseq
    %v140 = vshrl.u32 %v139, 7
    %v141 = vsub.s32 0, %v140
    %v142 = vrot.slane %v137, %v141
    %vm144 = vcmask 261120
    %v146 = vsel %vm144, %v69, 0
    %v149 = vsel %vm144, %v70, 0
    %v152 = vsel %vm144, %v71, 0
    %v155 = vsel %vm144, %v72, 0
    %v158 = vsel %vm144, %v73, 0
    %v161 = vsel %vm144, %v74, 0
    %v164 = vsel %vm144, %v75, 0
    %v167 = vsel %vm144, %v76, 0
    %v170 = vsel %vm144, %v77, 0
    %v173 = vsel %vm144, %v78, 0
    %v176 = vsel %vm144, %v79, 0
    %v179 = vsel %vm144, %v80, 0
    %v182 = vsel %vm144, %v81, 0
    %v185 = vsel %vm144, %v82, 0
    %v188 = vsel %vm144, %v83, 0
    %v191 = vsel %vm144, %v84, 0
    %v194 = vsel %vm144, %v85, 0
    %v197 = vsel %vm144, %v86, 0
    %v200 = vsel %vm144, %v87, 0
    %v203 = vsel %vm144, %v88, 0
    %v206 = vsel %vm144, %v89, 0
    %v209 = vsel %vm144, %v90, 0
    %v212 = vsel %vm144, %v91, 0
    %v215 = vsel %vm144, %v92, 0
    %v218 = vsel %vm144, %v93, 0
    %v221 = vsel %vm144, %v94, 0
    %v224 = vsel %vm144, %v95, 0
    %v227 = vsel %vm144, %v96, 0
    %v230 = vsel %vm144, %v97, 0
    %v233 = vsel %vm144, %v98, 0
    %v236 = vsel %vm144, %v99, 0
    %v239 = vsel %vm144, %v100, 0
    %v242 = vsel %vm144, %v101, 0
    %v245 = vsel %vm144, %v102, 0
    %v248 = vsel %vm144, %v103, 0
    %v251 = vsel %vm144, %v104, 0
    %v254 = vsel %vm144, %v105, 0
    %v257 = vsel %vm144, %v106, 0
    %v260 = vsel %vm144, %v107, 0
    %v263 = vsel %vm144, %v108, 0
    %v266 = vsel %vm144, %v109, 0
    %v269 = vsel %vm144, %v110, 0
    %v272 = vsel %vm144, %v111, 0
    %v275 = vsel %vm144, %v112, 0
    %v278 = vsel %vm144, %v113, 0
    %v281 = vsel %vm144, %v114, 0
    %v284 = vsel %vm144, %v115, 0
    %v287 = vsel %vm144, %v116, 0
    %v290 = vsel %vm144, %v117, 0
    %v293 = vsel %vm144, %v118, 0
    %v296 = vsel %vm144, %v119, 0
    %v299 = vsel %vm144, %v120, 0
    %v302 = vsel %vm144, %v121, 0
    %v305 = vsel %vm144, %v122, 0
    %v308 = vsel %vm144, %v123, 0
    %v311 = vsel %vm144, %v124, 0
    %v314 = vsel %vm144, %v125, 0
    %v317 = vsel %vm144, %v126, 0
    %v320 = vsel %vm144, %v127, 0
    %v323 = vsel %vm144, %v128, 0
    %v326 = vsel %vm144, %v129, 0
    %v329 = vsel %vm144, %v130, 0
    %v332 = vsel %vm144, %v131, 0
    %v335 = vsel %vm144, %v132, 0
    %337 = vmatprep.subr.mxu0 0.0
    %338 = vmatpush1.msra.mxu0 %v133
    %339 = vmatprep.subr.mxu0 0.0
    %340 = vmatpush1.msra.mxu0 %v134
    %341 = vmatprep.subr.mxu0 0.0
    %342 = vmatpush1.msra.mxu0 %v135
    %343 = vmatprep.subr.mxu0 0.0
    %344 = vmatpush1.msra.mxu0 %v136
    %345 = vmatprep.subr.mxu0 0.0
    %346 = vmatpush1.msra.mxu0 0.0
    %347 = vmatprep.subr.mxu0 0.0
    %348 = vmatpush1.msra.mxu0 0.0
    %349 = vmatprep.subr.mxu0 0.0
    %350 = vmatpush1.msra.mxu0 0.0
    %351 = vmatprep.subr.mxu0 0.0
    %352 = vmatpush1.msra.mxu0 0.0
    %353 = vmatprep.subr.mxu0 0.0
    %354 = vmatpush1.msra.mxu0 0.0
    %355 = vmatprep.subr.mxu0 0.0
    %356 = vmatpush1.msra.mxu0 0.0
    %357 = vmatprep.subr.mxu0 0.0
    %358 = vmatpush1.msra.mxu0 0.0
    %359 = vmatprep.subr.mxu0 0.0
    %360 = vmatpush1.msra.mxu0 0.0
    %361 = vmatprep.subr.mxu0 0.0
    %362 = vmatpush1.msra.mxu0 0.0
    %363 = vmatprep.subr.mxu0 0.0
    %364 = vmatpush1.msra.mxu0 0.0
    %365 = vmatprep.subr.mxu0 0.0
    %366 = vmatpush1.msra.mxu0 0.0
    %367 = vmatprep.subr.mxu0 0.0
    %368 = vmatpush1.msra.mxu0 0.0
    %369 = vmatprep.subr.mxu0 0.0
    %370 = vmatpush1.msra.mxu0 0.0
    %371 = vmatprep.subr.mxu0 0.0
    %372 = vmatpush1.msra.mxu0 0.0
    %373 = vmatprep.subr.mxu0 0.0
    %374 = vmatpush1.msra.mxu0 0.0
    %375 = vmatprep.subr.mxu0 0.0
    %376 = vmatpush1.msra.mxu0 0.0
    %377 = vmatprep.subr.mxu0 0.0
    %378 = vmatpush1.msra.mxu0 0.0
    %379 = vmatprep.subr.mxu0 0.0
    %380 = vmatpush1.msra.mxu0 0.0
    %381 = vmatprep.subr.mxu0 0.0
    %382 = vmatpush1.msra.mxu0 0.0
    %383 = vmatprep.subr.mxu0 0.0
    %384 = vmatpush1.msra.mxu0 0.0
    %385 = vmatprep.subr.mxu0 0.0
    %386 = vmatpush1.msra.mxu0 0.0
    %387 = vmatprep.subr.mxu0 0.0
    %388 = vmatpush1.msra.mxu0 0.0
    %389 = vmatprep.subr.mxu0 0.0
    %390 = vmatpush1.msra.mxu0 0.0
    %391 = vmatprep.subr.mxu0 0.0
    %392 = vmatpush1.msra.mxu0 0.0
    %393 = vmatprep.subr.mxu0 0.0
    %394 = vmatpush1.msra.mxu0 0.0
    %395 = vmatprep.subr.mxu0 0.0
    %396 = vmatpush1.msra.mxu0 0.0
    %397 = vmatprep.subr.mxu0 0.0
    %398 = vmatpush1.msra.mxu0 0.0
    %399 = vmatprep.subr.mxu0 0.0
    %400 = vmatpush1.msra.mxu0 0.0
    %401 = vmatprep.mubr.f32.mxu0 0.0
    %402 = vmatmul.mubr.f32.gmra.mrb[0].mxu0 %v146
    %v403 = vpop.f32.mrb[0].mxu0
    %v404 = vadd.f32 %v142, %v403
    %v405 = vpop.f32.mrb[0].mxu0
    %406 = vmatprep.mubr.f32.mxu0 0.0
    %407 = vmatmul.mubr.f32.gmra.mrb[0].mxu0 %v149
    %v408 = vpop.f32.mrb[0].mxu0
    %v409 = vadd.f32 %v142, %v408
    %v410 = vpop.f32.mrb[0].mxu0
    %411 = vmatprep.mubr.f32.mxu0 0.0
    %412 = vmatmul.mubr.f32.gmra.mrb[0].mxu0 %v152
    %v413 = vpop.f32.mrb[0].mxu0
    %v414 = vadd.f32 %v142, %v413
    %v415 = vpop.f32.mrb[0].mxu0
    %416 = vmatprep.mubr.f32.mxu0 0.0
    %417 = vmatmul.mubr.f32.gmra.mrb[0].mxu0 %v155
    %v418 = vpop.f32.mrb[0].mxu0
    %v419 = vadd.f32 %v142, %v418
    %v420 = vpop.f32.mrb[0].mxu0
    %421 = vmatprep.mubr.f32.mxu0 0.0
    %422 = vmatmul.mubr.f32.gmra.mrb[0].mxu0 %v158
    %v423 = vpop.f32.mrb[0].mxu0
    %v424 = vadd.f32 %v142, %v423
    %v425 = vpop.f32.mrb[0].mxu0
    %426 = vmatprep.mubr.f32.mxu0 0.0
    %427 = vmatmul.mubr.f32.gmra.mrb[0].mxu0 %v161
    %v428 = vpop.f32.mrb[0].mxu0
    %v429 = vadd.f32 %v142, %v428
    %v430 = vpop.f32.mrb[0].mxu0
    %431 = vmatprep.mubr.f32.mxu0 0.0
    %432 = vmatmul.mubr.f32.gmra.mrb[0].mxu0 %v164
    %v433 = vpop.f32.mrb[0].mxu0
    %v434 = vadd.f32 %v142, %v433
    %v435 = vpop.f32.mrb[0].mxu0
    %436 = vmatprep.mubr.f32.mxu0 0.0
    %437 = vmatmul.mubr.f32.gmra.mrb[0].mxu0 %v167
    %v438 = vpop.f32.mrb[0].mxu0
    %v439 = vadd.f32 %v142, %v438
    %v440 = vpop.f32.mrb[0].mxu0
    %441 = vmatprep.mubr.f32.mxu0 0.0
    %442 = vmatmul.mubr.f32.gmra.mrb[0].mxu0 %v170
    %v443 = vpop.f32.mrb[0].mxu0
    %v444 = vadd.f32 %v142, %v443
    %v445 = vpop.f32.mrb[0].mxu0
    %446 = vmatprep.mubr.f32.mxu0 0.0
    %447 = vmatmul.mubr.f32.gmra.mrb[0].mxu0 %v173
    %v448 = vpop.f32.mrb[0].mxu0
    %v449 = vadd.f32 %v142, %v448
    %v450 = vpop.f32.mrb[0].mxu0
    %451 = vmatprep.mubr.f32.mxu0 0.0
    %452 = vmatmul.mubr.f32.gmra.mrb[0].mxu0 %v176
    %v453 = vpop.f32.mrb[0].mxu0
    %v454 = vadd.f32 %v142, %v453
    %v455 = vpop.f32.mrb[0].mxu0
    %456 = vmatprep.mubr.f32.mxu0 0.0
    %457 = vmatmul.mubr.f32.gmra.mrb[0].mxu0 %v179
    %v458 = vpop.f32.mrb[0].mxu0
    %v459 = vadd.f32 %v142, %v458
    %v460 = vpop.f32.mrb[0].mxu0
    %461 = vmatprep.mubr.f32.mxu0 0.0
    %462 = vmatmul.mubr.f32.gmra.mrb[0].mxu0 %v182
    %v463 = vpop.f32.mrb[0].mxu0
    %v464 = vadd.f32 %v142, %v463
    %v465 = vpop.f32.mrb[0].mxu0
    %466 = vmatprep.mubr.f32.mxu0 0.0
    %467 = vmatmul.mubr.f32.gmra.mrb[0].mxu0 %v185
    %v468 = vpop.f32.mrb[0].mxu0
    %v469 = vadd.f32 %v142, %v468
    %v470 = vpop.f32.mrb[0].mxu0
    %471 = vmatprep.mubr.f32.mxu0 0.0
    %472 = vmatmul.mubr.f32.gmra.mrb[0].mxu0 %v188
    %v473 = vpop.f32.mrb[0].mxu0
    %v474 = vadd.f32 %v142, %v473
    %v475 = vpop.f32.mrb[0].mxu0
    %476 = vmatprep.mubr.f32.mxu0 0.0
    %477 = vmatmul.mubr.f32.gmra.mrb[0].mxu0 %v191
    %v478 = vpop.f32.mrb[0].mxu0
    %v479 = vadd.f32 %v142, %v478
    %v480 = vpop.f32.mrb[0].mxu0
    %481 = vmatprep.mubr.f32.mxu0 0.0
    %482 = vmatmul.mubr.f32.gmra.mrb[0].mxu0 %v194
    %v483 = vpop.f32.mrb[0].mxu0
    %v484 = vadd.f32 %v142, %v483
    %v485 = vpop.f32.mrb[0].mxu0
    %486 = vmatprep.mubr.f32.mxu0 0.0
    %487 = vmatmul.mubr.f32.gmra.mrb[0].mxu0 %v197
    %v488 = vpop.f32.mrb[0].mxu0
    %v489 = vadd.f32 %v142, %v488
    %v490 = vpop.f32.mrb[0].mxu0
    %491 = vmatprep.mubr.f32.mxu0 0.0
    %492 = vmatmul.mubr.f32.gmra.mrb[0].mxu0 %v200
    %v493 = vpop.f32.mrb[0].mxu0
    %v494 = vadd.f32 %v142, %v493
    %v495 = vpop.f32.mrb[0].mxu0
    %496 = vmatprep.mubr.f32.mxu0 0.0
    %497 = vmatmul.mubr.f32.gmra.mrb[0].mxu0 %v203
    %v498 = vpop.f32.mrb[0].mxu0
    %v499 = vadd.f32 %v142, %v498
    %v500 = vpop.f32.mrb[0].mxu0
    %501 = vmatprep.mubr.f32.mxu0 0.0
    %502 = vmatmul.mubr.f32.gmra.mrb[0].mxu0 %v206
    %v503 = vpop.f32.mrb[0].mxu0
    %v504 = vadd.f32 %v142, %v503
    %v505 = vpop.f32.mrb[0].mxu0
    %506 = vmatprep.mubr.f32.mxu0 0.0
    %507 = vmatmul.mubr.f32.gmra.mrb[0].mxu0 %v209
    %v508 = vpop.f32.mrb[0].mxu0
    %v509 = vadd.f32 %v142, %v508
    %v510 = vpop.f32.mrb[0].mxu0
    %511 = vmatprep.mubr.f32.mxu0 0.0
    %512 = vmatmul.mubr.f32.gmra.mrb[0].mxu0 %v212
    %v513 = vpop.f32.mrb[0].mxu0
    %v514 = vadd.f32 %v142, %v513
    %v515 = vpop.f32.mrb[0].mxu0
    %516 = vmatprep.mubr.f32.mxu0 0.0
    %517 = vmatmul.mubr.f32.gmra.mrb[0].mxu0 %v215
    %v518 = vpop.f32.mrb[0].mxu0
    %v519 = vadd.f32 %v142, %v518
    %v520 = vpop.f32.mrb[0].mxu0
    %521 = vmatprep.mubr.f32.mxu0 0.0
    %522 = vmatmul.mubr.f32.gmra.mrb[0].mxu0 %v218
    %v523 = vpop.f32.mrb[0].mxu0
    %v524 = vadd.f32 %v142, %v523
    %v525 = vpop.f32.mrb[0].mxu0
    %526 = vmatprep.mubr.f32.mxu0 0.0
    %527 = vmatmul.mubr.f32.gmra.mrb[0].mxu0 %v221
    %v528 = vpop.f32.mrb[0].mxu0
    %v529 = vadd.f32 %v142, %v528
    %v530 = vpop.f32.mrb[0].mxu0
    %531 = vmatprep.mubr.f32.mxu0 0.0
    %532 = vmatmul.mubr.f32.gmra.mrb[0].mxu0 %v224
    %v533 = vpop.f32.mrb[0].mxu0
    %v534 = vadd.f32 %v142, %v533
    %v535 = vpop.f32.mrb[0].mxu0
    %536 = vmatprep.mubr.f32.mxu0 0.0
    %537 = vmatmul.mubr.f32.gmra.mrb[0].mxu0 %v227
    %v538 = vpop.f32.mrb[0].mxu0
    %v539 = vadd.f32 %v142, %v538
    %v540 = vpop.f32.mrb[0].mxu0
    %541 = vmatprep.mubr.f32.mxu0 0.0
    %542 = vmatmul.mubr.f32.gmra.mrb[0].mxu0 %v230
    %v543 = vpop.f32.mrb[0].mxu0
    %v544 = vadd.f32 %v142, %v543
    %v545 = vpop.f32.mrb[0].mxu0
    %546 = vmatprep.mubr.f32.mxu0 0.0
    %547 = vmatmul.mubr.f32.gmra.mrb[0].mxu0 %v233
    %v548 = vpop.f32.mrb[0].mxu0
    %v549 = vadd.f32 %v142, %v548
    %v550 = vpop.f32.mrb[0].mxu0
    %551 = vmatprep.mubr.f32.mxu0 0.0
    %552 = vmatmul.mubr.f32.gmra.mrb[0].mxu0 %v236
    %v553 = vpop.f32.mrb[0].mxu0
    %v554 = vadd.f32 %v142, %v553
    %v555 = vpop.f32.mrb[0].mxu0
    %556 = vmatprep.mubr.f32.mxu0 0.0
    %557 = vmatmul.mubr.f32.gmra.mrb[0].mxu0 %v239
    %v558 = vpop.f32.mrb[0].mxu0
    %v559 = vadd.f32 %v142, %v558
    %v560 = vpop.f32.mrb[0].mxu0
    %561 = vmatprep.mubr.f32.mxu0 0.0
    %562 = vmatmul.mubr.f32.gmra.mrb[0].mxu0 %v242
    %v563 = vpop.f32.mrb[0].mxu0
    %v564 = vadd.f32 %v142, %v563
    %v565 = vpop.f32.mrb[0].mxu0
    %566 = vmatprep.mubr.f32.mxu0 0.0
    %567 = vmatmul.mubr.f32.gmra.mrb[0].mxu0 %v245
    %v568 = vpop.f32.mrb[0].mxu0
    %v569 = vadd.f32 %v142, %v568
    %v570 = vpop.f32.mrb[0].mxu0
    %571 = vmatprep.mubr.f32.mxu0 0.0
    %572 = vmatmul.mubr.f32.gmra.mrb[0].mxu0 %v248
    %v573 = vpop.f32.mrb[0].mxu0
    %v574 = vadd.f32 %v142, %v573
    %v575 = vpop.f32.mrb[0].mxu0
    %576 = vmatprep.mubr.f32.mxu0 0.0
    %577 = vmatmul.mubr.f32.gmra.mrb[0].mxu0 %v251
    %v578 = vpop.f32.mrb[0].mxu0
    %v579 = vadd.f32 %v142, %v578
    %v580 = vpop.f32.mrb[0].mxu0
    %581 = vmatprep.mubr.f32.mxu0 0.0
    %582 = vmatmul.mubr.f32.gmra.mrb[0].mxu0 %v254
    %v583 = vpop.f32.mrb[0].mxu0
    %v584 = vadd.f32 %v142, %v583
    %v585 = vpop.f32.mrb[0].mxu0
    %586 = vmatprep.mubr.f32.mxu0 0.0
    %587 = vmatmul.mubr.f32.gmra.mrb[0].mxu0 %v257
    %v588 = vpop.f32.mrb[0].mxu0
    %v589 = vadd.f32 %v142, %v588
    %v590 = vpop.f32.mrb[0].mxu0
    %591 = vmatprep.mubr.f32.mxu0 0.0
    %592 = vmatmul.mubr.f32.gmra.mrb[0].mxu0 %v260
    %v593 = vpop.f32.mrb[0].mxu0
    %v594 = vadd.f32 %v142, %v593
    %v595 = vpop.f32.mrb[0].mxu0
    %596 = vmatprep.mubr.f32.mxu0 0.0
    %597 = vmatmul.mubr.f32.gmra.mrb[0].mxu0 %v263
    %v598 = vpop.f32.mrb[0].mxu0
    %v599 = vadd.f32 %v142, %v598
    %v600 = vpop.f32.mrb[0].mxu0
    %601 = vmatprep.mubr.f32.mxu0 0.0
    %602 = vmatmul.mubr.f32.gmra.mrb[0].mxu0 %v266
    %v603 = vpop.f32.mrb[0].mxu0
    %v604 = vadd.f32 %v142, %v603
    %v605 = vpop.f32.mrb[0].mxu0
    %606 = vmatprep.mubr.f32.mxu0 0.0
    %607 = vmatmul.mubr.f32.gmra.mrb[0].mxu0 %v269
    %v608 = vpop.f32.mrb[0].mxu0
    %v609 = vadd.f32 %v142, %v608
    %v610 = vpop.f32.mrb[0].mxu0
    %611 = vmatprep.mubr.f32.mxu0 0.0
    %612 = vmatmul.mubr.f32.gmra.mrb[0].mxu0 %v272
    %v613 = vpop.f32.mrb[0].mxu0
    %v614 = vadd.f32 %v142, %v613
    %v615 = vpop.f32.mrb[0].mxu0
    %616 = vmatprep.mubr.f32.mxu0 0.0
    %617 = vmatmul.mubr.f32.gmra.mrb[0].mxu0 %v275
    %v618 = vpop.f32.mrb[0].mxu0
    %v619 = vadd.f32 %v142, %v618
    %v620 = vpop.f32.mrb[0].mxu0
    %621 = vmatprep.mubr.f32.mxu0 0.0
    %622 = vmatmul.mubr.f32.gmra.mrb[0].mxu0 %v278
    %v623 = vpop.f32.mrb[0].mxu0
    %v624 = vadd.f32 %v142, %v623
    %v625 = vpop.f32.mrb[0].mxu0
    %626 = vmatprep.mubr.f32.mxu0 0.0
    %627 = vmatmul.mubr.f32.gmra.mrb[0].mxu0 %v281
    %v628 = vpop.f32.mrb[0].mxu0
    %v629 = vadd.f32 %v142, %v628
    %v630 = vpop.f32.mrb[0].mxu0
    %631 = vmatprep.mubr.f32.mxu0 0.0
    %632 = vmatmul.mubr.f32.gmra.mrb[0].mxu0 %v284
    %v633 = vpop.f32.mrb[0].mxu0
    %v634 = vadd.f32 %v142, %v633
    %v635 = vpop.f32.mrb[0].mxu0
    %636 = vmatprep.mubr.f32.mxu0 0.0
    %637 = vmatmul.mubr.f32.gmra.mrb[0].mxu0 %v287
    %v638 = vpop.f32.mrb[0].mxu0
    %v639 = vadd.f32 %v142, %v638
    %v640 = vpop.f32.mrb[0].mxu0
    %641 = vmatprep.mubr.f32.mxu0 0.0
    %642 = vmatmul.mubr.f32.gmra.mrb[0].mxu0 %v290
    %v643 = vpop.f32.mrb[0].mxu0
    %v644 = vadd.f32 %v142, %v643
    %v645 = vpop.f32.mrb[0].mxu0
    %646 = vmatprep.mubr.f32.mxu0 0.0
    %647 = vmatmul.mubr.f32.gmra.mrb[0].mxu0 %v293
    %v648 = vpop.f32.mrb[0].mxu0
    %v649 = vadd.f32 %v142, %v648
    %v650 = vpop.f32.mrb[0].mxu0
    %651 = vmatprep.mubr.f32.mxu0 0.0
    %652 = vmatmul.mubr.f32.gmra.mrb[0].mxu0 %v296
    %v653 = vpop.f32.mrb[0].mxu0
    %v654 = vadd.f32 %v142, %v653
    %v655 = vpop.f32.mrb[0].mxu0
    %656 = vmatprep.mubr.f32.mxu0 0.0
    %657 = vmatmul.mubr.f32.gmra.mrb[0].mxu0 %v299
    %v658 = vpop.f32.mrb[0].mxu0
    %v659 = vadd.f32 %v142, %v658
    %v660 = vpop.f32.mrb[0].mxu0
    %661 = vmatprep.mubr.f32.mxu0 0.0
    %662 = vmatmul.mubr.f32.gmra.mrb[0].mxu0 %v302
    %v663 = vpop.f32.mrb[0].mxu0
    %v664 = vadd.f32 %v142, %v663
    %v665 = vpop.f32.mrb[0].mxu0
    %666 = vmatprep.mubr.f32.mxu0 0.0
    %667 = vmatmul.mubr.f32.gmra.mrb[0].mxu0 %v305
    %v668 = vpop.f32.mrb[0].mxu0
    %v669 = vadd.f32 %v142, %v668
    %v670 = vpop.f32.mrb[0].mxu0
    %671 = vmatprep.mubr.f32.mxu0 0.0
    %672 = vmatmul.mubr.f32.gmra.mrb[0].mxu0 %v308
    %v673 = vpop.f32.mrb[0].mxu0
    %v674 = vadd.f32 %v142, %v673
    %v675 = vpop.f32.mrb[0].mxu0
    %676 = vmatprep.mubr.f32.mxu0 0.0
    %677 = vmatmul.mubr.f32.gmra.mrb[0].mxu0 %v311
    %v678 = vpop.f32.mrb[0].mxu0
    %v679 = vadd.f32 %v142, %v678
    %v680 = vpop.f32.mrb[0].mxu0
    %681 = vmatprep.mubr.f32.mxu0 0.0
    %682 = vmatmul.mubr.f32.gmra.mrb[0].mxu0 %v314
    %v683 = vpop.f32.mrb[0].mxu0
    %v684 = vadd.f32 %v142, %v683
    %v685 = vpop.f32.mrb[0].mxu0
    %686 = vmatprep.mubr.f32.mxu0 0.0
    %687 = vmatmul.mubr.f32.gmra.mrb[0].mxu0 %v317
    %v688 = vpop.f32.mrb[0].mxu0
    %v689 = vadd.f32 %v142, %v688
    %v690 = vpop.f32.mrb[0].mxu0
    %691 = vmatprep.mubr.f32.mxu0 0.0
    %692 = vmatmul.mubr.f32.gmra.mrb[0].mxu0 %v320
    %v693 = vpop.f32.mrb[0].mxu0
    %v694 = vadd.f32 %v142, %v693
    %v695 = vpop.f32.mrb[0].mxu0
    %696 = vmatprep.mubr.f32.mxu0 0.0
    %697 = vmatmul.mubr.f32.gmra.mrb[0].mxu0 %v323
    %v698 = vpop.f32.mrb[0].mxu0
    %v699 = vadd.f32 %v142, %v698
    %v700 = vpop.f32.mrb[0].mxu0
    %701 = vmatprep.mubr.f32.mxu0 0.0
    %702 = vmatmul.mubr.f32.gmra.mrb[0].mxu0 %v326
    %v703 = vpop.f32.mrb[0].mxu0
    %v704 = vadd.f32 %v142, %v703
    %v705 = vpop.f32.mrb[0].mxu0
    %706 = vmatprep.mubr.f32.mxu0 0.0
    %707 = vmatmul.mubr.f32.gmra.mrb[0].mxu0 %v329
    %v708 = vpop.f32.mrb[0].mxu0
    %v709 = vadd.f32 %v142, %v708
    %v710 = vpop.f32.mrb[0].mxu0
    %711 = vmatprep.mubr.f32.mxu0 0.0
    %712 = vmatmul.mubr.f32.gmra.mrb[0].mxu0 %v332
    %v713 = vpop.f32.mrb[0].mxu0
    %v714 = vadd.f32 %v142, %v713
    %v715 = vpop.f32.mrb[0].mxu0
    %716 = vmatprep.mubr.f32.mxu0 0.0
    %717 = vmatmul.mubr.f32.gmra.mrb[0].mxu0 %v335
    %v718 = vpop.f32.mrb[0].mxu0
    %v719 = vadd.f32 %v142, %v718
    %v720 = vpop.f32.mrb[0].mxu0
    %721 = vdwg.mxu0
    %v722 = vadd.f32 %v404, %v409
    %v723 = vadd.f32 %v722, %v414
    %v724 = vadd.f32 %v723, %v419
    %v725 = vadd.f32 %v724, %v424
    %v726 = vadd.f32 %v725, %v429
    %v727 = vadd.f32 %v726, %v434
    %v728 = vadd.f32 %v727, %v439
    %v729 = vadd.f32 %v728, %v444
    %v730 = vadd.f32 %v729, %v449
    %v731 = vadd.f32 %v730, %v454
    %v732 = vadd.f32 %v731, %v459
    %v733 = vadd.f32 %v732, %v464
    %v734 = vadd.f32 %v733, %v469
    %v735 = vadd.f32 %v734, %v474
    %v736 = vadd.f32 %v735, %v479
    %v737 = vadd.f32 %v736, %v484
    %v738 = vadd.f32 %v737, %v489
    %v739 = vadd.f32 %v738, %v494
    %v740 = vadd.f32 %v739, %v499
    %v741 = vadd.f32 %v740, %v504
    %v742 = vadd.f32 %v741, %v509
    %v743 = vadd.f32 %v742, %v514
    %v744 = vadd.f32 %v743, %v519
    %v745 = vadd.f32 %v744, %v524
    %v746 = vadd.f32 %v745, %v529
    %v747 = vadd.f32 %v746, %v534
    %v748 = vadd.f32 %v747, %v539
    %v749 = vadd.f32 %v748, %v544
    %v750 = vadd.f32 %v749, %v549
    %v751 = vadd.f32 %v750, %v554
    %v752 = vadd.f32 %v751, %v559
    %v753 = vadd.f32 %v752, %v564
    %v754 = vadd.f32 %v753, %v569
    %v755 = vadd.f32 %v754, %v574
    %v756 = vadd.f32 %v755, %v579
    %v757 = vadd.f32 %v756, %v584
    %v758 = vadd.f32 %v757, %v589
    %v759 = vadd.f32 %v758, %v594
    %v760 = vadd.f32 %v759, %v599
    %v761 = vadd.f32 %v760, %v604
    %v762 = vadd.f32 %v761, %v609
    %v763 = vadd.f32 %v762, %v614
    %v764 = vadd.f32 %v763, %v619
    %v765 = vadd.f32 %v764, %v624
    %v766 = vadd.f32 %v765, %v629
    %v767 = vadd.f32 %v766, %v634
    %v768 = vadd.f32 %v767, %v639
    %v769 = vadd.f32 %v768, %v644
    %v770 = vadd.f32 %v769, %v649
    %v771 = vadd.f32 %v770, %v654
    %v772 = vadd.f32 %v771, %v659
    %v773 = vadd.f32 %v772, %v664
    %v774 = vadd.f32 %v773, %v669
    %v775 = vadd.f32 %v774, %v674
    %v776 = vadd.f32 %v775, %v679
    %v777 = vadd.f32 %v776, %v684
    %v778 = vadd.f32 %v777, %v689
    %v779 = vadd.f32 %v778, %v694
    %v780 = vadd.f32 %v779, %v699
    %v781 = vadd.f32 %v780, %v704
    %v782 = vadd.f32 %v781, %v709
    %v783 = vadd.f32 %v782, %v714
    %v784 = vadd.f32 %v783, %v719
    %v785 = vrot.slane %v784, 4
    %v786 = vadd.f32 %v784, %v785
    %v787 = vrot.slane %v786, 2
    %v788 = vadd.f32 %v786, %v787
    %v789 = vrot.slane %v788, 1
    %v790 = vadd.f32 %v788, %v789
    %v791 = vrcp.pop 512.0
    %v792 = vmul.f32 %v790, %v791
    %v793 = vsub.f32 %v404, %v792
    %v794 = vsub.f32 %v409, %v792
    %v795 = vsub.f32 %v414, %v792
    %v796 = vsub.f32 %v419, %v792
    %v797 = vsub.f32 %v424, %v792
    %v798 = vsub.f32 %v429, %v792
    %v799 = vsub.f32 %v434, %v792
    %v800 = vsub.f32 %v439, %v792
    %v801 = vsub.f32 %v444, %v792
    %v802 = vsub.f32 %v449, %v792
    %v803 = vsub.f32 %v454, %v792
    %v804 = vsub.f32 %v459, %v792
    %v805 = vsub.f32 %v464, %v792
    %v806 = vsub.f32 %v469, %v792
    %v807 = vsub.f32 %v474, %v792
    %v808 = vsub.f32 %v479, %v792
    %v809 = vsub.f32 %v484, %v792
    %v810 = vsub.f32 %v489, %v792
    %v811 = vsub.f32 %v494, %v792
    %v812 = vsub.f32 %v499, %v792
    %v813 = vsub.f32 %v504, %v792
    %v814 = vsub.f32 %v509, %v792
    %v815 = vsub.f32 %v514, %v792
    %v816 = vsub.f32 %v519, %v792
    %v817 = vsub.f32 %v524, %v792
    %v818 = vsub.f32 %v529, %v792
    %v819 = vsub.f32 %v534, %v792
    %v820 = vsub.f32 %v539, %v792
    %v821 = vsub.f32 %v544, %v792
    %v822 = vsub.f32 %v549, %v792
    %v823 = vsub.f32 %v554, %v792
    %v824 = vsub.f32 %v559, %v792
    %v825 = vsub.f32 %v564, %v792
    %v826 = vsub.f32 %v569, %v792
    %v827 = vsub.f32 %v574, %v792
    %v828 = vsub.f32 %v579, %v792
    %v829 = vsub.f32 %v584, %v792
    %v830 = vsub.f32 %v589, %v792
    %v831 = vsub.f32 %v594, %v792
    %v832 = vsub.f32 %v599, %v792
    %v833 = vsub.f32 %v604, %v792
    %v834 = vsub.f32 %v609, %v792
    %v835 = vsub.f32 %v614, %v792
    %v836 = vsub.f32 %v619, %v792
    %v837 = vsub.f32 %v624, %v792
    %v838 = vsub.f32 %v629, %v792
    %v839 = vsub.f32 %v634, %v792
    %v840 = vsub.f32 %v639, %v792
    %v841 = vsub.f32 %v644, %v792
    %v842 = vsub.f32 %v649, %v792
    %v843 = vsub.f32 %v654, %v792
    %v844 = vsub.f32 %v659, %v792
    %v845 = vsub.f32 %v664, %v792
    %v846 = vsub.f32 %v669, %v792
    %v847 = vsub.f32 %v674, %v792
    %v848 = vsub.f32 %v679, %v792
    %v849 = vsub.f32 %v684, %v792
    %v850 = vsub.f32 %v689, %v792
    %v851 = vsub.f32 %v694, %v792
    %v852 = vsub.f32 %v699, %v792
    %v853 = vsub.f32 %v704, %v792
    %v854 = vsub.f32 %v709, %v792
    %v855 = vsub.f32 %v714, %v792
    %v856 = vsub.f32 %v719, %v792
    %v857 = vmul.f32 %v793, %v793
    %v858 = vmul.f32 %v794, %v794
    %v859 = vmul.f32 %v795, %v795
    %v860 = vmul.f32 %v796, %v796
    %v861 = vmul.f32 %v797, %v797
    %v862 = vmul.f32 %v798, %v798
    %v863 = vmul.f32 %v799, %v799
    %v864 = vmul.f32 %v800, %v800
    %v865 = vmul.f32 %v801, %v801
    %v866 = vmul.f32 %v802, %v802
    %v867 = vmul.f32 %v803, %v803
    %v868 = vmul.f32 %v804, %v804
    %v869 = vmul.f32 %v805, %v805
    %v870 = vmul.f32 %v806, %v806
    %v871 = vmul.f32 %v807, %v807
    %v872 = vmul.f32 %v808, %v808
    %v873 = vmul.f32 %v809, %v809
    %v874 = vmul.f32 %v810, %v810
    %v875 = vmul.f32 %v811, %v811
    %v876 = vmul.f32 %v812, %v812
    %v877 = vmul.f32 %v813, %v813
    %v878 = vmul.f32 %v814, %v814
    %v879 = vmul.f32 %v815, %v815
    %v880 = vmul.f32 %v816, %v816
    %v881 = vmul.f32 %v817, %v817
    %v882 = vmul.f32 %v818, %v818
    %v883 = vmul.f32 %v819, %v819
    %v884 = vmul.f32 %v820, %v820
    %v885 = vmul.f32 %v821, %v821
    %v886 = vmul.f32 %v822, %v822
    %v887 = vmul.f32 %v823, %v823
    %v888 = vmul.f32 %v824, %v824
    %v889 = vmul.f32 %v825, %v825
    %v890 = vmul.f32 %v826, %v826
    %v891 = vmul.f32 %v827, %v827
    %v892 = vmul.f32 %v828, %v828
    %v893 = vmul.f32 %v829, %v829
    %v894 = vmul.f32 %v830, %v830
    %v895 = vmul.f32 %v831, %v831
    %v896 = vmul.f32 %v832, %v832
    %v897 = vmul.f32 %v833, %v833
    %v898 = vmul.f32 %v834, %v834
    %v899 = vmul.f32 %v835, %v835
    %v900 = vmul.f32 %v836, %v836
    %v901 = vmul.f32 %v837, %v837
    %v902 = vmul.f32 %v838, %v838
    %v903 = vmul.f32 %v839, %v839
    %v904 = vmul.f32 %v840, %v840
    %v905 = vmul.f32 %v841, %v841
    %v906 = vmul.f32 %v842, %v842
    %v907 = vmul.f32 %v843, %v843
    %v908 = vmul.f32 %v844, %v844
    %v909 = vmul.f32 %v845, %v845
    %v910 = vmul.f32 %v846, %v846
    %v911 = vmul.f32 %v847, %v847
    %v912 = vmul.f32 %v848, %v848
    %v913 = vmul.f32 %v849, %v849
    %v914 = vmul.f32 %v850, %v850
    %v915 = vmul.f32 %v851, %v851
    %v916 = vmul.f32 %v852, %v852
    %v917 = vmul.f32 %v853, %v853
    %v918 = vmul.f32 %v854, %v854
    %v919 = vmul.f32 %v855, %v855
    %v920 = vmul.f32 %v856, %v856
    %v921 = vadd.f32 %v857, %v858
    %v922 = vadd.f32 %v921, %v859
    %v923 = vadd.f32 %v922, %v860
    %v924 = vadd.f32 %v923, %v861
    %v925 = vadd.f32 %v924, %v862
    %v926 = vadd.f32 %v925, %v863
    %v927 = vadd.f32 %v926, %v864
    %v928 = vadd.f32 %v927, %v865
    %v929 = vadd.f32 %v928, %v866
    %v930 = vadd.f32 %v929, %v867
    %v931 = vadd.f32 %v930, %v868
    %v932 = vadd.f32 %v931, %v869
    %v933 = vadd.f32 %v932, %v870
    %v934 = vadd.f32 %v933, %v871
    %v935 = vadd.f32 %v934, %v872
    %v936 = vadd.f32 %v935, %v873
    %v937 = vadd.f32 %v936, %v874
    %v938 = vadd.f32 %v937, %v875
    %v939 = vadd.f32 %v938, %v876
    %v940 = vadd.f32 %v939, %v877
    %v941 = vadd.f32 %v940, %v878
    %v942 = vadd.f32 %v941, %v879
    %v943 = vadd.f32 %v942, %v880
    %v944 = vadd.f32 %v943, %v881
    %v945 = vadd.f32 %v944, %v882
    %v946 = vadd.f32 %v945, %v883
    %v947 = vadd.f32 %v946, %v884
    %v948 = vadd.f32 %v947, %v885
    %v949 = vadd.f32 %v948, %v886
    %v950 = vadd.f32 %v949, %v887
    %v951 = vadd.f32 %v950, %v888
    %v952 = vadd.f32 %v951, %v889
    %v953 = vadd.f32 %v952, %v890
    %v954 = vadd.f32 %v953, %v891
    %v955 = vadd.f32 %v954, %v892
    %v956 = vadd.f32 %v955, %v893
    %v957 = vadd.f32 %v956, %v894
    %v958 = vadd.f32 %v957, %v895
    %v959 = vadd.f32 %v958, %v896
    %v960 = vadd.f32 %v959, %v897
    %v961 = vadd.f32 %v960, %v898
    %v962 = vadd.f32 %v961, %v899
    %v963 = vadd.f32 %v962, %v900
    %v964 = vadd.f32 %v963, %v901
    %v965 = vadd.f32 %v964, %v902
    %v966 = vadd.f32 %v965, %v903
    %v967 = vadd.f32 %v966, %v904
    %v968 = vadd.f32 %v967, %v905
    %v969 = vadd.f32 %v968, %v906
    %v970 = vadd.f32 %v969, %v907
    %v971 = vadd.f32 %v970, %v908
    %v972 = vadd.f32 %v971, %v909
    %v973 = vadd.f32 %v972, %v910
    %v974 = vadd.f32 %v973, %v911
    %v975 = vadd.f32 %v974, %v912
    %v976 = vadd.f32 %v975, %v913
    %v977 = vadd.f32 %v976, %v914
    %v978 = vadd.f32 %v977, %v915
    %v979 = vadd.f32 %v978, %v916
    %v980 = vadd.f32 %v979, %v917
    %v981 = vadd.f32 %v980, %v918
    %v982 = vadd.f32 %v981, %v919
    %v983 = vadd.f32 %v982, %v920
    %v984 = vrot.slane %v983, 4
    %v985 = vadd.f32 %v983, %v984
    %v986 = vrot.slane %v985, 2
    %v987 = vadd.f32 %v985, %v986
    %v988 = vrot.slane %v987, 1
    %v989 = vadd.f32 %v987, %v988
    %v990 = vmul.f32 %v989, %v791
    %v991 = vadd.f32 %v990, 1e-05
    %v992 = vrsqrt.pop %v991
    %v993 = vmul.f32 %v793, %v992
    %v994 = vmul.f32 %v794, %v992
    %v995 = vmul.f32 %v795, %v992
    %v996 = vmul.f32 %v796, %v992
    %v997 = vmul.f32 %v797, %v992
    %v998 = vmul.f32 %v798, %v992
    %v999 = vmul.f32 %v799, %v992
    %v1000 = vmul.f32 %v800, %v992
    %v1001 = vmul.f32 %v801, %v992
    %v1002 = vmul.f32 %v802, %v992
    %v1003 = vmul.f32 %v803, %v992
    %v1004 = vmul.f32 %v804, %v992
    %v1005 = vmul.f32 %v805, %v992
    %v1006 = vmul.f32 %v806, %v992
    %v1007 = vmul.f32 %v807, %v992
    %v1008 = vmul.f32 %v808, %v992
    %v1009 = vmul.f32 %v809, %v992
    %v1010 = vmul.f32 %v810, %v992
    %v1011 = vmul.f32 %v811, %v992
    %v1012 = vmul.f32 %v812, %v992
    %v1013 = vmul.f32 %v813, %v992
    %v1014 = vmul.f32 %v814, %v992
    %v1015 = vmul.f32 %v815, %v992
    %v1016 = vmul.f32 %v816, %v992
    %v1017 = vmul.f32 %v817, %v992
    %v1018 = vmul.f32 %v818, %v992
    %v1019 = vmul.f32 %v819, %v992
    %v1020 = vmul.f32 %v820, %v992
    %v1021 = vmul.f32 %v821, %v992
    %v1022 = vmul.f32 %v822, %v992
    %v1023 = vmul.f32 %v823, %v992
    %v1024 = vmul.f32 %v824, %v992
    %v1025 = vmul.f32 %v825, %v992
    %v1026 = vmul.f32 %v826, %v992
    %v1027 = vmul.f32 %v827, %v992
    %v1028 = vmul.f32 %v828, %v992
    %v1029 = vmul.f32 %v829, %v992
    %v1030 = vmul.f32 %v830, %v992
    %v1031 = vmul.f32 %v831, %v992
    %v1032 = vmul.f32 %v832, %v992
    %v1033 = vmul.f32 %v833, %v992
    %v1034 = vmul.f32 %v834, %v992
    %v1035 = vmul.f32 %v835, %v992
    %v1036 = vmul.f32 %v836, %v992
    %v1037 = vmul.f32 %v837, %v992
    %v1038 = vmul.f32 %v838, %v992
    %v1039 = vmul.f32 %v839, %v992
    %v1040 = vmul.f32 %v840, %v992
    %v1041 = vmul.f32 %v841, %v992
    %v1042 = vmul.f32 %v842, %v992
    %v1043 = vmul.f32 %v843, %v992
    %v1044 = vmul.f32 %v844, %v992
    %v1045 = vmul.f32 %v845, %v992
    %v1046 = vmul.f32 %v846, %v992
    %v1047 = vmul.f32 %v847, %v992
    %v1048 = vmul.f32 %v848, %v992
    %v1049 = vmul.f32 %v849, %v992
    %v1050 = vmul.f32 %v850, %v992
    %v1051 = vmul.f32 %v851, %v992
    %v1052 = vmul.f32 %v852, %v992
    %v1053 = vmul.f32 %v853, %v992
    %v1054 = vmul.f32 %v854, %v992
    %v1055 = vmul.f32 %v855, %v992
    %v1056 = vmul.f32 %v856, %v992
    %v1057 = vld [vmem:[#allocation6] sm:$0x1]
    %v1059 = vlaneseq
    %v1060 = vshrl.u32 %v1059, 7
    %v1061 = vsub.s32 0, %v1060
    %v1062 = vrot.slane %v1057, %v1061
    %v1064 = vmul.f32 %v993, %v1062
    %v1065 = vmul.f32 %v994, %v1062
    %v1066 = vmul.f32 %v995, %v1062
    %v1067 = vmul.f32 %v996, %v1062
    %v1068 = vmul.f32 %v997, %v1062
    %v1069 = vmul.f32 %v998, %v1062
    %v1070 = vmul.f32 %v999, %v1062
    %v1071 = vmul.f32 %v1000, %v1062
    %v1072 = vmul.f32 %v1001, %v1062
    %v1073 = vmul.f32 %v1002, %v1062
    %v1074 = vmul.f32 %v1003, %v1062
    %v1075 = vmul.f32 %v1004, %v1062
    %v1076 = vmul.f32 %v1005, %v1062
    %v1077 = vmul.f32 %v1006, %v1062
    %v1078 = vmul.f32 %v1007, %v1062
    %v1079 = vmul.f32 %v1008, %v1062
    %v1080 = vmul.f32 %v1009, %v1062
    %v1081 = vmul.f32 %v1010, %v1062
    %v1082 = vmul.f32 %v1011, %v1062
    %v1083 = vmul.f32 %v1012, %v1062
    %v1084 = vmul.f32 %v1013, %v1062
    %v1085 = vmul.f32 %v1014, %v1062
    %v1086 = vmul.f32 %v1015, %v1062
    %v1087 = vmul.f32 %v1016, %v1062
    %v1088 = vmul.f32 %v1017, %v1062
    %v1089 = vmul.f32 %v1018, %v1062
    %v1090 = vmul.f32 %v1019, %v1062
    %v1091 = vmul.f32 %v1020, %v1062
    %v1092 = vmul.f32 %v1021, %v1062
    %v1093 = vmul.f32 %v1022, %v1062
    %v1094 = vmul.f32 %v1023, %v1062
    %v1095 = vmul.f32 %v1024, %v1062
    %v1096 = vmul.f32 %v1025, %v1062
    %v1097 = vmul.f32 %v1026, %v1062
    %v1098 = vmul.f32 %v1027, %v1062
    %v1099 = vmul.f32 %v1028, %v1062
    %v1100 = vmul.f32 %v1029, %v1062
    %v1101 = vmul.f32 %v1030, %v1062
    %v1102 = vmul.f32 %v1031, %v1062
    %v1103 = vmul.f32 %v1032, %v1062
    %v1104 = vmul.f32 %v1033, %v1062
    %v1105 = vmul.f32 %v1034, %v1062
    %v1106 = vmul.f32 %v1035, %v1062
    %v1107 = vmul.f32 %v1036, %v1062
    %v1108 = vmul.f32 %v1037, %v1062
    %v1109 = vmul.f32 %v1038, %v1062
    %v1110 = vmul.f32 %v1039, %v1062
    %v1111 = vmul.f32 %v1040, %v1062
    %v1112 = vmul.f32 %v1041, %v1062
    %v1113 = vmul.f32 %v1042, %v1062
    %v1114 = vmul.f32 %v1043, %v1062
    %v1115 = vmul.f32 %v1044, %v1062
    %v1116 = vmul.f32 %v1045, %v1062
    %v1117 = vmul.f32 %v1046, %v1062
    %v1118 = vmul.f32 %v1047, %v1062
    %v1119 = vmul.f32 %v1048, %v1062
    %v1120 = vmul.f32 %v1049, %v1062
    %v1121 = vmul.f32 %v1050, %v1062
    %v1122 = vmul.f32 %v1051, %v1062
    %v1123 = vmul.f32 %v1052, %v1062
    %v1124 = vmul.f32 %v1053, %v1062
    %v1125 = vmul.f32 %v1054, %v1062
    %v1126 = vmul.f32 %v1055, %v1062
    %v1127 = vmul.f32 %v1056, %v1062
    %v1128 = vld [vmem:[#allocation7] sm:$0x1]
    %v1130 = vlaneseq
    %v1131 = vshrl.u32 %v1130, 7
    %v1132 = vsub.s32 0, %v1131
    %v1133 = vrot.slane %v1128, %v1132
    %v1135 = vadd.f32 %v1064, %v1133
    %v1136 = vadd.f32 %v1065, %v1133
    %v1137 = vadd.f32 %v1066, %v1133
    %v1138 = vadd.f32 %v1067, %v1133
    %v1139 = vadd.f32 %v1068, %v1133
    %v1140 = vadd.f32 %v1069, %v1133
    %v1141 = vadd.f32 %v1070, %v1133
    %v1142 = vadd.f32 %v1071, %v1133
    %v1143 = vadd.f32 %v1072, %v1133
    %v1144 = vadd.f32 %v1073, %v1133
    %v1145 = vadd.f32 %v1074, %v1133
    %v1146 = vadd.f32 %v1075, %v1133
    %v1147 = vadd.f32 %v1076, %v1133
    %v1148 = vadd.f32 %v1077, %v1133
    %v1149 = vadd.f32 %v1078, %v1133
    %v1150 = vadd.f32 %v1079, %v1133
    %v1151 = vadd.f32 %v1080, %v1133
    %v1152 = vadd.f32 %v1081, %v1133
    %v1153 = vadd.f32 %v1082, %v1133
    %v1154 = vadd.f32 %v1083, %v1133
    %v1155 = vadd.f32 %v1084, %v1133
    %v1156 = vadd.f32 %v1085, %v1133
    %v1157 = vadd.f32 %v1086, %v1133
    %v1158 = vadd.f32 %v1087, %v1133
    %v1159 = vadd.f32 %v1088, %v1133
    %v1160 = vadd.f32 %v1089, %v1133
    %v1161 = vadd.f32 %v1090, %v1133
    %v1162 = vadd.f32 %v1091, %v1133
    %v1163 = vadd.f32 %v1092, %v1133
    %v1164 = vadd.f32 %v1093, %v1133
    %v1165 = vadd.f32 %v1094, %v1133
    %v1166 = vadd.f32 %v1095, %v1133
    %v1167 = vadd.f32 %v1096, %v1133
    %v1168 = vadd.f32 %v1097, %v1133
    %v1169 = vadd.f32 %v1098, %v1133
    %v1170 = vadd.f32 %v1099, %v1133
    %v1171 = vadd.f32 %v1100, %v1133
    %v1172 = vadd.f32 %v1101, %v1133
    %v1173 = vadd.f32 %v1102, %v1133
    %v1174 = vadd.f32 %v1103, %v1133
    %v1175 = vadd.f32 %v1104, %v1133
    %v1176 = vadd.f32 %v1105, %v1133
    %v1177 = vadd.f32 %v1106, %v1133
    %v1178 = vadd.f32 %v1107, %v1133
    %v1179 = vadd.f32 %v1108, %v1133
    %v1180 = vadd.f32 %v1109, %v1133
    %v1181 = vadd.f32 %v1110, %v1133
    %v1182 = vadd.f32 %v1111, %v1133
    %v1183 = vadd.f32 %v1112, %v1133
    %v1184 = vadd.f32 %v1113, %v1133
    %v1185 = vadd.f32 %v1114, %v1133
    %v1186 = vadd.f32 %v1115, %v1133
    %v1187 = vadd.f32 %v1116, %v1133
    %v1188 = vadd.f32 %v1117, %v1133
    %v1189 = vadd.f32 %v1118, %v1133
    %v1190 = vadd.f32 %v1119, %v1133
    %v1191 = vadd.f32 %v1120, %v1133
    %v1192 = vadd.f32 %v1121, %v1133
    %v1193 = vadd.f32 %v1122, %v1133
    %v1194 = vadd.f32 %v1123, %v1133
    %v1195 = vadd.f32 %v1124, %v1133
    %v1196 = vadd.f32 %v1125, %v1133
    %v1197 = vadd.f32 %v1126, %v1133
    %v1198 = vadd.f32 %v1127, %v1133
    %v1199 = vtanh.pop %v1135
    %v1200 = vtanh.pop %v1136
    %v1201 = vtanh.pop %v1137
    %v1202 = vtanh.pop %v1138
    %v1203 = vtanh.pop %v1139
    %v1204 = vtanh.pop %v1140
    %v1205 = vtanh.pop %v1141
    %v1206 = vtanh.pop %v1142
    %v1207 = vtanh.pop %v1143
    %v1208 = vtanh.pop %v1144
    %v1209 = vtanh.pop %v1145
    %v1210 = vtanh.pop %v1146
    %v1211 = vtanh.pop %v1147
    %v1212 = vtanh.pop %v1148
    %v1213 = vtanh.pop %v1149
    %v1214 = vtanh.pop %v1150
    %v1215 = vtanh.pop %v1151
    %v1216 = vtanh.pop %v1152
    %v1217 = vtanh.pop %v1153
    %v1218 = vtanh.pop %v1154
    %v1219 = vtanh.pop %v1155
    %v1220 = vtanh.pop %v1156
    %v1221 = vtanh.pop %v1157
    %v1222 = vtanh.pop %v1158
    %v1223 = vtanh.pop %v1159
    %v1224 = vtanh.pop %v1160
    %v1225 = vtanh.pop %v1161
    %v1226 = vtanh.pop %v1162
    %v1227 = vtanh.pop %v1163
    %v1228 = vtanh.pop %v1164
    %v1229 = vtanh.pop %v1165
    %v1230 = vtanh.pop %v1166
    %v1231 = vtanh.pop %v1167
    %v1232 = vtanh.pop %v1168
    %v1233 = vtanh.pop %v1169
    %v1234 = vtanh.pop %v1170
    %v1235 = vtanh.pop %v1171
    %v1236 = vtanh.pop %v1172
    %v1237 = vtanh.pop %v1173
    %v1238 = vtanh.pop %v1174
    %v1239 = vtanh.pop %v1175
    %v1240 = vtanh.pop %v1176
    %v1241 = vtanh.pop %v1177
    %v1242 = vtanh.pop %v1178
    %v1243 = vtanh.pop %v1179
    %v1244 = vtanh.pop %v1180
    %v1245 = vtanh.pop %v1181
    %v1246 = vtanh.pop %v1182
    %v1247 = vtanh.pop %v1183
    %v1248 = vtanh.pop %v1184
    %v1249 = vtanh.pop %v1185
    %v1250 = vtanh.pop %v1186
    %v1251 = vtanh.pop %v1187
    %v1252 = vtanh.pop %v1188
    %v1253 = vtanh.pop %v1189
    %v1254 = vtanh.pop %v1190
    %v1255 = vtanh.pop %v1191
    %v1256 = vtanh.pop %v1192
    %v1257 = vtanh.pop %v1193
    %v1258 = vtanh.pop %v1194
    %v1259 = vtanh.pop %v1195
    %v1260 = vtanh.pop %v1196
    %v1261 = vtanh.pop %v1197
    %v1262 = vtanh.pop %v1198
    %1263 = vst [vmem:[%s5] sm:$0xff] %v1199
    %1264 = vst [vmem:[%s5 + $0x8] sm:$0xff] %v1200
    %1265 = vst [vmem:[%s5 + $0x10] sm:$0xff] %v1201
    %1266 = vst [vmem:[%s5 + $0x18] sm:$0xff] %v1202
    %1267 = vst [vmem:[%s5 + $0x20] sm:$0xff] %v1203
    %1268 = vst [vmem:[%s5 + $0x28] sm:$0xff] %v1204
    %1269 = vst [vmem:[%s5 + $0x30] sm:$0xff] %v1205
    %1270 = vst [vmem:[%s5 + $0x38] sm:$0xff] %v1206
    %1271 = vst [vmem:[%s5 + $0x40] sm:$0xff] %v1207
    %1272 = vst [vmem:[%s5 + $0x48] sm:$0xff] %v1208
    %1273 = vst [vmem:[%s5 + $0x50] sm:$0xff] %v1209
    %1274 = vst [vmem:[%s5 + $0x58] sm:$0xff] %v1210
    %1275 = vst [vmem:[%s5 + $0x60] sm:$0xff] %v1211
    %1276 = vst [vmem:[%s5 + $0x68] sm:$0xff] %v1212
    %1277 = vst [vmem:[%s5 + $0x70] sm:$0xff] %v1213
    %1278 = vst [vmem:[%s5 + $0x78] sm:$0xff] %v1214
    %1279 = vst [vmem:[%s5 + $0x80] sm:$0xff] %v1215
    %1280 = vst [vmem:[%s5 + $0x88] sm:$0xff] %v1216
    %1281 = vst [vmem:[%s5 + $0x90] sm:$0xff] %v1217
    %1282 = vst [vmem:[%s5 + $0x98] sm:$0xff] %v1218
    %1283 = vst [vmem:[%s5 + $0xa0] sm:$0xff] %v1219
    %1284 = vst [vmem:[%s5 + $0xa8] sm:$0xff] %v1220
    %1285 = vst [vmem:[%s5 + $0xb0] sm:$0xff] %v1221
    %1286 = vst [vmem:[%s5 + $0xb8] sm:$0xff] %v1222
    %1287 = vst [vmem:[%s5 + $0xc0] sm:$0xff] %v1223
    %1288 = vst [vmem:[%s5 + $0xc8] sm:$0xff] %v1224
    %1289 = vst [vmem:[%s5 + $0xd0] sm:$0xff] %v1225
    %1290 = vst [vmem:[%s5 + $0xd8] sm:$0xff] %v1226
    %1291 = vst [vmem:[%s5 + $0xe0] sm:$0xff] %v1227
    %1292 = vst [vmem:[%s5 + $0xe8] sm:$0xff] %v1228
    %1293 = vst [vmem:[%s5 + $0xf0] sm:$0xff] %v1229
    %1294 = vst [vmem:[%s5 + $0xf8] sm:$0xff] %v1230
    %1295 = vst [vmem:[%s5 + $0x100] sm:$0xff] %v1231
    %1296 = vst [vmem:[%s5 + $0x108] sm:$0xff] %v1232
    %1297 = vst [vmem:[%s5 + $0x110] sm:$0xff] %v1233
    %1298 = vst [vmem:[%s5 + $0x118] sm:$0xff] %v1234
    %1299 = vst [vmem:[%s5 + $0x120] sm:$0xff] %v1235
    %1300 = vst [vmem:[%s5 + $0x128] sm:$0xff] %v1236
    %1301 = vst [vmem:[%s5 + $0x130] sm:$0xff] %v1237
    %1302 = vst [vmem:[%s5 + $0x138] sm:$0xff] %v1238
    %1303 = vst [vmem:[%s5 + $0x140] sm:$0xff] %v1239
    %1304 = vst [vmem:[%s5 + $0x148] sm:$0xff] %v1240
    %1305 = vst [vmem:[%s5 + $0x150] sm:$0xff] %v1241
    %1306 = vst [vmem:[%s5 + $0x158] sm:$0xff] %v1242
    %1307 = vst [vmem:[%s5 + $0x160] sm:$0xff] %v1243
    %1308 = vst [vmem:[%s5 + $0x168] sm:$0xff] %v1244
    %1309 = vst [vmem:[%s5 + $0x170] sm:$0xff] %v1245
    %1310 = vst [vmem:[%s5 + $0x178] sm:$0xff] %v1246
    %1311 = vst [vmem:[%s5 + $0x180] sm:$0xff] %v1247
    %1312 = vst [vmem:[%s5 + $0x188] sm:$0xff] %v1248
    %1313 = vst [vmem:[%s5 + $0x190] sm:$0xff] %v1249
    %1314 = vst [vmem:[%s5 + $0x198] sm:$0xff] %v1250
    %1315 = vst [vmem:[%s5 + $0x1a0] sm:$0xff] %v1251
    %1316 = vst [vmem:[%s5 + $0x1a8] sm:$0xff] %v1252
    %1317 = vst [vmem:[%s5 + $0x1b0] sm:$0xff] %v1253
    %1318 = vst [vmem:[%s5 + $0x1b8] sm:$0xff] %v1254
    %1319 = vst [vmem:[%s5 + $0x1c0] sm:$0xff] %v1255
    %1320 = vst [vmem:[%s5 + $0x1c8] sm:$0xff] %v1256
    %1321 = vst [vmem:[%s5 + $0x1d0] sm:$0xff] %v1257
    %1322 = vst [vmem:[%s5 + $0x1d8] sm:$0xff] %v1258
    %1323 = vst [vmem:[%s5 + $0x1e0] sm:$0xff] %v1259
    %1324 = vst [vmem:[%s5 + $0x1e8] sm:$0xff] %v1260
    %1325 = vst [vmem:[%s5 + $0x1f0] sm:$0xff] %v1261
    %1326 = vst [vmem:[%s5 + $0x1f8] sm:$0xff] %v1262
    // Predicated region
    $region38: #{cnnae_forward.5} parent=1 // pred_check
      _
    $region39: #{cnnae_forward.5} parent=1 // pred_check_branch
      %1328 = sbr.rel (0) target = $region41
    $region40: #{cnnae_forward.5} parent=1 // pred_region
      _
    $region41: #{cnnae_forward.5} parent=1 // pred_fallthru
      _
    // Predicated region
    $region42: #{cnnae_forward.5} parent=1 // pred_check
      _
    $region43: #{cnnae_forward.5} parent=1 // pred_check_branch
      %1330 = sbr.rel (0) target = $region45
    $region44: #{cnnae_forward.5} parent=1 // pred_region
      _
    $region45: #{cnnae_forward.5} parent=1 // pred_fallthru
      _
    %1331 = vsyncpa [#allocation3], 1
    %1332 = vsyncpa [#allocation5], 1
    %1333 = vsyncpa [#allocation8], 1

// kernel: cnnae_forward.6
$region0: #{cnnae_forward.6}
  #allocation0 [shape = 'u32[]', space=smem, size = 0x4, offset = 0x4, fixed_abs, tag = 'smem constant byte address 0x4 - core index']
  #allocation1 [shape = 'u32[144,128]{1,0:T(1,128)}', space=vmem, size = 0x12000, scoped, tag = 'internal scratch']
  %s0 = inlined_call_operand.vmem [shape: f32[32,144], index: 0, kind: input, shape index: {}]
  %s1 = inlined_call_operand.hbm [shape: f32[144,128], index: 1, kind: input, shape index: {}]
  %s2 = inlined_call_operand.hbm [shape: f32[1,128], index: 2, kind: input, shape index: {}]
  %s3 = inlined_call_operand.hbm [shape: f32[1,128], index: 3, kind: input, shape index: {}]
  %s4 = inlined_call_operand.hbm [shape: f32[1,128], index: 4, kind: input, shape index: {}]
  %s5 = inlined_call_operand.vmem [shape: f32[32,128], index: 5, kind: output, shape index: {}]
  %s6 = sld [smem:[#allocation0]]
  $region46: #{cnnae_forward.6} parent=0
    _
  %s8 = ssub.s32 1, %s6
  %s9 = scalar_select 0, %s8, %s6
  $region1: #{cnnae_forward.6} parent=0
    #allocation2 [shape = 'u8[73728]{0}', space=vmem, size = 0x12000, scoped, tag = 'input window, operand 1, single buffered']
    #allocation3 [shape = 's32[1]{0}', space=sflag, size = 0x4, scoped, tag = 'scoped memory for cnnae_forward.6']
    #allocation4 [shape = 'u8[512]{0}', space=vmem, size = 0x400, scoped, tag = 'input window, operand 2, single buffered']
    #allocation5 [shape = 's32[1]{0}', space=sflag, size = 0x4, scoped, tag = 'scoped memory for cnnae_forward.6']
    #allocation6 [shape = 'u8[512]{0}', space=vmem, size = 0x400, scoped, tag = 'input window, operand 3, single buffered']
    #allocation7 [shape = 'u8[512]{0}', space=vmem, size = 0x400, scoped, tag = 'input window, operand 4, single buffered']
    #allocation8 [shape = 's32[1]{0}', space=sflag, size = 0x4, scoped, tag = 'scoped memory for cnnae_forward.6']
    %10 = vsyncpa [#allocation3], 0
    %11 = vsyncpa [#allocation5], 0
    %12 = vsyncpa [#allocation8], 0
    // Predicated region
    $region2: #{cnnae_forward.6} parent=1 // pred_check
      _
    $region3: #{cnnae_forward.6} parent=1 // pred_check_branch
      %14 = sbr.rel (0) target = $region5
    $region4: #{cnnae_forward.6} parent=1 // pred_region
      _
    $region5: #{cnnae_forward.6} parent=1 // pred_fallthru
      _
    // Predicated region
    $region6: #{cnnae_forward.6} parent=1 // pred_check
      _
    $region7: #{cnnae_forward.6} parent=1 // pred_check_branch
      %16 = sbr.rel (0) target = $region9
    $region8: #{cnnae_forward.6} parent=1 // pred_region
      %s18 = ssub.s32 2304, 2304
      %19 = vsyncadd [#allocation3], %s18
      %s20 = sshll.u32 [#allocation2], 4
      %s21 = int_to_ptr.vmem [resolvable:$true] %s20
      %26 = dma.hbm_to_vmem [thread:$0]  %s1, 2304, %s21, [#allocation3], 128, 128, 8
    $region9: #{cnnae_forward.6} parent=1 // pred_fallthru
      _
    // Predicated region
    $region10: #{cnnae_forward.6} parent=1 // pred_check
      _
    $region11: #{cnnae_forward.6} parent=1 // pred_check_branch
      %28 = sbr.rel (0) target = $region13
    $region12: #{cnnae_forward.6} parent=1 // pred_region
      %s30 = ssub.s32 16, 16
      %31 = vsyncadd [#allocation5], %s30
      %s33 = sshll.u32 [#allocation4], 4
      %s34 = int_to_ptr.vmem [resolvable:$true] %s33
      %36 = dma.hbm_to_vmem [thread:$0]  %s2, 16, %s34, [#allocation5]
    $region13: #{cnnae_forward.6} parent=1 // pred_fallthru
      _
    // Predicated region
    $region14: #{cnnae_forward.6} parent=1 // pred_check
      _
    $region15: #{cnnae_forward.6} parent=1 // pred_check_branch
      %38 = sbr.rel (0) target = $region17
    $region16: #{cnnae_forward.6} parent=1 // pred_region
      %s40 = ssub.s32 16, 16
      %41 = vsyncadd [#allocation5], %s40
      %s43 = sshll.u32 [#allocation6], 4
      %s44 = int_to_ptr.vmem [resolvable:$true] %s43
      %46 = dma.hbm_to_vmem [thread:$0]  %s3, 16, %s44, [#allocation5]
    $region17: #{cnnae_forward.6} parent=1 // pred_fallthru
      _
    // Predicated region
    $region18: #{cnnae_forward.6} parent=1 // pred_check
      _
    $region19: #{cnnae_forward.6} parent=1 // pred_check_branch
      %48 = sbr.rel (0) target = $region21
    $region20: #{cnnae_forward.6} parent=1 // pred_region
      %s50 = ssub.s32 16, 16
      %51 = vsyncadd [#allocation8], %s50
      %s53 = sshll.u32 [#allocation7], 4
      %s54 = int_to_ptr.vmem [resolvable:$true] %s53
      %56 = dma.hbm_to_vmem [thread:$0]  %s4, 16, %s54, [#allocation8]
    $region21: #{cnnae_forward.6} parent=1 // pred_fallthru
      _
    // Predicated region
    $region22: #{cnnae_forward.6} parent=1 // pred_check
      _
    $region23: #{cnnae_forward.6} parent=1 // pred_check_branch
      %58 = sbr.rel (0) target = $region25
    $region24: #{cnnae_forward.6} parent=1 // pred_region
      %59 = dma.done [#allocation3], 2304
    $region25: #{cnnae_forward.6} parent=1 // pred_fallthru
      _
    // Predicated region
    $region26: #{cnnae_forward.6} parent=1 // pred_check
      _
    $region27: #{cnnae_forward.6} parent=1 // pred_check_branch
      %61 = sbr.rel (0) target = $region29
    $region28: #{cnnae_forward.6} parent=1 // pred_region
      %62 = dma.done [#allocation5], 16
    $region29: #{cnnae_forward.6} parent=1 // pred_fallthru
      _
    // Predicated region
    $region30: #{cnnae_forward.6} parent=1 // pred_check
      _
    $region31: #{cnnae_forward.6} parent=1 // pred_check_branch
      %64 = sbr.rel (0) target = $region33
    $region32: #{cnnae_forward.6} parent=1 // pred_region
      %65 = dma.done [#allocation5], 16
    $region33: #{cnnae_forward.6} parent=1 // pred_fallthru
      _
    // Predicated region
    $region34: #{cnnae_forward.6} parent=1 // pred_check
      _
    $region35: #{cnnae_forward.6} parent=1 // pred_check_branch
      %67 = sbr.rel (0) target = $region37
    $region36: #{cnnae_forward.6} parent=1 // pred_region
      %68 = dma.done [#allocation8], 16
    $region37: #{cnnae_forward.6} parent=1 // pred_fallthru
      _
    %v69 = vld [vmem:[%s0] sm:$0xff]
    %v70 = vld [vmem:[%s0 + $0x8] sm:$0xff]
    %v71 = vld [vmem:[%s0 + $0x10] sm:$0xff]
    %v72 = vld [vmem:[%s0 + $0x18] sm:$0xff]
    %v73 = vld [vmem:[%s0 + $0x20] sm:$0xff]
    %v74 = vld [vmem:[%s0 + $0x28] sm:$0xff]
    %v75 = vld [vmem:[%s0 + $0x30] sm:$0xff]
    %v76 = vld [vmem:[%s0 + $0x38] sm:$0xff]
    %v77 = vld [vmem:[#allocation2] sm:$0xff]
    %v78 = vld [vmem:[#allocation2 + $0x8] sm:$0xff]
    %v79 = vld [vmem:[#allocation2 + $0x10] sm:$0xff]
    %v80 = vld [vmem:[#allocation2 + $0x18] sm:$0xff]
    %v81 = vld [vmem:[#allocation2 + $0x20] sm:$0xff]
    %v82 = vld [vmem:[#allocation2 + $0x28] sm:$0xff]
    %v83 = vld [vmem:[#allocation2 + $0x30] sm:$0xff]
    %v84 = vld [vmem:[#allocation2 + $0x38] sm:$0xff]
    %v85 = vld [vmem:[#allocation2 + $0x40] sm:$0xff]
    %v86 = vld [vmem:[#allocation2 + $0x48] sm:$0xff]
    %v87 = vld [vmem:[#allocation2 + $0x50] sm:$0xff]
    %v88 = vld [vmem:[#allocation2 + $0x58] sm:$0xff]
    %v89 = vld [vmem:[#allocation2 + $0x60] sm:$0xff]
    %v90 = vld [vmem:[#allocation2 + $0x68] sm:$0xff]
    %v91 = vld [vmem:[#allocation2 + $0x70] sm:$0xff]
    %v92 = vld [vmem:[#allocation2 + $0x78] sm:$0xff]
    %v93 = vld [vmem:[#allocation2 + $0x80] sm:$0xff]
    %v94 = vld [vmem:[#allocation2 + $0x88] sm:$0xff]
    %v95 = vld [vmem:[#allocation4] sm:$0x1]
    %v97 = vlaneseq
    %v98 = vshrl.u32 %v97, 7
    %v99 = vsub.s32 0, %v98
    %v100 = vrot.slane %v95, %v99
    %vm102 = vcmask 130048
    %v104 = vsel %vm102, %v70, 0
    %v107 = vsel %vm102, %v72, 0
    %v110 = vsel %vm102, %v74, 0
    %v113 = vsel %vm102, %v76, 0
    %115 = vmatprep.subr.mxu0 0.0
    %116 = vmatpush1.msra.mxu0 %v77
    %117 = vmatprep.subr.mxu0 0.0
    %118 = vmatpush1.msra.mxu0 %v78
    %119 = vmatprep.subr.mxu0 0.0
    %120 = vmatpush1.msra.mxu0 %v79
    %121 = vmatprep.subr.mxu0 0.0
    %122 = vmatpush1.msra.mxu0 %v80
    %123 = vmatprep.subr.mxu0 0.0
    %124 = vmatpush1.msra.mxu0 %v81
    %125 = vmatprep.subr.mxu0 0.0
    %126 = vmatpush1.msra.mxu0 %v82
    %127 = vmatprep.subr.mxu0 0.0
    %128 = vmatpush1.msra.mxu0 %v83
    %129 = vmatprep.subr.mxu0 0.0
    %130 = vmatpush1.msra.mxu0 %v84
    %131 = vmatprep.subr.mxu0 0.0
    %132 = vmatpush1.msra.mxu0 %v85
    %133 = vmatprep.subr.mxu0 0.0
    %134 = vmatpush1.msra.mxu0 %v86
    %135 = vmatprep.subr.mxu0 0.0
    %136 = vmatpush1.msra.mxu0 %v87
    %137 = vmatprep.subr.mxu0 0.0
    %138 = vmatpush1.msra.mxu0 %v88
    %139 = vmatprep.subr.mxu0 0.0
    %140 = vmatpush1.msra.mxu0 %v89
    %141 = vmatprep.subr.mxu0 0.0
    %142 = vmatpush1.msra.mxu0 %v90
    %143 = vmatprep.subr.mxu0 0.0
    %144 = vmatpush1.msra.mxu0 %v91
    %145 = vmatprep.subr.mxu0 0.0
    %146 = vmatpush1.msra.mxu0 %v92
    %147 = vmatprep.subr.mxu0 0.0
    %148 = vmatpush1.msra.mxu0 %v93
    %149 = vmatprep.subr.mxu0 0.0
    %150 = vmatpush1.msra.mxu0 %v94
    %151 = vmatprep.subr.mxu0 0.0
    %152 = vmatpush1.msra.mxu0 0.0
    %153 = vmatprep.subr.mxu0 0.0
    %154 = vmatpush1.msra.mxu0 0.0
    %155 = vmatprep.subr.mxu0 0.0
    %156 = vmatpush1.msra.mxu0 0.0
    %157 = vmatprep.subr.mxu0 0.0
    %158 = vmatpush1.msra.mxu0 0.0
    %159 = vmatprep.subr.mxu0 0.0
    %160 = vmatpush1.msra.mxu0 0.0
    %161 = vmatprep.subr.mxu0 0.0
    %162 = vmatpush1.msra.mxu0 0.0
    %163 = vmatprep.subr.mxu0 0.0
    %164 = vmatpush1.msra.mxu0 0.0
    %165 = vmatprep.subr.mxu0 0.0
    %166 = vmatpush1.msra.mxu0 0.0
    %167 = vmatprep.subr.mxu0 0.0
    %168 = vmatpush1.msra.mxu0 0.0
    %169 = vmatprep.subr.mxu0 0.0
    %170 = vmatpush1.msra.mxu0 0.0
    %171 = vmatprep.subr.mxu0 0.0
    %172 = vmatpush1.msra.mxu0 0.0
    %173 = vmatprep.subr.mxu0 0.0
    %174 = vmatpush1.msra.mxu0 0.0
    %175 = vmatprep.subr.mxu0 0.0
    %176 = vmatpush1.msra.mxu0 0.0
    %177 = vmatprep.subr.mxu0 0.0
    %178 = vmatpush1.msra.mxu0 0.0
    %179 = vmatprep.mubr.f32.mxu0 %v104
    %180 = vmatmul.mubr.f32.gmra.mrb[0].mxu0 %v69
    %v181 = vpop.f32.mrb[0].mxu0
    %v182 = vadd.f32 %v100, %v181
    %v183 = vpop.f32.mrb[0].mxu0
    %184 = vmatprep.mubr.f32.mxu0 %v107
    %185 = vmatmul.mubr.f32.gmra.mrb[0].mxu0 %v71
    %v186 = vpop.f32.mrb[0].mxu0
    %v187 = vadd.f32 %v100, %v186
    %v188 = vpop.f32.mrb[0].mxu0
    %189 = vmatprep.mubr.f32.mxu0 %v110
    %190 = vmatmul.mubr.f32.gmra.mrb[0].mxu0 %v73
    %v191 = vpop.f32.mrb[0].mxu0
    %v192 = vadd.f32 %v100, %v191
    %v193 = vpop.f32.mrb[0].mxu0
    %194 = vmatprep.mubr.f32.mxu0 %v113
    %195 = vmatmul.mubr.f32.gmra.mrb[0].mxu0 %v75
    %v196 = vpop.f32.mrb[0].mxu0
    %v197 = vadd.f32 %v100, %v196
    %v198 = vpop.f32.mrb[0].mxu0
    %199 = vdwg.mxu0
    %v200 = vadd.f32 %v182, %v187
    %v201 = vadd.f32 %v200, %v192
    %v202 = vadd.f32 %v201, %v197
    %v203 = vrot.slane %v202, 4
    %v204 = vadd.f32 %v202, %v203
    %v205 = vrot.slane %v204, 2
    %v206 = vadd.f32 %v204, %v205
    %v207 = vrot.slane %v206, 1
    %v208 = vadd.f32 %v206, %v207
    %v209 = vrcp.pop 32.0
    %v210 = vmul.f32 %v208, %v209
    %v211 = vsub.f32 %v182, %v210
    %v212 = vsub.f32 %v187, %v210
    %v213 = vsub.f32 %v192, %v210
    %v214 = vsub.f32 %v197, %v210
    %v215 = vmul.f32 %v211, %v211
    %v216 = vmul.f32 %v212, %v212
    %v217 = vmul.f32 %v213, %v213
    %v218 = vmul.f32 %v214, %v214
    %v219 = vadd.f32 %v215, %v216
    %v220 = vadd.f32 %v219, %v217
    %v221 = vadd.f32 %v220, %v218
    %v222 = vrot.slane %v221, 4
    %v223 = vadd.f32 %v221, %v222
    %v224 = vrot.slane %v223, 2
    %v225 = vadd.f32 %v223, %v224
    %v226 = vrot.slane %v225, 1
    %v227 = vadd.f32 %v225, %v226
    %v228 = vmul.f32 %v227, %v209
    %v229 = vadd.f32 %v228, 1e-05
    %v230 = vrsqrt.pop %v229
    %v231 = vmul.f32 %v211, %v230
    %v232 = vmul.f32 %v212, %v230
    %v233 = vmul.f32 %v213, %v230
    %v234 = vmul.f32 %v214, %v230
    %v235 = vld [vmem:[#allocation6] sm:$0x1]
    %v237 = vlaneseq
    %v238 = vshrl.u32 %v237, 7
    %v239 = vsub.s32 0, %v238
    %v240 = vrot.slane %v235, %v239
    %v242 = vmul.f32 %v231, %v240
    %v243 = vmul.f32 %v232, %v240
    %v244 = vmul.f32 %v233, %v240
    %v245 = vmul.f32 %v234, %v240
    %v246 = vld [vmem:[#allocation7] sm:$0x1]
    %v248 = vlaneseq
    %v249 = vshrl.u32 %v248, 7
    %v250 = vsub.s32 0, %v249
    %v251 = vrot.slane %v246, %v250
    %v253 = vadd.f32 %v242, %v251
    %v254 = vadd.f32 %v243, %v251
    %v255 = vadd.f32 %v244, %v251
    %v256 = vadd.f32 %v245, %v251
    %v257 = vtanh.pop %v253
    %v258 = vtanh.pop %v254
    %v259 = vtanh.pop %v255
    %v260 = vtanh.pop %v256
    %261 = vst [vmem:[%s5] sm:$0xff] %v257
    %262 = vst [vmem:[%s5 + $0x8] sm:$0xff] %v258
    %263 = vst [vmem:[%s5 + $0x10] sm:$0xff] %v259
    %264 = vst [vmem:[%s5 + $0x18] sm:$0xff] %v260
    // Predicated region
    $region38: #{cnnae_forward.6} parent=1 // pred_check
      _
    $region39: #{cnnae_forward.6} parent=1 // pred_check_branch
      %266 = sbr.rel (0) target = $region41
    $region40: #{cnnae_forward.6} parent=1 // pred_region
      _
    $region41: #{cnnae_forward.6} parent=1 // pred_fallthru
      _
    // Predicated region
    $region42: #{cnnae_forward.6} parent=1 // pred_check
      _
    $region43: #{cnnae_forward.6} parent=1 // pred_check_branch
      %268 = sbr.rel (0) target = $region45
    $region44: #{cnnae_forward.6} parent=1 // pred_region
      _
    $region45: #{cnnae_forward.6} parent=1 // pred_fallthru
      _
    %269 = vsyncpa [#allocation3], 1
    %270 = vsyncpa [#allocation5], 1
    %271 = vsyncpa [#allocation8], 1

// kernel: cnnae_forward.7
$region0: #{cnnae_forward.7}
  #allocation0 [shape = 'u32[]', space=smem, size = 0x4, offset = 0x4, fixed_abs, tag = 'smem constant byte address 0x4 - core index']
  #allocation1 [shape = 'u32[144,128]{1,0:T(1,128)}', space=vmem, size = 0x12000, scoped, tag = 'internal scratch']
  %s0 = inlined_call_operand.vmem [shape: f32[104,40], index: 0, kind: input, shape index: {}]
  %s1 = inlined_call_operand.hbm [shape: f32[40,128], index: 1, kind: input, shape index: {}]
  %s2 = inlined_call_operand.hbm [shape: f32[1,128], index: 2, kind: input, shape index: {}]
  %s3 = inlined_call_operand.hbm [shape: f32[1,128], index: 3, kind: input, shape index: {}]
  %s4 = inlined_call_operand.hbm [shape: f32[1,128], index: 4, kind: input, shape index: {}]
  %s5 = inlined_call_operand.vmem [shape: f32[104,128], index: 5, kind: output, shape index: {}]
  %s6 = sld [smem:[#allocation0]]
  $region46: #{cnnae_forward.7} parent=0
    _
  %s8 = ssub.s32 1, %s6
  %s9 = scalar_select 0, %s8, %s6
  $region1: #{cnnae_forward.7} parent=0
    #allocation2 [shape = 'u8[20480]{0}', space=vmem, size = 0x5000, scoped, tag = 'input window, operand 1, single buffered']
    #allocation3 [shape = 's32[1]{0}', space=sflag, size = 0x4, scoped, tag = 'scoped memory for cnnae_forward.7']
    #allocation4 [shape = 'u8[512]{0}', space=vmem, size = 0x400, scoped, tag = 'input window, operand 2, single buffered']
    #allocation5 [shape = 's32[1]{0}', space=sflag, size = 0x4, scoped, tag = 'scoped memory for cnnae_forward.7']
    #allocation6 [shape = 'u8[512]{0}', space=vmem, size = 0x400, scoped, tag = 'input window, operand 3, single buffered']
    #allocation7 [shape = 'u8[512]{0}', space=vmem, size = 0x400, scoped, tag = 'input window, operand 4, single buffered']
    #allocation8 [shape = 's32[1]{0}', space=sflag, size = 0x4, scoped, tag = 'scoped memory for cnnae_forward.7']
    %10 = vsyncpa [#allocation3], 0
    %11 = vsyncpa [#allocation5], 0
    %12 = vsyncpa [#allocation8], 0
    // Predicated region
    $region2: #{cnnae_forward.7} parent=1 // pred_check
      _
    $region3: #{cnnae_forward.7} parent=1 // pred_check_branch
      %14 = sbr.rel (0) target = $region5
    $region4: #{cnnae_forward.7} parent=1 // pred_region
      _
    $region5: #{cnnae_forward.7} parent=1 // pred_fallthru
      _
    // Predicated region
    $region6: #{cnnae_forward.7} parent=1 // pred_check
      _
    $region7: #{cnnae_forward.7} parent=1 // pred_check_branch
      %16 = sbr.rel (0) target = $region9
    $region8: #{cnnae_forward.7} parent=1 // pred_region
      %s18 = ssub.s32 640, 640
      %19 = vsyncadd [#allocation3], %s18
      %s20 = sshll.u32 [#allocation2], 4
      %s21 = int_to_ptr.vmem [resolvable:$true] %s20
      %26 = dma.hbm_to_vmem [thread:$0]  %s1, 640, %s21, [#allocation3], 128, 128, 8
    $region9: #{cnnae_forward.7} parent=1 // pred_fallthru
      _
    // Predicated region
    $region10: #{cnnae_forward.7} parent=1 // pred_check
      _
    $region11: #{cnnae_forward.7} parent=1 // pred_check_branch
      %28 = sbr.rel (0) target = $region13
    $region12: #{cnnae_forward.7} parent=1 // pred_region
      %s30 = ssub.s32 16, 16
      %31 = vsyncadd [#allocation5], %s30
      %s33 = sshll.u32 [#allocation4], 4
      %s34 = int_to_ptr.vmem [resolvable:$true] %s33
      %36 = dma.hbm_to_vmem [thread:$0]  %s2, 16, %s34, [#allocation5]
    $region13: #{cnnae_forward.7} parent=1 // pred_fallthru
      _
    // Predicated region
    $region14: #{cnnae_forward.7} parent=1 // pred_check
      _
    $region15: #{cnnae_forward.7} parent=1 // pred_check_branch
      %38 = sbr.rel (0) target = $region17
    $region16: #{cnnae_forward.7} parent=1 // pred_region
      %s40 = ssub.s32 16, 16
      %41 = vsyncadd [#allocation5], %s40
      %s43 = sshll.u32 [#allocation6], 4
      %s44 = int_to_ptr.vmem [resolvable:$true] %s43
      %46 = dma.hbm_to_vmem [thread:$0]  %s3, 16, %s44, [#allocation5]
    $region17: #{cnnae_forward.7} parent=1 // pred_fallthru
      _
    // Predicated region
    $region18: #{cnnae_forward.7} parent=1 // pred_check
      _
    $region19: #{cnnae_forward.7} parent=1 // pred_check_branch
      %48 = sbr.rel (0) target = $region21
    $region20: #{cnnae_forward.7} parent=1 // pred_region
      %s50 = ssub.s32 16, 16
      %51 = vsyncadd [#allocation8], %s50
      %s53 = sshll.u32 [#allocation7], 4
      %s54 = int_to_ptr.vmem [resolvable:$true] %s53
      %56 = dma.hbm_to_vmem [thread:$0]  %s4, 16, %s54, [#allocation8]
    $region21: #{cnnae_forward.7} parent=1 // pred_fallthru
      _
    // Predicated region
    $region22: #{cnnae_forward.7} parent=1 // pred_check
      _
    $region23: #{cnnae_forward.7} parent=1 // pred_check_branch
      %58 = sbr.rel (0) target = $region25
    $region24: #{cnnae_forward.7} parent=1 // pred_region
      %59 = dma.done [#allocation3], 640
    $region25: #{cnnae_forward.7} parent=1 // pred_fallthru
      _
    // Predicated region
    $region26: #{cnnae_forward.7} parent=1 // pred_check
      _
    $region27: #{cnnae_forward.7} parent=1 // pred_check_branch
      %61 = sbr.rel (0) target = $region29
    $region28: #{cnnae_forward.7} parent=1 // pred_region
      %62 = dma.done [#allocation5], 16
    $region29: #{cnnae_forward.7} parent=1 // pred_fallthru
      _
    // Predicated region
    $region30: #{cnnae_forward.7} parent=1 // pred_check
      _
    $region31: #{cnnae_forward.7} parent=1 // pred_check_branch
      %64 = sbr.rel (0) target = $region33
    $region32: #{cnnae_forward.7} parent=1 // pred_region
      %65 = dma.done [#allocation5], 16
    $region33: #{cnnae_forward.7} parent=1 // pred_fallthru
      _
    // Predicated region
    $region34: #{cnnae_forward.7} parent=1 // pred_check
      _
    $region35: #{cnnae_forward.7} parent=1 // pred_check_branch
      %67 = sbr.rel (0) target = $region37
    $region36: #{cnnae_forward.7} parent=1 // pred_region
      %68 = dma.done [#allocation8], 16
    $region37: #{cnnae_forward.7} parent=1 // pred_fallthru
      _
    %v69 = vld [vmem:[%s0] sm:$0xff]
    %v70 = vld [vmem:[%s0 + $0x8] sm:$0xff]
    %v71 = vld [vmem:[%s0 + $0x10] sm:$0xff]
    %v72 = vld [vmem:[%s0 + $0x18] sm:$0xff]
    %v73 = vld [vmem:[%s0 + $0x20] sm:$0xff]
    %v74 = vld [vmem:[%s0 + $0x28] sm:$0xff]
    %v75 = vld [vmem:[%s0 + $0x30] sm:$0xff]
    %v76 = vld [vmem:[%s0 + $0x38] sm:$0xff]
    %v77 = vld [vmem:[%s0 + $0x40] sm:$0xff]
    %v78 = vld [vmem:[%s0 + $0x48] sm:$0xff]
    %v79 = vld [vmem:[%s0 + $0x50] sm:$0xff]
    %v80 = vld [vmem:[%s0 + $0x58] sm:$0xff]
    %v81 = vld [vmem:[%s0 + $0x60] sm:$0xff]
    %v82 = vld [vmem:[#allocation2] sm:$0xff]
    %v83 = vld [vmem:[#allocation2 + $0x8] sm:$0xff]
    %v84 = vld [vmem:[#allocation2 + $0x10] sm:$0xff]
    %v85 = vld [vmem:[#allocation2 + $0x18] sm:$0xff]
    %v86 = vld [vmem:[#allocation2 + $0x20] sm:$0xff]
    %v87 = vld [vmem:[#allocation4] sm:$0x1]
    %v89 = vlaneseq
    %v90 = vshrl.u32 %v89, 7
    %v91 = vsub.s32 0, %v90
    %v92 = vrot.slane %v87, %v91
    %vm94 = vcmask 326656
    %v96 = vsel %vm94, %v69, 0
    %v99 = vsel %vm94, %v70, 0
    %v102 = vsel %vm94, %v71, 0
    %v105 = vsel %vm94, %v72, 0
    %v108 = vsel %vm94, %v73, 0
    %v111 = vsel %vm94, %v74, 0
    %v114 = vsel %vm94, %v75, 0
    %v117 = vsel %vm94, %v76, 0
    %v120 = vsel %vm94, %v77, 0
    %v123 = vsel %vm94, %v78, 0
    %v126 = vsel %vm94, %v79, 0
    %v129 = vsel %vm94, %v80, 0
    %v132 = vsel %vm94, %v81, 0
    %134 = vmatprep.subr.mxu0 0.0
    %135 = vmatpush1.msra.mxu0 %v82
    %136 = vmatprep.subr.mxu0 0.0
    %137 = vmatpush1.msra.mxu0 %v83
    %138 = vmatprep.subr.mxu0 0.0
    %139 = vmatpush1.msra.mxu0 %v84
    %140 = vmatprep.subr.mxu0 0.0
    %141 = vmatpush1.msra.mxu0 %v85
    %142 = vmatprep.subr.mxu0 0.0
    %143 = vmatpush1.msra.mxu0 %v86
    %144 = vmatprep.subr.mxu0 0.0
    %145 = vmatpush1.msra.mxu0 0.0
    %146 = vmatprep.subr.mxu0 0.0
    %147 = vmatpush1.msra.mxu0 0.0
    %148 = vmatprep.subr.mxu0 0.0
    %149 = vmatpush1.msra.mxu0 0.0
    %150 = vmatprep.subr.mxu0 0.0
    %151 = vmatpush1.msra.mxu0 0.0
    %152 = vmatprep.subr.mxu0 0.0
    %153 = vmatpush1.msra.mxu0 0.0
    %154 = vmatprep.subr.mxu0 0.0
    %155 = vmatpush1.msra.mxu0 0.0
    %156 = vmatprep.subr.mxu0 0.0
    %157 = vmatpush1.msra.mxu0 0.0
    %158 = vmatprep.subr.mxu0 0.0
    %159 = vmatpush1.msra.mxu0 0.0
    %160 = vmatprep.subr.mxu0 0.0
    %161 = vmatpush1.msra.mxu0 0.0
    %162 = vmatprep.subr.mxu0 0.0
    %163 = vmatpush1.msra.mxu0 0.0
    %164 = vmatprep.subr.mxu0 0.0
    %165 = vmatpush1.msra.mxu0 0.0
    %166 = vmatprep.subr.mxu0 0.0
    %167 = vmatpush1.msra.mxu0 0.0
    %168 = vmatprep.subr.mxu0 0.0
    %169 = vmatpush1.msra.mxu0 0.0
    %170 = vmatprep.subr.mxu0 0.0
    %171 = vmatpush1.msra.mxu0 0.0
    %172 = vmatprep.subr.mxu0 0.0
    %173 = vmatpush1.msra.mxu0 0.0
    %174 = vmatprep.subr.mxu0 0.0
    %175 = vmatpush1.msra.mxu0 0.0
    %176 = vmatprep.subr.mxu0 0.0
    %177 = vmatpush1.msra.mxu0 0.0
    %178 = vmatprep.subr.mxu0 0.0
    %179 = vmatpush1.msra.mxu0 0.0
    %180 = vmatprep.subr.mxu0 0.0
    %181 = vmatpush1.msra.mxu0 0.0
    %182 = vmatprep.subr.mxu0 0.0
    %183 = vmatpush1.msra.mxu0 0.0
    %184 = vmatprep.subr.mxu0 0.0
    %185 = vmatpush1.msra.mxu0 0.0
    %186 = vmatprep.subr.mxu0 0.0
    %187 = vmatpush1.msra.mxu0 0.0
    %188 = vmatprep.subr.mxu0 0.0
    %189 = vmatpush1.msra.mxu0 0.0
    %190 = vmatprep.subr.mxu0 0.0
    %191 = vmatpush1.msra.mxu0 0.0
    %192 = vmatprep.subr.mxu0 0.0
    %193 = vmatpush1.msra.mxu0 0.0
    %194 = vmatprep.subr.mxu0 0.0
    %195 = vmatpush1.msra.mxu0 0.0
    %196 = vmatprep.subr.mxu0 0.0
    %197 = vmatpush1.msra.mxu0 0.0
    %198 = vmatprep.mubr.f32.mxu0 0.0
    %199 = vmatmul.mubr.f32.gmra.mrb[0].mxu0 %v96
    %v200 = vpop.f32.mrb[0].mxu0
    %v201 = vadd.f32 %v92, %v200
    %v202 = vpop.f32.mrb[0].mxu0
    %203 = vmatprep.mubr.f32.mxu0 0.0
    %204 = vmatmul.mubr.f32.gmra.mrb[0].mxu0 %v99
    %v205 = vpop.f32.mrb[0].mxu0
    %v206 = vadd.f32 %v92, %v205
    %v207 = vpop.f32.mrb[0].mxu0
    %208 = vmatprep.mubr.f32.mxu0 0.0
    %209 = vmatmul.mubr.f32.gmra.mrb[0].mxu0 %v102
    %v210 = vpop.f32.mrb[0].mxu0
    %v211 = vadd.f32 %v92, %v210
    %v212 = vpop.f32.mrb[0].mxu0
    %213 = vmatprep.mubr.f32.mxu0 0.0
    %214 = vmatmul.mubr.f32.gmra.mrb[0].mxu0 %v105
    %v215 = vpop.f32.mrb[0].mxu0
    %v216 = vadd.f32 %v92, %v215
    %v217 = vpop.f32.mrb[0].mxu0
    %218 = vmatprep.mubr.f32.mxu0 0.0
    %219 = vmatmul.mubr.f32.gmra.mrb[0].mxu0 %v108
    %v220 = vpop.f32.mrb[0].mxu0
    %v221 = vadd.f32 %v92, %v220
    %v222 = vpop.f32.mrb[0].mxu0
    %223 = vmatprep.mubr.f32.mxu0 0.0
    %224 = vmatmul.mubr.f32.gmra.mrb[0].mxu0 %v111
    %v225 = vpop.f32.mrb[0].mxu0
    %v226 = vadd.f32 %v92, %v225
    %v227 = vpop.f32.mrb[0].mxu0
    %228 = vmatprep.mubr.f32.mxu0 0.0
    %229 = vmatmul.mubr.f32.gmra.mrb[0].mxu0 %v114
    %v230 = vpop.f32.mrb[0].mxu0
    %v231 = vadd.f32 %v92, %v230
    %v232 = vpop.f32.mrb[0].mxu0
    %233 = vmatprep.mubr.f32.mxu0 0.0
    %234 = vmatmul.mubr.f32.gmra.mrb[0].mxu0 %v117
    %v235 = vpop.f32.mrb[0].mxu0
    %v236 = vadd.f32 %v92, %v235
    %v237 = vpop.f32.mrb[0].mxu0
    %238 = vmatprep.mubr.f32.mxu0 0.0
    %239 = vmatmul.mubr.f32.gmra.mrb[0].mxu0 %v120
    %v240 = vpop.f32.mrb[0].mxu0
    %v241 = vadd.f32 %v92, %v240
    %v242 = vpop.f32.mrb[0].mxu0
    %243 = vmatprep.mubr.f32.mxu0 0.0
    %244 = vmatmul.mubr.f32.gmra.mrb[0].mxu0 %v123
    %v245 = vpop.f32.mrb[0].mxu0
    %v246 = vadd.f32 %v92, %v245
    %v247 = vpop.f32.mrb[0].mxu0
    %248 = vmatprep.mubr.f32.mxu0 0.0
    %249 = vmatmul.mubr.f32.gmra.mrb[0].mxu0 %v126
    %v250 = vpop.f32.mrb[0].mxu0
    %v251 = vadd.f32 %v92, %v250
    %v252 = vpop.f32.mrb[0].mxu0
    %253 = vmatprep.mubr.f32.mxu0 0.0
    %254 = vmatmul.mubr.f32.gmra.mrb[0].mxu0 %v129
    %v255 = vpop.f32.mrb[0].mxu0
    %v256 = vadd.f32 %v92, %v255
    %v257 = vpop.f32.mrb[0].mxu0
    %258 = vmatprep.mubr.f32.mxu0 0.0
    %259 = vmatmul.mubr.f32.gmra.mrb[0].mxu0 %v132
    %v260 = vpop.f32.mrb[0].mxu0
    %v261 = vadd.f32 %v92, %v260
    %v262 = vpop.f32.mrb[0].mxu0
    %263 = vdwg.mxu0
    %v264 = vlaneseq
    %v265 = vshrl.u32 %v264, 7
    %v266 = vadd.s32 %v265, 8
    %v267 = vadd.s32 %v265, 16
    %v268 = vadd.s32 %v265, 24
    %v269 = vadd.s32 %v265, 32
    %v270 = vadd.s32 %v265, 40
    %v271 = vadd.s32 %v265, 48
    %v272 = vadd.s32 %v265, 56
    %v273 = vadd.s32 %v265, 64
    %v274 = vadd.s32 %v265, 72
    %v275 = vadd.s32 %v265, 80
    %v276 = vadd.s32 %v265, 88
    %v277 = vadd.s32 %v265, 96
    %vm278 = vcmp.lt.s32.totalorder %v265, 98
    %vm279 = vcmp.lt.s32.totalorder %v266, 98
    %vm280 = vcmp.lt.s32.totalorder %v267, 98
    %vm281 = vcmp.lt.s32.totalorder %v268, 98
    %vm282 = vcmp.lt.s32.totalorder %v269, 98
    %vm283 = vcmp.lt.s32.totalorder %v270, 98
    %vm284 = vcmp.lt.s32.totalorder %v271, 98
    %vm285 = vcmp.lt.s32.totalorder %v272, 98
    %vm286 = vcmp.lt.s32.totalorder %v273, 98
    %vm287 = vcmp.lt.s32.totalorder %v274, 98
    %vm288 = vcmp.lt.s32.totalorder %v275, 98
    %vm289 = vcmp.lt.s32.totalorder %v276, 98
    %vm290 = vcmp.lt.s32.totalorder %v277, 98
    %v291 = vsel %vm278, 1, 0
    %v292 = vsel %vm279, 1, 0
    %v293 = vsel %vm280, 1, 0
    %v294 = vsel %vm281, 1, 0
    %v295 = vsel %vm282, 1, 0
    %v296 = vsel %vm283, 1, 0
    %v297 = vsel %vm284, 1, 0
    %v298 = vsel %vm285, 1, 0
    %v299 = vsel %vm286, 1, 0
    %v300 = vsel %vm287, 1, 0
    %v301 = vsel %vm288, 1, 0
    %v302 = vsel %vm289, 1, 0
    %v303 = vsel %vm290, 1, 0
    %v304 = vcvt.s32.f32 %v291
    %v305 = vcvt.s32.f32 %v292
    %v306 = vcvt.s32.f32 %v293
    %v307 = vcvt.s32.f32 %v294
    %v308 = vcvt.s32.f32 %v295
    %v309 = vcvt.s32.f32 %v296
    %v310 = vcvt.s32.f32 %v297
    %v311 = vcvt.s32.f32 %v298
    %v312 = vcvt.s32.f32 %v299
    %v313 = vcvt.s32.f32 %v300
    %v314 = vcvt.s32.f32 %v301
    %v315 = vcvt.s32.f32 %v302
    %v316 = vcvt.s32.f32 %v303
    %v317 = vmul.f32 %v201, %v304
    %v318 = vmul.f32 %v206, %v305
    %v319 = vmul.f32 %v211, %v306
    %v320 = vmul.f32 %v216, %v307
    %v321 = vmul.f32 %v221, %v308
    %v322 = vmul.f32 %v226, %v309
    %v323 = vmul.f32 %v231, %v310
    %v324 = vmul.f32 %v236, %v311
    %v325 = vmul.f32 %v241, %v312
    %v326 = vmul.f32 %v246, %v313
    %v327 = vmul.f32 %v251, %v314
    %v328 = vmul.f32 %v256, %v315
    %v329 = vmul.f32 %v261, %v316
    %v330 = vadd.f32 %v317, %v318
    %v331 = vadd.f32 %v330, %v319
    %v332 = vadd.f32 %v331, %v320
    %v333 = vadd.f32 %v332, %v321
    %v334 = vadd.f32 %v333, %v322
    %v335 = vadd.f32 %v334, %v323
    %v336 = vadd.f32 %v335, %v324
    %v337 = vadd.f32 %v336, %v325
    %v338 = vadd.f32 %v337, %v326
    %v339 = vadd.f32 %v338, %v327
    %v340 = vadd.f32 %v339, %v328
    %v341 = vadd.f32 %v340, %v329
    %v342 = vrot.slane %v341, 4
    %v343 = vadd.f32 %v341, %v342
    %v344 = vrot.slane %v343, 2
    %v345 = vadd.f32 %v343, %v344
    %v346 = vrot.slane %v345, 1
    %v347 = vadd.f32 %v345, %v346
    %v348 = vmul.f32 %v347, 0.010204081
    %v349 = vsub.f32 %v201, %v348
    %v350 = vsub.f32 %v206, %v348
    %v351 = vsub.f32 %v211, %v348
    %v352 = vsub.f32 %v216, %v348
    %v353 = vsub.f32 %v221, %v348
    %v354 = vsub.f32 %v226, %v348
    %v355 = vsub.f32 %v231, %v348
    %v356 = vsub.f32 %v236, %v348
    %v357 = vsub.f32 %v241, %v348
    %v358 = vsub.f32 %v246, %v348
    %v359 = vsub.f32 %v251, %v348
    %v360 = vsub.f32 %v256, %v348
    %v361 = vsub.f32 %v261, %v348
    %v362 = vmul.f32 %v349, %v349
    %v363 = vmul.f32 %v350, %v350
    %v364 = vmul.f32 %v351, %v351
    %v365 = vmul.f32 %v352, %v352
    %v366 = vmul.f32 %v353, %v353
    %v367 = vmul.f32 %v354, %v354
    %v368 = vmul.f32 %v355, %v355
    %v369 = vmul.f32 %v356, %v356
    %v370 = vmul.f32 %v357, %v357
    %v371 = vmul.f32 %v358, %v358
    %v372 = vmul.f32 %v359, %v359
    %v373 = vmul.f32 %v360, %v360
    %v374 = vmul.f32 %v361, %v361
    %v375 = vmul.f32 %v362, %v304
    %v376 = vmul.f32 %v363, %v305
    %v377 = vmul.f32 %v364, %v306
    %v378 = vmul.f32 %v365, %v307
    %v379 = vmul.f32 %v366, %v308
    %v380 = vmul.f32 %v367, %v309
    %v381 = vmul.f32 %v368, %v310
    %v382 = vmul.f32 %v369, %v311
    %v383 = vmul.f32 %v370, %v312
    %v384 = vmul.f32 %v371, %v313
    %v385 = vmul.f32 %v372, %v314
    %v386 = vmul.f32 %v373, %v315
    %v387 = vmul.f32 %v374, %v316
    %v388 = vadd.f32 %v375, %v376
    %v389 = vadd.f32 %v388, %v377
    %v390 = vadd.f32 %v389, %v378
    %v391 = vadd.f32 %v390, %v379
    %v392 = vadd.f32 %v391, %v380
    %v393 = vadd.f32 %v392, %v381
    %v394 = vadd.f32 %v393, %v382
    %v395 = vadd.f32 %v394, %v383
    %v396 = vadd.f32 %v395, %v384
    %v397 = vadd.f32 %v396, %v385
    %v398 = vadd.f32 %v397, %v386
    %v399 = vadd.f32 %v398, %v387
    %v400 = vrot.slane %v399, 4
    %v401 = vadd.f32 %v399, %v400
    %v402 = vrot.slane %v401, 2
    %v403 = vadd.f32 %v401, %v402
    %v404 = vrot.slane %v403, 1
    %v405 = vadd.f32 %v403, %v404
    %v406 = vmul.f32 %v405, 0.010204081
    %v407 = vadd.f32 %v406, 1e-05
    %v408 = vrsqrt.pop %v407
    %v409 = vmul.f32 %v349, %v408
    %v410 = vmul.f32 %v350, %v408
    %v411 = vmul.f32 %v351, %v408
    %v412 = vmul.f32 %v352, %v408
    %v413 = vmul.f32 %v353, %v408
    %v414 = vmul.f32 %v354, %v408
    %v415 = vmul.f32 %v355, %v408
    %v416 = vmul.f32 %v356, %v408
    %v417 = vmul.f32 %v357, %v408
    %v418 = vmul.f32 %v358, %v408
    %v419 = vmul.f32 %v359, %v408
    %v420 = vmul.f32 %v360, %v408
    %v421 = vmul.f32 %v361, %v408
    %v422 = vld [vmem:[#allocation6] sm:$0x1]
    %v424 = vlaneseq
    %v425 = vshrl.u32 %v424, 7
    %v426 = vsub.s32 0, %v425
    %v427 = vrot.slane %v422, %v426
    %v429 = vmul.f32 %v409, %v427
    %v430 = vmul.f32 %v410, %v427
    %v431 = vmul.f32 %v411, %v427
    %v432 = vmul.f32 %v412, %v427
    %v433 = vmul.f32 %v413, %v427
    %v434 = vmul.f32 %v414, %v427
    %v435 = vmul.f32 %v415, %v427
    %v436 = vmul.f32 %v416, %v427
    %v437 = vmul.f32 %v417, %v427
    %v438 = vmul.f32 %v418, %v427
    %v439 = vmul.f32 %v419, %v427
    %v440 = vmul.f32 %v420, %v427
    %v441 = vmul.f32 %v421, %v427
    %v442 = vld [vmem:[#allocation7] sm:$0x1]
    %v444 = vlaneseq
    %v445 = vshrl.u32 %v444, 7
    %v446 = vsub.s32 0, %v445
    %v447 = vrot.slane %v442, %v446
    %v449 = vadd.f32 %v429, %v447
    %v450 = vadd.f32 %v430, %v447
    %v451 = vadd.f32 %v431, %v447
    %v452 = vadd.f32 %v432, %v447
    %v453 = vadd.f32 %v433, %v447
    %v454 = vadd.f32 %v434, %v447
    %v455 = vadd.f32 %v435, %v447
    %v456 = vadd.f32 %v436, %v447
    %v457 = vadd.f32 %v437, %v447
    %v458 = vadd.f32 %v438, %v447
    %v459 = vadd.f32 %v439, %v447
    %v460 = vadd.f32 %v440, %v447
    %v461 = vadd.f32 %v441, %v447
    %v462 = vtanh.pop %v449
    %v463 = vtanh.pop %v450
    %v464 = vtanh.pop %v451
    %v465 = vtanh.pop %v452
    %v466 = vtanh.pop %v453
    %v467 = vtanh.pop %v454
    %v468 = vtanh.pop %v455
    %v469 = vtanh.pop %v456
    %v470 = vtanh.pop %v457
    %v471 = vtanh.pop %v458
    %v472 = vtanh.pop %v459
    %v473 = vtanh.pop %v460
    %v474 = vtanh.pop %v461
    %475 = vst [vmem:[%s5] sm:$0xff] %v462
    %476 = vst [vmem:[%s5 + $0x8] sm:$0xff] %v463
    %477 = vst [vmem:[%s5 + $0x10] sm:$0xff] %v464
    %478 = vst [vmem:[%s5 + $0x18] sm:$0xff] %v465
    %479 = vst [vmem:[%s5 + $0x20] sm:$0xff] %v466
    %480 = vst [vmem:[%s5 + $0x28] sm:$0xff] %v467
    %481 = vst [vmem:[%s5 + $0x30] sm:$0xff] %v468
    %482 = vst [vmem:[%s5 + $0x38] sm:$0xff] %v469
    %483 = vst [vmem:[%s5 + $0x40] sm:$0xff] %v470
    %484 = vst [vmem:[%s5 + $0x48] sm:$0xff] %v471
    %485 = vst [vmem:[%s5 + $0x50] sm:$0xff] %v472
    %486 = vst [vmem:[%s5 + $0x58] sm:$0xff] %v473
    %487 = vst [vmem:[%s5 + $0x60] sm:$0xff] %v474
    // Predicated region
    $region38: #{cnnae_forward.7} parent=1 // pred_check
      _
    $region39: #{cnnae_forward.7} parent=1 // pred_check_branch
      %489 = sbr.rel (0) target = $region41
    $region40: #{cnnae_forward.7} parent=1 // pred_region
      _
    $region41: #{cnnae_forward.7} parent=1 // pred_fallthru
      _
    // Predicated region
    $region42: #{cnnae_forward.7} parent=1 // pred_check
      _
    $region43: #{cnnae_forward.7} parent=1 // pred_check_branch
      %491 = sbr.rel (0) target = $region45
    $region44: #{cnnae_forward.7} parent=1 // pred_region
      _
    $region45: #{cnnae_forward.7} parent=1 // pred_fallthru
      _
    %492 = vsyncpa [#allocation3], 1
    %493 = vsyncpa [#allocation5], 1
    %494 = vsyncpa [#allocation8], 1

// kernel: cnnae_forward.8
$region0: #{cnnae_forward.8}
  #allocation0 [shape = 'u32[]', space=smem, size = 0x4, offset = 0x4, fixed_abs, tag = 'smem constant byte address 0x4 - core index']
  #allocation1 [shape = 'u32[144,128]{1,0:T(1,128)}', space=vmem, size = 0x12000, scoped, tag = 'internal scratch']
  %s0 = inlined_call_operand.vmem [shape: f32[888,400], index: 0, kind: input, shape index: {}]
  %s1 = inlined_call_operand.vmem [shape: f32[400,128], index: 1, kind: input, shape index: {}]
  %s2 = inlined_call_operand.vmem [shape: f32[1,128], index: 2, kind: input, shape index: {}]
  %s3 = inlined_call_operand.vmem [shape: f32[1,128], index: 3, kind: input, shape index: {}]
  %s4 = inlined_call_operand.vmem [shape: f32[1,128], index: 4, kind: input, shape index: {}]
  %s5 = inlined_call_operand.vmem [shape: f32[888,128], index: 5, kind: output, shape index: {}]
  %s6 = sld [smem:[#allocation0]]
  $region30: #{cnnae_forward.8} parent=0
    _
  %s8 = ssub.s32 1, %s6
  %s9 = scalar_select 0, %s8, %s6
  // Predicated region
  $region2: #{cnnae_forward.8} parent=0 // pred_check
    _
  $region3: #{cnnae_forward.8} parent=0 // pred_check_branch
    %11 = sbr.rel (0) target = $region5
  $region4: #{cnnae_forward.8} parent=0 // pred_region
    _
  $region5: #{cnnae_forward.8} parent=0 // pred_fallthru
    _
  // Predicated region
  $region6: #{cnnae_forward.8} parent=0 // pred_check
    _
  $region7: #{cnnae_forward.8} parent=0 // pred_check_branch
    %13 = sbr.rel (0) target = $region9
  $region8: #{cnnae_forward.8} parent=0 // pred_region
    _
  $region9: #{cnnae_forward.8} parent=0 // pred_fallthru
    _
  // Predicated region
  $region10: #{cnnae_forward.8} parent=0 // pred_check
    _
  $region11: #{cnnae_forward.8} parent=0 // pred_check_branch
    %15 = sbr.rel (0) target = $region13
  $region12: #{cnnae_forward.8} parent=0 // pred_region
    _
  $region13: #{cnnae_forward.8} parent=0 // pred_fallthru
    _
  // Predicated region
  $region14: #{cnnae_forward.8} parent=0 // pred_check
    _
  $region15: #{cnnae_forward.8} parent=0 // pred_check_branch
    %17 = sbr.rel (0) target = $region17
  $region16: #{cnnae_forward.8} parent=0 // pred_region
    _
  $region17: #{cnnae_forward.8} parent=0 // pred_fallthru
    _
  // Predicated region
  $region18: #{cnnae_forward.8} parent=0 // pred_check
    _
  $region19: #{cnnae_forward.8} parent=0 // pred_check_branch
    %19 = sbr.rel (0) target = $region21
  $region20: #{cnnae_forward.8} parent=0 // pred_region
    _
  $region21: #{cnnae_forward.8} parent=0 // pred_fallthru
    _
  %v20 = vld [vmem:[%s0] sm:$0xff]
  %v21 = vld [vmem:[%s0 + $0x8] sm:$0xff]
  %v22 = vld [vmem:[%s0 + $0x10] sm:$0xff]
  %v23 = vld [vmem:[%s0 + $0x18] sm:$0xff]
  %v24 = vld [vmem:[%s0 + $0x20] sm:$0xff]
  %v25 = vld [vmem:[%s0 + $0x28] sm:$0xff]
  %v26 = vld [vmem:[%s0 + $0x30] sm:$0xff]
  %v27 = vld [vmem:[%s0 + $0x38] sm:$0xff]
  %v28 = vld [vmem:[%s0 + $0x40] sm:$0xff]
  %v29 = vld [vmem:[%s0 + $0x48] sm:$0xff]
  %v30 = vld [vmem:[%s0 + $0x50] sm:$0xff]
  %v31 = vld [vmem:[%s0 + $0x58] sm:$0xff]
  %v32 = vld [vmem:[%s0 + $0x60] sm:$0xff]
  %v33 = vld [vmem:[%s0 + $0x68] sm:$0xff]
  %v34 = vld [vmem:[%s0 + $0x70] sm:$0xff]
  %v35 = vld [vmem:[%s0 + $0x78] sm:$0xff]
  %v36 = vld [vmem:[%s0 + $0x80] sm:$0xff]
  %v37 = vld [vmem:[%s0 + $0x88] sm:$0xff]
  %v38 = vld [vmem:[%s0 + $0x90] sm:$0xff]
  %v39 = vld [vmem:[%s0 + $0x98] sm:$0xff]
  %v40 = vld [vmem:[%s0 + $0xa0] sm:$0xff]
  %v41 = vld [vmem:[%s0 + $0xa8] sm:$0xff]
  %v42 = vld [vmem:[%s0 + $0xb0] sm:$0xff]
  %v43 = vld [vmem:[%s0 + $0xb8] sm:$0xff]
  %v44 = vld [vmem:[%s0 + $0xc0] sm:$0xff]
  %v45 = vld [vmem:[%s0 + $0xc8] sm:$0xff]
  %v46 = vld [vmem:[%s0 + $0xd0] sm:$0xff]
  %v47 = vld [vmem:[%s0 + $0xd8] sm:$0xff]
  %v48 = vld [vmem:[%s0 + $0xe0] sm:$0xff]
  %v49 = vld [vmem:[%s0 + $0xe8] sm:$0xff]
  %v50 = vld [vmem:[%s0 + $0xf0] sm:$0xff]
  %v51 = vld [vmem:[%s0 + $0xf8] sm:$0xff]
  %v52 = vld [vmem:[%s0 + $0x100] sm:$0xff]
  %v53 = vld [vmem:[%s0 + $0x108] sm:$0xff]
  %v54 = vld [vmem:[%s0 + $0x110] sm:$0xff]
  %v55 = vld [vmem:[%s0 + $0x118] sm:$0xff]
  %v56 = vld [vmem:[%s0 + $0x120] sm:$0xff]
  %v57 = vld [vmem:[%s0 + $0x128] sm:$0xff]
  %v58 = vld [vmem:[%s0 + $0x130] sm:$0xff]
  %v59 = vld [vmem:[%s0 + $0x138] sm:$0xff]
  %v60 = vld [vmem:[%s0 + $0x140] sm:$0xff]
  %v61 = vld [vmem:[%s0 + $0x148] sm:$0xff]
  %v62 = vld [vmem:[%s0 + $0x150] sm:$0xff]
  %v63 = vld [vmem:[%s0 + $0x158] sm:$0xff]
  %v64 = vld [vmem:[%s0 + $0x160] sm:$0xff]
  %v65 = vld [vmem:[%s0 + $0x168] sm:$0xff]
  %v66 = vld [vmem:[%s0 + $0x170] sm:$0xff]
  %v67 = vld [vmem:[%s0 + $0x178] sm:$0xff]
  %v68 = vld [vmem:[%s0 + $0x180] sm:$0xff]
  %v69 = vld [vmem:[%s0 + $0x188] sm:$0xff]
  %v70 = vld [vmem:[%s0 + $0x190] sm:$0xff]
  %v71 = vld [vmem:[%s0 + $0x198] sm:$0xff]
  %v72 = vld [vmem:[%s0 + $0x1a0] sm:$0xff]
  %v73 = vld [vmem:[%s0 + $0x1a8] sm:$0xff]
  %v74 = vld [vmem:[%s0 + $0x1b0] sm:$0xff]
  %v75 = vld [vmem:[%s0 + $0x1b8] sm:$0xff]
  %v76 = vld [vmem:[%s0 + $0x1c0] sm:$0xff]
  %v77 = vld [vmem:[%s0 + $0x1c8] sm:$0xff]
  %v78 = vld [vmem:[%s0 + $0x1d0] sm:$0xff]
  %v79 = vld [vmem:[%s0 + $0x1d8] sm:$0xff]
  %v80 = vld [vmem:[%s0 + $0x1e0] sm:$0xff]
  %v81 = vld [vmem:[%s0 + $0x1e8] sm:$0xff]
  %v82 = vld [vmem:[%s0 + $0x1f0] sm:$0xff]
  %v83 = vld [vmem:[%s0 + $0x1f8] sm:$0xff]
  %v84 = vld [vmem:[%s0 + $0x200] sm:$0xff]
  %v85 = vld [vmem:[%s0 + $0x208] sm:$0xff]
  %v86 = vld [vmem:[%s0 + $0x210] sm:$0xff]
  %v87 = vld [vmem:[%s0 + $0x218] sm:$0xff]
  %v88 = vld [vmem:[%s0 + $0x220] sm:$0xff]
  %v89 = vld [vmem:[%s0 + $0x228] sm:$0xff]
  %v90 = vld [vmem:[%s0 + $0x230] sm:$0xff]
  %v91 = vld [vmem:[%s0 + $0x238] sm:$0xff]
  %v92 = vld [vmem:[%s0 + $0x240] sm:$0xff]
  %v93 = vld [vmem:[%s0 + $0x248] sm:$0xff]
  %v94 = vld [vmem:[%s0 + $0x250] sm:$0xff]
  %v95 = vld [vmem:[%s0 + $0x258] sm:$0xff]
  %v96 = vld [vmem:[%s0 + $0x260] sm:$0xff]
  %v97 = vld [vmem:[%s0 + $0x268] sm:$0xff]
  %v98 = vld [vmem:[%s0 + $0x270] sm:$0xff]
  %v99 = vld [vmem:[%s0 + $0x278] sm:$0xff]
  %v100 = vld [vmem:[%s0 + $0x280] sm:$0xff]
  %v101 = vld [vmem:[%s0 + $0x288] sm:$0xff]
  %v102 = vld [vmem:[%s0 + $0x290] sm:$0xff]
  %v103 = vld [vmem:[%s0 + $0x298] sm:$0xff]
  %v104 = vld [vmem:[%s0 + $0x2a0] sm:$0xff]
  %v105 = vld [vmem:[%s0 + $0x2a8] sm:$0xff]
  %v106 = vld [vmem:[%s0 + $0x2b0] sm:$0xff]
  %v107 = vld [vmem:[%s0 + $0x2b8] sm:$0xff]
  %v108 = vld [vmem:[%s0 + $0x2c0] sm:$0xff]
  %v109 = vld [vmem:[%s0 + $0x2c8] sm:$0xff]
  %v110 = vld [vmem:[%s0 + $0x2d0] sm:$0xff]
  %v111 = vld [vmem:[%s0 + $0x2d8] sm:$0xff]
  %v112 = vld [vmem:[%s0 + $0x2e0] sm:$0xff]
  %v113 = vld [vmem:[%s0 + $0x2e8] sm:$0xff]
  %v114 = vld [vmem:[%s0 + $0x2f0] sm:$0xff]
  %v115 = vld [vmem:[%s0 + $0x2f8] sm:$0xff]
  %v116 = vld [vmem:[%s0 + $0x300] sm:$0xff]
  %v117 = vld [vmem:[%s0 + $0x308] sm:$0xff]
  %v118 = vld [vmem:[%s0 + $0x310] sm:$0xff]
  %v119 = vld [vmem:[%s0 + $0x318] sm:$0xff]
  %v120 = vld [vmem:[%s0 + $0x320] sm:$0xff]
  %v121 = vld [vmem:[%s0 + $0x328] sm:$0xff]
  %v122 = vld [vmem:[%s0 + $0x330] sm:$0xff]
  %v123 = vld [vmem:[%s0 + $0x338] sm:$0xff]
  %v124 = vld [vmem:[%s0 + $0x340] sm:$0xff]
  %v125 = vld [vmem:[%s0 + $0x348] sm:$0xff]
  %v126 = vld [vmem:[%s0 + $0x350] sm:$0xff]
  %v127 = vld [vmem:[%s0 + $0x358] sm:$0xff]
  %v128 = vld [vmem:[%s0 + $0x360] sm:$0xff]
  %v129 = vld [vmem:[%s0 + $0x368] sm:$0xff]
  %v130 = vld [vmem:[%s0 + $0x370] sm:$0xff]
  %v131 = vld [vmem:[%s0 + $0x378] sm:$0xff]
  %v132 = vld [vmem:[%s0 + $0x380] sm:$0xff]
  %v133 = vld [vmem:[%s0 + $0x388] sm:$0xff]
  %v134 = vld [vmem:[%s0 + $0x390] sm:$0xff]
  %v135 = vld [vmem:[%s0 + $0x398] sm:$0xff]
  %v136 = vld [vmem:[%s0 + $0x3a0] sm:$0xff]
  %v137 = vld [vmem:[%s0 + $0x3a8] sm:$0xff]
  %v138 = vld [vmem:[%s0 + $0x3b0] sm:$0xff]
  %v139 = vld [vmem:[%s0 + $0x3b8] sm:$0xff]
  %v140 = vld [vmem:[%s0 + $0x3c0] sm:$0xff]
  %v141 = vld [vmem:[%s0 + $0x3c8] sm:$0xff]
  %v142 = vld [vmem:[%s0 + $0x3d0] sm:$0xff]
  %v143 = vld [vmem:[%s0 + $0x3d8] sm:$0xff]
  %v144 = vld [vmem:[%s0 + $0x3e0] sm:$0xff]
  %v145 = vld [vmem:[%s0 + $0x3e8] sm:$0xff]
  %v146 = vld [vmem:[%s0 + $0x3f0] sm:$0xff]
  %v147 = vld [vmem:[%s0 + $0x3f8] sm:$0xff]
  %v148 = vld [vmem:[%s0 + $0x400] sm:$0xff]
  %v149 = vld [vmem:[%s0 + $0x408] sm:$0xff]
  %v150 = vld [vmem:[%s0 + $0x410] sm:$0xff]
  %v151 = vld [vmem:[%s0 + $0x418] sm:$0xff]
  %v152 = vld [vmem:[%s0 + $0x420] sm:$0xff]
  %v153 = vld [vmem:[%s0 + $0x428] sm:$0xff]
  %v154 = vld [vmem:[%s0 + $0x430] sm:$0xff]
  %v155 = vld [vmem:[%s0 + $0x438] sm:$0xff]
  %v156 = vld [vmem:[%s0 + $0x440] sm:$0xff]
  %v157 = vld [vmem:[%s0 + $0x448] sm:$0xff]
  %v158 = vld [vmem:[%s0 + $0x450] sm:$0xff]
  %v159 = vld [vmem:[%s0 + $0x458] sm:$0xff]
  %v160 = vld [vmem:[%s0 + $0x460] sm:$0xff]
  %v161 = vld [vmem:[%s0 + $0x468] sm:$0xff]
  %v162 = vld [vmem:[%s0 + $0x470] sm:$0xff]
  %v163 = vld [vmem:[%s0 + $0x478] sm:$0xff]
  %v164 = vld [vmem:[%s0 + $0x480] sm:$0xff]
  %v165 = vld [vmem:[%s0 + $0x488] sm:$0xff]
  %v166 = vld [vmem:[%s0 + $0x490] sm:$0xff]
  %v167 = vld [vmem:[%s0 + $0x498] sm:$0xff]
  %v168 = vld [vmem:[%s0 + $0x4a0] sm:$0xff]
  %v169 = vld [vmem:[%s0 + $0x4a8] sm:$0xff]
  %v170 = vld [vmem:[%s0 + $0x4b0] sm:$0xff]
  %v171 = vld [vmem:[%s0 + $0x4b8] sm:$0xff]
  %v172 = vld [vmem:[%s0 + $0x4c0] sm:$0xff]
  %v173 = vld [vmem:[%s0 + $0x4c8] sm:$0xff]
  %v174 = vld [vmem:[%s0 + $0x4d0] sm:$0xff]
  %v175 = vld [vmem:[%s0 + $0x4d8] sm:$0xff]
  %v176 = vld [vmem:[%s0 + $0x4e0] sm:$0xff]
  %v177 = vld [vmem:[%s0 + $0x4e8] sm:$0xff]
  %v178 = vld [vmem:[%s0 + $0x4f0] sm:$0xff]
  %v179 = vld [vmem:[%s0 + $0x4f8] sm:$0xff]
  %v180 = vld [vmem:[%s0 + $0x500] sm:$0xff]
  %v181 = vld [vmem:[%s0 + $0x508] sm:$0xff]
  %v182 = vld [vmem:[%s0 + $0x510] sm:$0xff]
  %v183 = vld [vmem:[%s0 + $0x518] sm:$0xff]
  %v184 = vld [vmem:[%s0 + $0x520] sm:$0xff]
  %v185 = vld [vmem:[%s0 + $0x528] sm:$0xff]
  %v186 = vld [vmem:[%s0 + $0x530] sm:$0xff]
  %v187 = vld [vmem:[%s0 + $0x538] sm:$0xff]
  %v188 = vld [vmem:[%s0 + $0x540] sm:$0xff]
  %v189 = vld [vmem:[%s0 + $0x548] sm:$0xff]
  %v190 = vld [vmem:[%s0 + $0x550] sm:$0xff]
  %v191 = vld [vmem:[%s0 + $0x558] sm:$0xff]
  %v192 = vld [vmem:[%s0 + $0x560] sm:$0xff]
  %v193 = vld [vmem:[%s0 + $0x568] sm:$0xff]
  %v194 = vld [vmem:[%s0 + $0x570] sm:$0xff]
  %v195 = vld [vmem:[%s0 + $0x578] sm:$0xff]
  %v196 = vld [vmem:[%s0 + $0x580] sm:$0xff]
  %v197 = vld [vmem:[%s0 + $0x588] sm:$0xff]
  %v198 = vld [vmem:[%s0 + $0x590] sm:$0xff]
  %v199 = vld [vmem:[%s0 + $0x598] sm:$0xff]
  %v200 = vld [vmem:[%s0 + $0x5a0] sm:$0xff]
  %v201 = vld [vmem:[%s0 + $0x5a8] sm:$0xff]
  %v202 = vld [vmem:[%s0 + $0x5b0] sm:$0xff]
  %v203 = vld [vmem:[%s0 + $0x5b8] sm:$0xff]
  %v204 = vld [vmem:[%s0 + $0x5c0] sm:$0xff]
  %v205 = vld [vmem:[%s0 + $0x5c8] sm:$0xff]
  %v206 = vld [vmem:[%s0 + $0x5d0] sm:$0xff]
  %v207 = vld [vmem:[%s0 + $0x5d8] sm:$0xff]
  %v208 = vld [vmem:[%s0 + $0x5e0] sm:$0xff]
  %v209 = vld [vmem:[%s0 + $0x5e8] sm:$0xff]
  %v210 = vld [vmem:[%s0 + $0x5f0] sm:$0xff]
  %v211 = vld [vmem:[%s0 + $0x5f8] sm:$0xff]
  %v212 = vld [vmem:[%s0 + $0x600] sm:$0xff]
  %v213 = vld [vmem:[%s0 + $0x608] sm:$0xff]
  %v214 = vld [vmem:[%s0 + $0x610] sm:$0xff]
  %v215 = vld [vmem:[%s0 + $0x618] sm:$0xff]
  %v216 = vld [vmem:[%s0 + $0x620] sm:$0xff]
  %v217 = vld [vmem:[%s0 + $0x628] sm:$0xff]
  %v218 = vld [vmem:[%s0 + $0x630] sm:$0xff]
  %v219 = vld [vmem:[%s0 + $0x638] sm:$0xff]
  %v220 = vld [vmem:[%s0 + $0x640] sm:$0xff]
  %v221 = vld [vmem:[%s0 + $0x648] sm:$0xff]
  %v222 = vld [vmem:[%s0 + $0x650] sm:$0xff]
  %v223 = vld [vmem:[%s0 + $0x658] sm:$0xff]
  %v224 = vld [vmem:[%s0 + $0x660] sm:$0xff]
  %v225 = vld [vmem:[%s0 + $0x668] sm:$0xff]
  %v226 = vld [vmem:[%s0 + $0x670] sm:$0xff]
  %v227 = vld [vmem:[%s0 + $0x678] sm:$0xff]
  %v228 = vld [vmem:[%s0 + $0x680] sm:$0xff]
  %v229 = vld [vmem:[%s0 + $0x688] sm:$0xff]
  %v230 = vld [vmem:[%s0 + $0x690] sm:$0xff]
  %v231 = vld [vmem:[%s0 + $0x698] sm:$0xff]
  %v232 = vld [vmem:[%s0 + $0x6a0] sm:$0xff]
  %v233 = vld [vmem:[%s0 + $0x6a8] sm:$0xff]
  %v234 = vld [vmem:[%s0 + $0x6b0] sm:$0xff]
  %v235 = vld [vmem:[%s0 + $0x6b8] sm:$0xff]
  %v236 = vld [vmem:[%s0 + $0x6c0] sm:$0xff]
  %v237 = vld [vmem:[%s0 + $0x6c8] sm:$0xff]
  %v238 = vld [vmem:[%s0 + $0x6d0] sm:$0xff]
  %v239 = vld [vmem:[%s0 + $0x6d8] sm:$0xff]
  %v240 = vld [vmem:[%s0 + $0x6e0] sm:$0xff]
  %v241 = vld [vmem:[%s0 + $0x6e8] sm:$0xff]
  %v242 = vld [vmem:[%s0 + $0x6f0] sm:$0xff]
  %v243 = vld [vmem:[%s0 + $0x6f8] sm:$0xff]
  %v244 = vld [vmem:[%s0 + $0x700] sm:$0xff]
  %v245 = vld [vmem:[%s0 + $0x708] sm:$0xff]
  %v246 = vld [vmem:[%s0 + $0x710] sm:$0xff]
  %v247 = vld [vmem:[%s0 + $0x718] sm:$0xff]
  %v248 = vld [vmem:[%s0 + $0x720] sm:$0xff]
  %v249 = vld [vmem:[%s0 + $0x728] sm:$0xff]
  %v250 = vld [vmem:[%s0 + $0x730] sm:$0xff]
  %v251 = vld [vmem:[%s0 + $0x738] sm:$0xff]
  %v252 = vld [vmem:[%s0 + $0x740] sm:$0xff]
  %v253 = vld [vmem:[%s0 + $0x748] sm:$0xff]
  %v254 = vld [vmem:[%s0 + $0x750] sm:$0xff]
  %v255 = vld [vmem:[%s0 + $0x758] sm:$0xff]
  %v256 = vld [vmem:[%s0 + $0x760] sm:$0xff]
  %v257 = vld [vmem:[%s0 + $0x768] sm:$0xff]
  %v258 = vld [vmem:[%s0 + $0x770] sm:$0xff]
  %v259 = vld [vmem:[%s0 + $0x778] sm:$0xff]
  %v260 = vld [vmem:[%s0 + $0x780] sm:$0xff]
  %v261 = vld [vmem:[%s0 + $0x788] sm:$0xff]
  %v262 = vld [vmem:[%s0 + $0x790] sm:$0xff]
  %v263 = vld [vmem:[%s0 + $0x798] sm:$0xff]
  %v264 = vld [vmem:[%s0 + $0x7a0] sm:$0xff]
  %v265 = vld [vmem:[%s0 + $0x7a8] sm:$0xff]
  %v266 = vld [vmem:[%s0 + $0x7b0] sm:$0xff]
  %v267 = vld [vmem:[%s0 + $0x7b8] sm:$0xff]
  %v268 = vld [vmem:[%s0 + $0x7c0] sm:$0xff]
  %v269 = vld [vmem:[%s0 + $0x7c8] sm:$0xff]
  %v270 = vld [vmem:[%s0 + $0x7d0] sm:$0xff]
  %v271 = vld [vmem:[%s0 + $0x7d8] sm:$0xff]
  %v272 = vld [vmem:[%s0 + $0x7e0] sm:$0xff]
  %v273 = vld [vmem:[%s0 + $0x7e8] sm:$0xff]
  %v274 = vld [vmem:[%s0 + $0x7f0] sm:$0xff]
  %v275 = vld [vmem:[%s0 + $0x7f8] sm:$0xff]
  %v276 = vld [vmem:[%s0 + $0x800] sm:$0xff]
  %v277 = vld [vmem:[%s0 + $0x808] sm:$0xff]
  %v278 = vld [vmem:[%s0 + $0x810] sm:$0xff]
  %v279 = vld [vmem:[%s0 + $0x818] sm:$0xff]
  %v280 = vld [vmem:[%s0 + $0x820] sm:$0xff]
  %v281 = vld [vmem:[%s0 + $0x828] sm:$0xff]
  %v282 = vld [vmem:[%s0 + $0x830] sm:$0xff]
  %v283 = vld [vmem:[%s0 + $0x838] sm:$0xff]
  %v284 = vld [vmem:[%s0 + $0x840] sm:$0xff]
  %v285 = vld [vmem:[%s0 + $0x848] sm:$0xff]
  %v286 = vld [vmem:[%s0 + $0x850] sm:$0xff]
  %v287 = vld [vmem:[%s0 + $0x858] sm:$0xff]
  %v288 = vld [vmem:[%s0 + $0x860] sm:$0xff]
  %v289 = vld [vmem:[%s0 + $0x868] sm:$0xff]
  %v290 = vld [vmem:[%s0 + $0x870] sm:$0xff]
  %v291 = vld [vmem:[%s0 + $0x878] sm:$0xff]
  %v292 = vld [vmem:[%s0 + $0x880] sm:$0xff]
  %v293 = vld [vmem:[%s0 + $0x888] sm:$0xff]
  %v294 = vld [vmem:[%s0 + $0x890] sm:$0xff]
  %v295 = vld [vmem:[%s0 + $0x898] sm:$0xff]
  %v296 = vld [vmem:[%s0 + $0x8a0] sm:$0xff]
  %v297 = vld [vmem:[%s0 + $0x8a8] sm:$0xff]
  %v298 = vld [vmem:[%s0 + $0x8b0] sm:$0xff]
  %v299 = vld [vmem:[%s0 + $0x8b8] sm:$0xff]
  %v300 = vld [vmem:[%s0 + $0x8c0] sm:$0xff]
  %v301 = vld [vmem:[%s0 + $0x8c8] sm:$0xff]
  %v302 = vld [vmem:[%s0 + $0x8d0] sm:$0xff]
  %v303 = vld [vmem:[%s0 + $0x8d8] sm:$0xff]
  %v304 = vld [vmem:[%s0 + $0x8e0] sm:$0xff]
  %v305 = vld [vmem:[%s0 + $0x8e8] sm:$0xff]
  %v306 = vld [vmem:[%s0 + $0x8f0] sm:$0xff]
  %v307 = vld [vmem:[%s0 + $0x8f8] sm:$0xff]
  %v308 = vld [vmem:[%s0 + $0x900] sm:$0xff]
  %v309 = vld [vmem:[%s0 + $0x908] sm:$0xff]
  %v310 = vld [vmem:[%s0 + $0x910] sm:$0xff]
  %v311 = vld [vmem:[%s0 + $0x918] sm:$0xff]
  %v312 = vld [vmem:[%s0 + $0x920] sm:$0xff]
  %v313 = vld [vmem:[%s0 + $0x928] sm:$0xff]
  %v314 = vld [vmem:[%s0 + $0x930] sm:$0xff]
  %v315 = vld [vmem:[%s0 + $0x938] sm:$0xff]
  %v316 = vld [vmem:[%s0 + $0x940] sm:$0xff]
  %v317 = vld [vmem:[%s0 + $0x948] sm:$0xff]
  %v318 = vld [vmem:[%s0 + $0x950] sm:$0xff]
  %v319 = vld [vmem:[%s0 + $0x958] sm:$0xff]
  %v320 = vld [vmem:[%s0 + $0x960] sm:$0xff]
  %v321 = vld [vmem:[%s0 + $0x968] sm:$0xff]
  %v322 = vld [vmem:[%s0 + $0x970] sm:$0xff]
  %v323 = vld [vmem:[%s0 + $0x978] sm:$0xff]
  %v324 = vld [vmem:[%s0 + $0x980] sm:$0xff]
  %v325 = vld [vmem:[%s0 + $0x988] sm:$0xff]
  %v326 = vld [vmem:[%s0 + $0x990] sm:$0xff]
  %v327 = vld [vmem:[%s0 + $0x998] sm:$0xff]
  %v328 = vld [vmem:[%s0 + $0x9a0] sm:$0xff]
  %v329 = vld [vmem:[%s0 + $0x9a8] sm:$0xff]
  %v330 = vld [vmem:[%s0 + $0x9b0] sm:$0xff]
  %v331 = vld [vmem:[%s0 + $0x9b8] sm:$0xff]
  %v332 = vld [vmem:[%s0 + $0x9c0] sm:$0xff]
  %v333 = vld [vmem:[%s0 + $0x9c8] sm:$0xff]
  %v334 = vld [vmem:[%s0 + $0x9d0] sm:$0xff]
  %v335 = vld [vmem:[%s0 + $0x9d8] sm:$0xff]
  %v336 = vld [vmem:[%s0 + $0x9e0] sm:$0xff]
  %v337 = vld [vmem:[%s0 + $0x9e8] sm:$0xff]
  %v338 = vld [vmem:[%s0 + $0x9f0] sm:$0xff]
  %v339 = vld [vmem:[%s0 + $0x9f8] sm:$0xff]
  %v340 = vld [vmem:[%s0 + $0xa00] sm:$0xff]
  %v341 = vld [vmem:[%s0 + $0xa08] sm:$0xff]
  %v342 = vld [vmem:[%s0 + $0xa10] sm:$0xff]
  %v343 = vld [vmem:[%s0 + $0xa18] sm:$0xff]
  %v344 = vld [vmem:[%s0 + $0xa20] sm:$0xff]
  %v345 = vld [vmem:[%s0 + $0xa28] sm:$0xff]
  %v346 = vld [vmem:[%s0 + $0xa30] sm:$0xff]
  %v347 = vld [vmem:[%s0 + $0xa38] sm:$0xff]
  %v348 = vld [vmem:[%s0 + $0xa40] sm:$0xff]
  %v349 = vld [vmem:[%s0 + $0xa48] sm:$0xff]
  %v350 = vld [vmem:[%s0 + $0xa50] sm:$0xff]
  %v351 = vld [vmem:[%s0 + $0xa58] sm:$0xff]
  %v352 = vld [vmem:[%s0 + $0xa60] sm:$0xff]
  %v353 = vld [vmem:[%s0 + $0xa68] sm:$0xff]
  %v354 = vld [vmem:[%s0 + $0xa70] sm:$0xff]
  %v355 = vld [vmem:[%s0 + $0xa78] sm:$0xff]
  %v356 = vld [vmem:[%s0 + $0xa80] sm:$0xff]
  %v357 = vld [vmem:[%s0 + $0xa88] sm:$0xff]
  %v358 = vld [vmem:[%s0 + $0xa90] sm:$0xff]
  %v359 = vld [vmem:[%s0 + $0xa98] sm:$0xff]
  %v360 = vld [vmem:[%s0 + $0xaa0] sm:$0xff]
  %v361 = vld [vmem:[%s0 + $0xaa8] sm:$0xff]
  %v362 = vld [vmem:[%s0 + $0xab0] sm:$0xff]
  %v363 = vld [vmem:[%s0 + $0xab8] sm:$0xff]
  %v364 = vld [vmem:[%s0 + $0xac0] sm:$0xff]
  %v365 = vld [vmem:[%s0 + $0xac8] sm:$0xff]
  %v366 = vld [vmem:[%s0 + $0xad0] sm:$0xff]
  %v367 = vld [vmem:[%s0 + $0xad8] sm:$0xff]
  %v368 = vld [vmem:[%s0 + $0xae0] sm:$0xff]
  %v369 = vld [vmem:[%s0 + $0xae8] sm:$0xff]
  %v370 = vld [vmem:[%s0 + $0xaf0] sm:$0xff]
  %v371 = vld [vmem:[%s0 + $0xaf8] sm:$0xff]
  %v372 = vld [vmem:[%s0 + $0xb00] sm:$0xff]
  %v373 = vld [vmem:[%s0 + $0xb08] sm:$0xff]
  %v374 = vld [vmem:[%s0 + $0xb10] sm:$0xff]
  %v375 = vld [vmem:[%s0 + $0xb18] sm:$0xff]
  %v376 = vld [vmem:[%s0 + $0xb20] sm:$0xff]
  %v377 = vld [vmem:[%s0 + $0xb28] sm:$0xff]
  %v378 = vld [vmem:[%s0 + $0xb30] sm:$0xff]
  %v379 = vld [vmem:[%s0 + $0xb38] sm:$0xff]
  %v380 = vld [vmem:[%s0 + $0xb40] sm:$0xff]
  %v381 = vld [vmem:[%s0 + $0xb48] sm:$0xff]
  %v382 = vld [vmem:[%s0 + $0xb50] sm:$0xff]
  %v383 = vld [vmem:[%s0 + $0xb58] sm:$0xff]
  %v384 = vld [vmem:[%s0 + $0xb60] sm:$0xff]
  %v385 = vld [vmem:[%s0 + $0xb68] sm:$0xff]
  %v386 = vld [vmem:[%s0 + $0xb70] sm:$0xff]
  %v387 = vld [vmem:[%s0 + $0xb78] sm:$0xff]
  %v388 = vld [vmem:[%s0 + $0xb80] sm:$0xff]
  %v389 = vld [vmem:[%s0 + $0xb88] sm:$0xff]
  %v390 = vld [vmem:[%s0 + $0xb90] sm:$0xff]
  %v391 = vld [vmem:[%s0 + $0xb98] sm:$0xff]
  %v392 = vld [vmem:[%s0 + $0xba0] sm:$0xff]
  %v393 = vld [vmem:[%s0 + $0xba8] sm:$0xff]
  %v394 = vld [vmem:[%s0 + $0xbb0] sm:$0xff]
  %v395 = vld [vmem:[%s0 + $0xbb8] sm:$0xff]
  %v396 = vld [vmem:[%s0 + $0xbc0] sm:$0xff]
  %v397 = vld [vmem:[%s0 + $0xbc8] sm:$0xff]
  %v398 = vld [vmem:[%s0 + $0xbd0] sm:$0xff]
  %v399 = vld [vmem:[%s0 + $0xbd8] sm:$0xff]
  %v400 = vld [vmem:[%s0 + $0xbe0] sm:$0xff]
  %v401 = vld [vmem:[%s0 + $0xbe8] sm:$0xff]
  %v402 = vld [vmem:[%s0 + $0xbf0] sm:$0xff]
  %v403 = vld [vmem:[%s0 + $0xbf8] sm:$0xff]
  %v404 = vld [vmem:[%s0 + $0xc00] sm:$0xff]
  %v405 = vld [vmem:[%s0 + $0xc08] sm:$0xff]
  %v406 = vld [vmem:[%s0 + $0xc10] sm:$0xff]
  %v407 = vld [vmem:[%s0 + $0xc18] sm:$0xff]
  %v408 = vld [vmem:[%s0 + $0xc20] sm:$0xff]
  %v409 = vld [vmem:[%s0 + $0xc28] sm:$0xff]
  %v410 = vld [vmem:[%s0 + $0xc30] sm:$0xff]
  %v411 = vld [vmem:[%s0 + $0xc38] sm:$0xff]
  %v412 = vld [vmem:[%s0 + $0xc40] sm:$0xff]
  %v413 = vld [vmem:[%s0 + $0xc48] sm:$0xff]
  %v414 = vld [vmem:[%s0 + $0xc50] sm:$0xff]
  %v415 = vld [vmem:[%s0 + $0xc58] sm:$0xff]
  %v416 = vld [vmem:[%s0 + $0xc60] sm:$0xff]
  %v417 = vld [vmem:[%s0 + $0xc68] sm:$0xff]
  %v418 = vld [vmem:[%s0 + $0xc70] sm:$0xff]
  %v419 = vld [vmem:[%s0 + $0xc78] sm:$0xff]
  %v420 = vld [vmem:[%s0 + $0xc80] sm:$0xff]
  %v421 = vld [vmem:[%s0 + $0xc88] sm:$0xff]
  %v422 = vld [vmem:[%s0 + $0xc90] sm:$0xff]
  %v423 = vld [vmem:[%s0 + $0xc98] sm:$0xff]
  %v424 = vld [vmem:[%s0 + $0xca0] sm:$0xff]
  %v425 = vld [vmem:[%s0 + $0xca8] sm:$0xff]
  %v426 = vld [vmem:[%s0 + $0xcb0] sm:$0xff]
  %v427 = vld [vmem:[%s0 + $0xcb8] sm:$0xff]
  %v428 = vld [vmem:[%s0 + $0xcc0] sm:$0xff]
  %v429 = vld [vmem:[%s0 + $0xcc8] sm:$0xff]
  %v430 = vld [vmem:[%s0 + $0xcd0] sm:$0xff]
  %v431 = vld [vmem:[%s0 + $0xcd8] sm:$0xff]
  %v432 = vld [vmem:[%s0 + $0xce0] sm:$0xff]
  %v433 = vld [vmem:[%s0 + $0xce8] sm:$0xff]
  %v434 = vld [vmem:[%s0 + $0xcf0] sm:$0xff]
  %v435 = vld [vmem:[%s0 + $0xcf8] sm:$0xff]
  %v436 = vld [vmem:[%s0 + $0xd00] sm:$0xff]
  %v437 = vld [vmem:[%s0 + $0xd08] sm:$0xff]
  %v438 = vld [vmem:[%s0 + $0xd10] sm:$0xff]
  %v439 = vld [vmem:[%s0 + $0xd18] sm:$0xff]
  %v440 = vld [vmem:[%s0 + $0xd20] sm:$0xff]
  %v441 = vld [vmem:[%s0 + $0xd28] sm:$0xff]
  %v442 = vld [vmem:[%s0 + $0xd30] sm:$0xff]
  %v443 = vld [vmem:[%s0 + $0xd38] sm:$0xff]
  %v444 = vld [vmem:[%s0 + $0xd40] sm:$0xff]
  %v445 = vld [vmem:[%s0 + $0xd48] sm:$0xff]
  %v446 = vld [vmem:[%s0 + $0xd50] sm:$0xff]
  %v447 = vld [vmem:[%s0 + $0xd58] sm:$0xff]
  %v448 = vld [vmem:[%s0 + $0xd60] sm:$0xff]
  %v449 = vld [vmem:[%s0 + $0xd68] sm:$0xff]
  %v450 = vld [vmem:[%s0 + $0xd70] sm:$0xff]
  %v451 = vld [vmem:[%s0 + $0xd78] sm:$0xff]
  %v452 = vld [vmem:[%s0 + $0xd80] sm:$0xff]
  %v453 = vld [vmem:[%s0 + $0xd88] sm:$0xff]
  %v454 = vld [vmem:[%s0 + $0xd90] sm:$0xff]
  %v455 = vld [vmem:[%s0 + $0xd98] sm:$0xff]
  %v456 = vld [vmem:[%s0 + $0xda0] sm:$0xff]
  %v457 = vld [vmem:[%s0 + $0xda8] sm:$0xff]
  %v458 = vld [vmem:[%s0 + $0xdb0] sm:$0xff]
  %v459 = vld [vmem:[%s0 + $0xdb8] sm:$0xff]
  %v460 = vld [vmem:[%s0 + $0xdc0] sm:$0xff]
  %v461 = vld [vmem:[%s0 + $0xdc8] sm:$0xff]
  %v462 = vld [vmem:[%s0 + $0xdd0] sm:$0xff]
  %v463 = vld [vmem:[%s0 + $0xdd8] sm:$0xff]
  %v464 = vld [vmem:[%s1] sm:$0xff]
  %v465 = vld [vmem:[%s1 + $0x8] sm:$0xff]
  %v466 = vld [vmem:[%s1 + $0x10] sm:$0xff]
  %v467 = vld [vmem:[%s1 + $0x18] sm:$0xff]
  %v468 = vld [vmem:[%s1 + $0x20] sm:$0xff]
  %v469 = vld [vmem:[%s1 + $0x28] sm:$0xff]
  %v470 = vld [vmem:[%s1 + $0x30] sm:$0xff]
  %v471 = vld [vmem:[%s1 + $0x38] sm:$0xff]
  %v472 = vld [vmem:[%s1 + $0x40] sm:$0xff]
  %v473 = vld [vmem:[%s1 + $0x48] sm:$0xff]
  %v474 = vld [vmem:[%s1 + $0x50] sm:$0xff]
  %v475 = vld [vmem:[%s1 + $0x58] sm:$0xff]
  %v476 = vld [vmem:[%s1 + $0x60] sm:$0xff]
  %v477 = vld [vmem:[%s1 + $0x68] sm:$0xff]
  %v478 = vld [vmem:[%s1 + $0x70] sm:$0xff]
  %v479 = vld [vmem:[%s1 + $0x78] sm:$0xff]
  %v480 = vld [vmem:[%s1 + $0x80] sm:$0xff]
  %v481 = vld [vmem:[%s1 + $0x88] sm:$0xff]
  %v482 = vld [vmem:[%s1 + $0x90] sm:$0xff]
  %v483 = vld [vmem:[%s1 + $0x98] sm:$0xff]
  %v484 = vld [vmem:[%s1 + $0xa0] sm:$0xff]
  %v485 = vld [vmem:[%s1 + $0xa8] sm:$0xff]
  %v486 = vld [vmem:[%s1 + $0xb0] sm:$0xff]
  %v487 = vld [vmem:[%s1 + $0xb8] sm:$0xff]
  %v488 = vld [vmem:[%s1 + $0xc0] sm:$0xff]
  %v489 = vld [vmem:[%s1 + $0xc8] sm:$0xff]
  %v490 = vld [vmem:[%s1 + $0xd0] sm:$0xff]
  %v491 = vld [vmem:[%s1 + $0xd8] sm:$0xff]
  %v492 = vld [vmem:[%s1 + $0xe0] sm:$0xff]
  %v493 = vld [vmem:[%s1 + $0xe8] sm:$0xff]
  %v494 = vld [vmem:[%s1 + $0xf0] sm:$0xff]
  %v495 = vld [vmem:[%s1 + $0xf8] sm:$0xff]
  %v496 = vld [vmem:[%s1 + $0x100] sm:$0xff]
  %v497 = vld [vmem:[%s1 + $0x108] sm:$0xff]
  %v498 = vld [vmem:[%s1 + $0x110] sm:$0xff]
  %v499 = vld [vmem:[%s1 + $0x118] sm:$0xff]
  %v500 = vld [vmem:[%s1 + $0x120] sm:$0xff]
  %v501 = vld [vmem:[%s1 + $0x128] sm:$0xff]
  %v502 = vld [vmem:[%s1 + $0x130] sm:$0xff]
  %v503 = vld [vmem:[%s1 + $0x138] sm:$0xff]
  %v504 = vld [vmem:[%s1 + $0x140] sm:$0xff]
  %v505 = vld [vmem:[%s1 + $0x148] sm:$0xff]
  %v506 = vld [vmem:[%s1 + $0x150] sm:$0xff]
  %v507 = vld [vmem:[%s1 + $0x158] sm:$0xff]
  %v508 = vld [vmem:[%s1 + $0x160] sm:$0xff]
  %v509 = vld [vmem:[%s1 + $0x168] sm:$0xff]
  %v510 = vld [vmem:[%s1 + $0x170] sm:$0xff]
  %v511 = vld [vmem:[%s1 + $0x178] sm:$0xff]
  %v512 = vld [vmem:[%s1 + $0x180] sm:$0xff]
  %v513 = vld [vmem:[%s1 + $0x188] sm:$0xff]
  %v514 = vld [vmem:[%s2] sm:$0x1]
  %v516 = vlaneseq
  %v517 = vshrl.u32 %v516, 7
  %v518 = vsub.s32 0, %v517
  %v519 = vrot.slane %v514, %v518
  %vm521 = vcmask 130048
  %v523 = vsel %vm521, %v23, 0
  %v526 = vsel %vm521, %v27, 0
  %v529 = vsel %vm521, %v31, 0
  %v532 = vsel %vm521, %v35, 0
  %v535 = vsel %vm521, %v39, 0
  %v538 = vsel %vm521, %v43, 0
  %v541 = vsel %vm521, %v47, 0
  %v544 = vsel %vm521, %v51, 0
  %v547 = vsel %vm521, %v55, 0
  %v550 = vsel %vm521, %v59, 0
  %v553 = vsel %vm521, %v63, 0
  %v556 = vsel %vm521, %v67, 0
  %v559 = vsel %vm521, %v71, 0
  %v562 = vsel %vm521, %v75, 0
  %v565 = vsel %vm521, %v79, 0
  %v568 = vsel %vm521, %v83, 0
  %v571 = vsel %vm521, %v87, 0
  %v574 = vsel %vm521, %v91, 0
  %v577 = vsel %vm521, %v95, 0
  %v580 = vsel %vm521, %v99, 0
  %v583 = vsel %vm521, %v103, 0
  %v586 = vsel %vm521, %v107, 0
  %v589 = vsel %vm521, %v111, 0
  %v592 = vsel %vm521, %v115, 0
  %v595 = vsel %vm521, %v119, 0
  %v598 = vsel %vm521, %v123, 0
  %v601 = vsel %vm521, %v127, 0
  %v604 = vsel %vm521, %v131, 0
  %v607 = vsel %vm521, %v135, 0
  %v610 = vsel %vm521, %v139, 0
  %v613 = vsel %vm521, %v143, 0
  %v616 = vsel %vm521, %v147, 0
  %v619 = vsel %vm521, %v151, 0
  %v622 = vsel %vm521, %v155, 0
  %v625 = vsel %vm521, %v159, 0
  %v628 = vsel %vm521, %v163, 0
  %v631 = vsel %vm521, %v167, 0
  %v634 = vsel %vm521, %v171, 0
  %v637 = vsel %vm521, %v175, 0
  %v640 = vsel %vm521, %v179, 0
  %v643 = vsel %vm521, %v183, 0
  %v646 = vsel %vm521, %v187, 0
  %v649 = vsel %vm521, %v191, 0
  %v652 = vsel %vm521, %v195, 0
  %v655 = vsel %vm521, %v199, 0
  %v658 = vsel %vm521, %v203, 0
  %v661 = vsel %vm521, %v207, 0
  %v664 = vsel %vm521, %v211, 0
  %v667 = vsel %vm521, %v215, 0
  %v670 = vsel %vm521, %v219, 0
  %v673 = vsel %vm521, %v223, 0
  %v676 = vsel %vm521, %v227, 0
  %v679 = vsel %vm521, %v231, 0
  %v682 = vsel %vm521, %v235, 0
  %v685 = vsel %vm521, %v239, 0
  %v688 = vsel %vm521, %v243, 0
  %v691 = vsel %vm521, %v247, 0
  %v694 = vsel %vm521, %v251, 0
  %v697 = vsel %vm521, %v255, 0
  %v700 = vsel %vm521, %v259, 0
  %v703 = vsel %vm521, %v263, 0
  %v706 = vsel %vm521, %v267, 0
  %v709 = vsel %vm521, %v271, 0
  %v712 = vsel %vm521, %v275, 0
  %v715 = vsel %vm521, %v279, 0
  %v718 = vsel %vm521, %v283, 0
  %v721 = vsel %vm521, %v287, 0
  %v724 = vsel %vm521, %v291, 0
  %v727 = vsel %vm521, %v295, 0
  %v730 = vsel %vm521, %v299, 0
  %v733 = vsel %vm521, %v303, 0
  %v736 = vsel %vm521, %v307, 0
  %v739 = vsel %vm521, %v311, 0
  %v742 = vsel %vm521, %v315, 0
  %v745 = vsel %vm521, %v319, 0
  %v748 = vsel %vm521, %v323, 0
  %v751 = vsel %vm521, %v327, 0
  %v754 = vsel %vm521, %v331, 0
  %v757 = vsel %vm521, %v335, 0
  %v760 = vsel %vm521, %v339, 0
  %v763 = vsel %vm521, %v343, 0
  %v766 = vsel %vm521, %v347, 0
  %v769 = vsel %vm521, %v351, 0
  %v772 = vsel %vm521, %v355, 0
  %v775 = vsel %vm521, %v359, 0
  %v778 = vsel %vm521, %v363, 0
  %v781 = vsel %vm521, %v367, 0
  %v784 = vsel %vm521, %v371, 0
  %v787 = vsel %vm521, %v375, 0
  %v790 = vsel %vm521, %v379, 0
  %v793 = vsel %vm521, %v383, 0
  %v796 = vsel %vm521, %v387, 0
  %v799 = vsel %vm521, %v391, 0
  %v802 = vsel %vm521, %v395, 0
  %v805 = vsel %vm521, %v399, 0
  %v808 = vsel %vm521, %v403, 0
  %v811 = vsel %vm521, %v407, 0
  %v814 = vsel %vm521, %v411, 0
  %v817 = vsel %vm521, %v415, 0
  %v820 = vsel %vm521, %v419, 0
  %v823 = vsel %vm521, %v423, 0
  %v826 = vsel %vm521, %v427, 0
  %v829 = vsel %vm521, %v431, 0
  %v832 = vsel %vm521, %v435, 0
  %v835 = vsel %vm521, %v439, 0
  %v838 = vsel %vm521, %v443, 0
  %v841 = vsel %vm521, %v447, 0
  %v844 = vsel %vm521, %v451, 0
  %v847 = vsel %vm521, %v455, 0
  %v850 = vsel %vm521, %v459, 0
  %v853 = vsel %vm521, %v463, 0
  %855 = vmatprep.subr.mxu0 0.0
  %856 = vmatpush1.msra.mxu0 %v464
  %857 = vmatprep.subr.mxu0 0.0
  %858 = vmatpush1.msra.mxu0 %v465
  %859 = vmatprep.subr.mxu0 0.0
  %860 = vmatpush1.msra.mxu0 %v466
  %861 = vmatprep.subr.mxu0 0.0
  %862 = vmatpush1.msra.mxu0 %v467
  %863 = vmatprep.subr.mxu0 0.0
  %864 = vmatpush1.msra.mxu0 %v468
  %865 = vmatprep.subr.mxu0 0.0
  %866 = vmatpush1.msra.mxu0 %v469
  %867 = vmatprep.subr.mxu0 0.0
  %868 = vmatpush1.msra.mxu0 %v470
  %869 = vmatprep.subr.mxu0 0.0
  %870 = vmatpush1.msra.mxu0 %v471
  %871 = vmatprep.subr.mxu0 0.0
  %872 = vmatpush1.msra.mxu0 %v472
  %873 = vmatprep.subr.mxu0 0.0
  %874 = vmatpush1.msra.mxu0 %v473
  %875 = vmatprep.subr.mxu0 0.0
  %876 = vmatpush1.msra.mxu0 %v474
  %877 = vmatprep.subr.mxu0 0.0
  %878 = vmatpush1.msra.mxu0 %v475
  %879 = vmatprep.subr.mxu0 0.0
  %880 = vmatpush1.msra.mxu0 %v476
  %881 = vmatprep.subr.mxu0 0.0
  %882 = vmatpush1.msra.mxu0 %v477
  %883 = vmatprep.subr.mxu0 0.0
  %884 = vmatpush1.msra.mxu0 %v478
  %885 = vmatprep.subr.mxu0 0.0
  %886 = vmatpush1.msra.mxu0 %v479
  %887 = vmatprep.subr.mxu0 0.0
  %888 = vmatpush1.msra.mxu0 %v480
  %889 = vmatprep.subr.mxu0 0.0
  %890 = vmatpush1.msra.mxu0 %v481
  %891 = vmatprep.subr.mxu0 0.0
  %892 = vmatpush1.msra.mxu0 %v482
  %893 = vmatprep.subr.mxu0 0.0
  %894 = vmatpush1.msra.mxu0 %v483
  %895 = vmatprep.subr.mxu0 0.0
  %896 = vmatpush1.msra.mxu0 %v484
  %897 = vmatprep.subr.mxu0 0.0
  %898 = vmatpush1.msra.mxu0 %v485
  %899 = vmatprep.subr.mxu0 0.0
  %900 = vmatpush1.msra.mxu0 %v486
  %901 = vmatprep.subr.mxu0 0.0
  %902 = vmatpush1.msra.mxu0 %v487
  %903 = vmatprep.subr.mxu0 0.0
  %904 = vmatpush1.msra.mxu0 %v488
  %905 = vmatprep.subr.mxu0 0.0
  %906 = vmatpush1.msra.mxu0 %v489
  %907 = vmatprep.subr.mxu0 0.0
  %908 = vmatpush1.msra.mxu0 %v490
  %909 = vmatprep.subr.mxu0 0.0
  %910 = vmatpush1.msra.mxu0 %v491
  %911 = vmatprep.subr.mxu0 0.0
  %912 = vmatpush1.msra.mxu0 %v492
  %913 = vmatprep.subr.mxu0 0.0
  %914 = vmatpush1.msra.mxu0 %v493
  %915 = vmatprep.subr.mxu0 0.0
  %916 = vmatpush1.msra.mxu0 %v494
  %917 = vmatprep.subr.mxu0 0.0
  %918 = vmatpush1.msra.mxu0 %v495
  %919 = vmatprep.mubr.f32.mxu0 %v21
  %920 = vmatmul.mubr.f32.gmra.mrb[0].mxu0 %v20
  %v921 = vpop.f32.mrb[0].mxu0
  %v922 = vadd.f32 %v519, %v921
  %v923 = vpop.f32.mrb[0].mxu0
  %924 = vmatprep.mubr.f32.mxu0 %v25
  %925 = vmatmul.mubr.f32.gmra.mrb[0].mxu0 %v24
  %v926 = vpop.f32.mrb[0].mxu0
  %v927 = vadd.f32 %v519, %v926
  %v928 = vpop.f32.mrb[0].mxu0
  %929 = vmatprep.mubr.f32.mxu0 %v29
  %930 = vmatmul.mubr.f32.gmra.mrb[0].mxu0 %v28
  %v931 = vpop.f32.mrb[0].mxu0
  %v932 = vadd.f32 %v519, %v931
  %v933 = vpop.f32.mrb[0].mxu0
  %934 = vmatprep.mubr.f32.mxu0 %v33
  %935 = vmatmul.mubr.f32.gmra.mrb[0].mxu0 %v32
  %v936 = vpop.f32.mrb[0].mxu0
  %v937 = vadd.f32 %v519, %v936
  %v938 = vpop.f32.mrb[0].mxu0
  %939 = vmatprep.mubr.f32.mxu0 %v37
  %940 = vmatmul.mubr.f32.gmra.mrb[0].mxu0 %v36
  %v941 = vpop.f32.mrb[0].mxu0
  %v942 = vadd.f32 %v519, %v941
  %v943 = vpop.f32.mrb[0].mxu0
  %944 = vmatprep.mubr.f32.mxu0 %v41
  %945 = vmatmul.mubr.f32.gmra.mrb[0].mxu0 %v40
  %v946 = vpop.f32.mrb[0].mxu0
  %v947 = vadd.f32 %v519, %v946
  %v948 = vpop.f32.mrb[0].mxu0
  %949 = vmatprep.mubr.f32.mxu0 %v45
  %950 = vmatmul.mubr.f32.gmra.mrb[0].mxu0 %v44
  %v951 = vpop.f32.mrb[0].mxu0
  %v952 = vadd.f32 %v519, %v951
  %v953 = vpop.f32.mrb[0].mxu0
  %954 = vmatprep.mubr.f32.mxu0 %v49
  %955 = vmatmul.mubr.f32.gmra.mrb[0].mxu0 %v48
  %v956 = vpop.f32.mrb[0].mxu0
  %v957 = vadd.f32 %v519, %v956
  %v958 = vpop.f32.mrb[0].mxu0
  %959 = vmatprep.mubr.f32.mxu0 %v53
  %960 = vmatmul.mubr.f32.gmra.mrb[0].mxu0 %v52
  %v961 = vpop.f32.mrb[0].mxu0
  %v962 = vadd.f32 %v519, %v961
  %v963 = vpop.f32.mrb[0].mxu0
  %964 = vmatprep.mubr.f32.mxu0 %v57
  %965 = vmatmul.mubr.f32.gmra.mrb[0].mxu0 %v56
  %v966 = vpop.f32.mrb[0].mxu0
  %v967 = vadd.f32 %v519, %v966
  %v968 = vpop.f32.mrb[0].mxu0
  %969 = vmatprep.mubr.f32.mxu0 %v61
  %970 = vmatmul.mubr.f32.gmra.mrb[0].mxu0 %v60
  %v971 = vpop.f32.mrb[0].mxu0
  %v972 = vadd.f32 %v519, %v971
  %v973 = vpop.f32.mrb[0].mxu0
  %974 = vmatprep.mubr.f32.mxu0 %v65
  %975 = vmatmul.mubr.f32.gmra.mrb[0].mxu0 %v64
  %v976 = vpop.f32.mrb[0].mxu0
  %v977 = vadd.f32 %v519, %v976
  %v978 = vpop.f32.mrb[0].mxu0
  %979 = vmatprep.mubr.f32.mxu0 %v69
  %980 = vmatmul.mubr.f32.gmra.mrb[0].mxu0 %v68
  %v981 = vpop.f32.mrb[0].mxu0
  %v982 = vadd.f32 %v519, %v981
  %v983 = vpop.f32.mrb[0].mxu0
  %984 = vmatprep.mubr.f32.mxu0 %v73
  %985 = vmatmul.mubr.f32.gmra.mrb[0].mxu0 %v72
  %v986 = vpop.f32.mrb[0].mxu0
  %v987 = vadd.f32 %v519, %v986
  %v988 = vpop.f32.mrb[0].mxu0
  %989 = vmatprep.mubr.f32.mxu0 %v77
  %990 = vmatmul.mubr.f32.gmra.mrb[0].mxu0 %v76
  %v991 = vpop.f32.mrb[0].mxu0
  %v992 = vadd.f32 %v519, %v991
  %v993 = vpop.f32.mrb[0].mxu0
  %994 = vmatprep.mubr.f32.mxu0 %v81
  %995 = vmatmul.mubr.f32.gmra.mrb[0].mxu0 %v80
  %v996 = vpop.f32.mrb[0].mxu0
  %v997 = vadd.f32 %v519, %v996
  %v998 = vpop.f32.mrb[0].mxu0
  %999 = vmatprep.mubr.f32.mxu0 %v85
  %1000 = vmatmul.mubr.f32.gmra.mrb[0].mxu0 %v84
  %v1001 = vpop.f32.mrb[0].mxu0
  %v1002 = vadd.f32 %v519, %v1001
  %v1003 = vpop.f32.mrb[0].mxu0
  %1004 = vmatprep.mubr.f32.mxu0 %v89
  %1005 = vmatmul.mubr.f32.gmra.mrb[0].mxu0 %v88
  %v1006 = vpop.f32.mrb[0].mxu0
  %v1007 = vadd.f32 %v519, %v1006
  %v1008 = vpop.f32.mrb[0].mxu0
  %1009 = vmatprep.mubr.f32.mxu0 %v93
  %1010 = vmatmul.mubr.f32.gmra.mrb[0].mxu0 %v92
  %v1011 = vpop.f32.mrb[0].mxu0
  %v1012 = vadd.f32 %v519, %v1011
  %v1013 = vpop.f32.mrb[0].mxu0
  %1014 = vmatprep.mubr.f32.mxu0 %v97
  %1015 = vmatmul.mubr.f32.gmra.mrb[0].mxu0 %v96
  %v1016 = vpop.f32.mrb[0].mxu0
  %v1017 = vadd.f32 %v519, %v1016
  %v1018 = vpop.f32.mrb[0].mxu0
  %1019 = vmatprep.mubr.f32.mxu0 %v101
  %1020 = vmatmul.mubr.f32.gmra.mrb[0].mxu0 %v100
  %v1021 = vpop.f32.mrb[0].mxu0
  %v1022 = vadd.f32 %v519, %v1021
  %v1023 = vpop.f32.mrb[0].mxu0
  %1024 = vmatprep.mubr.f32.mxu0 %v105
  %1025 = vmatmul.mubr.f32.gmra.mrb[0].mxu0 %v104
  %v1026 = vpop.f32.mrb[0].mxu0
  %v1027 = vadd.f32 %v519, %v1026
  %v1028 = vpop.f32.mrb[0].mxu0
  %1029 = vmatprep.mubr.f32.mxu0 %v109
  %1030 = vmatmul.mubr.f32.gmra.mrb[0].mxu0 %v108
  %v1031 = vpop.f32.mrb[0].mxu0
  %v1032 = vadd.f32 %v519, %v1031
  %v1033 = vpop.f32.mrb[0].mxu0
  %1034 = vmatprep.mubr.f32.mxu0 %v113
  %1035 = vmatmul.mubr.f32.gmra.mrb[0].mxu0 %v112
  %v1036 = vpop.f32.mrb[0].mxu0
  %v1037 = vadd.f32 %v519, %v1036
  %v1038 = vpop.f32.mrb[0].mxu0
  %1039 = vmatprep.mubr.f32.mxu0 %v117
  %1040 = vmatmul.mubr.f32.gmra.mrb[0].mxu0 %v116
  %v1041 = vpop.f32.mrb[0].mxu0
  %v1042 = vadd.f32 %v519, %v1041
  %v1043 = vpop.f32.mrb[0].mxu0
  %1044 = vmatprep.mubr.f32.mxu0 %v121
  %1045 = vmatmul.mubr.f32.gmra.mrb[0].mxu0 %v120
  %v1046 = vpop.f32.mrb[0].mxu0
  %v1047 = vadd.f32 %v519, %v1046
  %v1048 = vpop.f32.mrb[0].mxu0
  %1049 = vmatprep.mubr.f32.mxu0 %v125
  %1050 = vmatmul.mubr.f32.gmra.mrb[0].mxu0 %v124
  %v1051 = vpop.f32.mrb[0].mxu0
  %v1052 = vadd.f32 %v519, %v1051
  %v1053 = vpop.f32.mrb[0].mxu0
  %1054 = vmatprep.mubr.f32.mxu0 %v129
  %1055 = vmatmul.mubr.f32.gmra.mrb[0].mxu0 %v128
  %v1056 = vpop.f32.mrb[0].mxu0
  %v1057 = vadd.f32 %v519, %v1056
  %v1058 = vpop.f32.mrb[0].mxu0
  %1059 = vmatprep.mubr.f32.mxu0 %v133
  %1060 = vmatmul.mubr.f32.gmra.mrb[0].mxu0 %v132
  %v1061 = vpop.f32.mrb[0].mxu0
  %v1062 = vadd.f32 %v519, %v1061
  %v1063 = vpop.f32.mrb[0].mxu0
  %1064 = vmatprep.mubr.f32.mxu0 %v137
  %1065 = vmatmul.mubr.f32.gmra.mrb[0].mxu0 %v136
  %v1066 = vpop.f32.mrb[0].mxu0
  %v1067 = vadd.f32 %v519, %v1066
  %v1068 = vpop.f32.mrb[0].mxu0
  %1069 = vmatprep.mubr.f32.mxu0 %v141
  %1070 = vmatmul.mubr.f32.gmra.mrb[0].mxu0 %v140
  %v1071 = vpop.f32.mrb[0].mxu0
  %v1072 = vadd.f32 %v519, %v1071
  %v1073 = vpop.f32.mrb[0].mxu0
  %1074 = vmatprep.mubr.f32.mxu0 %v145
  %1075 = vmatmul.mubr.f32.gmra.mrb[0].mxu0 %v144
  %v1076 = vpop.f32.mrb[0].mxu0
  %v1077 = vadd.f32 %v519, %v1076
  %v1078 = vpop.f32.mrb[0].mxu0
  %1079 = vmatprep.mubr.f32.mxu0 %v149
  %1080 = vmatmul.mubr.f32.gmra.mrb[0].mxu0 %v148
  %v1081 = vpop.f32.mrb[0].mxu0
  %v1082 = vadd.f32 %v519, %v1081
  %v1083 = vpop.f32.mrb[0].mxu0
  %1084 = vmatprep.mubr.f32.mxu0 %v153
  %1085 = vmatmul.mubr.f32.gmra.mrb[0].mxu0 %v152
  %v1086 = vpop.f32.mrb[0].mxu0
  %v1087 = vadd.f32 %v519, %v1086
  %v1088 = vpop.f32.mrb[0].mxu0
  %1089 = vmatprep.mubr.f32.mxu0 %v157
  %1090 = vmatmul.mubr.f32.gmra.mrb[0].mxu0 %v156
  %v1091 = vpop.f32.mrb[0].mxu0
  %v1092 = vadd.f32 %v519, %v1091
  %v1093 = vpop.f32.mrb[0].mxu0
  %1094 = vmatprep.mubr.f32.mxu0 %v161
  %1095 = vmatmul.mubr.f32.gmra.mrb[0].mxu0 %v160
  %v1096 = vpop.f32.mrb[0].mxu0
  %v1097 = vadd.f32 %v519, %v1096
  %v1098 = vpop.f32.mrb[0].mxu0
  %1099 = vmatprep.mubr.f32.mxu0 %v165
  %1100 = vmatmul.mubr.f32.gmra.mrb[0].mxu0 %v164
  %v1101 = vpop.f32.mrb[0].mxu0
  %v1102 = vadd.f32 %v519, %v1101
  %v1103 = vpop.f32.mrb[0].mxu0
  %1104 = vmatprep.mubr.f32.mxu0 %v169
  %1105 = vmatmul.mubr.f32.gmra.mrb[0].mxu0 %v168
  %v1106 = vpop.f32.mrb[0].mxu0
  %v1107 = vadd.f32 %v519, %v1106
  %v1108 = vpop.f32.mrb[0].mxu0
  %1109 = vmatprep.mubr.f32.mxu0 %v173
  %1110 = vmatmul.mubr.f32.gmra.mrb[0].mxu0 %v172
  %v1111 = vpop.f32.mrb[0].mxu0
  %v1112 = vadd.f32 %v519, %v1111
  %v1113 = vpop.f32.mrb[0].mxu0
  %1114 = vmatprep.mubr.f32.mxu0 %v177
  %1115 = vmatmul.mubr.f32.gmra.mrb[0].mxu0 %v176
  %v1116 = vpop.f32.mrb[0].mxu0
  %v1117 = vadd.f32 %v519, %v1116
  %v1118 = vpop.f32.mrb[0].mxu0
  %1119 = vmatprep.mubr.f32.mxu0 %v181
  %1120 = vmatmul.mubr.f32.gmra.mrb[0].mxu0 %v180
  %v1121 = vpop.f32.mrb[0].mxu0
  %v1122 = vadd.f32 %v519, %v1121
  %v1123 = vpop.f32.mrb[0].mxu0
  %1124 = vmatprep.mubr.f32.mxu0 %v185
  %1125 = vmatmul.mubr.f32.gmra.mrb[0].mxu0 %v184
  %v1126 = vpop.f32.mrb[0].mxu0
  %v1127 = vadd.f32 %v519, %v1126
  %v1128 = vpop.f32.mrb[0].mxu0
  %1129 = vmatprep.mubr.f32.mxu0 %v189
  %1130 = vmatmul.mubr.f32.gmra.mrb[0].mxu0 %v188
  %v1131 = vpop.f32.mrb[0].mxu0
  %v1132 = vadd.f32 %v519, %v1131
  %v1133 = vpop.f32.mrb[0].mxu0
  %1134 = vmatprep.mubr.f32.mxu0 %v193
  %1135 = vmatmul.mubr.f32.gmra.mrb[0].mxu0 %v192
  %v1136 = vpop.f32.mrb[0].mxu0
  %v1137 = vadd.f32 %v519, %v1136
  %v1138 = vpop.f32.mrb[0].mxu0
  %1139 = vmatprep.mubr.f32.mxu0 %v197
  %1140 = vmatmul.mubr.f32.gmra.mrb[0].mxu0 %v196
  %v1141 = vpop.f32.mrb[0].mxu0
  %v1142 = vadd.f32 %v519, %v1141
  %v1143 = vpop.f32.mrb[0].mxu0
  %1144 = vmatprep.mubr.f32.mxu0 %v201
  %1145 = vmatmul.mubr.f32.gmra.mrb[0].mxu0 %v200
  %v1146 = vpop.f32.mrb[0].mxu0
  %v1147 = vadd.f32 %v519, %v1146
  %v1148 = vpop.f32.mrb[0].mxu0
  %1149 = vmatprep.mubr.f32.mxu0 %v205
  %1150 = vmatmul.mubr.f32.gmra.mrb[0].mxu0 %v204
  %v1151 = vpop.f32.mrb[0].mxu0
  %v1152 = vadd.f32 %v519, %v1151
  %v1153 = vpop.f32.mrb[0].mxu0
  %1154 = vmatprep.mubr.f32.mxu0 %v209
  %1155 = vmatmul.mubr.f32.gmra.mrb[0].mxu0 %v208
  %v1156 = vpop.f32.mrb[0].mxu0
  %v1157 = vadd.f32 %v519, %v1156
  %v1158 = vpop.f32.mrb[0].mxu0
  %1159 = vmatprep.mubr.f32.mxu0 %v213
  %1160 = vmatmul.mubr.f32.gmra.mrb[0].mxu0 %v212
  %v1161 = vpop.f32.mrb[0].mxu0
  %v1162 = vadd.f32 %v519, %v1161
  %v1163 = vpop.f32.mrb[0].mxu0
  %1164 = vmatprep.mubr.f32.mxu0 %v217
  %1165 = vmatmul.mubr.f32.gmra.mrb[0].mxu0 %v216
  %v1166 = vpop.f32.mrb[0].mxu0
  %v1167 = vadd.f32 %v519, %v1166
  %v1168 = vpop.f32.mrb[0].mxu0
  %1169 = vmatprep.mubr.f32.mxu0 %v221
  %1170 = vmatmul.mubr.f32.gmra.mrb[0].mxu0 %v220
  %v1171 = vpop.f32.mrb[0].mxu0
  %v1172 = vadd.f32 %v519, %v1171
  %v1173 = vpop.f32.mrb[0].mxu0
  %1174 = vmatprep.mubr.f32.mxu0 %v225
  %1175 = vmatmul.mubr.f32.gmra.mrb[0].mxu0 %v224
  %v1176 = vpop.f32.mrb[0].mxu0
  %v1177 = vadd.f32 %v519, %v1176
  %v1178 = vpop.f32.mrb[0].mxu0
  %1179 = vmatprep.mubr.f32.mxu0 %v229
  %1180 = vmatmul.mubr.f32.gmra.mrb[0].mxu0 %v228
  %v1181 = vpop.f32.mrb[0].mxu0
  %v1182 = vadd.f32 %v519, %v1181
  %v1183 = vpop.f32.mrb[0].mxu0
  %1184 = vmatprep.mubr.f32.mxu0 %v233
  %1185 = vmatmul.mubr.f32.gmra.mrb[0].mxu0 %v232
  %v1186 = vpop.f32.mrb[0].mxu0
  %v1187 = vadd.f32 %v519, %v1186
  %v1188 = vpop.f32.mrb[0].mxu0
  %1189 = vmatprep.mubr.f32.mxu0 %v237
  %1190 = vmatmul.mubr.f32.gmra.mrb[0].mxu0 %v236
  %v1191 = vpop.f32.mrb[0].mxu0
  %v1192 = vadd.f32 %v519, %v1191
  %v1193 = vpop.f32.mrb[0].mxu0
  %1194 = vmatprep.mubr.f32.mxu0 %v241
  %1195 = vmatmul.mubr.f32.gmra.mrb[0].mxu0 %v240
  %v1196 = vpop.f32.mrb[0].mxu0
  %v1197 = vadd.f32 %v519, %v1196
  %v1198 = vpop.f32.mrb[0].mxu0
  %1199 = vmatprep.mubr.f32.mxu0 %v245
  %1200 = vmatmul.mubr.f32.gmra.mrb[0].mxu0 %v244
  %v1201 = vpop.f32.mrb[0].mxu0
  %v1202 = vadd.f32 %v519, %v1201
  %v1203 = vpop.f32.mrb[0].mxu0
  %1204 = vmatprep.mubr.f32.mxu0 %v249
  %1205 = vmatmul.mubr.f32.gmra.mrb[0].mxu0 %v248
  %v1206 = vpop.f32.mrb[0].mxu0
  %v1207 = vadd.f32 %v519, %v1206
  %v1208 = vpop.f32.mrb[0].mxu0
  %1209 = vmatprep.mubr.f32.mxu0 %v253
  %1210 = vmatmul.mubr.f32.gmra.mrb[0].mxu0 %v252
  %v1211 = vpop.f32.mrb[0].mxu0
  %v1212 = vadd.f32 %v519, %v1211
  %v1213 = vpop.f32.mrb[0].mxu0
  %1214 = vmatprep.mubr.f32.mxu0 %v257
  %1215 = vmatmul.mubr.f32.gmra.mrb[0].mxu0 %v256
  %v1216 = vpop.f32.mrb[0].mxu0
  %v1217 = vadd.f32 %v519, %v1216
  %v1218 = vpop.f32.mrb[0].mxu0
  %1219 = vmatprep.mubr.f32.mxu0 %v261
  %1220 = vmatmul.mubr.f32.gmra.mrb[0].mxu0 %v260
  %v1221 = vpop.f32.mrb[0].mxu0
  %v1222 = vadd.f32 %v519, %v1221
  %v1223 = vpop.f32.mrb[0].mxu0
  %1224 = vmatprep.mubr.f32.mxu0 %v265
  %1225 = vmatmul.mubr.f32.gmra.mrb[0].mxu0 %v264
  %v1226 = vpop.f32.mrb[0].mxu0
  %v1227 = vadd.f32 %v519, %v1226
  %v1228 = vpop.f32.mrb[0].mxu0
  %1229 = vmatprep.mubr.f32.mxu0 %v269
  %1230 = vmatmul.mubr.f32.gmra.mrb[0].mxu0 %v268
  %v1231 = vpop.f32.mrb[0].mxu0
  %v1232 = vadd.f32 %v519, %v1231
  %v1233 = vpop.f32.mrb[0].mxu0
  %1234 = vmatprep.mubr.f32.mxu0 %v273
  %1235 = vmatmul.mubr.f32.gmra.mrb[0].mxu0 %v272
  %v1236 = vpop.f32.mrb[0].mxu0
  %v1237 = vadd.f32 %v519, %v1236
  %v1238 = vpop.f32.mrb[0].mxu0
  %1239 = vmatprep.mubr.f32.mxu0 %v277
  %1240 = vmatmul.mubr.f32.gmra.mrb[0].mxu0 %v276
  %v1241 = vpop.f32.mrb[0].mxu0
  %v1242 = vadd.f32 %v519, %v1241
  %v1243 = vpop.f32.mrb[0].mxu0
  %1244 = vmatprep.mubr.f32.mxu0 %v281
  %1245 = vmatmul.mubr.f32.gmra.mrb[0].mxu0 %v280
  %v1246 = vpop.f32.mrb[0].mxu0
  %v1247 = vadd.f32 %v519, %v1246
  %v1248 = vpop.f32.mrb[0].mxu0
  %1249 = vmatprep.mubr.f32.mxu0 %v285
  %1250 = vmatmul.mubr.f32.gmra.mrb[0].mxu0 %v284
  %v1251 = vpop.f32.mrb[0].mxu0
  %v1252 = vadd.f32 %v519, %v1251
  %v1253 = vpop.f32.mrb[0].mxu0
  %1254 = vmatprep.mubr.f32.mxu0 %v289
  %1255 = vmatmul.mubr.f32.gmra.mrb[0].mxu0 %v288
  %v1256 = vpop.f32.mrb[0].mxu0
  %v1257 = vadd.f32 %v519, %v1256
  %v1258 = vpop.f32.mrb[0].mxu0
  %1259 = vmatprep.mubr.f32.mxu0 %v293
  %1260 = vmatmul.mubr.f32.gmra.mrb[0].mxu0 %v292
  %v1261 = vpop.f32.mrb[0].mxu0
  %v1262 = vadd.f32 %v519, %v1261
  %v1263 = vpop.f32.mrb[0].mxu0
  %1264 = vmatprep.mubr.f32.mxu0 %v297
  %1265 = vmatmul.mubr.f32.gmra.mrb[0].mxu0 %v296
  %v1266 = vpop.f32.mrb[0].mxu0
  %v1267 = vadd.f32 %v519, %v1266
  %v1268 = vpop.f32.mrb[0].mxu0
  %1269 = vmatprep.mubr.f32.mxu0 %v301
  %1270 = vmatmul.mubr.f32.gmra.mrb[0].mxu0 %v300
  %v1271 = vpop.f32.mrb[0].mxu0
  %v1272 = vadd.f32 %v519, %v1271
  %v1273 = vpop.f32.mrb[0].mxu0
  %1274 = vmatprep.mubr.f32.mxu0 %v305
  %1275 = vmatmul.mubr.f32.gmra.mrb[0].mxu0 %v304
  %v1276 = vpop.f32.mrb[0].mxu0
  %v1277 = vadd.f32 %v519, %v1276
  %v1278 = vpop.f32.mrb[0].mxu0
  %1279 = vmatprep.mubr.f32.mxu0 %v309
  %1280 = vmatmul.mubr.f32.gmra.mrb[0].mxu0 %v308
  %v1281 = vpop.f32.mrb[0].mxu0
  %v1282 = vadd.f32 %v519, %v1281
  %v1283 = vpop.f32.mrb[0].mxu0
  %1284 = vmatprep.mubr.f32.mxu0 %v313
  %1285 = vmatmul.mubr.f32.gmra.mrb[0].mxu0 %v312
  %v1286 = vpop.f32.mrb[0].mxu0
  %v1287 = vadd.f32 %v519, %v1286
  %v1288 = vpop.f32.mrb[0].mxu0
  %1289 = vmatprep.mubr.f32.mxu0 %v317
  %1290 = vmatmul.mubr.f32.gmra.mrb[0].mxu0 %v316
  %v1291 = vpop.f32.mrb[0].mxu0
  %v1292 = vadd.f32 %v519, %v1291
  %v1293 = vpop.f32.mrb[0].mxu0
  %1294 = vmatprep.mubr.f32.mxu0 %v321
  %1295 = vmatmul.mubr.f32.gmra.mrb[0].mxu0 %v320
  %v1296 = vpop.f32.mrb[0].mxu0
  %v1297 = vadd.f32 %v519, %v1296
  %v1298 = vpop.f32.mrb[0].mxu0
  %1299 = vmatprep.mubr.f32.mxu0 %v325
  %1300 = vmatmul.mubr.f32.gmra.mrb[0].mxu0 %v324
  %v1301 = vpop.f32.mrb[0].mxu0
  %v1302 = vadd.f32 %v519, %v1301
  %v1303 = vpop.f32.mrb[0].mxu0
  %1304 = vmatprep.mubr.f32.mxu0 %v329
  %1305 = vmatmul.mubr.f32.gmra.mrb[0].mxu0 %v328
  %v1306 = vpop.f32.mrb[0].mxu0
  %v1307 = vadd.f32 %v519, %v1306
  %v1308 = vpop.f32.mrb[0].mxu0
  %1309 = vmatprep.mubr.f32.mxu0 %v333
  %1310 = vmatmul.mubr.f32.gmra.mrb[0].mxu0 %v332
  %v1311 = vpop.f32.mrb[0].mxu0
  %v1312 = vadd.f32 %v519, %v1311
  %v1313 = vpop.f32.mrb[0].mxu0
  %1314 = vmatprep.mubr.f32.mxu0 %v337
  %1315 = vmatmul.mubr.f32.gmra.mrb[0].mxu0 %v336
  %v1316 = vpop.f32.mrb[0].mxu0
  %v1317 = vadd.f32 %v519, %v1316
  %v1318 = vpop.f32.mrb[0].mxu0
  %1319 = vmatprep.mubr.f32.mxu0 %v341
  %1320 = vmatmul.mubr.f32.gmra.mrb[0].mxu0 %v340
  %v1321 = vpop.f32.mrb[0].mxu0
  %v1322 = vadd.f32 %v519, %v1321
  %v1323 = vpop.f32.mrb[0].mxu0
  %1324 = vmatprep.mubr.f32.mxu0 %v345
  %1325 = vmatmul.mubr.f32.gmra.mrb[0].mxu0 %v344
  %v1326 = vpop.f32.mrb[0].mxu0
  %v1327 = vadd.f32 %v519, %v1326
  %v1328 = vpop.f32.mrb[0].mxu0
  %1329 = vmatprep.mubr.f32.mxu0 %v349
  %1330 = vmatmul.mubr.f32.gmra.mrb[0].mxu0 %v348
  %v1331 = vpop.f32.mrb[0].mxu0
  %v1332 = vadd.f32 %v519, %v1331
  %v1333 = vpop.f32.mrb[0].mxu0
  %1334 = vmatprep.mubr.f32.mxu0 %v353
  %1335 = vmatmul.mubr.f32.gmra.mrb[0].mxu0 %v352
  %v1336 = vpop.f32.mrb[0].mxu0
  %v1337 = vadd.f32 %v519, %v1336
  %v1338 = vpop.f32.mrb[0].mxu0
  %1339 = vmatprep.mubr.f32.mxu0 %v357
  %1340 = vmatmul.mubr.f32.gmra.mrb[0].mxu0 %v356
  %v1341 = vpop.f32.mrb[0].mxu0
  %v1342 = vadd.f32 %v519, %v1341
  %v1343 = vpop.f32.mrb[0].mxu0
  %1344 = vmatprep.mubr.f32.mxu0 %v361
  %1345 = vmatmul.mubr.f32.gmra.mrb[0].mxu0 %v360
  %v1346 = vpop.f32.mrb[0].mxu0
  %v1347 = vadd.f32 %v519, %v1346
  %v1348 = vpop.f32.mrb[0].mxu0
  %1349 = vmatprep.mubr.f32.mxu0 %v365
  %1350 = vmatmul.mubr.f32.gmra.mrb[0].mxu0 %v364
  %v1351 = vpop.f32.mrb[0].mxu0
  %v1352 = vadd.f32 %v519, %v1351
  %v1353 = vpop.f32.mrb[0].mxu0
  %1354 = vmatprep.mubr.f32.mxu0 %v369
  %1355 = vmatmul.mubr.f32.gmra.mrb[0].mxu0 %v368
  %v1356 = vpop.f32.mrb[0].mxu0
  %v1357 = vadd.f32 %v519, %v1356
  %v1358 = vpop.f32.mrb[0].mxu0
  %1359 = vmatprep.mubr.f32.mxu0 %v373
  %1360 = vmatmul.mubr.f32.gmra.mrb[0].mxu0 %v372
  %v1361 = vpop.f32.mrb[0].mxu0
  %v1362 = vadd.f32 %v519, %v1361
  %v1363 = vpop.f32.mrb[0].mxu0
  %1364 = vmatprep.mubr.f32.mxu0 %v377
  %1365 = vmatmul.mubr.f32.gmra.mrb[0].mxu0 %v376
  %v1366 = vpop.f32.mrb[0].mxu0
  %v1367 = vadd.f32 %v519, %v1366
  %v1368 = vpop.f32.mrb[0].mxu0
  %1369 = vmatprep.mubr.f32.mxu0 %v381
  %1370 = vmatmul.mubr.f32.gmra.mrb[0].mxu0 %v380
  %v1371 = vpop.f32.mrb[0].mxu0
  %v1372 = vadd.f32 %v519, %v1371
  %v1373 = vpop.f32.mrb[0].mxu0
  %1374 = vmatprep.mubr.f32.mxu0 %v385
  %1375 = vmatmul.mubr.f32.gmra.mrb[0].mxu0 %v384
  %v1376 = vpop.f32.mrb[0].mxu0
  %v1377 = vadd.f32 %v519, %v1376
  %v1378 = vpop.f32.mrb[0].mxu0
  %1379 = vmatprep.mubr.f32.mxu0 %v389
  %1380 = vmatmul.mubr.f32.gmra.mrb[0].mxu0 %v388
  %v1381 = vpop.f32.mrb[0].mxu0
  %v1382 = vadd.f32 %v519, %v1381
  %v1383 = vpop.f32.mrb[0].mxu0
  %1384 = vmatprep.mubr.f32.mxu0 %v393
  %1385 = vmatmul.mubr.f32.gmra.mrb[0].mxu0 %v392
  %v1386 = vpop.f32.mrb[0].mxu0
  %v1387 = vadd.f32 %v519, %v1386
  %v1388 = vpop.f32.mrb[0].mxu0
  %1389 = vmatprep.mubr.f32.mxu0 %v397
  %1390 = vmatmul.mubr.f32.gmra.mrb[0].mxu0 %v396
  %v1391 = vpop.f32.mrb[0].mxu0
  %v1392 = vadd.f32 %v519, %v1391
  %v1393 = vpop.f32.mrb[0].mxu0
  %1394 = vmatprep.mubr.f32.mxu0 %v401
  %1395 = vmatmul.mubr.f32.gmra.mrb[0].mxu0 %v400
  %v1396 = vpop.f32.mrb[0].mxu0
  %v1397 = vadd.f32 %v519, %v1396
  %v1398 = vpop.f32.mrb[0].mxu0
  %1399 = vmatprep.mubr.f32.mxu0 %v405
  %1400 = vmatmul.mubr.f32.gmra.mrb[0].mxu0 %v404
  %v1401 = vpop.f32.mrb[0].mxu0
  %v1402 = vadd.f32 %v519, %v1401
  %v1403 = vpop.f32.mrb[0].mxu0
  %1404 = vmatprep.mubr.f32.mxu0 %v409
  %1405 = vmatmul.mubr.f32.gmra.mrb[0].mxu0 %v408
  %v1406 = vpop.f32.mrb[0].mxu0
  %v1407 = vadd.f32 %v519, %v1406
  %v1408 = vpop.f32.mrb[0].mxu0
  %1409 = vmatprep.mubr.f32.mxu0 %v413
  %1410 = vmatmul.mubr.f32.gmra.mrb[0].mxu0 %v412
  %v1411 = vpop.f32.mrb[0].mxu0
  %v1412 = vadd.f32 %v519, %v1411
  %v1413 = vpop.f32.mrb[0].mxu0
  %1414 = vmatprep.mubr.f32.mxu0 %v417
  %1415 = vmatmul.mubr.f32.gmra.mrb[0].mxu0 %v416
  %v1416 = vpop.f32.mrb[0].mxu0
  %v1417 = vadd.f32 %v519, %v1416
  %v1418 = vpop.f32.mrb[0].mxu0
  %1419 = vmatprep.mubr.f32.mxu0 %v421
  %1420 = vmatmul.mubr.f32.gmra.mrb[0].mxu0 %v420
  %v1421 = vpop.f32.mrb[0].mxu0
  %v1422 = vadd.f32 %v519, %v1421
  %v1423 = vpop.f32.mrb[0].mxu0
  %1424 = vmatprep.mubr.f32.mxu0 %v425
  %1425 = vmatmul.mubr.f32.gmra.mrb[0].mxu0 %v424
  %v1426 = vpop.f32.mrb[0].mxu0
  %v1427 = vadd.f32 %v519, %v1426
  %v1428 = vpop.f32.mrb[0].mxu0
  %1429 = vmatprep.mubr.f32.mxu0 %v429
  %1430 = vmatmul.mubr.f32.gmra.mrb[0].mxu0 %v428
  %v1431 = vpop.f32.mrb[0].mxu0
  %v1432 = vadd.f32 %v519, %v1431
  %v1433 = vpop.f32.mrb[0].mxu0
  %1434 = vmatprep.mubr.f32.mxu0 %v433
  %1435 = vmatmul.mubr.f32.gmra.mrb[0].mxu0 %v432
  %v1436 = vpop.f32.mrb[0].mxu0
  %v1437 = vadd.f32 %v519, %v1436
  %v1438 = vpop.f32.mrb[0].mxu0
  %1439 = vmatprep.mubr.f32.mxu0 %v437
  %1440 = vmatmul.mubr.f32.gmra.mrb[0].mxu0 %v436
  %v1441 = vpop.f32.mrb[0].mxu0
  %v1442 = vadd.f32 %v519, %v1441
  %v1443 = vpop.f32.mrb[0].mxu0
  %1444 = vmatprep.mubr.f32.mxu0 %v441
  %1445 = vmatmul.mubr.f32.gmra.mrb[0].mxu0 %v440
  %v1446 = vpop.f32.mrb[0].mxu0
  %v1447 = vadd.f32 %v519, %v1446
  %v1448 = vpop.f32.mrb[0].mxu0
  %1449 = vmatprep.mubr.f32.mxu0 %v445
  %1450 = vmatmul.mubr.f32.gmra.mrb[0].mxu0 %v444
  %v1451 = vpop.f32.mrb[0].mxu0
  %v1452 = vadd.f32 %v519, %v1451
  %v1453 = vpop.f32.mrb[0].mxu0
  %1454 = vmatprep.mubr.f32.mxu0 %v449
  %1455 = vmatmul.mubr.f32.gmra.mrb[0].mxu0 %v448
  %v1456 = vpop.f32.mrb[0].mxu0
  %v1457 = vadd.f32 %v519, %v1456
  %v1458 = vpop.f32.mrb[0].mxu0
  %1459 = vmatprep.mubr.f32.mxu0 %v453
  %1460 = vmatmul.mubr.f32.gmra.mrb[0].mxu0 %v452
  %v1461 = vpop.f32.mrb[0].mxu0
  %v1462 = vadd.f32 %v519, %v1461
  %v1463 = vpop.f32.mrb[0].mxu0
  %1464 = vmatprep.mubr.f32.mxu0 %v457
  %1465 = vmatmul.mubr.f32.gmra.mrb[0].mxu0 %v456
  %v1466 = vpop.f32.mrb[0].mxu0
  %v1467 = vadd.f32 %v519, %v1466
  %v1468 = vpop.f32.mrb[0].mxu0
  %1469 = vmatprep.mubr.f32.mxu0 %v461
  %1470 = vmatmul.mubr.f32.gmra.mrb[0].mxu0 %v460
  %v1471 = vpop.f32.mrb[0].mxu0
  %v1472 = vadd.f32 %v519, %v1471
  %v1473 = vpop.f32.mrb[0].mxu0
  %1474 = vdwg.mxu0
  %1475 = vmatprep.subr.mxu0 0.0
  %1476 = vmatpush1.msra.mxu0 %v496
  %1477 = vmatprep.subr.mxu0 0.0
  %1478 = vmatpush1.msra.mxu0 %v497
  %1479 = vmatprep.subr.mxu0 0.0
  %1480 = vmatpush1.msra.mxu0 %v498
  %1481 = vmatprep.subr.mxu0 0.0
  %1482 = vmatpush1.msra.mxu0 %v499
  %1483 = vmatprep.subr.mxu0 0.0
  %1484 = vmatpush1.msra.mxu0 %v500
  %1485 = vmatprep.subr.mxu0 0.0
  %1486 = vmatpush1.msra.mxu0 %v501
  %1487 = vmatprep.subr.mxu0 0.0
  %1488 = vmatpush1.msra.mxu0 %v502
  %1489 = vmatprep.subr.mxu0 0.0
  %1490 = vmatpush1.msra.mxu0 %v503
  %1491 = vmatprep.subr.mxu0 0.0
  %1492 = vmatpush1.msra.mxu0 %v504
  %1493 = vmatprep.subr.mxu0 0.0
  %1494 = vmatpush1.msra.mxu0 %v505
  %1495 = vmatprep.subr.mxu0 0.0
  %1496 = vmatpush1.msra.mxu0 %v506
  %1497 = vmatprep.subr.mxu0 0.0
  %1498 = vmatpush1.msra.mxu0 %v507
  %1499 = vmatprep.subr.mxu0 0.0
  %1500 = vmatpush1.msra.mxu0 %v508
  %1501 = vmatprep.subr.mxu0 0.0
  %1502 = vmatpush1.msra.mxu0 %v509
  %1503 = vmatprep.subr.mxu0 0.0
  %1504 = vmatpush1.msra.mxu0 %v510
  %1505 = vmatprep.subr.mxu0 0.0
  %1506 = vmatpush1.msra.mxu0 %v511
  %1507 = vmatprep.subr.mxu0 0.0
  %1508 = vmatpush1.msra.mxu0 %v512
  %1509 = vmatprep.subr.mxu0 0.0
  %1510 = vmatpush1.msra.mxu0 %v513
  %1511 = vmatprep.subr.mxu0 0.0
  %1512 = vmatpush1.msra.mxu0 0.0
  %1513 = vmatprep.subr.mxu0 0.0
  %1514 = vmatpush1.msra.mxu0 0.0
  %1515 = vmatprep.subr.mxu0 0.0
  %1516 = vmatpush1.msra.mxu0 0.0
  %1517 = vmatprep.subr.mxu0 0.0
  %1518 = vmatpush1.msra.mxu0 0.0
  %1519 = vmatprep.subr.mxu0 0.0
  %1520 = vmatpush1.msra.mxu0 0.0
  %1521 = vmatprep.subr.mxu0 0.0
  %1522 = vmatpush1.msra.mxu0 0.0
  %1523 = vmatprep.subr.mxu0 0.0
  %1524 = vmatpush1.msra.mxu0 0.0
  %1525 = vmatprep.subr.mxu0 0.0
  %1526 = vmatpush1.msra.mxu0 0.0
  %1527 = vmatprep.subr.mxu0 0.0
  %1528 = vmatpush1.msra.mxu0 0.0
  %1529 = vmatprep.subr.mxu0 0.0
  %1530 = vmatpush1.msra.mxu0 0.0
  %1531 = vmatprep.subr.mxu0 0.0
  %1532 = vmatpush1.msra.mxu0 0.0
  %1533 = vmatprep.subr.mxu0 0.0
  %1534 = vmatpush1.msra.mxu0 0.0
  %1535 = vmatprep.subr.mxu0 0.0
  %1536 = vmatpush1.msra.mxu0 0.0
  %1537 = vmatprep.subr.mxu0 0.0
  %1538 = vmatpush1.msra.mxu0 0.0
  %1539 = vmatprep.mubr.f32.mxu0 %v523
  %1540 = vmatmul.mubr.f32.gmra.mrb[0].mxu0 %v22
  %v1541 = vpop.f32.mrb[0].mxu0
  %v1542 = vadd.f32 %v922, %v1541
  %v1543 = vpop.f32.mrb[0].mxu0
  %1544 = vmatprep.mubr.f32.mxu0 %v526
  %1545 = vmatmul.mubr.f32.gmra.mrb[0].mxu0 %v26
  %v1546 = vpop.f32.mrb[0].mxu0
  %v1547 = vadd.f32 %v927, %v1546
  %v1548 = vpop.f32.mrb[0].mxu0
  %1549 = vmatprep.mubr.f32.mxu0 %v529
  %1550 = vmatmul.mubr.f32.gmra.mrb[0].mxu0 %v30
  %v1551 = vpop.f32.mrb[0].mxu0
  %v1552 = vadd.f32 %v932, %v1551
  %v1553 = vpop.f32.mrb[0].mxu0
  %1554 = vmatprep.mubr.f32.mxu0 %v532
  %1555 = vmatmul.mubr.f32.gmra.mrb[0].mxu0 %v34
  %v1556 = vpop.f32.mrb[0].mxu0
  %v1557 = vadd.f32 %v937, %v1556
  %v1558 = vpop.f32.mrb[0].mxu0
  %1559 = vmatprep.mubr.f32.mxu0 %v535
  %1560 = vmatmul.mubr.f32.gmra.mrb[0].mxu0 %v38
  %v1561 = vpop.f32.mrb[0].mxu0
  %v1562 = vadd.f32 %v942, %v1561
  %v1563 = vpop.f32.mrb[0].mxu0
  %1564 = vmatprep.mubr.f32.mxu0 %v538
  %1565 = vmatmul.mubr.f32.gmra.mrb[0].mxu0 %v42
  %v1566 = vpop.f32.mrb[0].mxu0
  %v1567 = vadd.f32 %v947, %v1566
  %v1568 = vpop.f32.mrb[0].mxu0
  %1569 = vmatprep.mubr.f32.mxu0 %v541
  %1570 = vmatmul.mubr.f32.gmra.mrb[0].mxu0 %v46
  %v1571 = vpop.f32.mrb[0].mxu0
  %v1572 = vadd.f32 %v952, %v1571
  %v1573 = vpop.f32.mrb[0].mxu0
  %1574 = vmatprep.mubr.f32.mxu0 %v544
  %1575 = vmatmul.mubr.f32.gmra.mrb[0].mxu0 %v50
  %v1576 = vpop.f32.mrb[0].mxu0
  %v1577 = vadd.f32 %v957, %v1576
  %v1578 = vpop.f32.mrb[0].mxu0
  %1579 = vmatprep.mubr.f32.mxu0 %v547
  %1580 = vmatmul.mubr.f32.gmra.mrb[0].mxu0 %v54
  %v1581 = vpop.f32.mrb[0].mxu0
  %v1582 = vadd.f32 %v962, %v1581
  %v1583 = vpop.f32.mrb[0].mxu0
  %1584 = vmatprep.mubr.f32.mxu0 %v550
  %1585 = vmatmul.mubr.f32.gmra.mrb[0].mxu0 %v58
  %v1586 = vpop.f32.mrb[0].mxu0
  %v1587 = vadd.f32 %v967, %v1586
  %v1588 = vpop.f32.mrb[0].mxu0
  %1589 = vmatprep.mubr.f32.mxu0 %v553
  %1590 = vmatmul.mubr.f32.gmra.mrb[0].mxu0 %v62
  %v1591 = vpop.f32.mrb[0].mxu0
  %v1592 = vadd.f32 %v972, %v1591
  %v1593 = vpop.f32.mrb[0].mxu0
  %1594 = vmatprep.mubr.f32.mxu0 %v556
  %1595 = vmatmul.mubr.f32.gmra.mrb[0].mxu0 %v66
  %v1596 = vpop.f32.mrb[0].mxu0
  %v1597 = vadd.f32 %v977, %v1596
  %v1598 = vpop.f32.mrb[0].mxu0
  %1599 = vmatprep.mubr.f32.mxu0 %v559
  %1600 = vmatmul.mubr.f32.gmra.mrb[0].mxu0 %v70
  %v1601 = vpop.f32.mrb[0].mxu0
  %v1602 = vadd.f32 %v982, %v1601
  %v1603 = vpop.f32.mrb[0].mxu0
  %1604 = vmatprep.mubr.f32.mxu0 %v562
  %1605 = vmatmul.mubr.f32.gmra.mrb[0].mxu0 %v74
  %v1606 = vpop.f32.mrb[0].mxu0
  %v1607 = vadd.f32 %v987, %v1606
  %v1608 = vpop.f32.mrb[0].mxu0
  %1609 = vmatprep.mubr.f32.mxu0 %v565
  %1610 = vmatmul.mubr.f32.gmra.mrb[0].mxu0 %v78
  %v1611 = vpop.f32.mrb[0].mxu0
  %v1612 = vadd.f32 %v992, %v1611
  %v1613 = vpop.f32.mrb[0].mxu0
  %1614 = vmatprep.mubr.f32.mxu0 %v568
  %1615 = vmatmul.mubr.f32.gmra.mrb[0].mxu0 %v82
  %v1616 = vpop.f32.mrb[0].mxu0
  %v1617 = vadd.f32 %v997, %v1616
  %v1618 = vpop.f32.mrb[0].mxu0
  %1619 = vmatprep.mubr.f32.mxu0 %v571
  %1620 = vmatmul.mubr.f32.gmra.mrb[0].mxu0 %v86
  %v1621 = vpop.f32.mrb[0].mxu0
  %v1622 = vadd.f32 %v1002, %v1621
  %v1623 = vpop.f32.mrb[0].mxu0
  %1624 = vmatprep.mubr.f32.mxu0 %v574
  %1625 = vmatmul.mubr.f32.gmra.mrb[0].mxu0 %v90
  %v1626 = vpop.f32.mrb[0].mxu0
  %v1627 = vadd.f32 %v1007, %v1626
  %v1628 = vpop.f32.mrb[0].mxu0
  %1629 = vmatprep.mubr.f32.mxu0 %v577
  %1630 = vmatmul.mubr.f32.gmra.mrb[0].mxu0 %v94
  %v1631 = vpop.f32.mrb[0].mxu0
  %v1632 = vadd.f32 %v1012, %v1631
  %v1633 = vpop.f32.mrb[0].mxu0
  %1634 = vmatprep.mubr.f32.mxu0 %v580
  %1635 = vmatmul.mubr.f32.gmra.mrb[0].mxu0 %v98
  %v1636 = vpop.f32.mrb[0].mxu0
  %v1637 = vadd.f32 %v1017, %v1636
  %v1638 = vpop.f32.mrb[0].mxu0
  %1639 = vmatprep.mubr.f32.mxu0 %v583
  %1640 = vmatmul.mubr.f32.gmra.mrb[0].mxu0 %v102
  %v1641 = vpop.f32.mrb[0].mxu0
  %v1642 = vadd.f32 %v1022, %v1641
  %v1643 = vpop.f32.mrb[0].mxu0
  %1644 = vmatprep.mubr.f32.mxu0 %v586
  %1645 = vmatmul.mubr.f32.gmra.mrb[0].mxu0 %v106
  %v1646 = vpop.f32.mrb[0].mxu0
  %v1647 = vadd.f32 %v1027, %v1646
  %v1648 = vpop.f32.mrb[0].mxu0
  %1649 = vmatprep.mubr.f32.mxu0 %v589
  %1650 = vmatmul.mubr.f32.gmra.mrb[0].mxu0 %v110
  %v1651 = vpop.f32.mrb[0].mxu0
  %v1652 = vadd.f32 %v1032, %v1651
  %v1653 = vpop.f32.mrb[0].mxu0
  %1654 = vmatprep.mubr.f32.mxu0 %v592
  %1655 = vmatmul.mubr.f32.gmra.mrb[0].mxu0 %v114
  %v1656 = vpop.f32.mrb[0].mxu0
  %v1657 = vadd.f32 %v1037, %v1656
  %v1658 = vpop.f32.mrb[0].mxu0
  %1659 = vmatprep.mubr.f32.mxu0 %v595
  %1660 = vmatmul.mubr.f32.gmra.mrb[0].mxu0 %v118
  %v1661 = vpop.f32.mrb[0].mxu0
  %v1662 = vadd.f32 %v1042, %v1661
  %v1663 = vpop.f32.mrb[0].mxu0
  %1664 = vmatprep.mubr.f32.mxu0 %v598
  %1665 = vmatmul.mubr.f32.gmra.mrb[0].mxu0 %v122
  %v1666 = vpop.f32.mrb[0].mxu0
  %v1667 = vadd.f32 %v1047, %v1666
  %v1668 = vpop.f32.mrb[0].mxu0
  %1669 = vmatprep.mubr.f32.mxu0 %v601
  %1670 = vmatmul.mubr.f32.gmra.mrb[0].mxu0 %v126
  %v1671 = vpop.f32.mrb[0].mxu0
  %v1672 = vadd.f32 %v1052, %v1671
  %v1673 = vpop.f32.mrb[0].mxu0
  %1674 = vmatprep.mubr.f32.mxu0 %v604
  %1675 = vmatmul.mubr.f32.gmra.mrb[0].mxu0 %v130
  %v1676 = vpop.f32.mrb[0].mxu0
  %v1677 = vadd.f32 %v1057, %v1676
  %v1678 = vpop.f32.mrb[0].mxu0
  %1679 = vmatprep.mubr.f32.mxu0 %v607
  %1680 = vmatmul.mubr.f32.gmra.mrb[0].mxu0 %v134
  %v1681 = vpop.f32.mrb[0].mxu0
  %v1682 = vadd.f32 %v1062, %v1681
  %v1683 = vpop.f32.mrb[0].mxu0
  %1684 = vmatprep.mubr.f32.mxu0 %v610
  %1685 = vmatmul.mubr.f32.gmra.mrb[0].mxu0 %v138
  %v1686 = vpop.f32.mrb[0].mxu0
  %v1687 = vadd.f32 %v1067, %v1686
  %v1688 = vpop.f32.mrb[0].mxu0
  %1689 = vmatprep.mubr.f32.mxu0 %v613
  %1690 = vmatmul.mubr.f32.gmra.mrb[0].mxu0 %v142
  %v1691 = vpop.f32.mrb[0].mxu0
  %v1692 = vadd.f32 %v1072, %v1691
  %v1693 = vpop.f32.mrb[0].mxu0
  %1694 = vmatprep.mubr.f32.mxu0 %v616
  %1695 = vmatmul.mubr.f32.gmra.mrb[0].mxu0 %v146
  %v1696 = vpop.f32.mrb[0].mxu0
  %v1697 = vadd.f32 %v1077, %v1696
  %v1698 = vpop.f32.mrb[0].mxu0
  %1699 = vmatprep.mubr.f32.mxu0 %v619
  %1700 = vmatmul.mubr.f32.gmra.mrb[0].mxu0 %v150
  %v1701 = vpop.f32.mrb[0].mxu0
  %v1702 = vadd.f32 %v1082, %v1701
  %v1703 = vpop.f32.mrb[0].mxu0
  %1704 = vmatprep.mubr.f32.mxu0 %v622
  %1705 = vmatmul.mubr.f32.gmra.mrb[0].mxu0 %v154
  %v1706 = vpop.f32.mrb[0].mxu0
  %v1707 = vadd.f32 %v1087, %v1706
  %v1708 = vpop.f32.mrb[0].mxu0
  %1709 = vmatprep.mubr.f32.mxu0 %v625
  %1710 = vmatmul.mubr.f32.gmra.mrb[0].mxu0 %v158
  %v1711 = vpop.f32.mrb[0].mxu0
  %v1712 = vadd.f32 %v1092, %v1711
  %v1713 = vpop.f32.mrb[0].mxu0
  %1714 = vmatprep.mubr.f32.mxu0 %v628
  %1715 = vmatmul.mubr.f32.gmra.mrb[0].mxu0 %v162
  %v1716 = vpop.f32.mrb[0].mxu0
  %v1717 = vadd.f32 %v1097, %v1716
  %v1718 = vpop.f32.mrb[0].mxu0
  %1719 = vmatprep.mubr.f32.mxu0 %v631
  %1720 = vmatmul.mubr.f32.gmra.mrb[0].mxu0 %v166
  %v1721 = vpop.f32.mrb[0].mxu0
  %v1722 = vadd.f32 %v1102, %v1721
  %v1723 = vpop.f32.mrb[0].mxu0
  %1724 = vmatprep.mubr.f32.mxu0 %v634
  %1725 = vmatmul.mubr.f32.gmra.mrb[0].mxu0 %v170
  %v1726 = vpop.f32.mrb[0].mxu0
  %v1727 = vadd.f32 %v1107, %v1726
  %v1728 = vpop.f32.mrb[0].mxu0
  %1729 = vmatprep.mubr.f32.mxu0 %v637
  %1730 = vmatmul.mubr.f32.gmra.mrb[0].mxu0 %v174
  %v1731 = vpop.f32.mrb[0].mxu0
  %v1732 = vadd.f32 %v1112, %v1731
  %v1733 = vpop.f32.mrb[0].mxu0
  %1734 = vmatprep.mubr.f32.mxu0 %v640
  %1735 = vmatmul.mubr.f32.gmra.mrb[0].mxu0 %v178
  %v1736 = vpop.f32.mrb[0].mxu0
  %v1737 = vadd.f32 %v1117, %v1736
  %v1738 = vpop.f32.mrb[0].mxu0
  %1739 = vmatprep.mubr.f32.mxu0 %v643
  %1740 = vmatmul.mubr.f32.gmra.mrb[0].mxu0 %v182
  %v1741 = vpop.f32.mrb[0].mxu0
  %v1742 = vadd.f32 %v1122, %v1741
  %v1743 = vpop.f32.mrb[0].mxu0
  %1744 = vmatprep.mubr.f32.mxu0 %v646
  %1745 = vmatmul.mubr.f32.gmra.mrb[0].mxu0 %v186
  %v1746 = vpop.f32.mrb[0].mxu0
  %v1747 = vadd.f32 %v1127, %v1746
  %v1748 = vpop.f32.mrb[0].mxu0
  %1749 = vmatprep.mubr.f32.mxu0 %v649
  %1750 = vmatmul.mubr.f32.gmra.mrb[0].mxu0 %v190
  %v1751 = vpop.f32.mrb[0].mxu0
  %v1752 = vadd.f32 %v1132, %v1751
  %v1753 = vpop.f32.mrb[0].mxu0
  %1754 = vmatprep.mubr.f32.mxu0 %v652
  %1755 = vmatmul.mubr.f32.gmra.mrb[0].mxu0 %v194
  %v1756 = vpop.f32.mrb[0].mxu0
  %v1757 = vadd.f32 %v1137, %v1756
  %v1758 = vpop.f32.mrb[0].mxu0
  %1759 = vmatprep.mubr.f32.mxu0 %v655
  %1760 = vmatmul.mubr.f32.gmra.mrb[0].mxu0 %v198
  %v1761 = vpop.f32.mrb[0].mxu0
  %v1762 = vadd.f32 %v1142, %v1761
  %v1763 = vpop.f32.mrb[0].mxu0
  %1764 = vmatprep.mubr.f32.mxu0 %v658
  %1765 = vmatmul.mubr.f32.gmra.mrb[0].mxu0 %v202
  %v1766 = vpop.f32.mrb[0].mxu0
  %v1767 = vadd.f32 %v1147, %v1766
  %v1768 = vpop.f32.mrb[0].mxu0
  %1769 = vmatprep.mubr.f32.mxu0 %v661
  %1770 = vmatmul.mubr.f32.gmra.mrb[0].mxu0 %v206
  %v1771 = vpop.f32.mrb[0].mxu0
  %v1772 = vadd.f32 %v1152, %v1771
  %v1773 = vpop.f32.mrb[0].mxu0
  %1774 = vmatprep.mubr.f32.mxu0 %v664
  %1775 = vmatmul.mubr.f32.gmra.mrb[0].mxu0 %v210
  %v1776 = vpop.f32.mrb[0].mxu0
  %v1777 = vadd.f32 %v1157, %v1776
  %v1778 = vpop.f32.mrb[0].mxu0
  %1779 = vmatprep.mubr.f32.mxu0 %v667
  %1780 = vmatmul.mubr.f32.gmra.mrb[0].mxu0 %v214
  %v1781 = vpop.f32.mrb[0].mxu0
  %v1782 = vadd.f32 %v1162, %v1781
  %v1783 = vpop.f32.mrb[0].mxu0
  %1784 = vmatprep.mubr.f32.mxu0 %v670
  %1785 = vmatmul.mubr.f32.gmra.mrb[0].mxu0 %v218
  %v1786 = vpop.f32.mrb[0].mxu0
  %v1787 = vadd.f32 %v1167, %v1786
  %v1788 = vpop.f32.mrb[0].mxu0
  %1789 = vmatprep.mubr.f32.mxu0 %v673
  %1790 = vmatmul.mubr.f32.gmra.mrb[0].mxu0 %v222
  %v1791 = vpop.f32.mrb[0].mxu0
  %v1792 = vadd.f32 %v1172, %v1791
  %v1793 = vpop.f32.mrb[0].mxu0
  %1794 = vmatprep.mubr.f32.mxu0 %v676
  %1795 = vmatmul.mubr.f32.gmra.mrb[0].mxu0 %v226
  %v1796 = vpop.f32.mrb[0].mxu0
  %v1797 = vadd.f32 %v1177, %v1796
  %v1798 = vpop.f32.mrb[0].mxu0
  %1799 = vmatprep.mubr.f32.mxu0 %v679
  %1800 = vmatmul.mubr.f32.gmra.mrb[0].mxu0 %v230
  %v1801 = vpop.f32.mrb[0].mxu0
  %v1802 = vadd.f32 %v1182, %v1801
  %v1803 = vpop.f32.mrb[0].mxu0
  %1804 = vmatprep.mubr.f32.mxu0 %v682
  %1805 = vmatmul.mubr.f32.gmra.mrb[0].mxu0 %v234
  %v1806 = vpop.f32.mrb[0].mxu0
  %v1807 = vadd.f32 %v1187, %v1806
  %v1808 = vpop.f32.mrb[0].mxu0
  %1809 = vmatprep.mubr.f32.mxu0 %v685
  %1810 = vmatmul.mubr.f32.gmra.mrb[0].mxu0 %v238
  %v1811 = vpop.f32.mrb[0].mxu0
  %v1812 = vadd.f32 %v1192, %v1811
  %v1813 = vpop.f32.mrb[0].mxu0
  %1814 = vmatprep.mubr.f32.mxu0 %v688
  %1815 = vmatmul.mubr.f32.gmra.mrb[0].mxu0 %v242
  %v1816 = vpop.f32.mrb[0].mxu0
  %v1817 = vadd.f32 %v1197, %v1816
  %v1818 = vpop.f32.mrb[0].mxu0
  %1819 = vmatprep.mubr.f32.mxu0 %v691
  %1820 = vmatmul.mubr.f32.gmra.mrb[0].mxu0 %v246
  %v1821 = vpop.f32.mrb[0].mxu0
  %v1822 = vadd.f32 %v1202, %v1821
  %v1823 = vpop.f32.mrb[0].mxu0
  %1824 = vmatprep.mubr.f32.mxu0 %v694
  %1825 = vmatmul.mubr.f32.gmra.mrb[0].mxu0 %v250
  %v1826 = vpop.f32.mrb[0].mxu0
  %v1827 = vadd.f32 %v1207, %v1826
  %v1828 = vpop.f32.mrb[0].mxu0
  %1829 = vmatprep.mubr.f32.mxu0 %v697
  %1830 = vmatmul.mubr.f32.gmra.mrb[0].mxu0 %v254
  %v1831 = vpop.f32.mrb[0].mxu0
  %v1832 = vadd.f32 %v1212, %v1831
  %v1833 = vpop.f32.mrb[0].mxu0
  %1834 = vmatprep.mubr.f32.mxu0 %v700
  %1835 = vmatmul.mubr.f32.gmra.mrb[0].mxu0 %v258
  %v1836 = vpop.f32.mrb[0].mxu0
  %v1837 = vadd.f32 %v1217, %v1836
  %v1838 = vpop.f32.mrb[0].mxu0
  %1839 = vmatprep.mubr.f32.mxu0 %v703
  %1840 = vmatmul.mubr.f32.gmra.mrb[0].mxu0 %v262
  %v1841 = vpop.f32.mrb[0].mxu0
  %v1842 = vadd.f32 %v1222, %v1841
  %v1843 = vpop.f32.mrb[0].mxu0
  %1844 = vmatprep.mubr.f32.mxu0 %v706
  %1845 = vmatmul.mubr.f32.gmra.mrb[0].mxu0 %v266
  %v1846 = vpop.f32.mrb[0].mxu0
  %v1847 = vadd.f32 %v1227, %v1846
  %v1848 = vpop.f32.mrb[0].mxu0
  %1849 = vmatprep.mubr.f32.mxu0 %v709
  %1850 = vmatmul.mubr.f32.gmra.mrb[0].mxu0 %v270
  %v1851 = vpop.f32.mrb[0].mxu0
  %v1852 = vadd.f32 %v1232, %v1851
  %v1853 = vpop.f32.mrb[0].mxu0
  %1854 = vmatprep.mubr.f32.mxu0 %v712
  %1855 = vmatmul.mubr.f32.gmra.mrb[0].mxu0 %v274
  %v1856 = vpop.f32.mrb[0].mxu0
  %v1857 = vadd.f32 %v1237, %v1856
  %v1858 = vpop.f32.mrb[0].mxu0
  %1859 = vmatprep.mubr.f32.mxu0 %v715
  %1860 = vmatmul.mubr.f32.gmra.mrb[0].mxu0 %v278
  %v1861 = vpop.f32.mrb[0].mxu0
  %v1862 = vadd.f32 %v1242, %v1861
  %v1863 = vpop.f32.mrb[0].mxu0
  %1864 = vmatprep.mubr.f32.mxu0 %v718
  %1865 = vmatmul.mubr.f32.gmra.mrb[0].mxu0 %v282
  %v1866 = vpop.f32.mrb[0].mxu0
  %v1867 = vadd.f32 %v1247, %v1866
  %v1868 = vpop.f32.mrb[0].mxu0
  %1869 = vmatprep.mubr.f32.mxu0 %v721
  %1870 = vmatmul.mubr.f32.gmra.mrb[0].mxu0 %v286
  %v1871 = vpop.f32.mrb[0].mxu0
  %v1872 = vadd.f32 %v1252, %v1871
  %v1873 = vpop.f32.mrb[0].mxu0
  %1874 = vmatprep.mubr.f32.mxu0 %v724
  %1875 = vmatmul.mubr.f32.gmra.mrb[0].mxu0 %v290
  %v1876 = vpop.f32.mrb[0].mxu0
  %v1877 = vadd.f32 %v1257, %v1876
  %v1878 = vpop.f32.mrb[0].mxu0
  %1879 = vmatprep.mubr.f32.mxu0 %v727
  %1880 = vmatmul.mubr.f32.gmra.mrb[0].mxu0 %v294
  %v1881 = vpop.f32.mrb[0].mxu0
  %v1882 = vadd.f32 %v1262, %v1881
  %v1883 = vpop.f32.mrb[0].mxu0
  %1884 = vmatprep.mubr.f32.mxu0 %v730
  %1885 = vmatmul.mubr.f32.gmra.mrb[0].mxu0 %v298
  %v1886 = vpop.f32.mrb[0].mxu0
  %v1887 = vadd.f32 %v1267, %v1886
  %v1888 = vpop.f32.mrb[0].mxu0
  %1889 = vmatprep.mubr.f32.mxu0 %v733
  %1890 = vmatmul.mubr.f32.gmra.mrb[0].mxu0 %v302
  %v1891 = vpop.f32.mrb[0].mxu0
  %v1892 = vadd.f32 %v1272, %v1891
  %v1893 = vpop.f32.mrb[0].mxu0
  %1894 = vmatprep.mubr.f32.mxu0 %v736
  %1895 = vmatmul.mubr.f32.gmra.mrb[0].mxu0 %v306
  %v1896 = vpop.f32.mrb[0].mxu0
  %v1897 = vadd.f32 %v1277, %v1896
  %v1898 = vpop.f32.mrb[0].mxu0
  %1899 = vmatprep.mubr.f32.mxu0 %v739
  %1900 = vmatmul.mubr.f32.gmra.mrb[0].mxu0 %v310
  %v1901 = vpop.f32.mrb[0].mxu0
  %v1902 = vadd.f32 %v1282, %v1901
  %v1903 = vpop.f32.mrb[0].mxu0
  %1904 = vmatprep.mubr.f32.mxu0 %v742
  %1905 = vmatmul.mubr.f32.gmra.mrb[0].mxu0 %v314
  %v1906 = vpop.f32.mrb[0].mxu0
  %v1907 = vadd.f32 %v1287, %v1906
  %v1908 = vpop.f32.mrb[0].mxu0
  %1909 = vmatprep.mubr.f32.mxu0 %v745
  %1910 = vmatmul.mubr.f32.gmra.mrb[0].mxu0 %v318
  %v1911 = vpop.f32.mrb[0].mxu0
  %v1912 = vadd.f32 %v1292, %v1911
  %v1913 = vpop.f32.mrb[0].mxu0
  %1914 = vmatprep.mubr.f32.mxu0 %v748
  %1915 = vmatmul.mubr.f32.gmra.mrb[0].mxu0 %v322
  %v1916 = vpop.f32.mrb[0].mxu0
  %v1917 = vadd.f32 %v1297, %v1916
  %v1918 = vpop.f32.mrb[0].mxu0
  %1919 = vmatprep.mubr.f32.mxu0 %v751
  %1920 = vmatmul.mubr.f32.gmra.mrb[0].mxu0 %v326
  %v1921 = vpop.f32.mrb[0].mxu0
  %v1922 = vadd.f32 %v1302, %v1921
  %v1923 = vpop.f32.mrb[0].mxu0
  %1924 = vmatprep.mubr.f32.mxu0 %v754
  %1925 = vmatmul.mubr.f32.gmra.mrb[0].mxu0 %v330
  %v1926 = vpop.f32.mrb[0].mxu0
  %v1927 = vadd.f32 %v1307, %v1926
  %v1928 = vpop.f32.mrb[0].mxu0
  %1929 = vmatprep.mubr.f32.mxu0 %v757
  %1930 = vmatmul.mubr.f32.gmra.mrb[0].mxu0 %v334
  %v1931 = vpop.f32.mrb[0].mxu0
  %v1932 = vadd.f32 %v1312, %v1931
  %v1933 = vpop.f32.mrb[0].mxu0
  %1934 = vmatprep.mubr.f32.mxu0 %v760
  %1935 = vmatmul.mubr.f32.gmra.mrb[0].mxu0 %v338
  %v1936 = vpop.f32.mrb[0].mxu0
  %v1937 = vadd.f32 %v1317, %v1936
  %v1938 = vpop.f32.mrb[0].mxu0
  %1939 = vmatprep.mubr.f32.mxu0 %v763
  %1940 = vmatmul.mubr.f32.gmra.mrb[0].mxu0 %v342
  %v1941 = vpop.f32.mrb[0].mxu0
  %v1942 = vadd.f32 %v1322, %v1941
  %v1943 = vpop.f32.mrb[0].mxu0
  %1944 = vmatprep.mubr.f32.mxu0 %v766
  %1945 = vmatmul.mubr.f32.gmra.mrb[0].mxu0 %v346
  %v1946 = vpop.f32.mrb[0].mxu0
  %v1947 = vadd.f32 %v1327, %v1946
  %v1948 = vpop.f32.mrb[0].mxu0
  %1949 = vmatprep.mubr.f32.mxu0 %v769
  %1950 = vmatmul.mubr.f32.gmra.mrb[0].mxu0 %v350
  %v1951 = vpop.f32.mrb[0].mxu0
  %v1952 = vadd.f32 %v1332, %v1951
  %v1953 = vpop.f32.mrb[0].mxu0
  %1954 = vmatprep.mubr.f32.mxu0 %v772
  %1955 = vmatmul.mubr.f32.gmra.mrb[0].mxu0 %v354
  %v1956 = vpop.f32.mrb[0].mxu0
  %v1957 = vadd.f32 %v1337, %v1956
  %v1958 = vpop.f32.mrb[0].mxu0
  %1959 = vmatprep.mubr.f32.mxu0 %v775
  %1960 = vmatmul.mubr.f32.gmra.mrb[0].mxu0 %v358
  %v1961 = vpop.f32.mrb[0].mxu0
  %v1962 = vadd.f32 %v1342, %v1961
  %v1963 = vpop.f32.mrb[0].mxu0
  %1964 = vmatprep.mubr.f32.mxu0 %v778
  %1965 = vmatmul.mubr.f32.gmra.mrb[0].mxu0 %v362
  %v1966 = vpop.f32.mrb[0].mxu0
  %v1967 = vadd.f32 %v1347, %v1966
  %v1968 = vpop.f32.mrb[0].mxu0
  %1969 = vmatprep.mubr.f32.mxu0 %v781
  %1970 = vmatmul.mubr.f32.gmra.mrb[0].mxu0 %v366
  %v1971 = vpop.f32.mrb[0].mxu0
  %v1972 = vadd.f32 %v1352, %v1971
  %v1973 = vpop.f32.mrb[0].mxu0
  %1974 = vmatprep.mubr.f32.mxu0 %v784
  %1975 = vmatmul.mubr.f32.gmra.mrb[0].mxu0 %v370
  %v1976 = vpop.f32.mrb[0].mxu0
  %v1977 = vadd.f32 %v1357, %v1976
  %v1978 = vpop.f32.mrb[0].mxu0
  %1979 = vmatprep.mubr.f32.mxu0 %v787
  %1980 = vmatmul.mubr.f32.gmra.mrb[0].mxu0 %v374
  %v1981 = vpop.f32.mrb[0].mxu0
  %v1982 = vadd.f32 %v1362, %v1981
  %v1983 = vpop.f32.mrb[0].mxu0
  %1984 = vmatprep.mubr.f32.mxu0 %v790
  %1985 = vmatmul.mubr.f32.gmra.mrb[0].mxu0 %v378
  %v1986 = vpop.f32.mrb[0].mxu0
  %v1987 = vadd.f32 %v1367, %v1986
  %v1988 = vpop.f32.mrb[0].mxu0
  %1989 = vmatprep.mubr.f32.mxu0 %v793
  %1990 = vmatmul.mubr.f32.gmra.mrb[0].mxu0 %v382
  %v1991 = vpop.f32.mrb[0].mxu0
  %v1992 = vadd.f32 %v1372, %v1991
  %v1993 = vpop.f32.mrb[0].mxu0
  %1994 = vmatprep.mubr.f32.mxu0 %v796
  %1995 = vmatmul.mubr.f32.gmra.mrb[0].mxu0 %v386
  %v1996 = vpop.f32.mrb[0].mxu0
  %v1997 = vadd.f32 %v1377, %v1996
  %v1998 = vpop.f32.mrb[0].mxu0
  %1999 = vmatprep.mubr.f32.mxu0 %v799
  %2000 = vmatmul.mubr.f32.gmra.mrb[0].mxu0 %v390
  %v2001 = vpop.f32.mrb[0].mxu0
  %v2002 = vadd.f32 %v1382, %v2001
  %v2003 = vpop.f32.mrb[0].mxu0
  %2004 = vmatprep.mubr.f32.mxu0 %v802
  %2005 = vmatmul.mubr.f32.gmra.mrb[0].mxu0 %v394
  %v2006 = vpop.f32.mrb[0].mxu0
  %v2007 = vadd.f32 %v1387, %v2006
  %v2008 = vpop.f32.mrb[0].mxu0
  %2009 = vmatprep.mubr.f32.mxu0 %v805
  %2010 = vmatmul.mubr.f32.gmra.mrb[0].mxu0 %v398
  %v2011 = vpop.f32.mrb[0].mxu0
  %v2012 = vadd.f32 %v1392, %v2011
  %v2013 = vpop.f32.mrb[0].mxu0
  %2014 = vmatprep.mubr.f32.mxu0 %v808
  %2015 = vmatmul.mubr.f32.gmra.mrb[0].mxu0 %v402
  %v2016 = vpop.f32.mrb[0].mxu0
  %v2017 = vadd.f32 %v1397, %v2016
  %v2018 = vpop.f32.mrb[0].mxu0
  %2019 = vmatprep.mubr.f32.mxu0 %v811
  %2020 = vmatmul.mubr.f32.gmra.mrb[0].mxu0 %v406
  %v2021 = vpop.f32.mrb[0].mxu0
  %v2022 = vadd.f32 %v1402, %v2021
  %v2023 = vpop.f32.mrb[0].mxu0
  %2024 = vmatprep.mubr.f32.mxu0 %v814
  %2025 = vmatmul.mubr.f32.gmra.mrb[0].mxu0 %v410
  %v2026 = vpop.f32.mrb[0].mxu0
  %v2027 = vadd.f32 %v1407, %v2026
  %v2028 = vpop.f32.mrb[0].mxu0
  %2029 = vmatprep.mubr.f32.mxu0 %v817
  %2030 = vmatmul.mubr.f32.gmra.mrb[0].mxu0 %v414
  %v2031 = vpop.f32.mrb[0].mxu0
  %v2032 = vadd.f32 %v1412, %v2031
  %v2033 = vpop.f32.mrb[0].mxu0
  %2034 = vmatprep.mubr.f32.mxu0 %v820
  %2035 = vmatmul.mubr.f32.gmra.mrb[0].mxu0 %v418
  %v2036 = vpop.f32.mrb[0].mxu0
  %v2037 = vadd.f32 %v1417, %v2036
  %v2038 = vpop.f32.mrb[0].mxu0
  %2039 = vmatprep.mubr.f32.mxu0 %v823
  %2040 = vmatmul.mubr.f32.gmra.mrb[0].mxu0 %v422
  %v2041 = vpop.f32.mrb[0].mxu0
  %v2042 = vadd.f32 %v1422, %v2041
  %v2043 = vpop.f32.mrb[0].mxu0
  %2044 = vmatprep.mubr.f32.mxu0 %v826
  %2045 = vmatmul.mubr.f32.gmra.mrb[0].mxu0 %v426
  %v2046 = vpop.f32.mrb[0].mxu0
  %v2047 = vadd.f32 %v1427, %v2046
  %v2048 = vpop.f32.mrb[0].mxu0
  %2049 = vmatprep.mubr.f32.mxu0 %v829
  %2050 = vmatmul.mubr.f32.gmra.mrb[0].mxu0 %v430
  %v2051 = vpop.f32.mrb[0].mxu0
  %v2052 = vadd.f32 %v1432, %v2051
  %v2053 = vpop.f32.mrb[0].mxu0
  %2054 = vmatprep.mubr.f32.mxu0 %v832
  %2055 = vmatmul.mubr.f32.gmra.mrb[0].mxu0 %v434
  %v2056 = vpop.f32.mrb[0].mxu0
  %v2057 = vadd.f32 %v1437, %v2056
  %v2058 = vpop.f32.mrb[0].mxu0
  %2059 = vmatprep.mubr.f32.mxu0 %v835
  %2060 = vmatmul.mubr.f32.gmra.mrb[0].mxu0 %v438
  %v2061 = vpop.f32.mrb[0].mxu0
  %v2062 = vadd.f32 %v1442, %v2061
  %v2063 = vpop.f32.mrb[0].mxu0
  %2064 = vmatprep.mubr.f32.mxu0 %v838
  %2065 = vmatmul.mubr.f32.gmra.mrb[0].mxu0 %v442
  %v2066 = vpop.f32.mrb[0].mxu0
  %v2067 = vadd.f32 %v1447, %v2066
  %v2068 = vpop.f32.mrb[0].mxu0
  %2069 = vmatprep.mubr.f32.mxu0 %v841
  %2070 = vmatmul.mubr.f32.gmra.mrb[0].mxu0 %v446
  %v2071 = vpop.f32.mrb[0].mxu0
  %v2072 = vadd.f32 %v1452, %v2071
  %v2073 = vpop.f32.mrb[0].mxu0
  %2074 = vmatprep.mubr.f32.mxu0 %v844
  %2075 = vmatmul.mubr.f32.gmra.mrb[0].mxu0 %v450
  %v2076 = vpop.f32.mrb[0].mxu0
  %v2077 = vadd.f32 %v1457, %v2076
  %v2078 = vpop.f32.mrb[0].mxu0
  %2079 = vmatprep.mubr.f32.mxu0 %v847
  %2080 = vmatmul.mubr.f32.gmra.mrb[0].mxu0 %v454
  %v2081 = vpop.f32.mrb[0].mxu0
  %v2082 = vadd.f32 %v1462, %v2081
  %v2083 = vpop.f32.mrb[0].mxu0
  %2084 = vmatprep.mubr.f32.mxu0 %v850
  %2085 = vmatmul.mubr.f32.gmra.mrb[0].mxu0 %v458
  %v2086 = vpop.f32.mrb[0].mxu0
  %v2087 = vadd.f32 %v1467, %v2086
  %v2088 = vpop.f32.mrb[0].mxu0
  %2089 = vmatprep.mubr.f32.mxu0 %v853
  %2090 = vmatmul.mubr.f32.gmra.mrb[0].mxu0 %v462
  %v2091 = vpop.f32.mrb[0].mxu0
  %v2092 = vadd.f32 %v1472, %v2091
  %v2093 = vpop.f32.mrb[0].mxu0
  %2094 = vdwg.mxu0
  %v2095 = vlaneseq
  %v2096 = vshrl.u32 %v2095, 7
  %v2097 = vadd.s32 %v2096, 8
  %v2098 = vadd.s32 %v2096, 16
  %v2099 = vadd.s32 %v2096, 24
  %v2100 = vadd.s32 %v2096, 32
  %v2101 = vadd.s32 %v2096, 40
  %v2102 = vadd.s32 %v2096, 48
  %v2103 = vadd.s32 %v2096, 56
  %v2104 = vadd.s32 %v2096, 64
  %v2105 = vadd.s32 %v2096, 72
  %v2106 = vadd.s32 %v2096, 80
  %v2107 = vadd.s32 %v2096, 88
  %v2108 = vadd.s32 %v2096, 96
  %v2109 = vadd.s32 %v2096, 104
  %v2110 = vadd.s32 %v2096, 112
  %v2111 = vadd.s32 %v2096, 120
  %v2112 = vadd.s32 %v2096, 128
  %v2113 = vadd.s32 %v2096, 136
  %v2114 = vadd.s32 %v2096, 144
  %v2115 = vadd.s32 %v2096, 152
  %v2116 = vadd.s32 %v2096, 160
  %v2117 = vadd.s32 %v2096, 168
  %v2118 = vadd.s32 %v2096, 176
  %v2119 = vadd.s32 %v2096, 184
  %v2120 = vadd.s32 %v2096, 192
  %v2121 = vadd.s32 %v2096, 200
  %v2122 = vadd.s32 %v2096, 208
  %v2123 = vadd.s32 %v2096, 216
  %v2124 = vadd.s32 %v2096, 224
  %v2125 = vadd.s32 %v2096, 232
  %v2126 = vadd.s32 %v2096, 240
  %v2127 = vadd.s32 %v2096, 248
  %v2128 = vadd.s32 %v2096, 256
  %v2129 = vadd.s32 %v2096, 264
  %v2130 = vadd.s32 %v2096, 272
  %v2131 = vadd.s32 %v2096, 280
  %v2132 = vadd.s32 %v2096, 288
  %v2133 = vadd.s32 %v2096, 296
  %v2134 = vadd.s32 %v2096, 304
  %v2135 = vadd.s32 %v2096, 312
  %v2136 = vadd.s32 %v2096, 320
  %v2137 = vadd.s32 %v2096, 328
  %v2138 = vadd.s32 %v2096, 336
  %v2139 = vadd.s32 %v2096, 344
  %v2140 = vadd.s32 %v2096, 352
  %v2141 = vadd.s32 %v2096, 360
  %v2142 = vadd.s32 %v2096, 368
  %v2143 = vadd.s32 %v2096, 376
  %v2144 = vadd.s32 %v2096, 384
  %v2145 = vadd.s32 %v2096, 392
  %v2146 = vadd.s32 %v2096, 400
  %v2147 = vadd.s32 %v2096, 408
  %v2148 = vadd.s32 %v2096, 416
  %v2149 = vadd.s32 %v2096, 424
  %v2150 = vadd.s32 %v2096, 432
  %v2151 = vadd.s32 %v2096, 440
  %v2152 = vadd.s32 %v2096, 448
  %v2153 = vadd.s32 %v2096, 456
  %v2154 = vadd.s32 %v2096, 464
  %v2155 = vadd.s32 %v2096, 472
  %v2156 = vadd.s32 %v2096, 480
  %v2157 = vadd.s32 %v2096, 488
  %v2158 = vadd.s32 %v2096, 496
  %v2159 = vadd.s32 %v2096, 504
  %v2160 = vadd.s32 %v2096, 512
  %v2161 = vadd.s32 %v2096, 520
  %v2162 = vadd.s32 %v2096, 528
  %v2163 = vadd.s32 %v2096, 536
  %v2164 = vadd.s32 %v2096, 544
  %v2165 = vadd.s32 %v2096, 552
  %v2166 = vadd.s32 %v2096, 560
  %v2167 = vadd.s32 %v2096, 568
  %v2168 = vadd.s32 %v2096, 576
  %v2169 = vadd.s32 %v2096, 584
  %v2170 = vadd.s32 %v2096, 592
  %v2171 = vadd.s32 %v2096, 600
  %v2172 = vadd.s32 %v2096, 608
  %v2173 = vadd.s32 %v2096, 616
  %v2174 = vadd.s32 %v2096, 624
  %v2175 = vadd.s32 %v2096, 632
  %v2176 = vadd.s32 %v2096, 640
  %v2177 = vadd.s32 %v2096, 648
  %v2178 = vadd.s32 %v2096, 656
  %v2179 = vadd.s32 %v2096, 664
  %v2180 = vadd.s32 %v2096, 672
  %v2181 = vadd.s32 %v2096, 680
  %v2182 = vadd.s32 %v2096, 688
  %v2183 = vadd.s32 %v2096, 696
  %v2184 = vadd.s32 %v2096, 704
  %v2185 = vadd.s32 %v2096, 712
  %v2186 = vadd.s32 %v2096, 720
  %v2187 = vadd.s32 %v2096, 728
  %v2188 = vadd.s32 %v2096, 736
  %v2189 = vadd.s32 %v2096, 744
  %v2190 = vadd.s32 %v2096, 752
  %v2191 = vadd.s32 %v2096, 760
  %v2192 = vadd.s32 %v2096, 768
  %v2193 = vadd.s32 %v2096, 776
  %v2194 = vadd.s32 %v2096, 784
  %v2195 = vadd.s32 %v2096, 792
  %v2196 = vadd.s32 %v2096, 800
  %v2197 = vadd.s32 %v2096, 808
  %v2198 = vadd.s32 %v2096, 816
  %v2199 = vadd.s32 %v2096, 824
  %v2200 = vadd.s32 %v2096, 832
  %v2201 = vadd.s32 %v2096, 840
  %v2202 = vadd.s32 %v2096, 848
  %v2203 = vadd.s32 %v2096, 856
  %v2204 = vadd.s32 %v2096, 864
  %v2205 = vadd.s32 %v2096, 872
  %v2206 = vadd.s32 %v2096, 880
  %vm2207 = vcmp.lt.s32.totalorder %v2096, 882
  %vm2208 = vcmp.lt.s32.totalorder %v2097, 882
  %vm2209 = vcmp.lt.s32.totalorder %v2098, 882
  %vm2210 = vcmp.lt.s32.totalorder %v2099, 882
  %vm2211 = vcmp.lt.s32.totalorder %v2100, 882
  %vm2212 = vcmp.lt.s32.totalorder %v2101, 882
  %vm2213 = vcmp.lt.s32.totalorder %v2102, 882
  %vm2214 = vcmp.lt.s32.totalorder %v2103, 882
  %vm2215 = vcmp.lt.s32.totalorder %v2104, 882
  %vm2216 = vcmp.lt.s32.totalorder %v2105, 882
  %vm2217 = vcmp.lt.s32.totalorder %v2106, 882
  %vm2218 = vcmp.lt.s32.totalorder %v2107, 882
  %vm2219 = vcmp.lt.s32.totalorder %v2108, 882
  %vm2220 = vcmp.lt.s32.totalorder %v2109, 882
  %vm2221 = vcmp.lt.s32.totalorder %v2110, 882
  %vm2222 = vcmp.lt.s32.totalorder %v2111, 882
  %vm2223 = vcmp.lt.s32.totalorder %v2112, 882
  %vm2224 = vcmp.lt.s32.totalorder %v2113, 882
  %vm2225 = vcmp.lt.s32.totalorder %v2114, 882
  %vm2226 = vcmp.lt.s32.totalorder %v2115, 882
  %vm2227 = vcmp.lt.s32.totalorder %v2116, 882
  %vm2228 = vcmp.lt.s32.totalorder %v2117, 882
  %vm2229 = vcmp.lt.s32.totalorder %v2118, 882
  %vm2230 = vcmp.lt.s32.totalorder %v2119, 882
  %vm2231 = vcmp.lt.s32.totalorder %v2120, 882
  %vm2232 = vcmp.lt.s32.totalorder %v2121, 882
  %vm2233 = vcmp.lt.s32.totalorder %v2122, 882
  %vm2234 = vcmp.lt.s32.totalorder %v2123, 882
  %vm2235 = vcmp.lt.s32.totalorder %v2124, 882
  %vm2236 = vcmp.lt.s32.totalorder %v2125, 882
  %vm2237 = vcmp.lt.s32.totalorder %v2126, 882
  %vm2238 = vcmp.lt.s32.totalorder %v2127, 882
  %vm2239 = vcmp.lt.s32.totalorder %v2128, 882
  %vm2240 = vcmp.lt.s32.totalorder %v2129, 882
  %vm2241 = vcmp.lt.s32.totalorder %v2130, 882
  %vm2242 = vcmp.lt.s32.totalorder %v2131, 882
  %vm2243 = vcmp.lt.s32.totalorder %v2132, 882
  %vm2244 = vcmp.lt.s32.totalorder %v2133, 882
  %vm2245 = vcmp.lt.s32.totalorder %v2134, 882
  %vm2246 = vcmp.lt.s32.totalorder %v2135, 882
  %vm2247 = vcmp.lt.s32.totalorder %v2136, 882
  %vm2248 = vcmp.lt.s32.totalorder %v2137, 882
  %vm2249 = vcmp.lt.s32.totalorder %v2138, 882
  %vm2250 = vcmp.lt.s32.totalorder %v2139, 882
  %vm2251 = vcmp.lt.s32.totalorder %v2140, 882
  %vm2252 = vcmp.lt.s32.totalorder %v2141, 882
  %vm2253 = vcmp.lt.s32.totalorder %v2142, 882
  %vm2254 = vcmp.lt.s32.totalorder %v2143, 882
  %vm2255 = vcmp.lt.s32.totalorder %v2144, 882
  %vm2256 = vcmp.lt.s32.totalorder %v2145, 882
  %vm2257 = vcmp.lt.s32.totalorder %v2146, 882
  %vm2258 = vcmp.lt.s32.totalorder %v2147, 882
  %vm2259 = vcmp.lt.s32.totalorder %v2148, 882
  %vm2260 = vcmp.lt.s32.totalorder %v2149, 882
  %vm2261 = vcmp.lt.s32.totalorder %v2150, 882
  %vm2262 = vcmp.lt.s32.totalorder %v2151, 882
  %vm2263 = vcmp.lt.s32.totalorder %v2152, 882
  %vm2264 = vcmp.lt.s32.totalorder %v2153, 882
  %vm2265 = vcmp.lt.s32.totalorder %v2154, 882
  %vm2266 = vcmp.lt.s32.totalorder %v2155, 882
  %vm2267 = vcmp.lt.s32.totalorder %v2156, 882
  %vm2268 = vcmp.lt.s32.totalorder %v2157, 882
  %vm2269 = vcmp.lt.s32.totalorder %v2158, 882
  %vm2270 = vcmp.lt.s32.totalorder %v2159, 882
  %vm2271 = vcmp.lt.s32.totalorder %v2160, 882
  %vm2272 = vcmp.lt.s32.totalorder %v2161, 882
  %vm2273 = vcmp.lt.s32.totalorder %v2162, 882
  %vm2274 = vcmp.lt.s32.totalorder %v2163, 882
  %vm2275 = vcmp.lt.s32.totalorder %v2164, 882
  %vm2276 = vcmp.lt.s32.totalorder %v2165, 882
  %vm2277 = vcmp.lt.s32.totalorder %v2166, 882
  %vm2278 = vcmp.lt.s32.totalorder %v2167, 882
  %vm2279 = vcmp.lt.s32.totalorder %v2168, 882
  %vm2280 = vcmp.lt.s32.totalorder %v2169, 882
  %vm2281 = vcmp.lt.s32.totalorder %v2170, 882
  %vm2282 = vcmp.lt.s32.totalorder %v2171, 882
  %vm2283 = vcmp.lt.s32.totalorder %v2172, 882
  %vm2284 = vcmp.lt.s32.totalorder %v2173, 882
  %vm2285 = vcmp.lt.s32.totalorder %v2174, 882
  %vm2286 = vcmp.lt.s32.totalorder %v2175, 882
  %vm2287 = vcmp.lt.s32.totalorder %v2176, 882
  %vm2288 = vcmp.lt.s32.totalorder %v2177, 882
  %vm2289 = vcmp.lt.s32.totalorder %v2178, 882
  %vm2290 = vcmp.lt.s32.totalorder %v2179, 882
  %vm2291 = vcmp.lt.s32.totalorder %v2180, 882
  %vm2292 = vcmp.lt.s32.totalorder %v2181, 882
  %vm2293 = vcmp.lt.s32.totalorder %v2182, 882
  %vm2294 = vcmp.lt.s32.totalorder %v2183, 882
  %vm2295 = vcmp.lt.s32.totalorder %v2184, 882
  %vm2296 = vcmp.lt.s32.totalorder %v2185, 882
  %vm2297 = vcmp.lt.s32.totalorder %v2186, 882
  %vm2298 = vcmp.lt.s32.totalorder %v2187, 882
  %vm2299 = vcmp.lt.s32.totalorder %v2188, 882
  %vm2300 = vcmp.lt.s32.totalorder %v2189, 882
  %vm2301 = vcmp.lt.s32.totalorder %v2190, 882
  %vm2302 = vcmp.lt.s32.totalorder %v2191, 882
  %vm2303 = vcmp.lt.s32.totalorder %v2192, 882
  %vm2304 = vcmp.lt.s32.totalorder %v2193, 882
  %vm2305 = vcmp.lt.s32.totalorder %v2194, 882
  %vm2306 = vcmp.lt.s32.totalorder %v2195, 882
  %vm2307 = vcmp.lt.s32.totalorder %v2196, 882
  %vm2308 = vcmp.lt.s32.totalorder %v2197, 882
  %vm2309 = vcmp.lt.s32.totalorder %v2198, 882
  %vm2310 = vcmp.lt.s32.totalorder %v2199, 882
  %vm2311 = vcmp.lt.s32.totalorder %v2200, 882
  %vm2312 = vcmp.lt.s32.totalorder %v2201, 882
  %vm2313 = vcmp.lt.s32.totalorder %v2202, 882
  %vm2314 = vcmp.lt.s32.totalorder %v2203, 882
  %vm2315 = vcmp.lt.s32.totalorder %v2204, 882
  %vm2316 = vcmp.lt.s32.totalorder %v2205, 882
  %vm2317 = vcmp.lt.s32.totalorder %v2206, 882
  %v2318 = vsel %vm2207, 1, 0
  %v2319 = vsel %vm2208, 1, 0
  %v2320 = vsel %vm2209, 1, 0
  %v2321 = vsel %vm2210, 1, 0
  %v2322 = vsel %vm2211, 1, 0
  %v2323 = vsel %vm2212, 1, 0
  %v2324 = vsel %vm2213, 1, 0
  %v2325 = vsel %vm2214, 1, 0
  %v2326 = vsel %vm2215, 1, 0
  %v2327 = vsel %vm2216, 1, 0
  %v2328 = vsel %vm2217, 1, 0
  %v2329 = vsel %vm2218, 1, 0
  %v2330 = vsel %vm2219, 1, 0
  %v2331 = vsel %vm2220, 1, 0
  %v2332 = vsel %vm2221, 1, 0
  %v2333 = vsel %vm2222, 1, 0
  %v2334 = vsel %vm2223, 1, 0
  %v2335 = vsel %vm2224, 1, 0
  %v2336 = vsel %vm2225, 1, 0
  %v2337 = vsel %vm2226, 1, 0
  %v2338 = vsel %vm2227, 1, 0
  %v2339 = vsel %vm2228, 1, 0
  %v2340 = vsel %vm2229, 1, 0
  %v2341 = vsel %vm2230, 1, 0
  %v2342 = vsel %vm2231, 1, 0
  %v2343 = vsel %vm2232, 1, 0
  %v2344 = vsel %vm2233, 1, 0
  %v2345 = vsel %vm2234, 1, 0
  %v2346 = vsel %vm2235, 1, 0
  %v2347 = vsel %vm2236, 1, 0
  %v2348 = vsel %vm2237, 1, 0
  %v2349 = vsel %vm2238, 1, 0
  %v2350 = vsel %vm2239, 1, 0
  %v2351 = vsel %vm2240, 1, 0
  %v2352 = vsel %vm2241, 1, 0
  %v2353 = vsel %vm2242, 1, 0
  %v2354 = vsel %vm2243, 1, 0
  %v2355 = vsel %vm2244, 1, 0
  %v2356 = vsel %vm2245, 1, 0
  %v2357 = vsel %vm2246, 1, 0
  %v2358 = vsel %vm2247, 1, 0
  %v2359 = vsel %vm2248, 1, 0
  %v2360 = vsel %vm2249, 1, 0
  %v2361 = vsel %vm2250, 1, 0
  %v2362 = vsel %vm2251, 1, 0
  %v2363 = vsel %vm2252, 1, 0
  %v2364 = vsel %vm2253, 1, 0
  %v2365 = vsel %vm2254, 1, 0
  %v2366 = vsel %vm2255, 1, 0
  %v2367 = vsel %vm2256, 1, 0
  %v2368 = vsel %vm2257, 1, 0
  %v2369 = vsel %vm2258, 1, 0
  %v2370 = vsel %vm2259, 1, 0
  %v2371 = vsel %vm2260, 1, 0
  %v2372 = vsel %vm2261, 1, 0
  %v2373 = vsel %vm2262, 1, 0
  %v2374 = vsel %vm2263, 1, 0
  %v2375 = vsel %vm2264, 1, 0
  %v2376 = vsel %vm2265, 1, 0
  %v2377 = vsel %vm2266, 1, 0
  %v2378 = vsel %vm2267, 1, 0
  %v2379 = vsel %vm2268, 1, 0
  %v2380 = vsel %vm2269, 1, 0
  %v2381 = vsel %vm2270, 1, 0
  %v2382 = vsel %vm2271, 1, 0
  %v2383 = vsel %vm2272, 1, 0
  %v2384 = vsel %vm2273, 1, 0
  %v2385 = vsel %vm2274, 1, 0
  %v2386 = vsel %vm2275, 1, 0
  %v2387 = vsel %vm2276, 1, 0
  %v2388 = vsel %vm2277, 1, 0
  %v2389 = vsel %vm2278, 1, 0
  %v2390 = vsel %vm2279, 1, 0
  %v2391 = vsel %vm2280, 1, 0
  %v2392 = vsel %vm2281, 1, 0
  %v2393 = vsel %vm2282, 1, 0
  %v2394 = vsel %vm2283, 1, 0
  %v2395 = vsel %vm2284, 1, 0
  %v2396 = vsel %vm2285, 1, 0
  %v2397 = vsel %vm2286, 1, 0
  %v2398 = vsel %vm2287, 1, 0
  %v2399 = vsel %vm2288, 1, 0
  %v2400 = vsel %vm2289, 1, 0
  %v2401 = vsel %vm2290, 1, 0
  %v2402 = vsel %vm2291, 1, 0
  %v2403 = vsel %vm2292, 1, 0
  %v2404 = vsel %vm2293, 1, 0
  %v2405 = vsel %vm2294, 1, 0
  %v2406 = vsel %vm2295, 1, 0
  %v2407 = vsel %vm2296, 1, 0
  %v2408 = vsel %vm2297, 1, 0
  %v2409 = vsel %vm2298, 1, 0
  %v2410 = vsel %vm2299, 1, 0
  %v2411 = vsel %vm2300, 1, 0
  %v2412 = vsel %vm2301, 1, 0
  %v2413 = vsel %vm2302, 1, 0
  %v2414 = vsel %vm2303, 1, 0
  %v2415 = vsel %vm2304, 1, 0
  %v2416 = vsel %vm2305, 1, 0
  %v2417 = vsel %vm2306, 1, 0
  %v2418 = vsel %vm2307, 1, 0
  %v2419 = vsel %vm2308, 1, 0
  %v2420 = vsel %vm2309, 1, 0
  %v2421 = vsel %vm2310, 1, 0
  %v2422 = vsel %vm2311, 1, 0
  %v2423 = vsel %vm2312, 1, 0
  %v2424 = vsel %vm2313, 1, 0
  %v2425 = vsel %vm2314, 1, 0
  %v2426 = vsel %vm2315, 1, 0
  %v2427 = vsel %vm2316, 1, 0
  %v2428 = vsel %vm2317, 1, 0
  %v2429 = vcvt.s32.f32 %v2318
  %v2430 = vcvt.s32.f32 %v2319
  %v2431 = vcvt.s32.f32 %v2320
  %v2432 = vcvt.s32.f32 %v2321
  %v2433 = vcvt.s32.f32 %v2322
  %v2434 = vcvt.s32.f32 %v2323
  %v2435 = vcvt.s32.f32 %v2324
  %v2436 = vcvt.s32.f32 %v2325
  %v2437 = vcvt.s32.f32 %v2326
  %v2438 = vcvt.s32.f32 %v2327
  %v2439 = vcvt.s32.f32 %v2328
  %v2440 = vcvt.s32.f32 %v2329
  %v2441 = vcvt.s32.f32 %v2330
  %v2442 = vcvt.s32.f32 %v2331
  %v2443 = vcvt.s32.f32 %v2332
  %v2444 = vcvt.s32.f32 %v2333
  %v2445 = vcvt.s32.f32 %v2334
  %v2446 = vcvt.s32.f32 %v2335
  %v2447 = vcvt.s32.f32 %v2336
  %v2448 = vcvt.s32.f32 %v2337
  %v2449 = vcvt.s32.f32 %v2338
  %v2450 = vcvt.s32.f32 %v2339
  %v2451 = vcvt.s32.f32 %v2340
  %v2452 = vcvt.s32.f32 %v2341
  %v2453 = vcvt.s32.f32 %v2342
  %v2454 = vcvt.s32.f32 %v2343
  %v2455 = vcvt.s32.f32 %v2344
  %v2456 = vcvt.s32.f32 %v2345
  %v2457 = vcvt.s32.f32 %v2346
  %v2458 = vcvt.s32.f32 %v2347
  %v2459 = vcvt.s32.f32 %v2348
  %v2460 = vcvt.s32.f32 %v2349
  %v2461 = vcvt.s32.f32 %v2350
  %v2462 = vcvt.s32.f32 %v2351
  %v2463 = vcvt.s32.f32 %v2352
  %v2464 = vcvt.s32.f32 %v2353
  %v2465 = vcvt.s32.f32 %v2354
  %v2466 = vcvt.s32.f32 %v2355
  %v2467 = vcvt.s32.f32 %v2356
  %v2468 = vcvt.s32.f32 %v2357
  %v2469 = vcvt.s32.f32 %v2358
  %v2470 = vcvt.s32.f32 %v2359
  %v2471 = vcvt.s32.f32 %v2360
  %v2472 = vcvt.s32.f32 %v2361
  %v2473 = vcvt.s32.f32 %v2362
  %v2474 = vcvt.s32.f32 %v2363
  %v2475 = vcvt.s32.f32 %v2364
  %v2476 = vcvt.s32.f32 %v2365
  %v2477 = vcvt.s32.f32 %v2366
  %v2478 = vcvt.s32.f32 %v2367
  %v2479 = vcvt.s32.f32 %v2368
  %v2480 = vcvt.s32.f32 %v2369
  %v2481 = vcvt.s32.f32 %v2370
  %v2482 = vcvt.s32.f32 %v2371
  %v2483 = vcvt.s32.f32 %v2372
  %v2484 = vcvt.s32.f32 %v2373
  %v2485 = vcvt.s32.f32 %v2374
  %v2486 = vcvt.s32.f32 %v2375
  %v2487 = vcvt.s32.f32 %v2376
  %v2488 = vcvt.s32.f32 %v2377
  %v2489 = vcvt.s32.f32 %v2378
  %v2490 = vcvt.s32.f32 %v2379
  %v2491 = vcvt.s32.f32 %v2380
  %v2492 = vcvt.s32.f32 %v2381
  %v2493 = vcvt.s32.f32 %v2382
  %v2494 = vcvt.s32.f32 %v2383
  %v2495 = vcvt.s32.f32 %v2384
  %v2496 = vcvt.s32.f32 %v2385
  %v2497 = vcvt.s32.f32 %v2386
  %v2498 = vcvt.s32.f32 %v2387
  %v2499 = vcvt.s32.f32 %v2388
  %v2500 = vcvt.s32.f32 %v2389
  %v2501 = vcvt.s32.f32 %v2390
  %v2502 = vcvt.s32.f32 %v2391
  %v2503 = vcvt.s32.f32 %v2392
  %v2504 = vcvt.s32.f32 %v2393
  %v2505 = vcvt.s32.f32 %v2394
  %v2506 = vcvt.s32.f32 %v2395
  %v2507 = vcvt.s32.f32 %v2396
  %v2508 = vcvt.s32.f32 %v2397
  %v2509 = vcvt.s32.f32 %v2398
  %v2510 = vcvt.s32.f32 %v2399
  %v2511 = vcvt.s32.f32 %v2400
  %v2512 = vcvt.s32.f32 %v2401
  %v2513 = vcvt.s32.f32 %v2402
  %v2514 = vcvt.s32.f32 %v2403
  %v2515 = vcvt.s32.f32 %v2404
  %v2516 = vcvt.s32.f32 %v2405
  %v2517 = vcvt.s32.f32 %v2406
  %v2518 = vcvt.s32.f32 %v2407
  %v2519 = vcvt.s32.f32 %v2408
  %v2520 = vcvt.s32.f32 %v2409
  %v2521 = vcvt.s32.f32 %v2410
  %v2522 = vcvt.s32.f32 %v2411
  %v2523 = vcvt.s32.f32 %v2412
  %v2524 = vcvt.s32.f32 %v2413
  %v2525 = vcvt.s32.f32 %v2414
  %v2526 = vcvt.s32.f32 %v2415
  %v2527 = vcvt.s32.f32 %v2416
  %v2528 = vcvt.s32.f32 %v2417
  %v2529 = vcvt.s32.f32 %v2418
  %v2530 = vcvt.s32.f32 %v2419
  %v2531 = vcvt.s32.f32 %v2420
  %v2532 = vcvt.s32.f32 %v2421
  %v2533 = vcvt.s32.f32 %v2422
  %v2534 = vcvt.s32.f32 %v2423
  %v2535 = vcvt.s32.f32 %v2424
  %v2536 = vcvt.s32.f32 %v2425
  %v2537 = vcvt.s32.f32 %v2426
  %v2538 = vcvt.s32.f32 %v2427
  %v2539 = vcvt.s32.f32 %v2428
  %v2540 = vmul.f32 %v1542, %v2429
  %v2541 = vmul.f32 %v1547, %v2430
  %v2542 = vmul.f32 %v1552, %v2431
  %v2543 = vmul.f32 %v1557, %v2432
  %v2544 = vmul.f32 %v1562, %v2433
  %v2545 = vmul.f32 %v1567, %v2434
  %v2546 = vmul.f32 %v1572, %v2435
  %v2547 = vmul.f32 %v1577, %v2436
  %v2548 = vmul.f32 %v1582, %v2437
  %v2549 = vmul.f32 %v1587, %v2438
  %v2550 = vmul.f32 %v1592, %v2439
  %v2551 = vmul.f32 %v1597, %v2440
  %v2552 = vmul.f32 %v1602, %v2441
  %v2553 = vmul.f32 %v1607, %v2442
  %v2554 = vmul.f32 %v1612, %v2443
  %v2555 = vmul.f32 %v1617, %v2444
  %v2556 = vmul.f32 %v1622, %v2445
  %v2557 = vmul.f32 %v1627, %v2446
  %v2558 = vmul.f32 %v1632, %v2447
  %v2559 = vmul.f32 %v1637, %v2448
  %v2560 = vmul.f32 %v1642, %v2449
  %v2561 = vmul.f32 %v1647, %v2450
  %v2562 = vmul.f32 %v1652, %v2451
  %v2563 = vmul.f32 %v1657, %v2452
  %v2564 = vmul.f32 %v1662, %v2453
  %v2565 = vmul.f32 %v1667, %v2454
  %v2566 = vmul.f32 %v1672, %v2455
  %v2567 = vmul.f32 %v1677, %v2456
  %v2568 = vmul.f32 %v1682, %v2457
  %v2569 = vmul.f32 %v1687, %v2458
  %v2570 = vmul.f32 %v1692, %v2459
  %v2571 = vmul.f32 %v1697, %v2460
  %v2572 = vmul.f32 %v1702, %v2461
  %v2573 = vmul.f32 %v1707, %v2462
  %v2574 = vmul.f32 %v1712, %v2463
  %v2575 = vmul.f32 %v1717, %v2464
  %v2576 = vmul.f32 %v1722, %v2465
  %v2577 = vmul.f32 %v1727, %v2466
  %v2578 = vmul.f32 %v1732, %v2467
  %v2579 = vmul.f32 %v1737, %v2468
  %v2580 = vmul.f32 %v1742, %v2469
  %v2581 = vmul.f32 %v1747, %v2470
  %v2582 = vmul.f32 %v1752, %v2471
  %v2583 = vmul.f32 %v1757, %v2472
  %v2584 = vmul.f32 %v1762, %v2473
  %v2585 = vmul.f32 %v1767, %v2474
  %v2586 = vmul.f32 %v1772, %v2475
  %v2587 = vmul.f32 %v1777, %v2476
  %v2588 = vmul.f32 %v1782, %v2477
  %v2589 = vmul.f32 %v1787, %v2478
  %v2590 = vmul.f32 %v1792, %v2479
  %v2591 = vmul.f32 %v1797, %v2480
  %v2592 = vmul.f32 %v1802, %v2481
  %v2593 = vmul.f32 %v1807, %v2482
  %v2594 = vmul.f32 %v1812, %v2483
  %v2595 = vmul.f32 %v1817, %v2484
  %v2596 = vmul.f32 %v1822, %v2485
  %v2597 = vmul.f32 %v1827, %v2486
  %v2598 = vmul.f32 %v1832, %v2487
  %v2599 = vmul.f32 %v1837, %v2488
  %v2600 = vmul.f32 %v1842, %v2489
  %v2601 = vmul.f32 %v1847, %v2490
  %v2602 = vmul.f32 %v1852, %v2491
  %v2603 = vmul.f32 %v1857, %v2492
  %v2604 = vmul.f32 %v1862, %v2493
  %v2605 = vmul.f32 %v1867, %v2494
  %v2606 = vmul.f32 %v1872, %v2495
  %v2607 = vmul.f32 %v1877, %v2496
  %v2608 = vmul.f32 %v1882, %v2497
  %v2609 = vmul.f32 %v1887, %v2498
  %v2610 = vmul.f32 %v1892, %v2499
  %v2611 = vmul.f32 %v1897, %v2500
  %v2612 = vmul.f32 %v1902, %v2501
  %v2613 = vmul.f32 %v1907, %v2502
  %v2614 = vmul.f32 %v1912, %v2503
  %v2615 = vmul.f32 %v1917, %v2504
  %v2616 = vmul.f32 %v1922, %v2505
  %v2617 = vmul.f32 %v1927, %v2506
  %v2618 = vmul.f32 %v1932, %v2507
  %v2619 = vmul.f32 %v1937, %v2508
  %v2620 = vmul.f32 %v1942, %v2509
  %v2621 = vmul.f32 %v1947, %v2510
  %v2622 = vmul.f32 %v1952, %v2511
  %v2623 = vmul.f32 %v1957, %v2512
  %v2624 = vmul.f32 %v1962, %v2513
  %v2625 = vmul.f32 %v1967, %v2514
  %v2626 = vmul.f32 %v1972, %v2515
  %v2627 = vmul.f32 %v1977, %v2516
  %v2628 = vmul.f32 %v1982, %v2517
  %v2629 = vmul.f32 %v1987, %v2518
  %v2630 = vmul.f32 %v1992, %v2519
  %v2631 = vmul.f32 %v1997, %v2520
  %v2632 = vmul.f32 %v2002, %v2521
  %v2633 = vmul.f32 %v2007, %v2522
  %v2634 = vmul.f32 %v2012, %v2523
  %v2635 = vmul.f32 %v2017, %v2524
  %v2636 = vmul.f32 %v2022, %v2525
  %v2637 = vmul.f32 %v2027, %v2526
  %v2638 = vmul.f32 %v2032, %v2527
  %v2639 = vmul.f32 %v2037, %v2528
  %v2640 = vmul.f32 %v2042, %v2529
  %v2641 = vmul.f32 %v2047, %v2530
  %v2642 = vmul.f32 %v2052, %v2531
  %v2643 = vmul.f32 %v2057, %v2532
  %v2644 = vmul.f32 %v2062, %v2533
  %v2645 = vmul.f32 %v2067, %v2534
  %v2646 = vmul.f32 %v2072, %v2535
  %v2647 = vmul.f32 %v2077, %v2536
  %v2648 = vmul.f32 %v2082, %v2537
  %v2649 = vmul.f32 %v2087, %v2538
  %v2650 = vmul.f32 %v2092, %v2539
  %v2651 = vadd.f32 %v2540, %v2541
  %v2652 = vadd.f32 %v2651, %v2542
  %v2653 = vadd.f32 %v2652, %v2543
  %v2654 = vadd.f32 %v2653, %v2544
  %v2655 = vadd.f32 %v2654, %v2545
  %v2656 = vadd.f32 %v2655, %v2546
  %v2657 = vadd.f32 %v2656, %v2547
  %v2658 = vadd.f32 %v2657, %v2548
  %v2659 = vadd.f32 %v2658, %v2549
  %v2660 = vadd.f32 %v2659, %v2550
  %v2661 = vadd.f32 %v2660, %v2551
  %v2662 = vadd.f32 %v2661, %v2552
  %v2663 = vadd.f32 %v2662, %v2553
  %v2664 = vadd.f32 %v2663, %v2554
  %v2665 = vadd.f32 %v2664, %v2555
  %v2666 = vadd.f32 %v2665, %v2556
  %v2667 = vadd.f32 %v2666, %v2557
  %v2668 = vadd.f32 %v2667, %v2558
  %v2669 = vadd.f32 %v2668, %v2559
  %v2670 = vadd.f32 %v2669, %v2560
  %v2671 = vadd.f32 %v2670, %v2561
  %v2672 = vadd.f32 %v2671, %v2562
  %v2673 = vadd.f32 %v2672, %v2563
  %v2674 = vadd.f32 %v2673, %v2564
  %v2675 = vadd.f32 %v2674, %v2565
  %v2676 = vadd.f32 %v2675, %v2566
  %v2677 = vadd.f32 %v2676, %v2567
  %v2678 = vadd.f32 %v2677, %v2568
  %v2679 = vadd.f32 %v2678, %v2569
  %v2680 = vadd.f32 %v2679, %v2570
  %v2681 = vadd.f32 %v2680, %v2571
  %v2682 = vadd.f32 %v2681, %v2572
  %v2683 = vadd.f32 %v2682, %v2573
  %v2684 = vadd.f32 %v2683, %v2574
  %v2685 = vadd.f32 %v2684, %v2575
  %v2686 = vadd.f32 %v2685, %v2576
  %v2687 = vadd.f32 %v2686, %v2577
  %v2688 = vadd.f32 %v2687, %v2578
  %v2689 = vadd.f32 %v2688, %v2579
  %v2690 = vadd.f32 %v2689, %v2580
  %v2691 = vadd.f32 %v2690, %v2581
  %v2692 = vadd.f32 %v2691, %v2582
  %v2693 = vadd.f32 %v2692, %v2583
  %v2694 = vadd.f32 %v2693, %v2584
  %v2695 = vadd.f32 %v2694, %v2585
  %v2696 = vadd.f32 %v2695, %v2586
  %v2697 = vadd.f32 %v2696, %v2587
  %v2698 = vadd.f32 %v2697, %v2588
  %v2699 = vadd.f32 %v2698, %v2589
  %v2700 = vadd.f32 %v2699, %v2590
  %v2701 = vadd.f32 %v2700, %v2591
  %v2702 = vadd.f32 %v2701, %v2592
  %v2703 = vadd.f32 %v2702, %v2593
  %v2704 = vadd.f32 %v2703, %v2594
  %v2705 = vadd.f32 %v2704, %v2595
  %v2706 = vadd.f32 %v2705, %v2596
  %v2707 = vadd.f32 %v2706, %v2597
  %v2708 = vadd.f32 %v2707, %v2598
  %v2709 = vadd.f32 %v2708, %v2599
  %v2710 = vadd.f32 %v2709, %v2600
  %v2711 = vadd.f32 %v2710, %v2601
  %v2712 = vadd.f32 %v2711, %v2602
  %v2713 = vadd.f32 %v2712, %v2603
  %v2714 = vadd.f32 %v2713, %v2604
  %v2715 = vadd.f32 %v2714, %v2605
  %v2716 = vadd.f32 %v2715, %v2606
  %v2717 = vadd.f32 %v2716, %v2607
  %v2718 = vadd.f32 %v2717, %v2608
  %v2719 = vadd.f32 %v2718, %v2609
  %v2720 = vadd.f32 %v2719, %v2610
  %v2721 = vadd.f32 %v2720, %v2611
  %v2722 = vadd.f32 %v2721, %v2612
  %v2723 = vadd.f32 %v2722, %v2613
  %v2724 = vadd.f32 %v2723, %v2614
  %v2725 = vadd.f32 %v2724, %v2615
  %v2726 = vadd.f32 %v2725, %v2616
  %v2727 = vadd.f32 %v2726, %v2617
  %v2728 = vadd.f32 %v2727, %v2618
  %v2729 = vadd.f32 %v2728, %v2619
  %v2730 = vadd.f32 %v2729, %v2620
  %v2731 = vadd.f32 %v2730, %v2621
  %v2732 = vadd.f32 %v2731, %v2622
  %v2733 = vadd.f32 %v2732, %v2623
  %v2734 = vadd.f32 %v2733, %v2624
  %v2735 = vadd.f32 %v2734, %v2625
  %v2736 = vadd.f32 %v2735, %v2626
  %v2737 = vadd.f32 %v2736, %v2627
  %v2738 = vadd.f32 %v2737, %v2628
  %v2739 = vadd.f32 %v2738, %v2629
  %v2740 = vadd.f32 %v2739, %v2630
  %v2741 = vadd.f32 %v2740, %v2631
  %v2742 = vadd.f32 %v2741, %v2632
  %v2743 = vadd.f32 %v2742, %v2633
  %v2744 = vadd.f32 %v2743, %v2634
  %v2745 = vadd.f32 %v2744, %v2635
  %v2746 = vadd.f32 %v2745, %v2636
  %v2747 = vadd.f32 %v2746, %v2637
  %v2748 = vadd.f32 %v2747, %v2638
  %v2749 = vadd.f32 %v2748, %v2639
  %v2750 = vadd.f32 %v2749, %v2640
  %v2751 = vadd.f32 %v2750, %v2641
  %v2752 = vadd.f32 %v2751, %v2642
  %v2753 = vadd.f32 %v2752, %v2643
  %v2754 = vadd.f32 %v2753, %v2644
  %v2755 = vadd.f32 %v2754, %v2645
  %v2756 = vadd.f32 %v2755, %v2646
  %v2757 = vadd.f32 %v2756, %v2647
  %v2758 = vadd.f32 %v2757, %v2648
  %v2759 = vadd.f32 %v2758, %v2649
  %v2760 = vadd.f32 %v2759, %v2650
  %v2761 = vrot.slane %v2760, 4
  %v2762 = vadd.f32 %v2760, %v2761
  %v2763 = vrot.slane %v2762, 2
  %v2764 = vadd.f32 %v2762, %v2763
  %v2765 = vrot.slane %v2764, 1
  %v2766 = vadd.f32 %v2764, %v2765
  %v2767 = vmul.f32 %v2766, 0.0011337869
  %v2768 = vsub.f32 %v1542, %v2767
  %v2769 = vsub.f32 %v1547, %v2767
  %v2770 = vsub.f32 %v1552, %v2767
  %v2771 = vsub.f32 %v1557, %v2767
  %v2772 = vsub.f32 %v1562, %v2767
  %v2773 = vsub.f32 %v1567, %v2767
  %v2774 = vsub.f32 %v1572, %v2767
  %v2775 = vsub.f32 %v1577, %v2767
  %v2776 = vsub.f32 %v1582, %v2767
  %v2777 = vsub.f32 %v1587, %v2767
  %v2778 = vsub.f32 %v1592, %v2767
  %v2779 = vsub.f32 %v1597, %v2767
  %v2780 = vsub.f32 %v1602, %v2767
  %v2781 = vsub.f32 %v1607, %v2767
  %v2782 = vsub.f32 %v1612, %v2767
  %v2783 = vsub.f32 %v1617, %v2767
  %v2784 = vsub.f32 %v1622, %v2767
  %v2785 = vsub.f32 %v1627, %v2767
  %v2786 = vsub.f32 %v1632, %v2767
  %v2787 = vsub.f32 %v1637, %v2767
  %v2788 = vsub.f32 %v1642, %v2767
  %v2789 = vsub.f32 %v1647, %v2767
  %v2790 = vsub.f32 %v1652, %v2767
  %v2791 = vsub.f32 %v1657, %v2767
  %v2792 = vsub.f32 %v1662, %v2767
  %v2793 = vsub.f32 %v1667, %v2767
  %v2794 = vsub.f32 %v1672, %v2767
  %v2795 = vsub.f32 %v1677, %v2767
  %v2796 = vsub.f32 %v1682, %v2767
  %v2797 = vsub.f32 %v1687, %v2767
  %v2798 = vsub.f32 %v1692, %v2767
  %v2799 = vsub.f32 %v1697, %v2767
  %v2800 = vsub.f32 %v1702, %v2767
  %v2801 = vsub.f32 %v1707, %v2767
  %v2802 = vsub.f32 %v1712, %v2767
  %v2803 = vsub.f32 %v1717, %v2767
  %v2804 = vsub.f32 %v1722, %v2767
  %v2805 = vsub.f32 %v1727, %v2767
  %v2806 = vsub.f32 %v1732, %v2767
  %v2807 = vsub.f32 %v1737, %v2767
  %v2808 = vsub.f32 %v1742, %v2767
  %v2809 = vsub.f32 %v1747, %v2767
  %v2810 = vsub.f32 %v1752, %v2767
  %v2811 = vsub.f32 %v1757, %v2767
  %v2812 = vsub.f32 %v1762, %v2767
  %v2813 = vsub.f32 %v1767, %v2767
  %v2814 = vsub.f32 %v1772, %v2767
  %v2815 = vsub.f32 %v1777, %v2767
  %v2816 = vsub.f32 %v1782, %v2767
  %v2817 = vsub.f32 %v1787, %v2767
  %v2818 = vsub.f32 %v1792, %v2767
  %v2819 = vsub.f32 %v1797, %v2767
  %v2820 = vsub.f32 %v1802, %v2767
  %v2821 = vsub.f32 %v1807, %v2767
  %v2822 = vsub.f32 %v1812, %v2767
  %v2823 = vsub.f32 %v1817, %v2767
  %v2824 = vsub.f32 %v1822, %v2767
  %v2825 = vsub.f32 %v1827, %v2767
  %v2826 = vsub.f32 %v1832, %v2767
  %v2827 = vsub.f32 %v1837, %v2767
  %v2828 = vsub.f32 %v1842, %v2767
  %v2829 = vsub.f32 %v1847, %v2767
  %v2830 = vsub.f32 %v1852, %v2767
  %v2831 = vsub.f32 %v1857, %v2767
  %v2832 = vsub.f32 %v1862, %v2767
  %v2833 = vsub.f32 %v1867, %v2767
  %v2834 = vsub.f32 %v1872, %v2767
  %v2835 = vsub.f32 %v1877, %v2767
  %v2836 = vsub.f32 %v1882, %v2767
  %v2837 = vsub.f32 %v1887, %v2767
  %v2838 = vsub.f32 %v1892, %v2767
  %v2839 = vsub.f32 %v1897, %v2767
  %v2840 = vsub.f32 %v1902, %v2767
  %v2841 = vsub.f32 %v1907, %v2767
  %v2842 = vsub.f32 %v1912, %v2767
  %v2843 = vsub.f32 %v1917, %v2767
  %v2844 = vsub.f32 %v1922, %v2767
  %v2845 = vsub.f32 %v1927, %v2767
  %v2846 = vsub.f32 %v1932, %v2767
  %v2847 = vsub.f32 %v1937, %v2767
  %v2848 = vsub.f32 %v1942, %v2767
  %v2849 = vsub.f32 %v1947, %v2767
  %v2850 = vsub.f32 %v1952, %v2767
  %v2851 = vsub.f32 %v1957, %v2767
  %v2852 = vsub.f32 %v1962, %v2767
  %v2853 = vsub.f32 %v1967, %v2767
  %v2854 = vsub.f32 %v1972, %v2767
  %v2855 = vsub.f32 %v1977, %v2767
  %v2856 = vsub.f32 %v1982, %v2767
  %v2857 = vsub.f32 %v1987, %v2767
  %v2858 = vsub.f32 %v1992, %v2767
  %v2859 = vsub.f32 %v1997, %v2767
  %v2860 = vsub.f32 %v2002, %v2767
  %v2861 = vsub.f32 %v2007, %v2767
  %v2862 = vsub.f32 %v2012, %v2767
  %v2863 = vsub.f32 %v2017, %v2767
  %v2864 = vsub.f32 %v2022, %v2767
  %v2865 = vsub.f32 %v2027, %v2767
  %v2866 = vsub.f32 %v2032, %v2767
  %v2867 = vsub.f32 %v2037, %v2767
  %v2868 = vsub.f32 %v2042, %v2767
  %v2869 = vsub.f32 %v2047, %v2767
  %v2870 = vsub.f32 %v2052, %v2767
  %v2871 = vsub.f32 %v2057, %v2767
  %v2872 = vsub.f32 %v2062, %v2767
  %v2873 = vsub.f32 %v2067, %v2767
  %v2874 = vsub.f32 %v2072, %v2767
  %v2875 = vsub.f32 %v2077, %v2767
  %v2876 = vsub.f32 %v2082, %v2767
  %v2877 = vsub.f32 %v2087, %v2767
  %v2878 = vsub.f32 %v2092, %v2767
  %v2879 = vmul.f32 %v2768, %v2768
  %v2880 = vmul.f32 %v2769, %v2769
  %v2881 = vmul.f32 %v2770, %v2770
  %v2882 = vmul.f32 %v2771, %v2771
  %v2883 = vmul.f32 %v2772, %v2772
  %v2884 = vmul.f32 %v2773, %v2773
  %v2885 = vmul.f32 %v2774, %v2774
  %v2886 = vmul.f32 %v2775, %v2775
  %v2887 = vmul.f32 %v2776, %v2776
  %v2888 = vmul.f32 %v2777, %v2777
  %v2889 = vmul.f32 %v2778, %v2778
  %v2890 = vmul.f32 %v2779, %v2779
  %v2891 = vmul.f32 %v2780, %v2780
  %v2892 = vmul.f32 %v2781, %v2781
  %v2893 = vmul.f32 %v2782, %v2782
  %v2894 = vmul.f32 %v2783, %v2783
  %v2895 = vmul.f32 %v2784, %v2784
  %v2896 = vmul.f32 %v2785, %v2785
  %v2897 = vmul.f32 %v2786, %v2786
  %v2898 = vmul.f32 %v2787, %v2787
  %v2899 = vmul.f32 %v2788, %v2788
  %v2900 = vmul.f32 %v2789, %v2789
  %v2901 = vmul.f32 %v2790, %v2790
  %v2902 = vmul.f32 %v2791, %v2791
  %v2903 = vmul.f32 %v2792, %v2792
  %v2904 = vmul.f32 %v2793, %v2793
  %v2905 = vmul.f32 %v2794, %v2794
  %v2906 = vmul.f32 %v2795, %v2795
  %v2907 = vmul.f32 %v2796, %v2796
  %v2908 = vmul.f32 %v2797, %v2797
  %v2909 = vmul.f32 %v2798, %v2798
  %v2910 = vmul.f32 %v2799, %v2799
  %v2911 = vmul.f32 %v2800, %v2800
  %v2912 = vmul.f32 %v2801, %v2801
  %v2913 = vmul.f32 %v2802, %v2802
  %v2914 = vmul.f32 %v2803, %v2803
  %v2915 = vmul.f32 %v2804, %v2804
  %v2916 = vmul.f32 %v2805, %v2805
  %v2917 = vmul.f32 %v2806, %v2806
  %v2918 = vmul.f32 %v2807, %v2807
  %v2919 = vmul.f32 %v2808, %v2808
  %v2920 = vmul.f32 %v2809, %v2809
  %v2921 = vmul.f32 %v2810, %v2810
  %v2922 = vmul.f32 %v2811, %v2811
  %v2923 = vmul.f32 %v2812, %v2812
  %v2924 = vmul.f32 %v2813, %v2813
  %v2925 = vmul.f32 %v2814, %v2814
  %v2926 = vmul.f32 %v2815, %v2815
  %v2927 = vmul.f32 %v2816, %v2816
  %v2928 = vmul.f32 %v2817, %v2817
  %v2929 = vmul.f32 %v2818, %v2818
  %v2930 = vmul.f32 %v2819, %v2819
  %v2931 = vmul.f32 %v2820, %v2820
  %v2932 = vmul.f32 %v2821, %v2821
  %v2933 = vmul.f32 %v2822, %v2822
  %v2934 = vmul.f32 %v2823, %v2823
  %v2935 = vmul.f32 %v2824, %v2824
  %v2936 = vmul.f32 %v2825, %v2825
  %v2937 = vmul.f32 %v2826, %v2826
  %v2938 = vmul.f32 %v2827, %v2827
  %v2939 = vmul.f32 %v2828, %v2828
  %v2940 = vmul.f32 %v2829, %v2829
  %v2941 = vmul.f32 %v2830, %v2830
  %v2942 = vmul.f32 %v2831, %v2831
  %v2943 = vmul.f32 %v2832, %v2832
  %v2944 = vmul.f32 %v2833, %v2833
  %v2945 = vmul.f32 %v2834, %v2834
  %v2946 = vmul.f32 %v2835, %v2835
  %v2947 = vmul.f32 %v2836, %v2836
  %v2948 = vmul.f32 %v2837, %v2837
  %v2949 = vmul.f32 %v2838, %v2838
  %v2950 = vmul.f32 %v2839, %v2839
  %v2951 = vmul.f32 %v2840, %v2840
  %v2952 = vmul.f32 %v2841, %v2841
  %v2953 = vmul.f32 %v2842, %v2842
  %v2954 = vmul.f32 %v2843, %v2843
  %v2955 = vmul.f32 %v2844, %v2844
  %v2956 = vmul.f32 %v2845, %v2845
  %v2957 = vmul.f32 %v2846, %v2846
  %v2958 = vmul.f32 %v2847, %v2847
  %v2959 = vmul.f32 %v2848, %v2848
  %v2960 = vmul.f32 %v2849, %v2849
  %v2961 = vmul.f32 %v2850, %v2850
  %v2962 = vmul.f32 %v2851, %v2851
  %v2963 = vmul.f32 %v2852, %v2852
  %v2964 = vmul.f32 %v2853, %v2853
  %v2965 = vmul.f32 %v2854, %v2854
  %v2966 = vmul.f32 %v2855, %v2855
  %v2967 = vmul.f32 %v2856, %v2856
  %v2968 = vmul.f32 %v2857, %v2857
  %v2969 = vmul.f32 %v2858, %v2858
  %v2970 = vmul.f32 %v2859, %v2859
  %v2971 = vmul.f32 %v2860, %v2860
  %v2972 = vmul.f32 %v2861, %v2861
  %v2973 = vmul.f32 %v2862, %v2862
  %v2974 = vmul.f32 %v2863, %v2863
  %v2975 = vmul.f32 %v2864, %v2864
  %v2976 = vmul.f32 %v2865, %v2865
  %v2977 = vmul.f32 %v2866, %v2866
  %v2978 = vmul.f32 %v2867, %v2867
  %v2979 = vmul.f32 %v2868, %v2868
  %v2980 = vmul.f32 %v2869, %v2869
  %v2981 = vmul.f32 %v2870, %v2870
  %v2982 = vmul.f32 %v2871, %v2871
  %v2983 = vmul.f32 %v2872, %v2872
  %v2984 = vmul.f32 %v2873, %v2873
  %v2985 = vmul.f32 %v2874, %v2874
  %v2986 = vmul.f32 %v2875, %v2875
  %v2987 = vmul.f32 %v2876, %v2876
  %v2988 = vmul.f32 %v2877, %v2877
  %v2989 = vmul.f32 %v2878, %v2878
  %v2990 = vmul.f32 %v2879, %v2429
  %v2991 = vmul.f32 %v2880, %v2430
  %v2992 = vmul.f32 %v2881, %v2431
  %v2993 = vmul.f32 %v2882, %v2432
  %v2994 = vmul.f32 %v2883, %v2433
  %v2995 = vmul.f32 %v2884, %v2434
  %v2996 = vmul.f32 %v2885, %v2435
  %v2997 = vmul.f32 %v2886, %v2436
  %v2998 = vmul.f32 %v2887, %v2437
  %v2999 = vmul.f32 %v2888, %v2438
  %v3000 = vmul.f32 %v2889, %v2439
  %v3001 = vmul.f32 %v2890, %v2440
  %v3002 = vmul.f32 %v2891, %v2441
  %v3003 = vmul.f32 %v2892, %v2442
  %v3004 = vmul.f32 %v2893, %v2443
  %v3005 = vmul.f32 %v2894, %v2444
  %v3006 = vmul.f32 %v2895, %v2445
  %v3007 = vmul.f32 %v2896, %v2446
  %v3008 = vmul.f32 %v2897, %v2447
  %v3009 = vmul.f32 %v2898, %v2448
  %v3010 = vmul.f32 %v2899, %v2449
  %v3011 = vmul.f32 %v2900, %v2450
  %v3012 = vmul.f32 %v2901, %v2451
  %v3013 = vmul.f32 %v2902, %v2452
  %v3014 = vmul.f32 %v2903, %v2453
  %v3015 = vmul.f32 %v2904, %v2454
  %v3016 = vmul.f32 %v2905, %v2455
  %v3017 = vmul.f32 %v2906, %v2456
  %v3018 = vmul.f32 %v2907, %v2457
  %v3019 = vmul.f32 %v2908, %v2458
  %v3020 = vmul.f32 %v2909, %v2459
  %v3021 = vmul.f32 %v2910, %v2460
  %v3022 = vmul.f32 %v2911, %v2461
  %v3023 = vmul.f32 %v2912, %v2462
  %v3024 = vmul.f32 %v2913, %v2463
  %v3025 = vmul.f32 %v2914, %v2464
  %v3026 = vmul.f32 %v2915, %v2465
  %v3027 = vmul.f32 %v2916, %v2466
  %v3028 = vmul.f32 %v2917, %v2467
  %v3029 = vmul.f32 %v2918, %v2468
  %v3030 = vmul.f32 %v2919, %v2469
  %v3031 = vmul.f32 %v2920, %v2470
  %v3032 = vmul.f32 %v2921, %v2471
  %v3033 = vmul.f32 %v2922, %v2472
  %v3034 = vmul.f32 %v2923, %v2473
  %v3035 = vmul.f32 %v2924, %v2474
  %v3036 = vmul.f32 %v2925, %v2475
  %v3037 = vmul.f32 %v2926, %v2476
  %v3038 = vmul.f32 %v2927, %v2477
  %v3039 = vmul.f32 %v2928, %v2478
  %v3040 = vmul.f32 %v2929, %v2479
  %v3041 = vmul.f32 %v2930, %v2480
  %v3042 = vmul.f32 %v2931, %v2481
  %v3043 = vmul.f32 %v2932, %v2482
  %v3044 = vmul.f32 %v2933, %v2483
  %v3045 = vmul.f32 %v2934, %v2484
  %v3046 = vmul.f32 %v2935, %v2485
  %v3047 = vmul.f32 %v2936, %v2486
  %v3048 = vmul.f32 %v2937, %v2487
  %v3049 = vmul.f32 %v2938, %v2488
  %v3050 = vmul.f32 %v2939, %v2489
  %v3051 = vmul.f32 %v2940, %v2490
  %v3052 = vmul.f32 %v2941, %v2491
  %v3053 = vmul.f32 %v2942, %v2492
  %v3054 = vmul.f32 %v2943, %v2493
  %v3055 = vmul.f32 %v2944, %v2494
  %v3056 = vmul.f32 %v2945, %v2495
  %v3057 = vmul.f32 %v2946, %v2496
  %v3058 = vmul.f32 %v2947, %v2497
  %v3059 = vmul.f32 %v2948, %v2498
  %v3060 = vmul.f32 %v2949, %v2499
  %v3061 = vmul.f32 %v2950, %v2500
  %v3062 = vmul.f32 %v2951, %v2501
  %v3063 = vmul.f32 %v2952, %v2502
  %v3064 = vmul.f32 %v2953, %v2503
  %v3065 = vmul.f32 %v2954, %v2504
  %v3066 = vmul.f32 %v2955, %v2505
  %v3067 = vmul.f32 %v2956, %v2506
  %v3068 = vmul.f32 %v2957, %v2507
  %v3069 = vmul.f32 %v2958, %v2508
  %v3070 = vmul.f32 %v2959, %v2509
  %v3071 = vmul.f32 %v2960, %v2510
  %v3072 = vmul.f32 %v2961, %v2511
  %v3073 = vmul.f32 %v2962, %v2512
  %v3074 = vmul.f32 %v2963, %v2513
  %v3075 = vmul.f32 %v2964, %v2514
  %v3076 = vmul.f32 %v2965, %v2515
  %v3077 = vmul.f32 %v2966, %v2516
  %v3078 = vmul.f32 %v2967, %v2517
  %v3079 = vmul.f32 %v2968, %v2518
  %v3080 = vmul.f32 %v2969, %v2519
  %v3081 = vmul.f32 %v2970, %v2520
  %v3082 = vmul.f32 %v2971, %v2521
  %v3083 = vmul.f32 %v2972, %v2522
  %v3084 = vmul.f32 %v2973, %v2523
  %v3085 = vmul.f32 %v2974, %v2524
  %v3086 = vmul.f32 %v2975, %v2525
  %v3087 = vmul.f32 %v2976, %v2526
  %v3088 = vmul.f32 %v2977, %v2527
  %v3089 = vmul.f32 %v2978, %v2528
  %v3090 = vmul.f32 %v2979, %v2529
  %v3091 = vmul.f32 %v2980, %v2530
  %v3092 = vmul.f32 %v2981, %v2531
  %v3093 = vmul.f32 %v2982, %v2532
  %v3094 = vmul.f32 %v2983, %v2533
  %v3095 = vmul.f32 %v2984, %v2534
  %v3096 = vmul.f32 %v2985, %v2535
  %v3097 = vmul.f32 %v2986, %v2536
  %v3098 = vmul.f32 %v2987, %v2537
  %v3099 = vmul.f32 %v2988, %v2538
  %v3100 = vmul.f32 %v2989, %v2539
  %v3101 = vadd.f32 %v2990, %v2991
  %v3102 = vadd.f32 %v3101, %v2992
  %v3103 = vadd.f32 %v3102, %v2993
  %v3104 = vadd.f32 %v3103, %v2994
  %v3105 = vadd.f32 %v3104, %v2995
  %v3106 = vadd.f32 %v3105, %v2996
  %v3107 = vadd.f32 %v3106, %v2997
  %v3108 = vadd.f32 %v3107, %v2998
  %v3109 = vadd.f32 %v3108, %v2999
  %v3110 = vadd.f32 %v3109, %v3000
  %v3111 = vadd.f32 %v3110, %v3001
  %v3112 = vadd.f32 %v3111, %v3002
  %v3113 = vadd.f32 %v3112, %v3003
  %v3114 = vadd.f32 %v3113, %v3004
  %v3115 = vadd.f32 %v3114, %v3005
  %v3116 = vadd.f32 %v3115, %v3006
  %v3117 = vadd.f32 %v3116, %v3007
  %v3118 = vadd.f32 %v3117, %v3008
  %v3119 = vadd.f32 %v3118, %v3009
  %v3120 = vadd.f32 %v3119, %v3010
  %v3121 = vadd.f32 %v3120, %v3011
  %v3122 = vadd.f32 %v3121, %v3012
  %v3123 = vadd.f32 %v3122, %v3013
  %v3124 = vadd.f32 %v3123, %v3014
  %v3125 = vadd.f32 %v3124, %v3015
  %v3126 = vadd.f32 %v3125, %v3016
  %v3127 = vadd.f32 %v3126, %v3017
  %v3128 = vadd.f32 %v3127, %v3018
  %v3129 = vadd.f32 %v3128, %v3019
  %v3130 = vadd.f32 %v3129, %v3020
  %v3131 = vadd.f32 %v3130, %v3021
  %v3132 = vadd.f32 %v3131, %v3022
  %v3133 = vadd.f32 %v3132, %v3023
  %v3134 = vadd.f32 %v3133, %v3024
  %v3135 = vadd.f32 %v3134, %v3025
  %v3136 = vadd.f32 %v3135, %v3026
  %v3137 = vadd.f32 %v3136, %v3027
  %v3138 = vadd.f32 %v3137, %v3028
  %v3139 = vadd.f32 %v3138, %v3029
  %v3140 = vadd.f32 %v3139, %v3030
  %v3141 = vadd.f32 %v3140, %v3031
  %v3142 = vadd.f32 %v3141, %v3032
  %v3143 = vadd.f32 %v3142, %v3033
  %v3144 = vadd.f32 %v3143, %v3034
  %v3145 = vadd.f32 %v3144, %v3035
  %v3146 = vadd.f32 %v3145, %v3036
  %v3147 = vadd.f32 %v3146, %v3037
  %v3148 = vadd.f32 %v3147, %v3038
  %v3149 = vadd.f32 %v3148, %v3039
  %v3150 = vadd.f32 %v3149, %v3040
  %v3151 = vadd.f32 %v3150, %v3041
  %v3152 = vadd.f32 %v3151, %v3042
  %v3153 = vadd.f32 %v3152, %v3043
  %v3154 = vadd.f32 %v3153, %v3044
  %v3155 = vadd.f32 %v3154, %v3045
  %v3156 = vadd.f32 %v3155, %v3046
  %v3157 = vadd.f32 %v3156, %v3047
  %v3158 = vadd.f32 %v3157, %v3048
  %v3159 = vadd.f32 %v3158, %v3049
  %v3160 = vadd.f32 %v3159, %v3050
  %v3161 = vadd.f32 %v3160, %v3051
  %v3162 = vadd.f32 %v3161, %v3052
  %v3163 = vadd.f32 %v3162, %v3053
  %v3164 = vadd.f32 %v3163, %v3054
  %v3165 = vadd.f32 %v3164, %v3055
  %v3166 = vadd.f32 %v3165, %v3056
  %v3167 = vadd.f32 %v3166, %v3057
  %v3168 = vadd.f32 %v3167, %v3058
  %v3169 = vadd.f32 %v3168, %v3059
  %v3170 = vadd.f32 %v3169, %v3060
  %v3171 = vadd.f32 %v3170, %v3061
  %v3172 = vadd.f32 %v3171, %v3062
  %v3173 = vadd.f32 %v3172, %v3063
  %v3174 = vadd.f32 %v3173, %v3064
  %v3175 = vadd.f32 %v3174, %v3065
  %v3176 = vadd.f32 %v3175, %v3066
  %v3177 = vadd.f32 %v3176, %v3067
  %v3178 = vadd.f32 %v3177, %v3068
  %v3179 = vadd.f32 %v3178, %v3069
  %v3180 = vadd.f32 %v3179, %v3070
  %v3181 = vadd.f32 %v3180, %v3071
  %v3182 = vadd.f32 %v3181, %v3072
  %v3183 = vadd.f32 %v3182, %v3073
  %v3184 = vadd.f32 %v3183, %v3074
  %v3185 = vadd.f32 %v3184, %v3075
  %v3186 = vadd.f32 %v3185, %v3076
  %v3187 = vadd.f32 %v3186, %v3077
  %v3188 = vadd.f32 %v3187, %v3078
  %v3189 = vadd.f32 %v3188, %v3079
  %v3190 = vadd.f32 %v3189, %v3080
  %v3191 = vadd.f32 %v3190, %v3081
  %v3192 = vadd.f32 %v3191, %v3082
  %v3193 = vadd.f32 %v3192, %v3083
  %v3194 = vadd.f32 %v3193, %v3084
  %v3195 = vadd.f32 %v3194, %v3085
  %v3196 = vadd.f32 %v3195, %v3086
  %v3197 = vadd.f32 %v3196, %v3087
  %v3198 = vadd.f32 %v3197, %v3088
  %v3199 = vadd.f32 %v3198, %v3089
  %v3200 = vadd.f32 %v3199, %v3090
  %v3201 = vadd.f32 %v3200, %v3091
  %v3202 = vadd.f32 %v3201, %v3092
  %v3203 = vadd.f32 %v3202, %v3093
  %v3204 = vadd.f32 %v3203, %v3094
  %v3205 = vadd.f32 %v3204, %v3095
  %v3206 = vadd.f32 %v3205, %v3096
  %v3207 = vadd.f32 %v3206, %v3097
  %v3208 = vadd.f32 %v3207, %v3098
  %v3209 = vadd.f32 %v3208, %v3099
  %v3210 = vadd.f32 %v3209, %v3100
  %v3211 = vrot.slane %v3210, 4
  %v3212 = vadd.f32 %v3210, %v3211
  %v3213 = vrot.slane %v3212, 2
  %v3214 = vadd.f32 %v3212, %v3213
  %v3215 = vrot.slane %v3214, 1
  %v3216 = vadd.f32 %v3214, %v3215
  %v3217 = vmul.f32 %v3216, 0.0011337869
  %v3218 = vadd.f32 %v3217, 1e-05
  %v3219 = vrsqrt.pop %v3218
  %v3220 = vmul.f32 %v2768, %v3219
  %v3221 = vmul.f32 %v2769, %v3219
  %v3222 = vmul.f32 %v2770, %v3219
  %v3223 = vmul.f32 %v2771, %v3219
  %v3224 = vmul.f32 %v2772, %v3219
  %v3225 = vmul.f32 %v2773, %v3219
  %v3226 = vmul.f32 %v2774, %v3219
  %v3227 = vmul.f32 %v2775, %v3219
  %v3228 = vmul.f32 %v2776, %v3219
  %v3229 = vmul.f32 %v2777, %v3219
  %v3230 = vmul.f32 %v2778, %v3219
  %v3231 = vmul.f32 %v2779, %v3219
  %v3232 = vmul.f32 %v2780, %v3219
  %v3233 = vmul.f32 %v2781, %v3219
  %v3234 = vmul.f32 %v2782, %v3219
  %v3235 = vmul.f32 %v2783, %v3219
  %v3236 = vmul.f32 %v2784, %v3219
  %v3237 = vmul.f32 %v2785, %v3219
  %v3238 = vmul.f32 %v2786, %v3219
  %v3239 = vmul.f32 %v2787, %v3219
  %v3240 = vmul.f32 %v2788, %v3219
  %v3241 = vmul.f32 %v2789, %v3219
  %v3242 = vmul.f32 %v2790, %v3219
  %v3243 = vmul.f32 %v2791, %v3219
  %v3244 = vmul.f32 %v2792, %v3219
  %v3245 = vmul.f32 %v2793, %v3219
  %v3246 = vmul.f32 %v2794, %v3219
  %v3247 = vmul.f32 %v2795, %v3219
  %v3248 = vmul.f32 %v2796, %v3219
  %v3249 = vmul.f32 %v2797, %v3219
  %v3250 = vmul.f32 %v2798, %v3219
  %v3251 = vmul.f32 %v2799, %v3219
  %v3252 = vmul.f32 %v2800, %v3219
  %v3253 = vmul.f32 %v2801, %v3219
  %v3254 = vmul.f32 %v2802, %v3219
  %v3255 = vmul.f32 %v2803, %v3219
  %v3256 = vmul.f32 %v2804, %v3219
  %v3257 = vmul.f32 %v2805, %v3219
  %v3258 = vmul.f32 %v2806, %v3219
  %v3259 = vmul.f32 %v2807, %v3219
  %v3260 = vmul.f32 %v2808, %v3219
  %v3261 = vmul.f32 %v2809, %v3219
  %v3262 = vmul.f32 %v2810, %v3219
  %v3263 = vmul.f32 %v2811, %v3219
  %v3264 = vmul.f32 %v2812, %v3219
  %v3265 = vmul.f32 %v2813, %v3219
  %v3266 = vmul.f32 %v2814, %v3219
  %v3267 = vmul.f32 %v2815, %v3219
  %v3268 = vmul.f32 %v2816, %v3219
  %v3269 = vmul.f32 %v2817, %v3219
  %v3270 = vmul.f32 %v2818, %v3219
  %v3271 = vmul.f32 %v2819, %v3219
  %v3272 = vmul.f32 %v2820, %v3219
  %v3273 = vmul.f32 %v2821, %v3219
  %v3274 = vmul.f32 %v2822, %v3219
  %v3275 = vmul.f32 %v2823, %v3219
  %v3276 = vmul.f32 %v2824, %v3219
  %v3277 = vmul.f32 %v2825, %v3219
  %v3278 = vmul.f32 %v2826, %v3219
  %v3279 = vmul.f32 %v2827, %v3219
  %v3280 = vmul.f32 %v2828, %v3219
  %v3281 = vmul.f32 %v2829, %v3219
  %v3282 = vmul.f32 %v2830, %v3219
  %v3283 = vmul.f32 %v2831, %v3219
  %v3284 = vmul.f32 %v2832, %v3219
  %v3285 = vmul.f32 %v2833, %v3219
  %v3286 = vmul.f32 %v2834, %v3219
  %v3287 = vmul.f32 %v2835, %v3219
  %v3288 = vmul.f32 %v2836, %v3219
  %v3289 = vmul.f32 %v2837, %v3219
  %v3290 = vmul.f32 %v2838, %v3219
  %v3291 = vmul.f32 %v2839, %v3219
  %v3292 = vmul.f32 %v2840, %v3219
  %v3293 = vmul.f32 %v2841, %v3219
  %v3294 = vmul.f32 %v2842, %v3219
  %v3295 = vmul.f32 %v2843, %v3219
  %v3296 = vmul.f32 %v2844, %v3219
  %v3297 = vmul.f32 %v2845, %v3219
  %v3298 = vmul.f32 %v2846, %v3219
  %v3299 = vmul.f32 %v2847, %v3219
  %v3300 = vmul.f32 %v2848, %v3219
  %v3301 = vmul.f32 %v2849, %v3219
  %v3302 = vmul.f32 %v2850, %v3219
  %v3303 = vmul.f32 %v2851, %v3219
  %v3304 = vmul.f32 %v2852, %v3219
  %v3305 = vmul.f32 %v2853, %v3219
  %v3306 = vmul.f32 %v2854, %v3219
  %v3307 = vmul.f32 %v2855, %v3219
  %v3308 = vmul.f32 %v2856, %v3219
  %v3309 = vmul.f32 %v2857, %v3219
  %v3310 = vmul.f32 %v2858, %v3219
  %v3311 = vmul.f32 %v2859, %v3219
  %v3312 = vmul.f32 %v2860, %v3219
  %v3313 = vmul.f32 %v2861, %v3219
  %v3314 = vmul.f32 %v2862, %v3219
  %v3315 = vmul.f32 %v2863, %v3219
  %v3316 = vmul.f32 %v2864, %v3219
  %v3317 = vmul.f32 %v2865, %v3219
  %v3318 = vmul.f32 %v2866, %v3219
  %v3319 = vmul.f32 %v2867, %v3219
  %v3320 = vmul.f32 %v2868, %v3219
  %v3321 = vmul.f32 %v2869, %v3219
  %v3322 = vmul.f32 %v2870, %v3219
  %v3323 = vmul.f32 %v2871, %v3219
  %v3324 = vmul.f32 %v2872, %v3219
  %v3325 = vmul.f32 %v2873, %v3219
  %v3326 = vmul.f32 %v2874, %v3219
  %v3327 = vmul.f32 %v2875, %v3219
  %v3328 = vmul.f32 %v2876, %v3219
  %v3329 = vmul.f32 %v2877, %v3219
  %v3330 = vmul.f32 %v2878, %v3219
  %v3331 = vld [vmem:[%s3] sm:$0x1]
  %v3333 = vlaneseq
  %v3334 = vshrl.u32 %v3333, 7
  %v3335 = vsub.s32 0, %v3334
  %v3336 = vrot.slane %v3331, %v3335
  %v3338 = vmul.f32 %v3220, %v3336
  %v3339 = vmul.f32 %v3221, %v3336
  %v3340 = vmul.f32 %v3222, %v3336
  %v3341 = vmul.f32 %v3223, %v3336
  %v3342 = vmul.f32 %v3224, %v3336
  %v3343 = vmul.f32 %v3225, %v3336
  %v3344 = vmul.f32 %v3226, %v3336
  %v3345 = vmul.f32 %v3227, %v3336
  %v3346 = vmul.f32 %v3228, %v3336
  %v3347 = vmul.f32 %v3229, %v3336
  %v3348 = vmul.f32 %v3230, %v3336
  %v3349 = vmul.f32 %v3231, %v3336
  %v3350 = vmul.f32 %v3232, %v3336
  %v3351 = vmul.f32 %v3233, %v3336
  %v3352 = vmul.f32 %v3234, %v3336
  %v3353 = vmul.f32 %v3235, %v3336
  %v3354 = vmul.f32 %v3236, %v3336
  %v3355 = vmul.f32 %v3237, %v3336
  %v3356 = vmul.f32 %v3238, %v3336
  %v3357 = vmul.f32 %v3239, %v3336
  %v3358 = vmul.f32 %v3240, %v3336
  %v3359 = vmul.f32 %v3241, %v3336
  %v3360 = vmul.f32 %v3242, %v3336
  %v3361 = vmul.f32 %v3243, %v3336
  %v3362 = vmul.f32 %v3244, %v3336
  %v3363 = vmul.f32 %v3245, %v3336
  %v3364 = vmul.f32 %v3246, %v3336
  %v3365 = vmul.f32 %v3247, %v3336
  %v3366 = vmul.f32 %v3248, %v3336
  %v3367 = vmul.f32 %v3249, %v3336
  %v3368 = vmul.f32 %v3250, %v3336
  %v3369 = vmul.f32 %v3251, %v3336
  %v3370 = vmul.f32 %v3252, %v3336
  %v3371 = vmul.f32 %v3253, %v3336
  %v3372 = vmul.f32 %v3254, %v3336
  %v3373 = vmul.f32 %v3255, %v3336
  %v3374 = vmul.f32 %v3256, %v3336
  %v3375 = vmul.f32 %v3257, %v3336
  %v3376 = vmul.f32 %v3258, %v3336
  %v3377 = vmul.f32 %v3259, %v3336
  %v3378 = vmul.f32 %v3260, %v3336
  %v3379 = vmul.f32 %v3261, %v3336
  %v3380 = vmul.f32 %v3262, %v3336
  %v3381 = vmul.f32 %v3263, %v3336
  %v3382 = vmul.f32 %v3264, %v3336
  %v3383 = vmul.f32 %v3265, %v3336
  %v3384 = vmul.f32 %v3266, %v3336
  %v3385 = vmul.f32 %v3267, %v3336
  %v3386 = vmul.f32 %v3268, %v3336
  %v3387 = vmul.f32 %v3269, %v3336
  %v3388 = vmul.f32 %v3270, %v3336
  %v3389 = vmul.f32 %v3271, %v3336
  %v3390 = vmul.f32 %v3272, %v3336
  %v3391 = vmul.f32 %v3273, %v3336
  %v3392 = vmul.f32 %v3274, %v3336
  %v3393 = vmul.f32 %v3275, %v3336
  %v3394 = vmul.f32 %v3276, %v3336
  %v3395 = vmul.f32 %v3277, %v3336
  %v3396 = vmul.f32 %v3278, %v3336
  %v3397 = vmul.f32 %v3279, %v3336
  %v3398 = vmul.f32 %v3280, %v3336
  %v3399 = vmul.f32 %v3281, %v3336
  %v3400 = vmul.f32 %v3282, %v3336
  %v3401 = vmul.f32 %v3283, %v3336
  %v3402 = vmul.f32 %v3284, %v3336
  %v3403 = vmul.f32 %v3285, %v3336
  %v3404 = vmul.f32 %v3286, %v3336
  %v3405 = vmul.f32 %v3287, %v3336
  %v3406 = vmul.f32 %v3288, %v3336
  %v3407 = vmul.f32 %v3289, %v3336
  %v3408 = vmul.f32 %v3290, %v3336
  %v3409 = vmul.f32 %v3291, %v3336
  %v3410 = vmul.f32 %v3292, %v3336
  %v3411 = vmul.f32 %v3293, %v3336
  %v3412 = vmul.f32 %v3294, %v3336
  %v3413 = vmul.f32 %v3295, %v3336
  %v3414 = vmul.f32 %v3296, %v3336
  %v3415 = vmul.f32 %v3297, %v3336
  %v3416 = vmul.f32 %v3298, %v3336
  %v3417 = vmul.f32 %v3299, %v3336
  %v3418 = vmul.f32 %v3300, %v3336
  %v3419 = vmul.f32 %v3301, %v3336
  %v3420 = vmul.f32 %v3302, %v3336
  %v3421 = vmul.f32 %v3303, %v3336
  %v3422 = vmul.f32 %v3304, %v3336
  %v3423 = vmul.f32 %v3305, %v3336
  %v3424 = vmul.f32 %v3306, %v3336
  %v3425 = vmul.f32 %v3307, %v3336
  %v3426 = vmul.f32 %v3308, %v3336
  %v3427 = vmul.f32 %v3309, %v3336
  %v3428 = vmul.f32 %v3310, %v3336
  %v3429 = vmul.f32 %v3311, %v3336
  %v3430 = vmul.f32 %v3312, %v3336
  %v3431 = vmul.f32 %v3313, %v3336
  %v3432 = vmul.f32 %v3314, %v3336
  %v3433 = vmul.f32 %v3315, %v3336
  %v3434 = vmul.f32 %v3316, %v3336
  %v3435 = vmul.f32 %v3317, %v3336
  %v3436 = vmul.f32 %v3318, %v3336
  %v3437 = vmul.f32 %v3319, %v3336
  %v3438 = vmul.f32 %v3320, %v3336
  %v3439 = vmul.f32 %v3321, %v3336
  %v3440 = vmul.f32 %v3322, %v3336
  %v3441 = vmul.f32 %v3323, %v3336
  %v3442 = vmul.f32 %v3324, %v3336
  %v3443 = vmul.f32 %v3325, %v3336
  %v3444 = vmul.f32 %v3326, %v3336
  %v3445 = vmul.f32 %v3327, %v3336
  %v3446 = vmul.f32 %v3328, %v3336
  %v3447 = vmul.f32 %v3329, %v3336
  %v3448 = vmul.f32 %v3330, %v3336
  %v3449 = vld [vmem:[%s4] sm:$0x1]
  %v3451 = vlaneseq
  %v3452 = vshrl.u32 %v3451, 7
  %v3453 = vsub.s32 0, %v3452
  %v3454 = vrot.slane %v3449, %v3453
  %v3456 = vadd.f32 %v3338, %v3454
  %v3457 = vadd.f32 %v3339, %v3454
  %v3458 = vadd.f32 %v3340, %v3454
  %v3459 = vadd.f32 %v3341, %v3454
  %v3460 = vadd.f32 %v3342, %v3454
  %v3461 = vadd.f32 %v3343, %v3454
  %v3462 = vadd.f32 %v3344, %v3454
  %v3463 = vadd.f32 %v3345, %v3454
  %v3464 = vadd.f32 %v3346, %v3454
  %v3465 = vadd.f32 %v3347, %v3454
  %v3466 = vadd.f32 %v3348, %v3454
  %v3467 = vadd.f32 %v3349, %v3454
  %v3468 = vadd.f32 %v3350, %v3454
  %v3469 = vadd.f32 %v3351, %v3454
  %v3470 = vadd.f32 %v3352, %v3454
  %v3471 = vadd.f32 %v3353, %v3454
  %v3472 = vadd.f32 %v3354, %v3454
  %v3473 = vadd.f32 %v3355, %v3454
  %v3474 = vadd.f32 %v3356, %v3454
  %v3475 = vadd.f32 %v3357, %v3454
  %v3476 = vadd.f32 %v3358, %v3454
  %v3477 = vadd.f32 %v3359, %v3454
  %v3478 = vadd.f32 %v3360, %v3454
  %v3479 = vadd.f32 %v3361, %v3454
  %v3480 = vadd.f32 %v3362, %v3454
  %v3481 = vadd.f32 %v3363, %v3454
  %v3482 = vadd.f32 %v3364, %v3454
  %v3483 = vadd.f32 %v3365, %v3454
  %v3484 = vadd.f32 %v3366, %v3454
  %v3485 = vadd.f32 %v3367, %v3454
  %v3486 = vadd.f32 %v3368, %v3454
  %v3487 = vadd.f32 %v3369, %v3454
  %v3488 = vadd.f32 %v3370, %v3454
  %v3489 = vadd.f32 %v3371, %v3454
  %v3490 = vadd.f32 %v3372, %v3454
  %v3491 = vadd.f32 %v3373, %v3454
  %v3492 = vadd.f32 %v3374, %v3454
  %v3493 = vadd.f32 %v3375, %v3454
  %v3494 = vadd.f32 %v3376, %v3454
  %v3495 = vadd.f32 %v3377, %v3454
  %v3496 = vadd.f32 %v3378, %v3454
  %v3497 = vadd.f32 %v3379, %v3454
  %v3498 = vadd.f32 %v3380, %v3454
  %v3499 = vadd.f32 %v3381, %v3454
  %v3500 = vadd.f32 %v3382, %v3454
  %v3501 = vadd.f32 %v3383, %v3454
  %v3502 = vadd.f32 %v3384, %v3454
  %v3503 = vadd.f32 %v3385, %v3454
  %v3504 = vadd.f32 %v3386, %v3454
  %v3505 = vadd.f32 %v3387, %v3454
  %v3506 = vadd.f32 %v3388, %v3454
  %v3507 = vadd.f32 %v3389, %v3454
  %v3508 = vadd.f32 %v3390, %v3454
  %v3509 = vadd.f32 %v3391, %v3454
  %v3510 = vadd.f32 %v3392, %v3454
  %v3511 = vadd.f32 %v3393, %v3454
  %v3512 = vadd.f32 %v3394, %v3454
  %v3513 = vadd.f32 %v3395, %v3454
  %v3514 = vadd.f32 %v3396, %v3454
  %v3515 = vadd.f32 %v3397, %v3454
  %v3516 = vadd.f32 %v3398, %v3454
  %v3517 = vadd.f32 %v3399, %v3454
  %v3518 = vadd.f32 %v3400, %v3454
  %v3519 = vadd.f32 %v3401, %v3454
  %v3520 = vadd.f32 %v3402, %v3454
  %v3521 = vadd.f32 %v3403, %v3454
  %v3522 = vadd.f32 %v3404, %v3454
  %v3523 = vadd.f32 %v3405, %v3454
  %v3524 = vadd.f32 %v3406, %v3454
  %v3525 = vadd.f32 %v3407, %v3454
  %v3526 = vadd.f32 %v3408, %v3454
  %v3527 = vadd.f32 %v3409, %v3454
  %v3528 = vadd.f32 %v3410, %v3454
  %v3529 = vadd.f32 %v3411, %v3454
  %v3530 = vadd.f32 %v3412, %v3454
  %v3531 = vadd.f32 %v3413, %v3454
  %v3532 = vadd.f32 %v3414, %v3454
  %v3533 = vadd.f32 %v3415, %v3454
  %v3534 = vadd.f32 %v3416, %v3454
  %v3535 = vadd.f32 %v3417, %v3454
  %v3536 = vadd.f32 %v3418, %v3454
  %v3537 = vadd.f32 %v3419, %v3454
  %v3538 = vadd.f32 %v3420, %v3454
  %v3539 = vadd.f32 %v3421, %v3454
  %v3540 = vadd.f32 %v3422, %v3454
  %v3541 = vadd.f32 %v3423, %v3454
  %v3542 = vadd.f32 %v3424, %v3454
  %v3543 = vadd.f32 %v3425, %v3454
  %v3544 = vadd.f32 %v3426, %v3454
  %v3545 = vadd.f32 %v3427, %v3454
  %v3546 = vadd.f32 %v3428, %v3454
  %v3547 = vadd.f32 %v3429, %v3454
  %v3548 = vadd.f32 %v3430, %v3454
  %v3549 = vadd.f32 %v3431, %v3454
  %v3550 = vadd.f32 %v3432, %v3454
  %v3551 = vadd.f32 %v3433, %v3454
  %v3552 = vadd.f32 %v3434, %v3454
  %v3553 = vadd.f32 %v3435, %v3454
  %v3554 = vadd.f32 %v3436, %v3454
  %v3555 = vadd.f32 %v3437, %v3454
  %v3556 = vadd.f32 %v3438, %v3454
  %v3557 = vadd.f32 %v3439, %v3454
  %v3558 = vadd.f32 %v3440, %v3454
  %v3559 = vadd.f32 %v3441, %v3454
  %v3560 = vadd.f32 %v3442, %v3454
  %v3561 = vadd.f32 %v3443, %v3454
  %v3562 = vadd.f32 %v3444, %v3454
  %v3563 = vadd.f32 %v3445, %v3454
  %v3564 = vadd.f32 %v3446, %v3454
  %v3565 = vadd.f32 %v3447, %v3454
  %v3566 = vadd.f32 %v3448, %v3454
  %v3567 = vtanh.pop %v3456
  %v3568 = vtanh.pop %v3457
  %v3569 = vtanh.pop %v3458
  %v3570 = vtanh.pop %v3459
  %v3571 = vtanh.pop %v3460
  %v3572 = vtanh.pop %v3461
  %v3573 = vtanh.pop %v3462
  %v3574 = vtanh.pop %v3463
  %v3575 = vtanh.pop %v3464
  %v3576 = vtanh.pop %v3465
  %v3577 = vtanh.pop %v3466
  %v3578 = vtanh.pop %v3467
  %v3579 = vtanh.pop %v3468
  %v3580 = vtanh.pop %v3469
  %v3581 = vtanh.pop %v3470
  %v3582 = vtanh.pop %v3471
  %v3583 = vtanh.pop %v3472
  %v3584 = vtanh.pop %v3473
  %v3585 = vtanh.pop %v3474
  %v3586 = vtanh.pop %v3475
  %v3587 = vtanh.pop %v3476
  %v3588 = vtanh.pop %v3477
  %v3589 = vtanh.pop %v3478
  %v3590 = vtanh.pop %v3479
  %v3591 = vtanh.pop %v3480
  %v3592 = vtanh.pop %v3481
  %v3593 = vtanh.pop %v3482
  %v3594 = vtanh.pop %v3483
  %v3595 = vtanh.pop %v3484
  %v3596 = vtanh.pop %v3485
  %v3597 = vtanh.pop %v3486
  %v3598 = vtanh.pop %v3487
  %v3599 = vtanh.pop %v3488
  %v3600 = vtanh.pop %v3489
  %v3601 = vtanh.pop %v3490
  %v3602 = vtanh.pop %v3491
  %v3603 = vtanh.pop %v3492
  %v3604 = vtanh.pop %v3493
  %v3605 = vtanh.pop %v3494
  %v3606 = vtanh.pop %v3495
  %v3607 = vtanh.pop %v3496
  %v3608 = vtanh.pop %v3497
  %v3609 = vtanh.pop %v3498
  %v3610 = vtanh.pop %v3499
  %v3611 = vtanh.pop %v3500
  %v3612 = vtanh.pop %v3501
  %v3613 = vtanh.pop %v3502
  %v3614 = vtanh.pop %v3503
  %v3615 = vtanh.pop %v3504
  %v3616 = vtanh.pop %v3505
  %v3617 = vtanh.pop %v3506
  %v3618 = vtanh.pop %v3507
  %v3619 = vtanh.pop %v3508
  %v3620 = vtanh.pop %v3509
  %v3621 = vtanh.pop %v3510
  %v3622 = vtanh.pop %v3511
  %v3623 = vtanh.pop %v3512
  %v3624 = vtanh.pop %v3513
  %v3625 = vtanh.pop %v3514
  %v3626 = vtanh.pop %v3515
  %v3627 = vtanh.pop %v3516
  %v3628 = vtanh.pop %v3517
  %v3629 = vtanh.pop %v3518
  %v3630 = vtanh.pop %v3519
  %v3631 = vtanh.pop %v3520
  %v3632 = vtanh.pop %v3521
  %v3633 = vtanh.pop %v3522
  %v3634 = vtanh.pop %v3523
  %v3635 = vtanh.pop %v3524
  %v3636 = vtanh.pop %v3525
  %v3637 = vtanh.pop %v3526
  %v3638 = vtanh.pop %v3527
  %v3639 = vtanh.pop %v3528
  %v3640 = vtanh.pop %v3529
  %v3641 = vtanh.pop %v3530
  %v3642 = vtanh.pop %v3531
  %v3643 = vtanh.pop %v3532
  %v3644 = vtanh.pop %v3533
  %v3645 = vtanh.pop %v3534
  %v3646 = vtanh.pop %v3535
  %v3647 = vtanh.pop %v3536
  %v3648 = vtanh.pop %v3537
  %v3649 = vtanh.pop %v3538
  %v3650 = vtanh.pop %v3539
  %v3651 = vtanh.pop %v3540
  %v3652 = vtanh.pop %v3541
  %v3653 = vtanh.pop %v3542
  %v3654 = vtanh.pop %v3543
  %v3655 = vtanh.pop %v3544
  %v3656 = vtanh.pop %v3545
  %v3657 = vtanh.pop %v3546
  %v3658 = vtanh.pop %v3547
  %v3659 = vtanh.pop %v3548
  %v3660 = vtanh.pop %v3549
  %v3661 = vtanh.pop %v3550
  %v3662 = vtanh.pop %v3551
  %v3663 = vtanh.pop %v3552
  %v3664 = vtanh.pop %v3553
  %v3665 = vtanh.pop %v3554
  %v3666 = vtanh.pop %v3555
  %v3667 = vtanh.pop %v3556
  %v3668 = vtanh.pop %v3557
  %v3669 = vtanh.pop %v3558
  %v3670 = vtanh.pop %v3559
  %v3671 = vtanh.pop %v3560
  %v3672 = vtanh.pop %v3561
  %v3673 = vtanh.pop %v3562
  %v3674 = vtanh.pop %v3563
  %v3675 = vtanh.pop %v3564
  %v3676 = vtanh.pop %v3565
  %v3677 = vtanh.pop %v3566
  %3678 = vst [vmem:[%s5] sm:$0xff] %v3567
  %3679 = vst [vmem:[%s5 + $0x8] sm:$0xff] %v3568
  %3680 = vst [vmem:[%s5 + $0x10] sm:$0xff] %v3569
  %3681 = vst [vmem:[%s5 + $0x18] sm:$0xff] %v3570
  %3682 = vst [vmem:[%s5 + $0x20] sm:$0xff] %v3571
  %3683 = vst [vmem:[%s5 + $0x28] sm:$0xff] %v3572
  %3684 = vst [vmem:[%s5 + $0x30] sm:$0xff] %v3573
  %3685 = vst [vmem:[%s5 + $0x38] sm:$0xff] %v3574
  %3686 = vst [vmem:[%s5 + $0x40] sm:$0xff] %v3575
  %3687 = vst [vmem:[%s5 + $0x48] sm:$0xff] %v3576
  %3688 = vst [vmem:[%s5 + $0x50] sm:$0xff] %v3577
  %3689 = vst [vmem:[%s5 + $0x58] sm:$0xff] %v3578
  %3690 = vst [vmem:[%s5 + $0x60] sm:$0xff] %v3579
  %3691 = vst [vmem:[%s5 + $0x68] sm:$0xff] %v3580
  %3692 = vst [vmem:[%s5 + $0x70] sm:$0xff] %v3581
  %3693 = vst [vmem:[%s5 + $0x78] sm:$0xff] %v3582
  %3694 = vst [vmem:[%s5 + $0x80] sm:$0xff] %v3583
  %3695 = vst [vmem:[%s5 + $0x88] sm:$0xff] %v3584
  %3696 = vst [vmem:[%s5 + $0x90] sm:$0xff] %v3585
  %3697 = vst [vmem:[%s5 + $0x98] sm:$0xff] %v3586
  %3698 = vst [vmem:[%s5 + $0xa0] sm:$0xff] %v3587
  %3699 = vst [vmem:[%s5 + $0xa8] sm:$0xff] %v3588
  %3700 = vst [vmem:[%s5 + $0xb0] sm:$0xff] %v3589
  %3701 = vst [vmem:[%s5 + $0xb8] sm:$0xff] %v3590
  %3702 = vst [vmem:[%s5 + $0xc0] sm:$0xff] %v3591
  %3703 = vst [vmem:[%s5 + $0xc8] sm:$0xff] %v3592
  %3704 = vst [vmem:[%s5 + $0xd0] sm:$0xff] %v3593
  %3705 = vst [vmem:[%s5 + $0xd8] sm:$0xff] %v3594
  %3706 = vst [vmem:[%s5 + $0xe0] sm:$0xff] %v3595
  %3707 = vst [vmem:[%s5 + $0xe8] sm:$0xff] %v3596
  %3708 = vst [vmem:[%s5 + $0xf0] sm:$0xff] %v3597
  %3709 = vst [vmem:[%s5 + $0xf8] sm:$0xff] %v3598
  %3710 = vst [vmem:[%s5 + $0x100] sm:$0xff] %v3599
  %3711 = vst [vmem:[%s5 + $0x108] sm:$0xff] %v3600
  %3712 = vst [vmem:[%s5 + $0x110] sm:$0xff] %v3601
  %3713 = vst [vmem:[%s5 + $0x118] sm:$0xff] %v3602
  %3714 = vst [vmem:[%s5 + $0x120] sm:$0xff] %v3603
  %3715 = vst [vmem:[%s5 + $0x128] sm:$0xff] %v3604
  %3716 = vst [vmem:[%s5 + $0x130] sm:$0xff] %v3605
  %3717 = vst [vmem:[%s5 + $0x138] sm:$0xff] %v3606
  %3718 = vst [vmem:[%s5 + $0x140] sm:$0xff] %v3607
  %3719 = vst [vmem:[%s5 + $0x148] sm:$0xff] %v3608
  %3720 = vst [vmem:[%s5 + $0x150] sm:$0xff] %v3609
  %3721 = vst [vmem:[%s5 + $0x158] sm:$0xff] %v3610
  %3722 = vst [vmem:[%s5 + $0x160] sm:$0xff] %v3611
  %3723 = vst [vmem:[%s5 + $0x168] sm:$0xff] %v3612
  %3724 = vst [vmem:[%s5 + $0x170] sm:$0xff] %v3613
  %3725 = vst [vmem:[%s5 + $0x178] sm:$0xff] %v3614
  %3726 = vst [vmem:[%s5 + $0x180] sm:$0xff] %v3615
  %3727 = vst [vmem:[%s5 + $0x188] sm:$0xff] %v3616
  %3728 = vst [vmem:[%s5 + $0x190] sm:$0xff] %v3617
  %3729 = vst [vmem:[%s5 + $0x198] sm:$0xff] %v3618
  %3730 = vst [vmem:[%s5 + $0x1a0] sm:$0xff] %v3619
  %3731 = vst [vmem:[%s5 + $0x1a8] sm:$0xff] %v3620
  %3732 = vst [vmem:[%s5 + $0x1b0] sm:$0xff] %v3621
  %3733 = vst [vmem:[%s5 + $0x1b8] sm:$0xff] %v3622
  %3734 = vst [vmem:[%s5 + $0x1c0] sm:$0xff] %v3623
  %3735 = vst [vmem:[%s5 + $0x1c8] sm:$0xff] %v3624
  %3736 = vst [vmem:[%s5 + $0x1d0] sm:$0xff] %v3625
  %3737 = vst [vmem:[%s5 + $0x1d8] sm:$0xff] %v3626
  %3738 = vst [vmem:[%s5 + $0x1e0] sm:$0xff] %v3627
  %3739 = vst [vmem:[%s5 + $0x1e8] sm:$0xff] %v3628
  %3740 = vst [vmem:[%s5 + $0x1f0] sm:$0xff] %v3629
  %3741 = vst [vmem:[%s5 + $0x1f8] sm:$0xff] %v3630
  %3742 = vst [vmem:[%s5 + $0x200] sm:$0xff] %v3631
  %3743 = vst [vmem:[%s5 + $0x208] sm:$0xff] %v3632
  %3744 = vst [vmem:[%s5 + $0x210] sm:$0xff] %v3633
  %3745 = vst [vmem:[%s5 + $0x218] sm:$0xff] %v3634
  %3746 = vst [vmem:[%s5 + $0x220] sm:$0xff] %v3635
  %3747 = vst [vmem:[%s5 + $0x228] sm:$0xff] %v3636
  %3748 = vst [vmem:[%s5 + $0x230] sm:$0xff] %v3637
  %3749 = vst [vmem:[%s5 + $0x238] sm:$0xff] %v3638
  %3750 = vst [vmem:[%s5 + $0x240] sm:$0xff] %v3639
  %3751 = vst [vmem:[%s5 + $0x248] sm:$0xff] %v3640
  %3752 = vst [vmem:[%s5 + $0x250] sm:$0xff] %v3641
  %3753 = vst [vmem:[%s5 + $0x258] sm:$0xff] %v3642
  %3754 = vst [vmem:[%s5 + $0x260] sm:$0xff] %v3643
  %3755 = vst [vmem:[%s5 + $0x268] sm:$0xff] %v3644
  %3756 = vst [vmem:[%s5 + $0x270] sm:$0xff] %v3645
  %3757 = vst [vmem:[%s5 + $0x278] sm:$0xff] %v3646
  %3758 = vst [vmem:[%s5 + $0x280] sm:$0xff] %v3647
  %3759 = vst [vmem:[%s5 + $0x288] sm:$0xff] %v3648
  %3760 = vst [vmem:[%s5 + $0x290] sm:$0xff] %v3649
  %3761 = vst [vmem:[%s5 + $0x298] sm:$0xff] %v3650
  %3762 = vst [vmem:[%s5 + $0x2a0] sm:$0xff] %v3651
  %3763 = vst [vmem:[%s5 + $0x2a8] sm:$0xff] %v3652
  %3764 = vst [vmem:[%s5 + $0x2b0] sm:$0xff] %v3653
  %3765 = vst [vmem:[%s5 + $0x2b8] sm:$0xff] %v3654
  %3766 = vst [vmem:[%s5 + $0x2c0] sm:$0xff] %v3655
  %3767 = vst [vmem:[%s5 + $0x2c8] sm:$0xff] %v3656
  %3768 = vst [vmem:[%s5 + $0x2d0] sm:$0xff] %v3657
  %3769 = vst [vmem:[%s5 + $0x2d8] sm:$0xff] %v3658
  %3770 = vst [vmem:[%s5 + $0x2e0] sm:$0xff] %v3659
  %3771 = vst [vmem:[%s5 + $0x2e8] sm:$0xff] %v3660
  %3772 = vst [vmem:[%s5 + $0x2f0] sm:$0xff] %v3661
  %3773 = vst [vmem:[%s5 + $0x2f8] sm:$0xff] %v3662
  %3774 = vst [vmem:[%s5 + $0x300] sm:$0xff] %v3663
  %3775 = vst [vmem:[%s5 + $0x308] sm:$0xff] %v3664
  %3776 = vst [vmem:[%s5 + $0x310] sm:$0xff] %v3665
  %3777 = vst [vmem:[%s5 + $0x318] sm:$0xff] %v3666
  %3778 = vst [vmem:[%s5 + $0x320] sm:$0xff] %v3667
  %3779 = vst [vmem:[%s5 + $0x328] sm:$0xff] %v3668
  %3780 = vst [vmem:[%s5 + $0x330] sm:$0xff] %v3669
  %3781 = vst [vmem:[%s5 + $0x338] sm:$0xff] %v3670
  %3782 = vst [vmem:[%s5 + $0x340] sm:$0xff] %v3671
  %3783 = vst [vmem:[%s5 + $0x348] sm:$0xff] %v3672
  %3784 = vst [vmem:[%s5 + $0x350] sm:$0xff] %v3673
  %3785 = vst [vmem:[%s5 + $0x358] sm:$0xff] %v3674
  %3786 = vst [vmem:[%s5 + $0x360] sm:$0xff] %v3675
  %3787 = vst [vmem:[%s5 + $0x368] sm:$0xff] %v3676
  %3788 = vst [vmem:[%s5 + $0x370] sm:$0xff] %v3677
  // Predicated region
  $region22: #{cnnae_forward.8} parent=0 // pred_check
    _
  $region23: #{cnnae_forward.8} parent=0 // pred_check_branch
    %3790 = sbr.rel (0) target = $region25
  $region24: #{cnnae_forward.8} parent=0 // pred_region
    _
  $region25: #{cnnae_forward.8} parent=0 // pred_fallthru
    _
  // Predicated region
  $region26: #{cnnae_forward.8} parent=0 // pred_check
    _
  $region27: #{cnnae_forward.8} parent=0 // pred_check_branch
    %3792 = sbr.rel (0) target = $region29
  $region28: #{cnnae_forward.8} parent=0 // pred_region
    _
  $region29: #{cnnae_forward.8} parent=0 // pred_fallthru
    _

// kernel: cnnae_forward.9
$region0: #{cnnae_forward.9}
  #allocation0 [shape = 'u32[]', space=smem, size = 0x4, offset = 0x4, fixed_abs, tag = 'smem constant byte address 0x4 - core index']
  #allocation1 [shape = 'u32[144,128]{1,0:T(1,128)}', space=vmem, size = 0x12000, scoped, tag = 'internal scratch']
  %s0 = inlined_call_operand.vmem [shape: f32[3200,32], index: 0, kind: input, shape index: {}]
  %s1 = inlined_call_operand.vmem [shape: f32[32,128], index: 1, kind: input, shape index: {}]
  %s2 = inlined_call_operand.vmem [shape: f32[1,128], index: 2, kind: input, shape index: {}]
  %s3 = inlined_call_operand.vmem [shape: f32[1,128], index: 3, kind: input, shape index: {}]
  %s4 = inlined_call_operand.vmem [shape: f32[1,128], index: 4, kind: input, shape index: {}]
  %s5 = inlined_call_operand.vmem [shape: f32[3200,128], index: 5, kind: output, shape index: {}]
  %s6 = sld [smem:[#allocation0]]
  $region30: #{cnnae_forward.9} parent=0
    _
  %s8 = ssub.s32 1, %s6
  %s9 = scalar_select 0, %s8, %s6
  // Predicated region
  $region2: #{cnnae_forward.9} parent=0 // pred_check
    _
  $region3: #{cnnae_forward.9} parent=0 // pred_check_branch
    %11 = sbr.rel (0) target = $region5
  $region4: #{cnnae_forward.9} parent=0 // pred_region
    _
  $region5: #{cnnae_forward.9} parent=0 // pred_fallthru
    _
  // Predicated region
  $region6: #{cnnae_forward.9} parent=0 // pred_check
    _
  $region7: #{cnnae_forward.9} parent=0 // pred_check_branch
    %13 = sbr.rel (0) target = $region9
  $region8: #{cnnae_forward.9} parent=0 // pred_region
    _
  $region9: #{cnnae_forward.9} parent=0 // pred_fallthru
    _
  // Predicated region
  $region10: #{cnnae_forward.9} parent=0 // pred_check
    _
  $region11: #{cnnae_forward.9} parent=0 // pred_check_branch
    %15 = sbr.rel (0) target = $region13
  $region12: #{cnnae_forward.9} parent=0 // pred_region
    _
  $region13: #{cnnae_forward.9} parent=0 // pred_fallthru
    _
  // Predicated region
  $region14: #{cnnae_forward.9} parent=0 // pred_check
    _
  $region15: #{cnnae_forward.9} parent=0 // pred_check_branch
    %17 = sbr.rel (0) target = $region17
  $region16: #{cnnae_forward.9} parent=0 // pred_region
    _
  $region17: #{cnnae_forward.9} parent=0 // pred_fallthru
    _
  // Predicated region
  $region18: #{cnnae_forward.9} parent=0 // pred_check
    _
  $region19: #{cnnae_forward.9} parent=0 // pred_check_branch
    %19 = sbr.rel (0) target = $region21
  $region20: #{cnnae_forward.9} parent=0 // pred_region
    _
  $region21: #{cnnae_forward.9} parent=0 // pred_fallthru
    _
  %v20 = vld [vmem:[%s0] sm:$0xff]
  %v21 = vld [vmem:[%s0 + $0x8] sm:$0xff]
  %v22 = vld [vmem:[%s0 + $0x10] sm:$0xff]
  %v23 = vld [vmem:[%s0 + $0x18] sm:$0xff]
  %v24 = vld [vmem:[%s0 + $0x20] sm:$0xff]
  %v25 = vld [vmem:[%s0 + $0x28] sm:$0xff]
  %v26 = vld [vmem:[%s0 + $0x30] sm:$0xff]
  %v27 = vld [vmem:[%s0 + $0x38] sm:$0xff]
  %v28 = vld [vmem:[%s0 + $0x40] sm:$0xff]
  %v29 = vld [vmem:[%s0 + $0x48] sm:$0xff]
  %v30 = vld [vmem:[%s0 + $0x50] sm:$0xff]
  %v31 = vld [vmem:[%s0 + $0x58] sm:$0xff]
  %v32 = vld [vmem:[%s0 + $0x60] sm:$0xff]
  %v33 = vld [vmem:[%s0 + $0x68] sm:$0xff]
  %v34 = vld [vmem:[%s0 + $0x70] sm:$0xff]
  %v35 = vld [vmem:[%s0 + $0x78] sm:$0xff]
  %v36 = vld [vmem:[%s0 + $0x80] sm:$0xff]
  %v37 = vld [vmem:[%s0 + $0x88] sm:$0xff]
  %v38 = vld [vmem:[%s0 + $0x90] sm:$0xff]
  %v39 = vld [vmem:[%s0 + $0x98] sm:$0xff]
  %v40 = vld [vmem:[%s0 + $0xa0] sm:$0xff]
  %v41 = vld [vmem:[%s0 + $0xa8] sm:$0xff]
  %v42 = vld [vmem:[%s0 + $0xb0] sm:$0xff]
  %v43 = vld [vmem:[%s0 + $0xb8] sm:$0xff]
  %v44 = vld [vmem:[%s0 + $0xc0] sm:$0xff]
  %v45 = vld [vmem:[%s0 + $0xc8] sm:$0xff]
  %v46 = vld [vmem:[%s0 + $0xd0] sm:$0xff]
  %v47 = vld [vmem:[%s0 + $0xd8] sm:$0xff]
  %v48 = vld [vmem:[%s0 + $0xe0] sm:$0xff]
  %v49 = vld [vmem:[%s0 + $0xe8] sm:$0xff]
  %v50 = vld [vmem:[%s0 + $0xf0] sm:$0xff]
  %v51 = vld [vmem:[%s0 + $0xf8] sm:$0xff]
  %v52 = vld [vmem:[%s0 + $0x100] sm:$0xff]
  %v53 = vld [vmem:[%s0 + $0x108] sm:$0xff]
  %v54 = vld [vmem:[%s0 + $0x110] sm:$0xff]
  %v55 = vld [vmem:[%s0 + $0x118] sm:$0xff]
  %v56 = vld [vmem:[%s0 + $0x120] sm:$0xff]
  %v57 = vld [vmem:[%s0 + $0x128] sm:$0xff]
  %v58 = vld [vmem:[%s0 + $0x130] sm:$0xff]
  %v59 = vld [vmem:[%s0 + $0x138] sm:$0xff]
  %v60 = vld [vmem:[%s0 + $0x140] sm:$0xff]
  %v61 = vld [vmem:[%s0 + $0x148] sm:$0xff]
  %v62 = vld [vmem:[%s0 + $0x150] sm:$0xff]
  %v63 = vld [vmem:[%s0 + $0x158] sm:$0xff]
  %v64 = vld [vmem:[%s0 + $0x160] sm:$0xff]
  %v65 = vld [vmem:[%s0 + $0x168] sm:$0xff]
  %v66 = vld [vmem:[%s0 + $0x170] sm:$0xff]
  %v67 = vld [vmem:[%s0 + $0x178] sm:$0xff]
  %v68 = vld [vmem:[%s0 + $0x180] sm:$0xff]
  %v69 = vld [vmem:[%s0 + $0x188] sm:$0xff]
  %v70 = vld [vmem:[%s0 + $0x190] sm:$0xff]
  %v71 = vld [vmem:[%s0 + $0x198] sm:$0xff]
  %v72 = vld [vmem:[%s0 + $0x1a0] sm:$0xff]
  %v73 = vld [vmem:[%s0 + $0x1a8] sm:$0xff]
  %v74 = vld [vmem:[%s0 + $0x1b0] sm:$0xff]
  %v75 = vld [vmem:[%s0 + $0x1b8] sm:$0xff]
  %v76 = vld [vmem:[%s0 + $0x1c0] sm:$0xff]
  %v77 = vld [vmem:[%s0 + $0x1c8] sm:$0xff]
  %v78 = vld [vmem:[%s0 + $0x1d0] sm:$0xff]
  %v79 = vld [vmem:[%s0 + $0x1d8] sm:$0xff]
  %v80 = vld [vmem:[%s0 + $0x1e0] sm:$0xff]
  %v81 = vld [vmem:[%s0 + $0x1e8] sm:$0xff]
  %v82 = vld [vmem:[%s0 + $0x1f0] sm:$0xff]
  %v83 = vld [vmem:[%s0 + $0x1f8] sm:$0xff]
  %v84 = vld [vmem:[%s0 + $0x200] sm:$0xff]
  %v85 = vld [vmem:[%s0 + $0x208] sm:$0xff]
  %v86 = vld [vmem:[%s0 + $0x210] sm:$0xff]
  %v87 = vld [vmem:[%s0 + $0x218] sm:$0xff]
  %v88 = vld [vmem:[%s0 + $0x220] sm:$0xff]
  %v89 = vld [vmem:[%s0 + $0x228] sm:$0xff]
  %v90 = vld [vmem:[%s0 + $0x230] sm:$0xff]
  %v91 = vld [vmem:[%s0 + $0x238] sm:$0xff]
  %v92 = vld [vmem:[%s0 + $0x240] sm:$0xff]
  %v93 = vld [vmem:[%s0 + $0x248] sm:$0xff]
  %v94 = vld [vmem:[%s0 + $0x250] sm:$0xff]
  %v95 = vld [vmem:[%s0 + $0x258] sm:$0xff]
  %v96 = vld [vmem:[%s0 + $0x260] sm:$0xff]
  %v97 = vld [vmem:[%s0 + $0x268] sm:$0xff]
  %v98 = vld [vmem:[%s0 + $0x270] sm:$0xff]
  %v99 = vld [vmem:[%s0 + $0x278] sm:$0xff]
  %v100 = vld [vmem:[%s0 + $0x280] sm:$0xff]
  %v101 = vld [vmem:[%s0 + $0x288] sm:$0xff]
  %v102 = vld [vmem:[%s0 + $0x290] sm:$0xff]
  %v103 = vld [vmem:[%s0 + $0x298] sm:$0xff]
  %v104 = vld [vmem:[%s0 + $0x2a0] sm:$0xff]
  %v105 = vld [vmem:[%s0 + $0x2a8] sm:$0xff]
  %v106 = vld [vmem:[%s0 + $0x2b0] sm:$0xff]
  %v107 = vld [vmem:[%s0 + $0x2b8] sm:$0xff]
  %v108 = vld [vmem:[%s0 + $0x2c0] sm:$0xff]
  %v109 = vld [vmem:[%s0 + $0x2c8] sm:$0xff]
  %v110 = vld [vmem:[%s0 + $0x2d0] sm:$0xff]
  %v111 = vld [vmem:[%s0 + $0x2d8] sm:$0xff]
  %v112 = vld [vmem:[%s0 + $0x2e0] sm:$0xff]
  %v113 = vld [vmem:[%s0 + $0x2e8] sm:$0xff]
  %v114 = vld [vmem:[%s0 + $0x2f0] sm:$0xff]
  %v115 = vld [vmem:[%s0 + $0x2f8] sm:$0xff]
  %v116 = vld [vmem:[%s0 + $0x300] sm:$0xff]
  %v117 = vld [vmem:[%s0 + $0x308] sm:$0xff]
  %v118 = vld [vmem:[%s0 + $0x310] sm:$0xff]
  %v119 = vld [vmem:[%s0 + $0x318] sm:$0xff]
  %v120 = vld [vmem:[%s0 + $0x320] sm:$0xff]
  %v121 = vld [vmem:[%s0 + $0x328] sm:$0xff]
  %v122 = vld [vmem:[%s0 + $0x330] sm:$0xff]
  %v123 = vld [vmem:[%s0 + $0x338] sm:$0xff]
  %v124 = vld [vmem:[%s0 + $0x340] sm:$0xff]
  %v125 = vld [vmem:[%s0 + $0x348] sm:$0xff]
  %v126 = vld [vmem:[%s0 + $0x350] sm:$0xff]
  %v127 = vld [vmem:[%s0 + $0x358] sm:$0xff]
  %v128 = vld [vmem:[%s0 + $0x360] sm:$0xff]
  %v129 = vld [vmem:[%s0 + $0x368] sm:$0xff]
  %v130 = vld [vmem:[%s0 + $0x370] sm:$0xff]
  %v131 = vld [vmem:[%s0 + $0x378] sm:$0xff]
  %v132 = vld [vmem:[%s0 + $0x380] sm:$0xff]
  %v133 = vld [vmem:[%s0 + $0x388] sm:$0xff]
  %v134 = vld [vmem:[%s0 + $0x390] sm:$0xff]
  %v135 = vld [vmem:[%s0 + $0x398] sm:$0xff]
  %v136 = vld [vmem:[%s0 + $0x3a0] sm:$0xff]
  %v137 = vld [vmem:[%s0 + $0x3a8] sm:$0xff]
  %v138 = vld [vmem:[%s0 + $0x3b0] sm:$0xff]
  %v139 = vld [vmem:[%s0 + $0x3b8] sm:$0xff]
  %v140 = vld [vmem:[%s0 + $0x3c0] sm:$0xff]
  %v141 = vld [vmem:[%s0 + $0x3c8] sm:$0xff]
  %v142 = vld [vmem:[%s0 + $0x3d0] sm:$0xff]
  %v143 = vld [vmem:[%s0 + $0x3d8] sm:$0xff]
  %v144 = vld [vmem:[%s0 + $0x3e0] sm:$0xff]
  %v145 = vld [vmem:[%s0 + $0x3e8] sm:$0xff]
  %v146 = vld [vmem:[%s0 + $0x3f0] sm:$0xff]
  %v147 = vld [vmem:[%s0 + $0x3f8] sm:$0xff]
  %v148 = vld [vmem:[%s0 + $0x400] sm:$0xff]
  %v149 = vld [vmem:[%s0 + $0x408] sm:$0xff]
  %v150 = vld [vmem:[%s0 + $0x410] sm:$0xff]
  %v151 = vld [vmem:[%s0 + $0x418] sm:$0xff]
  %v152 = vld [vmem:[%s0 + $0x420] sm:$0xff]
  %v153 = vld [vmem:[%s0 + $0x428] sm:$0xff]
  %v154 = vld [vmem:[%s0 + $0x430] sm:$0xff]
  %v155 = vld [vmem:[%s0 + $0x438] sm:$0xff]
  %v156 = vld [vmem:[%s0 + $0x440] sm:$0xff]
  %v157 = vld [vmem:[%s0 + $0x448] sm:$0xff]
  %v158 = vld [vmem:[%s0 + $0x450] sm:$0xff]
  %v159 = vld [vmem:[%s0 + $0x458] sm:$0xff]
  %v160 = vld [vmem:[%s0 + $0x460] sm:$0xff]
  %v161 = vld [vmem:[%s0 + $0x468] sm:$0xff]
  %v162 = vld [vmem:[%s0 + $0x470] sm:$0xff]
  %v163 = vld [vmem:[%s0 + $0x478] sm:$0xff]
  %v164 = vld [vmem:[%s0 + $0x480] sm:$0xff]
  %v165 = vld [vmem:[%s0 + $0x488] sm:$0xff]
  %v166 = vld [vmem:[%s0 + $0x490] sm:$0xff]
  %v167 = vld [vmem:[%s0 + $0x498] sm:$0xff]
  %v168 = vld [vmem:[%s0 + $0x4a0] sm:$0xff]
  %v169 = vld [vmem:[%s0 + $0x4a8] sm:$0xff]
  %v170 = vld [vmem:[%s0 + $0x4b0] sm:$0xff]
  %v171 = vld [vmem:[%s0 + $0x4b8] sm:$0xff]
  %v172 = vld [vmem:[%s0 + $0x4c0] sm:$0xff]
  %v173 = vld [vmem:[%s0 + $0x4c8] sm:$0xff]
  %v174 = vld [vmem:[%s0 + $0x4d0] sm:$0xff]
  %v175 = vld [vmem:[%s0 + $0x4d8] sm:$0xff]
  %v176 = vld [vmem:[%s0 + $0x4e0] sm:$0xff]
  %v177 = vld [vmem:[%s0 + $0x4e8] sm:$0xff]
  %v178 = vld [vmem:[%s0 + $0x4f0] sm:$0xff]
  %v179 = vld [vmem:[%s0 + $0x4f8] sm:$0xff]
  %v180 = vld [vmem:[%s0 + $0x500] sm:$0xff]
  %v181 = vld [vmem:[%s0 + $0x508] sm:$0xff]
  %v182 = vld [vmem:[%s0 + $0x510] sm:$0xff]
  %v183 = vld [vmem:[%s0 + $0x518] sm:$0xff]
  %v184 = vld [vmem:[%s0 + $0x520] sm:$0xff]
  %v185 = vld [vmem:[%s0 + $0x528] sm:$0xff]
  %v186 = vld [vmem:[%s0 + $0x530] sm:$0xff]
  %v187 = vld [vmem:[%s0 + $0x538] sm:$0xff]
  %v188 = vld [vmem:[%s0 + $0x540] sm:$0xff]
  %v189 = vld [vmem:[%s0 + $0x548] sm:$0xff]
  %v190 = vld [vmem:[%s0 + $0x550] sm:$0xff]
  %v191 = vld [vmem:[%s0 + $0x558] sm:$0xff]
  %v192 = vld [vmem:[%s0 + $0x560] sm:$0xff]
  %v193 = vld [vmem:[%s0 + $0x568] sm:$0xff]
  %v194 = vld [vmem:[%s0 + $0x570] sm:$0xff]
  %v195 = vld [vmem:[%s0 + $0x578] sm:$0xff]
  %v196 = vld [vmem:[%s0 + $0x580] sm:$0xff]
  %v197 = vld [vmem:[%s0 + $0x588] sm:$0xff]
  %v198 = vld [vmem:[%s0 + $0x590] sm:$0xff]
  %v199 = vld [vmem:[%s0 + $0x598] sm:$0xff]
  %v200 = vld [vmem:[%s0 + $0x5a0] sm:$0xff]
  %v201 = vld [vmem:[%s0 + $0x5a8] sm:$0xff]
  %v202 = vld [vmem:[%s0 + $0x5b0] sm:$0xff]
  %v203 = vld [vmem:[%s0 + $0x5b8] sm:$0xff]
  %v204 = vld [vmem:[%s0 + $0x5c0] sm:$0xff]
  %v205 = vld [vmem:[%s0 + $0x5c8] sm:$0xff]
  %v206 = vld [vmem:[%s0 + $0x5d0] sm:$0xff]
  %v207 = vld [vmem:[%s0 + $0x5d8] sm:$0xff]
  %v208 = vld [vmem:[%s0 + $0x5e0] sm:$0xff]
  %v209 = vld [vmem:[%s0 + $0x5e8] sm:$0xff]
  %v210 = vld [vmem:[%s0 + $0x5f0] sm:$0xff]
  %v211 = vld [vmem:[%s0 + $0x5f8] sm:$0xff]
  %v212 = vld [vmem:[%s0 + $0x600] sm:$0xff]
  %v213 = vld [vmem:[%s0 + $0x608] sm:$0xff]
  %v214 = vld [vmem:[%s0 + $0x610] sm:$0xff]
  %v215 = vld [vmem:[%s0 + $0x618] sm:$0xff]
  %v216 = vld [vmem:[%s0 + $0x620] sm:$0xff]
  %v217 = vld [vmem:[%s0 + $0x628] sm:$0xff]
  %v218 = vld [vmem:[%s0 + $0x630] sm:$0xff]
  %v219 = vld [vmem:[%s0 + $0x638] sm:$0xff]
  %v220 = vld [vmem:[%s0 + $0x640] sm:$0xff]
  %v221 = vld [vmem:[%s0 + $0x648] sm:$0xff]
  %v222 = vld [vmem:[%s0 + $0x650] sm:$0xff]
  %v223 = vld [vmem:[%s0 + $0x658] sm:$0xff]
  %v224 = vld [vmem:[%s0 + $0x660] sm:$0xff]
  %v225 = vld [vmem:[%s0 + $0x668] sm:$0xff]
  %v226 = vld [vmem:[%s0 + $0x670] sm:$0xff]
  %v227 = vld [vmem:[%s0 + $0x678] sm:$0xff]
  %v228 = vld [vmem:[%s0 + $0x680] sm:$0xff]
  %v229 = vld [vmem:[%s0 + $0x688] sm:$0xff]
  %v230 = vld [vmem:[%s0 + $0x690] sm:$0xff]
  %v231 = vld [vmem:[%s0 + $0x698] sm:$0xff]
  %v232 = vld [vmem:[%s0 + $0x6a0] sm:$0xff]
  %v233 = vld [vmem:[%s0 + $0x6a8] sm:$0xff]
  %v234 = vld [vmem:[%s0 + $0x6b0] sm:$0xff]
  %v235 = vld [vmem:[%s0 + $0x6b8] sm:$0xff]
  %v236 = vld [vmem:[%s0 + $0x6c0] sm:$0xff]
  %v237 = vld [vmem:[%s0 + $0x6c8] sm:$0xff]
  %v238 = vld [vmem:[%s0 + $0x6d0] sm:$0xff]
  %v239 = vld [vmem:[%s0 + $0x6d8] sm:$0xff]
  %v240 = vld [vmem:[%s0 + $0x6e0] sm:$0xff]
  %v241 = vld [vmem:[%s0 + $0x6e8] sm:$0xff]
  %v242 = vld [vmem:[%s0 + $0x6f0] sm:$0xff]
  %v243 = vld [vmem:[%s0 + $0x6f8] sm:$0xff]
  %v244 = vld [vmem:[%s0 + $0x700] sm:$0xff]
  %v245 = vld [vmem:[%s0 + $0x708] sm:$0xff]
  %v246 = vld [vmem:[%s0 + $0x710] sm:$0xff]
  %v247 = vld [vmem:[%s0 + $0x718] sm:$0xff]
  %v248 = vld [vmem:[%s0 + $0x720] sm:$0xff]
  %v249 = vld [vmem:[%s0 + $0x728] sm:$0xff]
  %v250 = vld [vmem:[%s0 + $0x730] sm:$0xff]
  %v251 = vld [vmem:[%s0 + $0x738] sm:$0xff]
  %v252 = vld [vmem:[%s0 + $0x740] sm:$0xff]
  %v253 = vld [vmem:[%s0 + $0x748] sm:$0xff]
  %v254 = vld [vmem:[%s0 + $0x750] sm:$0xff]
  %v255 = vld [vmem:[%s0 + $0x758] sm:$0xff]
  %v256 = vld [vmem:[%s0 + $0x760] sm:$0xff]
  %v257 = vld [vmem:[%s0 + $0x768] sm:$0xff]
  %v258 = vld [vmem:[%s0 + $0x770] sm:$0xff]
  %v259 = vld [vmem:[%s0 + $0x778] sm:$0xff]
  %v260 = vld [vmem:[%s0 + $0x780] sm:$0xff]
  %v261 = vld [vmem:[%s0 + $0x788] sm:$0xff]
  %v262 = vld [vmem:[%s0 + $0x790] sm:$0xff]
  %v263 = vld [vmem:[%s0 + $0x798] sm:$0xff]
  %v264 = vld [vmem:[%s0 + $0x7a0] sm:$0xff]
  %v265 = vld [vmem:[%s0 + $0x7a8] sm:$0xff]
  %v266 = vld [vmem:[%s0 + $0x7b0] sm:$0xff]
  %v267 = vld [vmem:[%s0 + $0x7b8] sm:$0xff]
  %v268 = vld [vmem:[%s0 + $0x7c0] sm:$0xff]
  %v269 = vld [vmem:[%s0 + $0x7c8] sm:$0xff]
  %v270 = vld [vmem:[%s0 + $0x7d0] sm:$0xff]
  %v271 = vld [vmem:[%s0 + $0x7d8] sm:$0xff]
  %v272 = vld [vmem:[%s0 + $0x7e0] sm:$0xff]
  %v273 = vld [vmem:[%s0 + $0x7e8] sm:$0xff]
  %v274 = vld [vmem:[%s0 + $0x7f0] sm:$0xff]
  %v275 = vld [vmem:[%s0 + $0x7f8] sm:$0xff]
  %v276 = vld [vmem:[%s0 + $0x800] sm:$0xff]
  %v277 = vld [vmem:[%s0 + $0x808] sm:$0xff]
  %v278 = vld [vmem:[%s0 + $0x810] sm:$0xff]
  %v279 = vld [vmem:[%s0 + $0x818] sm:$0xff]
  %v280 = vld [vmem:[%s0 + $0x820] sm:$0xff]
  %v281 = vld [vmem:[%s0 + $0x828] sm:$0xff]
  %v282 = vld [vmem:[%s0 + $0x830] sm:$0xff]
  %v283 = vld [vmem:[%s0 + $0x838] sm:$0xff]
  %v284 = vld [vmem:[%s0 + $0x840] sm:$0xff]
  %v285 = vld [vmem:[%s0 + $0x848] sm:$0xff]
  %v286 = vld [vmem:[%s0 + $0x850] sm:$0xff]
  %v287 = vld [vmem:[%s0 + $0x858] sm:$0xff]
  %v288 = vld [vmem:[%s0 + $0x860] sm:$0xff]
  %v289 = vld [vmem:[%s0 + $0x868] sm:$0xff]
  %v290 = vld [vmem:[%s0 + $0x870] sm:$0xff]
  %v291 = vld [vmem:[%s0 + $0x878] sm:$0xff]
  %v292 = vld [vmem:[%s0 + $0x880] sm:$0xff]
  %v293 = vld [vmem:[%s0 + $0x888] sm:$0xff]
  %v294 = vld [vmem:[%s0 + $0x890] sm:$0xff]
  %v295 = vld [vmem:[%s0 + $0x898] sm:$0xff]
  %v296 = vld [vmem:[%s0 + $0x8a0] sm:$0xff]
  %v297 = vld [vmem:[%s0 + $0x8a8] sm:$0xff]
  %v298 = vld [vmem:[%s0 + $0x8b0] sm:$0xff]
  %v299 = vld [vmem:[%s0 + $0x8b8] sm:$0xff]
  %v300 = vld [vmem:[%s0 + $0x8c0] sm:$0xff]
  %v301 = vld [vmem:[%s0 + $0x8c8] sm:$0xff]
  %v302 = vld [vmem:[%s0 + $0x8d0] sm:$0xff]
  %v303 = vld [vmem:[%s0 + $0x8d8] sm:$0xff]
  %v304 = vld [vmem:[%s0 + $0x8e0] sm:$0xff]
  %v305 = vld [vmem:[%s0 + $0x8e8] sm:$0xff]
  %v306 = vld [vmem:[%s0 + $0x8f0] sm:$0xff]
  %v307 = vld [vmem:[%s0 + $0x8f8] sm:$0xff]
  %v308 = vld [vmem:[%s0 + $0x900] sm:$0xff]
  %v309 = vld [vmem:[%s0 + $0x908] sm:$0xff]
  %v310 = vld [vmem:[%s0 + $0x910] sm:$0xff]
  %v311 = vld [vmem:[%s0 + $0x918] sm:$0xff]
  %v312 = vld [vmem:[%s0 + $0x920] sm:$0xff]
  %v313 = vld [vmem:[%s0 + $0x928] sm:$0xff]
  %v314 = vld [vmem:[%s0 + $0x930] sm:$0xff]
  %v315 = vld [vmem:[%s0 + $0x938] sm:$0xff]
  %v316 = vld [vmem:[%s0 + $0x940] sm:$0xff]
  %v317 = vld [vmem:[%s0 + $0x948] sm:$0xff]
  %v318 = vld [vmem:[%s0 + $0x950] sm:$0xff]
  %v319 = vld [vmem:[%s0 + $0x958] sm:$0xff]
  %v320 = vld [vmem:[%s0 + $0x960] sm:$0xff]
  %v321 = vld [vmem:[%s0 + $0x968] sm:$0xff]
  %v322 = vld [vmem:[%s0 + $0x970] sm:$0xff]
  %v323 = vld [vmem:[%s0 + $0x978] sm:$0xff]
  %v324 = vld [vmem:[%s0 + $0x980] sm:$0xff]
  %v325 = vld [vmem:[%s0 + $0x988] sm:$0xff]
  %v326 = vld [vmem:[%s0 + $0x990] sm:$0xff]
  %v327 = vld [vmem:[%s0 + $0x998] sm:$0xff]
  %v328 = vld [vmem:[%s0 + $0x9a0] sm:$0xff]
  %v329 = vld [vmem:[%s0 + $0x9a8] sm:$0xff]
  %v330 = vld [vmem:[%s0 + $0x9b0] sm:$0xff]
  %v331 = vld [vmem:[%s0 + $0x9b8] sm:$0xff]
  %v332 = vld [vmem:[%s0 + $0x9c0] sm:$0xff]
  %v333 = vld [vmem:[%s0 + $0x9c8] sm:$0xff]
  %v334 = vld [vmem:[%s0 + $0x9d0] sm:$0xff]
  %v335 = vld [vmem:[%s0 + $0x9d8] sm:$0xff]
  %v336 = vld [vmem:[%s0 + $0x9e0] sm:$0xff]
  %v337 = vld [vmem:[%s0 + $0x9e8] sm:$0xff]
  %v338 = vld [vmem:[%s0 + $0x9f0] sm:$0xff]
  %v339 = vld [vmem:[%s0 + $0x9f8] sm:$0xff]
  %v340 = vld [vmem:[%s0 + $0xa00] sm:$0xff]
  %v341 = vld [vmem:[%s0 + $0xa08] sm:$0xff]
  %v342 = vld [vmem:[%s0 + $0xa10] sm:$0xff]
  %v343 = vld [vmem:[%s0 + $0xa18] sm:$0xff]
  %v344 = vld [vmem:[%s0 + $0xa20] sm:$0xff]
  %v345 = vld [vmem:[%s0 + $0xa28] sm:$0xff]
  %v346 = vld [vmem:[%s0 + $0xa30] sm:$0xff]
  %v347 = vld [vmem:[%s0 + $0xa38] sm:$0xff]
  %v348 = vld [vmem:[%s0 + $0xa40] sm:$0xff]
  %v349 = vld [vmem:[%s0 + $0xa48] sm:$0xff]
  %v350 = vld [vmem:[%s0 + $0xa50] sm:$0xff]
  %v351 = vld [vmem:[%s0 + $0xa58] sm:$0xff]
  %v352 = vld [vmem:[%s0 + $0xa60] sm:$0xff]
  %v353 = vld [vmem:[%s0 + $0xa68] sm:$0xff]
  %v354 = vld [vmem:[%s0 + $0xa70] sm:$0xff]
  %v355 = vld [vmem:[%s0 + $0xa78] sm:$0xff]
  %v356 = vld [vmem:[%s0 + $0xa80] sm:$0xff]
  %v357 = vld [vmem:[%s0 + $0xa88] sm:$0xff]
  %v358 = vld [vmem:[%s0 + $0xa90] sm:$0xff]
  %v359 = vld [vmem:[%s0 + $0xa98] sm:$0xff]
  %v360 = vld [vmem:[%s0 + $0xaa0] sm:$0xff]
  %v361 = vld [vmem:[%s0 + $0xaa8] sm:$0xff]
  %v362 = vld [vmem:[%s0 + $0xab0] sm:$0xff]
  %v363 = vld [vmem:[%s0 + $0xab8] sm:$0xff]
  %v364 = vld [vmem:[%s0 + $0xac0] sm:$0xff]
  %v365 = vld [vmem:[%s0 + $0xac8] sm:$0xff]
  %v366 = vld [vmem:[%s0 + $0xad0] sm:$0xff]
  %v367 = vld [vmem:[%s0 + $0xad8] sm:$0xff]
  %v368 = vld [vmem:[%s0 + $0xae0] sm:$0xff]
  %v369 = vld [vmem:[%s0 + $0xae8] sm:$0xff]
  %v370 = vld [vmem:[%s0 + $0xaf0] sm:$0xff]
  %v371 = vld [vmem:[%s0 + $0xaf8] sm:$0xff]
  %v372 = vld [vmem:[%s0 + $0xb00] sm:$0xff]
  %v373 = vld [vmem:[%s0 + $0xb08] sm:$0xff]
  %v374 = vld [vmem:[%s0 + $0xb10] sm:$0xff]
  %v375 = vld [vmem:[%s0 + $0xb18] sm:$0xff]
  %v376 = vld [vmem:[%s0 + $0xb20] sm:$0xff]
  %v377 = vld [vmem:[%s0 + $0xb28] sm:$0xff]
  %v378 = vld [vmem:[%s0 + $0xb30] sm:$0xff]
  %v379 = vld [vmem:[%s0 + $0xb38] sm:$0xff]
  %v380 = vld [vmem:[%s0 + $0xb40] sm:$0xff]
  %v381 = vld [vmem:[%s0 + $0xb48] sm:$0xff]
  %v382 = vld [vmem:[%s0 + $0xb50] sm:$0xff]
  %v383 = vld [vmem:[%s0 + $0xb58] sm:$0xff]
  %v384 = vld [vmem:[%s0 + $0xb60] sm:$0xff]
  %v385 = vld [vmem:[%s0 + $0xb68] sm:$0xff]
  %v386 = vld [vmem:[%s0 + $0xb70] sm:$0xff]
  %v387 = vld [vmem:[%s0 + $0xb78] sm:$0xff]
  %v388 = vld [vmem:[%s0 + $0xb80] sm:$0xff]
  %v389 = vld [vmem:[%s0 + $0xb88] sm:$0xff]
  %v390 = vld [vmem:[%s0 + $0xb90] sm:$0xff]
  %v391 = vld [vmem:[%s0 + $0xb98] sm:$0xff]
  %v392 = vld [vmem:[%s0 + $0xba0] sm:$0xff]
  %v393 = vld [vmem:[%s0 + $0xba8] sm:$0xff]
  %v394 = vld [vmem:[%s0 + $0xbb0] sm:$0xff]
  %v395 = vld [vmem:[%s0 + $0xbb8] sm:$0xff]
  %v396 = vld [vmem:[%s0 + $0xbc0] sm:$0xff]
  %v397 = vld [vmem:[%s0 + $0xbc8] sm:$0xff]
  %v398 = vld [vmem:[%s0 + $0xbd0] sm:$0xff]
  %v399 = vld [vmem:[%s0 + $0xbd8] sm:$0xff]
  %v400 = vld [vmem:[%s0 + $0xbe0] sm:$0xff]
  %v401 = vld [vmem:[%s0 + $0xbe8] sm:$0xff]
  %v402 = vld [vmem:[%s0 + $0xbf0] sm:$0xff]
  %v403 = vld [vmem:[%s0 + $0xbf8] sm:$0xff]
  %v404 = vld [vmem:[%s0 + $0xc00] sm:$0xff]
  %v405 = vld [vmem:[%s0 + $0xc08] sm:$0xff]
  %v406 = vld [vmem:[%s0 + $0xc10] sm:$0xff]
  %v407 = vld [vmem:[%s0 + $0xc18] sm:$0xff]
  %v408 = vld [vmem:[%s0 + $0xc20] sm:$0xff]
  %v409 = vld [vmem:[%s0 + $0xc28] sm:$0xff]
  %v410 = vld [vmem:[%s0 + $0xc30] sm:$0xff]
  %v411 = vld [vmem:[%s0 + $0xc38] sm:$0xff]
  %v412 = vld [vmem:[%s0 + $0xc40] sm:$0xff]
  %v413 = vld [vmem:[%s0 + $0xc48] sm:$0xff]
  %v414 = vld [vmem:[%s0 + $0xc50] sm:$0xff]
  %v415 = vld [vmem:[%s0 + $0xc58] sm:$0xff]
  %v416 = vld [vmem:[%s0 + $0xc60] sm:$0xff]
  %v417 = vld [vmem:[%s0 + $0xc68] sm:$0xff]
  %v418 = vld [vmem:[%s0 + $0xc70] sm:$0xff]
  %v419 = vld [vmem:[%s0 + $0xc78] sm:$0xff]
  %v420 = vld [vmem:[%s1] sm:$0xff]
  %v421 = vld [vmem:[%s1 + $0x8] sm:$0xff]
  %v422 = vld [vmem:[%s1 + $0x10] sm:$0xff]
  %v423 = vld [vmem:[%s1 + $0x18] sm:$0xff]
  %v424 = vld [vmem:[%s2] sm:$0x1]
  %v426 = vlaneseq
  %v427 = vshrl.u32 %v426, 7
  %v428 = vsub.s32 0, %v427
  %v429 = vrot.slane %v424, %v428
  %vm431 = vcmask 261120
  %v433 = vsel %vm431, %v20, 0
  %v436 = vsel %vm431, %v21, 0
  %v439 = vsel %vm431, %v22, 0
  %v442 = vsel %vm431, %v23, 0
  %v445 = vsel %vm431, %v24, 0
  %v448 = vsel %vm431, %v25, 0
  %v451 = vsel %vm431, %v26, 0
  %v454 = vsel %vm431, %v27, 0
  %v457 = vsel %vm431, %v28, 0
  %v460 = vsel %vm431, %v29, 0
  %v463 = vsel %vm431, %v30, 0
  %v466 = vsel %vm431, %v31, 0
  %v469 = vsel %vm431, %v32, 0
  %v472 = vsel %vm431, %v33, 0
  %v475 = vsel %vm431, %v34, 0
  %v478 = vsel %vm431, %v35, 0
  %v481 = vsel %vm431, %v36, 0
  %v484 = vsel %vm431, %v37, 0
  %v487 = vsel %vm431, %v38, 0
  %v490 = vsel %vm431, %v39, 0
  %v493 = vsel %vm431, %v40, 0
  %v496 = vsel %vm431, %v41, 0
  %v499 = vsel %vm431, %v42, 0
  %v502 = vsel %vm431, %v43, 0
  %v505 = vsel %vm431, %v44, 0
  %v508 = vsel %vm431, %v45, 0
  %v511 = vsel %vm431, %v46, 0
  %v514 = vsel %vm431, %v47, 0
  %v517 = vsel %vm431, %v48, 0
  %v520 = vsel %vm431, %v49, 0
  %v523 = vsel %vm431, %v50, 0
  %v526 = vsel %vm431, %v51, 0
  %v529 = vsel %vm431, %v52, 0
  %v532 = vsel %vm431, %v53, 0
  %v535 = vsel %vm431, %v54, 0
  %v538 = vsel %vm431, %v55, 0
  %v541 = vsel %vm431, %v56, 0
  %v544 = vsel %vm431, %v57, 0
  %v547 = vsel %vm431, %v58, 0
  %v550 = vsel %vm431, %v59, 0
  %v553 = vsel %vm431, %v60, 0
  %v556 = vsel %vm431, %v61, 0
  %v559 = vsel %vm431, %v62, 0
  %v562 = vsel %vm431, %v63, 0
  %v565 = vsel %vm431, %v64, 0
  %v568 = vsel %vm431, %v65, 0
  %v571 = vsel %vm431, %v66, 0
  %v574 = vsel %vm431, %v67, 0
  %v577 = vsel %vm431, %v68, 0
  %v580 = vsel %vm431, %v69, 0
  %v583 = vsel %vm431, %v70, 0
  %v586 = vsel %vm431, %v71, 0
  %v589 = vsel %vm431, %v72, 0
  %v592 = vsel %vm431, %v73, 0
  %v595 = vsel %vm431, %v74, 0
  %v598 = vsel %vm431, %v75, 0
  %v601 = vsel %vm431, %v76, 0
  %v604 = vsel %vm431, %v77, 0
  %v607 = vsel %vm431, %v78, 0
  %v610 = vsel %vm431, %v79, 0
  %v613 = vsel %vm431, %v80, 0
  %v616 = vsel %vm431, %v81, 0
  %v619 = vsel %vm431, %v82, 0
  %v622 = vsel %vm431, %v83, 0
  %v625 = vsel %vm431, %v84, 0
  %v628 = vsel %vm431, %v85, 0
  %v631 = vsel %vm431, %v86, 0
  %v634 = vsel %vm431, %v87, 0
  %v637 = vsel %vm431, %v88, 0
  %v640 = vsel %vm431, %v89, 0
  %v643 = vsel %vm431, %v90, 0
  %v646 = vsel %vm431, %v91, 0
  %v649 = vsel %vm431, %v92, 0
  %v652 = vsel %vm431, %v93, 0
  %v655 = vsel %vm431, %v94, 0
  %v658 = vsel %vm431, %v95, 0
  %v661 = vsel %vm431, %v96, 0
  %v664 = vsel %vm431, %v97, 0
  %v667 = vsel %vm431, %v98, 0
  %v670 = vsel %vm431, %v99, 0
  %v673 = vsel %vm431, %v100, 0
  %v676 = vsel %vm431, %v101, 0
  %v679 = vsel %vm431, %v102, 0
  %v682 = vsel %vm431, %v103, 0
  %v685 = vsel %vm431, %v104, 0
  %v688 = vsel %vm431, %v105, 0
  %v691 = vsel %vm431, %v106, 0
  %v694 = vsel %vm431, %v107, 0
  %v697 = vsel %vm431, %v108, 0
  %v700 = vsel %vm431, %v109, 0
  %v703 = vsel %vm431, %v110, 0
  %v706 = vsel %vm431, %v111, 0
  %v709 = vsel %vm431, %v112, 0
  %v712 = vsel %vm431, %v113, 0
  %v715 = vsel %vm431, %v114, 0
  %v718 = vsel %vm431, %v115, 0
  %v721 = vsel %vm431, %v116, 0
  %v724 = vsel %vm431, %v117, 0
  %v727 = vsel %vm431, %v118, 0
  %v730 = vsel %vm431, %v119, 0
  %v733 = vsel %vm431, %v120, 0
  %v736 = vsel %vm431, %v121, 0
  %v739 = vsel %vm431, %v122, 0
  %v742 = vsel %vm431, %v123, 0
  %v745 = vsel %vm431, %v124, 0
  %v748 = vsel %vm431, %v125, 0
  %v751 = vsel %vm431, %v126, 0
  %v754 = vsel %vm431, %v127, 0
  %v757 = vsel %vm431, %v128, 0
  %v760 = vsel %vm431, %v129, 0
  %v763 = vsel %vm431, %v130, 0
  %v766 = vsel %vm431, %v131, 0
  %v769 = vsel %vm431, %v132, 0
  %v772 = vsel %vm431, %v133, 0
  %v775 = vsel %vm431, %v134, 0
  %v778 = vsel %vm431, %v135, 0
  %v781 = vsel %vm431, %v136, 0
  %v784 = vsel %vm431, %v137, 0
  %v787 = vsel %vm431, %v138, 0
  %v790 = vsel %vm431, %v139, 0
  %v793 = vsel %vm431, %v140, 0
  %v796 = vsel %vm431, %v141, 0
  %v799 = vsel %vm431, %v142, 0
  %v802 = vsel %vm431, %v143, 0
  %v805 = vsel %vm431, %v144, 0
  %v808 = vsel %vm431, %v145, 0
  %v811 = vsel %vm431, %v146, 0
  %v814 = vsel %vm431, %v147, 0
  %v817 = vsel %vm431, %v148, 0
  %v820 = vsel %vm431, %v149, 0
  %v823 = vsel %vm431, %v150, 0
  %v826 = vsel %vm431, %v151, 0
  %v829 = vsel %vm431, %v152, 0
  %v832 = vsel %vm431, %v153, 0
  %v835 = vsel %vm431, %v154, 0
  %v838 = vsel %vm431, %v155, 0
  %v841 = vsel %vm431, %v156, 0
  %v844 = vsel %vm431, %v157, 0
  %v847 = vsel %vm431, %v158, 0
  %v850 = vsel %vm431, %v159, 0
  %v853 = vsel %vm431, %v160, 0
  %v856 = vsel %vm431, %v161, 0
  %v859 = vsel %vm431, %v162, 0
  %v862 = vsel %vm431, %v163, 0
  %v865 = vsel %vm431, %v164, 0
  %v868 = vsel %vm431, %v165, 0
  %v871 = vsel %vm431, %v166, 0
  %v874 = vsel %vm431, %v167, 0
  %v877 = vsel %vm431, %v168, 0
  %v880 = vsel %vm431, %v169, 0
  %v883 = vsel %vm431, %v170, 0
  %v886 = vsel %vm431, %v171, 0
  %v889 = vsel %vm431, %v172, 0
  %v892 = vsel %vm431, %v173, 0
  %v895 = vsel %vm431, %v174, 0
  %v898 = vsel %vm431, %v175, 0
  %v901 = vsel %vm431, %v176, 0
  %v904 = vsel %vm431, %v177, 0
  %v907 = vsel %vm431, %v178, 0
  %v910 = vsel %vm431, %v179, 0
  %v913 = vsel %vm431, %v180, 0
  %v916 = vsel %vm431, %v181, 0
  %v919 = vsel %vm431, %v182, 0
  %v922 = vsel %vm431, %v183, 0
  %v925 = vsel %vm431, %v184, 0
  %v928 = vsel %vm431, %v185, 0
  %v931 = vsel %vm431, %v186, 0
  %v934 = vsel %vm431, %v187, 0
  %v937 = vsel %vm431, %v188, 0
  %v940 = vsel %vm431, %v189, 0
  %v943 = vsel %vm431, %v190, 0
  %v946 = vsel %vm431, %v191, 0
  %v949 = vsel %vm431, %v192, 0
  %v952 = vsel %vm431, %v193, 0
  %v955 = vsel %vm431, %v194, 0
  %v958 = vsel %vm431, %v195, 0
  %v961 = vsel %vm431, %v196, 0
  %v964 = vsel %vm431, %v197, 0
  %v967 = vsel %vm431, %v198, 0
  %v970 = vsel %vm431, %v199, 0
  %v973 = vsel %vm431, %v200, 0
  %v976 = vsel %vm431, %v201, 0
  %v979 = vsel %vm431, %v202, 0
  %v982 = vsel %vm431, %v203, 0
  %v985 = vsel %vm431, %v204, 0
  %v988 = vsel %vm431, %v205, 0
  %v991 = vsel %vm431, %v206, 0
  %v994 = vsel %vm431, %v207, 0
  %v997 = vsel %vm431, %v208, 0
  %v1000 = vsel %vm431, %v209, 0
  %v1003 = vsel %vm431, %v210, 0
  %v1006 = vsel %vm431, %v211, 0
  %v1009 = vsel %vm431, %v212, 0
  %v1012 = vsel %vm431, %v213, 0
  %v1015 = vsel %vm431, %v214, 0
  %v1018 = vsel %vm431, %v215, 0
  %v1021 = vsel %vm431, %v216, 0
  %v1024 = vsel %vm431, %v217, 0
  %v1027 = vsel %vm431, %v218, 0
  %v1030 = vsel %vm431, %v219, 0
  %v1033 = vsel %vm431, %v220, 0
  %v1036 = vsel %vm431, %v221, 0
  %v1039 = vsel %vm431, %v222, 0
  %v1042 = vsel %vm431, %v223, 0
  %v1045 = vsel %vm431, %v224, 0
  %v1048 = vsel %vm431, %v225, 0
  %v1051 = vsel %vm431, %v226, 0
  %v1054 = vsel %vm431, %v227, 0
  %v1057 = vsel %vm431, %v228, 0
  %v1060 = vsel %vm431, %v229, 0
  %v1063 = vsel %vm431, %v230, 0
  %v1066 = vsel %vm431, %v231, 0
  %v1069 = vsel %vm431, %v232, 0
  %v1072 = vsel %vm431, %v233, 0
  %v1075 = vsel %vm431, %v234, 0
  %v1078 = vsel %vm431, %v235, 0
  %v1081 = vsel %vm431, %v236, 0
  %v1084 = vsel %vm431, %v237, 0
  %v1087 = vsel %vm431, %v238, 0
  %v1090 = vsel %vm431, %v239, 0
  %v1093 = vsel %vm431, %v240, 0
  %v1096 = vsel %vm431, %v241, 0
  %v1099 = vsel %vm431, %v242, 0
  %v1102 = vsel %vm431, %v243, 0
  %v1105 = vsel %vm431, %v244, 0
  %v1108 = vsel %vm431, %v245, 0
  %v1111 = vsel %vm431, %v246, 0
  %v1114 = vsel %vm431, %v247, 0
  %v1117 = vsel %vm431, %v248, 0
  %v1120 = vsel %vm431, %v249, 0
  %v1123 = vsel %vm431, %v250, 0
  %v1126 = vsel %vm431, %v251, 0
  %v1129 = vsel %vm431, %v252, 0
  %v1132 = vsel %vm431, %v253, 0
  %v1135 = vsel %vm431, %v254, 0
  %v1138 = vsel %vm431, %v255, 0
  %v1141 = vsel %vm431, %v256, 0
  %v1144 = vsel %vm431, %v257, 0
  %v1147 = vsel %vm431, %v258, 0
  %v1150 = vsel %vm431, %v259, 0
  %v1153 = vsel %vm431, %v260, 0
  %v1156 = vsel %vm431, %v261, 0
  %v1159 = vsel %vm431, %v262, 0
  %v1162 = vsel %vm431, %v263, 0
  %v1165 = vsel %vm431, %v264, 0
  %v1168 = vsel %vm431, %v265, 0
  %v1171 = vsel %vm431, %v266, 0
  %v1174 = vsel %vm431, %v267, 0
  %v1177 = vsel %vm431, %v268, 0
  %v1180 = vsel %vm431, %v269, 0
  %v1183 = vsel %vm431, %v270, 0
  %v1186 = vsel %vm431, %v271, 0
  %v1189 = vsel %vm431, %v272, 0
  %v1192 = vsel %vm431, %v273, 0
  %v1195 = vsel %vm431, %v274, 0
  %v1198 = vsel %vm431, %v275, 0
  %v1201 = vsel %vm431, %v276, 0
  %v1204 = vsel %vm431, %v277, 0
  %v1207 = vsel %vm431, %v278, 0
  %v1210 = vsel %vm431, %v279, 0
  %v1213 = vsel %vm431, %v280, 0
  %v1216 = vsel %vm431, %v281, 0
  %v1219 = vsel %vm431, %v282, 0
  %v1222 = vsel %vm431, %v283, 0
  %v1225 = vsel %vm431, %v284, 0
  %v1228 = vsel %vm431, %v285, 0
  %v1231 = vsel %vm431, %v286, 0
  %v1234 = vsel %vm431, %v287, 0
  %v1237 = vsel %vm431, %v288, 0
  %v1240 = vsel %vm431, %v289, 0
  %v1243 = vsel %vm431, %v290, 0
  %v1246 = vsel %vm431, %v291, 0
  %v1249 = vsel %vm431, %v292, 0
  %v1252 = vsel %vm431, %v293, 0
  %v1255 = vsel %vm431, %v294, 0
  %v1258 = vsel %vm431, %v295, 0
  %v1261 = vsel %vm431, %v296, 0
  %v1264 = vsel %vm431, %v297, 0
  %v1267 = vsel %vm431, %v298, 0
  %v1270 = vsel %vm431, %v299, 0
  %v1273 = vsel %vm431, %v300, 0
  %v1276 = vsel %vm431, %v301, 0
  %v1279 = vsel %vm431, %v302, 0
  %v1282 = vsel %vm431, %v303, 0
  %v1285 = vsel %vm431, %v304, 0
  %v1288 = vsel %vm431, %v305, 0
  %v1291 = vsel %vm431, %v306, 0
  %v1294 = vsel %vm431, %v307, 0
  %v1297 = vsel %vm431, %v308, 0
  %v1300 = vsel %vm431, %v309, 0
  %v1303 = vsel %vm431, %v310, 0
  %v1306 = vsel %vm431, %v311, 0
  %v1309 = vsel %vm431, %v312, 0
  %v1312 = vsel %vm431, %v313, 0
  %v1315 = vsel %vm431, %v314, 0
  %v1318 = vsel %vm431, %v315, 0
  %v1321 = vsel %vm431, %v316, 0
  %v1324 = vsel %vm431, %v317, 0
  %v1327 = vsel %vm431, %v318, 0
  %v1330 = vsel %vm431, %v319, 0
  %v1333 = vsel %vm431, %v320, 0
  %v1336 = vsel %vm431, %v321, 0
  %v1339 = vsel %vm431, %v322, 0
  %v1342 = vsel %vm431, %v323, 0
  %v1345 = vsel %vm431, %v324, 0
  %v1348 = vsel %vm431, %v325, 0
  %v1351 = vsel %vm431, %v326, 0
  %v1354 = vsel %vm431, %v327, 0
  %v1357 = vsel %vm431, %v328, 0
  %v1360 = vsel %vm431, %v329, 0
  %v1363 = vsel %vm431, %v330, 0
  %v1366 = vsel %vm431, %v331, 0
  %v1369 = vsel %vm431, %v332, 0
  %v1372 = vsel %vm431, %v333, 0
  %v1375 = vsel %vm431, %v334, 0
  %v1378 = vsel %vm431, %v335, 0
  %v1381 = vsel %vm431, %v336, 0
  %v1384 = vsel %vm431, %v337, 0
  %v1387 = vsel %vm431, %v338, 0
  %v1390 = vsel %vm431, %v339, 0
  %v1393 = vsel %vm431, %v340, 0
  %v1396 = vsel %vm431, %v341, 0
  %v1399 = vsel %vm431, %v342, 0
  %v1402 = vsel %vm431, %v343, 0
  %v1405 = vsel %vm431, %v344, 0
  %v1408 = vsel %vm431, %v345, 0
  %v1411 = vsel %vm431, %v346, 0
  %v1414 = vsel %vm431, %v347, 0
  %v1417 = vsel %vm431, %v348, 0
  %v1420 = vsel %vm431, %v349, 0
  %v1423 = vsel %vm431, %v350, 0
  %v1426 = vsel %vm431, %v351, 0
  %v1429 = vsel %vm431, %v352, 0
  %v1432 = vsel %vm431, %v353, 0
  %v1435 = vsel %vm431, %v354, 0
  %v1438 = vsel %vm431, %v355, 0
  %v1441 = vsel %vm431, %v356, 0
  %v1444 = vsel %vm431, %v357, 0
  %v1447 = vsel %vm431, %v358, 0
  %v1450 = vsel %vm431, %v359, 0
  %v1453 = vsel %vm431, %v360, 0
  %v1456 = vsel %vm431, %v361, 0
  %v1459 = vsel %vm431, %v362, 0
  %v1462 = vsel %vm431, %v363, 0
  %v1465 = vsel %vm431, %v364, 0
  %v1468 = vsel %vm431, %v365, 0
  %v1471 = vsel %vm431, %v366, 0
  %v1474 = vsel %vm431, %v367, 0
  %v1477 = vsel %vm431, %v368, 0
  %v1480 = vsel %vm431, %v369, 0
  %v1483 = vsel %vm431, %v370, 0
  %v1486 = vsel %vm431, %v371, 0
  %v1489 = vsel %vm431, %v372, 0
  %v1492 = vsel %vm431, %v373, 0
  %v1495 = vsel %vm431, %v374, 0
  %v1498 = vsel %vm431, %v375, 0
  %v1501 = vsel %vm431, %v376, 0
  %v1504 = vsel %vm431, %v377, 0
  %v1507 = vsel %vm431, %v378, 0
  %v1510 = vsel %vm431, %v379, 0
  %v1513 = vsel %vm431, %v380, 0
  %v1516 = vsel %vm431, %v381, 0
  %v1519 = vsel %vm431, %v382, 0
  %v1522 = vsel %vm431, %v383, 0
  %v1525 = vsel %vm431, %v384, 0
  %v1528 = vsel %vm431, %v385, 0
  %v1531 = vsel %vm431, %v386, 0
  %v1534 = vsel %vm431, %v387, 0
  %v1537 = vsel %vm431, %v388, 0
  %v1540 = vsel %vm431, %v389, 0
  %v1543 = vsel %vm431, %v390, 0
  %v1546 = vsel %vm431, %v391, 0
  %v1549 = vsel %vm431, %v392, 0
  %v1552 = vsel %vm431, %v393, 0
  %v1555 = vsel %vm431, %v394, 0
  %v1558 = vsel %vm431, %v395, 0
  %v1561 = vsel %vm431, %v396, 0
  %v1564 = vsel %vm431, %v397, 0
  %v1567 = vsel %vm431, %v398, 0
  %v1570 = vsel %vm431, %v399, 0
  %v1573 = vsel %vm431, %v400, 0
  %v1576 = vsel %vm431, %v401, 0
  %v1579 = vsel %vm431, %v402, 0
  %v1582 = vsel %vm431, %v403, 0
  %v1585 = vsel %vm431, %v404, 0
  %v1588 = vsel %vm431, %v405, 0
  %v1591 = vsel %vm431, %v406, 0
  %v1594 = vsel %vm431, %v407, 0
  %v1597 = vsel %vm431, %v408, 0
  %v1600 = vsel %vm431, %v409, 0
  %v1603 = vsel %vm431, %v410, 0
  %v1606 = vsel %vm431, %v411, 0
  %v1609 = vsel %vm431, %v412, 0
  %v1612 = vsel %vm431, %v413, 0
  %v1615 = vsel %vm431, %v414, 0
  %v1618 = vsel %vm431, %v415, 0
  %v1621 = vsel %vm431, %v416, 0
  %v1624 = vsel %vm431, %v417, 0
  %v1627 = vsel %vm431, %v418, 0
  %v1630 = vsel %vm431, %v419, 0
  %1632 = vmatprep.subr.mxu0 0.0
  %1633 = vmatpush1.msra.mxu0 %v420
  %1634 = vmatprep.subr.mxu0 0.0
  %1635 = vmatpush1.msra.mxu0 %v421
  %1636 = vmatprep.subr.mxu0 0.0
  %1637 = vmatpush1.msra.mxu0 %v422
  %1638 = vmatprep.subr.mxu0 0.0
  %1639 = vmatpush1.msra.mxu0 %v423
  %1640 = vmatprep.subr.mxu0 0.0
  %1641 = vmatpush1.msra.mxu0 0.0
  %1642 = vmatprep.subr.mxu0 0.0
  %1643 = vmatpush1.msra.mxu0 0.0
  %1644 = vmatprep.subr.mxu0 0.0
  %1645 = vmatpush1.msra.mxu0 0.0
  %1646 = vmatprep.subr.mxu0 0.0
  %1647 = vmatpush1.msra.mxu0 0.0
  %1648 = vmatprep.subr.mxu0 0.0
  %1649 = vmatpush1.msra.mxu0 0.0
  %1650 = vmatprep.subr.mxu0 0.0
  %1651 = vmatpush1.msra.mxu0 0.0
  %1652 = vmatprep.subr.mxu0 0.0
  %1653 = vmatpush1.msra.mxu0 0.0
  %1654 = vmatprep.subr.mxu0 0.0
  %1655 = vmatpush1.msra.mxu0 0.0
  %1656 = vmatprep.subr.mxu0 0.0
  %1657 = vmatpush1.msra.mxu0 0.0
  %1658 = vmatprep.subr.mxu0 0.0
  %1659 = vmatpush1.msra.mxu0 0.0
  %1660 = vmatprep.subr.mxu0 0.0
  %1661 = vmatpush1.msra.mxu0 0.0
  %1662 = vmatprep.subr.mxu0 0.0
  %1663 = vmatpush1.msra.mxu0 0.0
  %1664 = vmatprep.subr.mxu0 0.0
  %1665 = vmatpush1.msra.mxu0 0.0
  %1666 = vmatprep.subr.mxu0 0.0
  %1667 = vmatpush1.msra.mxu0 0.0
  %1668 = vmatprep.subr.mxu0 0.0
  %1669 = vmatpush1.msra.mxu0 0.0
  %1670 = vmatprep.subr.mxu0 0.0
  %1671 = vmatpush1.msra.mxu0 0.0
  %1672 = vmatprep.subr.mxu0 0.0
  %1673 = vmatpush1.msra.mxu0 0.0
  %1674 = vmatprep.subr.mxu0 0.0
  %1675 = vmatpush1.msra.mxu0 0.0
  %1676 = vmatprep.subr.mxu0 0.0
  %1677 = vmatpush1.msra.mxu0 0.0
  %1678 = vmatprep.subr.mxu0 0.0
  %1679 = vmatpush1.msra.mxu0 0.0
  %1680 = vmatprep.subr.mxu0 0.0
  %1681 = vmatpush1.msra.mxu0 0.0
  %1682 = vmatprep.subr.mxu0 0.0
  %1683 = vmatpush1.msra.mxu0 0.0
  %1684 = vmatprep.subr.mxu0 0.0
  %1685 = vmatpush1.msra.mxu0 0.0
  %1686 = vmatprep.subr.mxu0 0.0
  %1687 = vmatpush1.msra.mxu0 0.0
  %1688 = vmatprep.subr.mxu0 0.0
  %1689 = vmatpush1.msra.mxu0 0.0
  %1690 = vmatprep.subr.mxu0 0.0
  %1691 = vmatpush1.msra.mxu0 0.0
  %1692 = vmatprep.subr.mxu0 0.0
  %1693 = vmatpush1.msra.mxu0 0.0
  %1694 = vmatprep.subr.mxu0 0.0
  %1695 = vmatpush1.msra.mxu0 0.0
  %1696 = vmatprep.mubr.f32.mxu0 0.0
  %1697 = vmatmul.mubr.f32.gmra.mrb[0].mxu0 %v433
  %v1698 = vpop.f32.mrb[0].mxu0
  %v1699 = vadd.f32 %v429, %v1698
  %v1700 = vpop.f32.mrb[0].mxu0
  %1701 = vmatprep.mubr.f32.mxu0 0.0
  %1702 = vmatmul.mubr.f32.gmra.mrb[0].mxu0 %v436
  %v1703 = vpop.f32.mrb[0].mxu0
  %v1704 = vadd.f32 %v429, %v1703
  %v1705 = vpop.f32.mrb[0].mxu0
  %1706 = vmatprep.mubr.f32.mxu0 0.0
  %1707 = vmatmul.mubr.f32.gmra.mrb[0].mxu0 %v439
  %v1708 = vpop.f32.mrb[0].mxu0
  %v1709 = vadd.f32 %v429, %v1708
  %v1710 = vpop.f32.mrb[0].mxu0
  %1711 = vmatprep.mubr.f32.mxu0 0.0
  %1712 = vmatmul.mubr.f32.gmra.mrb[0].mxu0 %v442
  %v1713 = vpop.f32.mrb[0].mxu0
  %v1714 = vadd.f32 %v429, %v1713
  %v1715 = vpop.f32.mrb[0].mxu0
  %1716 = vmatprep.mubr.f32.mxu0 0.0
  %1717 = vmatmul.mubr.f32.gmra.mrb[0].mxu0 %v445
  %v1718 = vpop.f32.mrb[0].mxu0
  %v1719 = vadd.f32 %v429, %v1718
  %v1720 = vpop.f32.mrb[0].mxu0
  %1721 = vmatprep.mubr.f32.mxu0 0.0
  %1722 = vmatmul.mubr.f32.gmra.mrb[0].mxu0 %v448
  %v1723 = vpop.f32.mrb[0].mxu0
  %v1724 = vadd.f32 %v429, %v1723
  %v1725 = vpop.f32.mrb[0].mxu0
  %1726 = vmatprep.mubr.f32.mxu0 0.0
  %1727 = vmatmul.mubr.f32.gmra.mrb[0].mxu0 %v451
  %v1728 = vpop.f32.mrb[0].mxu0
  %v1729 = vadd.f32 %v429, %v1728
  %v1730 = vpop.f32.mrb[0].mxu0
  %1731 = vmatprep.mubr.f32.mxu0 0.0
  %1732 = vmatmul.mubr.f32.gmra.mrb[0].mxu0 %v454
  %v1733 = vpop.f32.mrb[0].mxu0
  %v1734 = vadd.f32 %v429, %v1733
  %v1735 = vpop.f32.mrb[0].mxu0
  %1736 = vmatprep.mubr.f32.mxu0 0.0
  %1737 = vmatmul.mubr.f32.gmra.mrb[0].mxu0 %v457
  %v1738 = vpop.f32.mrb[0].mxu0
  %v1739 = vadd.f32 %v429, %v1738
  %v1740 = vpop.f32.mrb[0].mxu0
  %1741 = vmatprep.mubr.f32.mxu0 0.0
  %1742 = vmatmul.mubr.f32.gmra.mrb[0].mxu0 %v460
  %v1743 = vpop.f32.mrb[0].mxu0
  %v1744 = vadd.f32 %v429, %v1743
  %v1745 = vpop.f32.mrb[0].mxu0
  %1746 = vmatprep.mubr.f32.mxu0 0.0
  %1747 = vmatmul.mubr.f32.gmra.mrb[0].mxu0 %v463
  %v1748 = vpop.f32.mrb[0].mxu0
  %v1749 = vadd.f32 %v429, %v1748
  %v1750 = vpop.f32.mrb[0].mxu0
  %1751 = vmatprep.mubr.f32.mxu0 0.0
  %1752 = vmatmul.mubr.f32.gmra.mrb[0].mxu0 %v466
  %v1753 = vpop.f32.mrb[0].mxu0
  %v1754 = vadd.f32 %v429, %v1753
  %v1755 = vpop.f32.mrb[0].mxu0
  %1756 = vmatprep.mubr.f32.mxu0 0.0
  %1757 = vmatmul.mubr.f32.gmra.mrb[0].mxu0 %v469
  %v1758 = vpop.f32.mrb[0].mxu0
  %v1759 = vadd.f32 %v429, %v1758
  %v1760 = vpop.f32.mrb[0].mxu0
  %1761 = vmatprep.mubr.f32.mxu0 0.0
  %1762 = vmatmul.mubr.f32.gmra.mrb[0].mxu0 %v472
  %v1763 = vpop.f32.mrb[0].mxu0
  %v1764 = vadd.f32 %v429, %v1763
  %v1765 = vpop.f32.mrb[0].mxu0
  %1766 = vmatprep.mubr.f32.mxu0 0.0
  %1767 = vmatmul.mubr.f32.gmra.mrb[0].mxu0 %v475
  %v1768 = vpop.f32.mrb[0].mxu0
  %v1769 = vadd.f32 %v429, %v1768
  %v1770 = vpop.f32.mrb[0].mxu0
  %1771 = vmatprep.mubr.f32.mxu0 0.0
  %1772 = vmatmul.mubr.f32.gmra.mrb[0].mxu0 %v478
  %v1773 = vpop.f32.mrb[0].mxu0
  %v1774 = vadd.f32 %v429, %v1773
  %v1775 = vpop.f32.mrb[0].mxu0
  %1776 = vmatprep.mubr.f32.mxu0 0.0
  %1777 = vmatmul.mubr.f32.gmra.mrb[0].mxu0 %v481
  %v1778 = vpop.f32.mrb[0].mxu0
  %v1779 = vadd.f32 %v429, %v1778
  %v1780 = vpop.f32.mrb[0].mxu0
  %1781 = vmatprep.mubr.f32.mxu0 0.0
  %1782 = vmatmul.mubr.f32.gmra.mrb[0].mxu0 %v484
  %v1783 = vpop.f32.mrb[0].mxu0
  %v1784 = vadd.f32 %v429, %v1783
  %v1785 = vpop.f32.mrb[0].mxu0
  %1786 = vmatprep.mubr.f32.mxu0 0.0
  %1787 = vmatmul.mubr.f32.gmra.mrb[0].mxu0 %v487
  %v1788 = vpop.f32.mrb[0].mxu0
  %v1789 = vadd.f32 %v429, %v1788
  %v1790 = vpop.f32.mrb[0].mxu0
  %1791 = vmatprep.mubr.f32.mxu0 0.0
  %1792 = vmatmul.mubr.f32.gmra.mrb[0].mxu0 %v490
  %v1793 = vpop.f32.mrb[0].mxu0
  %v1794 = vadd.f32 %v429, %v1793
  %v1795 = vpop.f32.mrb[0].mxu0
  %1796 = vmatprep.mubr.f32.mxu0 0.0
  %1797 = vmatmul.mubr.f32.gmra.mrb[0].mxu0 %v493
  %v1798 = vpop.f32.mrb[0].mxu0
  %v1799 = vadd.f32 %v429, %v1798
  %v1800 = vpop.f32.mrb[0].mxu0
  %1801 = vmatprep.mubr.f32.mxu0 0.0
  %1802 = vmatmul.mubr.f32.gmra.mrb[0].mxu0 %v496
  %v1803 = vpop.f32.mrb[0].mxu0
  %v1804 = vadd.f32 %v429, %v1803
  %v1805 = vpop.f32.mrb[0].mxu0
  %1806 = vmatprep.mubr.f32.mxu0 0.0
  %1807 = vmatmul.mubr.f32.gmra.mrb[0].mxu0 %v499
  %v1808 = vpop.f32.mrb[0].mxu0
  %v1809 = vadd.f32 %v429, %v1808
  %v1810 = vpop.f32.mrb[0].mxu0
  %1811 = vmatprep.mubr.f32.mxu0 0.0
  %1812 = vmatmul.mubr.f32.gmra.mrb[0].mxu0 %v502
  %v1813 = vpop.f32.mrb[0].mxu0
  %v1814 = vadd.f32 %v429, %v1813
  %v1815 = vpop.f32.mrb[0].mxu0
  %1816 = vmatprep.mubr.f32.mxu0 0.0
  %1817 = vmatmul.mubr.f32.gmra.mrb[0].mxu0 %v505
  %v1818 = vpop.f32.mrb[0].mxu0
  %v1819 = vadd.f32 %v429, %v1818
  %v1820 = vpop.f32.mrb[0].mxu0
  %1821 = vmatprep.mubr.f32.mxu0 0.0
  %1822 = vmatmul.mubr.f32.gmra.mrb[0].mxu0 %v508
  %v1823 = vpop.f32.mrb[0].mxu0
  %v1824 = vadd.f32 %v429, %v1823
  %v1825 = vpop.f32.mrb[0].mxu0
  %1826 = vmatprep.mubr.f32.mxu0 0.0
  %1827 = vmatmul.mubr.f32.gmra.mrb[0].mxu0 %v511
  %v1828 = vpop.f32.mrb[0].mxu0
  %v1829 = vadd.f32 %v429, %v1828
  %v1830 = vpop.f32.mrb[0].mxu0
  %1831 = vmatprep.mubr.f32.mxu0 0.0
  %1832 = vmatmul.mubr.f32.gmra.mrb[0].mxu0 %v514
  %v1833 = vpop.f32.mrb[0].mxu0
  %v1834 = vadd.f32 %v429, %v1833
  %v1835 = vpop.f32.mrb[0].mxu0
  %1836 = vmatprep.mubr.f32.mxu0 0.0
  %1837 = vmatmul.mubr.f32.gmra.mrb[0].mxu0 %v517
  %v1838 = vpop.f32.mrb[0].mxu0
  %v1839 = vadd.f32 %v429, %v1838
  %v1840 = vpop.f32.mrb[0].mxu0
  %1841 = vmatprep.mubr.f32.mxu0 0.0
  %1842 = vmatmul.mubr.f32.gmra.mrb[0].mxu0 %v520
  %v1843 = vpop.f32.mrb[0].mxu0
  %v1844 = vadd.f32 %v429, %v1843
  %v1845 = vpop.f32.mrb[0].mxu0
  %1846 = vmatprep.mubr.f32.mxu0 0.0
  %1847 = vmatmul.mubr.f32.gmra.mrb[0].mxu0 %v523
  %v1848 = vpop.f32.mrb[0].mxu0
  %v1849 = vadd.f32 %v429, %v1848
  %v1850 = vpop.f32.mrb[0].mxu0
  %1851 = vmatprep.mubr.f32.mxu0 0.0
  %1852 = vmatmul.mubr.f32.gmra.mrb[0].mxu0 %v526
  %v1853 = vpop.f32.mrb[0].mxu0
  %v1854 = vadd.f32 %v429, %v1853
  %v1855 = vpop.f32.mrb[0].mxu0
  %1856 = vmatprep.mubr.f32.mxu0 0.0
  %1857 = vmatmul.mubr.f32.gmra.mrb[0].mxu0 %v529
  %v1858 = vpop.f32.mrb[0].mxu0
  %v1859 = vadd.f32 %v429, %v1858
  %v1860 = vpop.f32.mrb[0].mxu0
  %1861 = vmatprep.mubr.f32.mxu0 0.0
  %1862 = vmatmul.mubr.f32.gmra.mrb[0].mxu0 %v532
  %v1863 = vpop.f32.mrb[0].mxu0
  %v1864 = vadd.f32 %v429, %v1863
  %v1865 = vpop.f32.mrb[0].mxu0
  %1866 = vmatprep.mubr.f32.mxu0 0.0
  %1867 = vmatmul.mubr.f32.gmra.mrb[0].mxu0 %v535
  %v1868 = vpop.f32.mrb[0].mxu0
  %v1869 = vadd.f32 %v429, %v1868
  %v1870 = vpop.f32.mrb[0].mxu0
  %1871 = vmatprep.mubr.f32.mxu0 0.0
  %1872 = vmatmul.mubr.f32.gmra.mrb[0].mxu0 %v538
  %v1873 = vpop.f32.mrb[0].mxu0
  %v1874 = vadd.f32 %v429, %v1873
  %v1875 = vpop.f32.mrb[0].mxu0
  %1876 = vmatprep.mubr.f32.mxu0 0.0
  %1877 = vmatmul.mubr.f32.gmra.mrb[0].mxu0 %v541
  %v1878 = vpop.f32.mrb[0].mxu0
  %v1879 = vadd.f32 %v429, %v1878
  %v1880 = vpop.f32.mrb[0].mxu0
  %1881 = vmatprep.mubr.f32.mxu0 0.0
  %1882 = vmatmul.mubr.f32.gmra.mrb[0].mxu0 %v544
  %v1883 = vpop.f32.mrb[0].mxu0
  %v1884 = vadd.f32 %v429, %v1883
  %v1885 = vpop.f32.mrb[0].mxu0
  %1886 = vmatprep.mubr.f32.mxu0 0.0
  %1887 = vmatmul.mubr.f32.gmra.mrb[0].mxu0 %v547
  %v1888 = vpop.f32.mrb[0].mxu0
  %v1889 = vadd.f32 %v429, %v1888
  %v1890 = vpop.f32.mrb[0].mxu0
  %1891 = vmatprep.mubr.f32.mxu0 0.0
  %1892 = vmatmul.mubr.f32.gmra.mrb[0].mxu0 %v550
  %v1893 = vpop.f32.mrb[0].mxu0
  %v1894 = vadd.f32 %v429, %v1893
  %v1895 = vpop.f32.mrb[0].mxu0
  %1896 = vmatprep.mubr.f32.mxu0 0.0
  %1897 = vmatmul.mubr.f32.gmra.mrb[0].mxu0 %v553
  %v1898 = vpop.f32.mrb[0].mxu0
  %v1899 = vadd.f32 %v429, %v1898
  %v1900 = vpop.f32.mrb[0].mxu0
  %1901 = vmatprep.mubr.f32.mxu0 0.0
  %1902 = vmatmul.mubr.f32.gmra.mrb[0].mxu0 %v556
  %v1903 = vpop.f32.mrb[0].mxu0
  %v1904 = vadd.f32 %v429, %v1903
  %v1905 = vpop.f32.mrb[0].mxu0
  %1906 = vmatprep.mubr.f32.mxu0 0.0
  %1907 = vmatmul.mubr.f32.gmra.mrb[0].mxu0 %v559
  %v1908 = vpop.f32.mrb[0].mxu0
  %v1909 = vadd.f32 %v429, %v1908
  %v1910 = vpop.f32.mrb[0].mxu0
  %1911 = vmatprep.mubr.f32.mxu0 0.0
  %1912 = vmatmul.mubr.f32.gmra.mrb[0].mxu0 %v562
  %v1913 = vpop.f32.mrb[0].mxu0
  %v1914 = vadd.f32 %v429, %v1913
  %v1915 = vpop.f32.mrb[0].mxu0
  %1916 = vmatprep.mubr.f32.mxu0 0.0
  %1917 = vmatmul.mubr.f32.gmra.mrb[0].mxu0 %v565
  %v1918 = vpop.f32.mrb[0].mxu0
  %v1919 = vadd.f32 %v429, %v1918
  %v1920 = vpop.f32.mrb[0].mxu0
  %1921 = vmatprep.mubr.f32.mxu0 0.0
  %1922 = vmatmul.mubr.f32.gmra.mrb[0].mxu0 %v568
  %v1923 = vpop.f32.mrb[0].mxu0
  %v1924 = vadd.f32 %v429, %v1923
  %v1925 = vpop.f32.mrb[0].mxu0
  %1926 = vmatprep.mubr.f32.mxu0 0.0
  %1927 = vmatmul.mubr.f32.gmra.mrb[0].mxu0 %v571
  %v1928 = vpop.f32.mrb[0].mxu0
  %v1929 = vadd.f32 %v429, %v1928
  %v1930 = vpop.f32.mrb[0].mxu0
  %1931 = vmatprep.mubr.f32.mxu0 0.0
  %1932 = vmatmul.mubr.f32.gmra.mrb[0].mxu0 %v574
  %v1933 = vpop.f32.mrb[0].mxu0
  %v1934 = vadd.f32 %v429, %v1933
  %v1935 = vpop.f32.mrb[0].mxu0
  %1936 = vmatprep.mubr.f32.mxu0 0.0
  %1937 = vmatmul.mubr.f32.gmra.mrb[0].mxu0 %v577
  %v1938 = vpop.f32.mrb[0].mxu0
  %v1939 = vadd.f32 %v429, %v1938
  %v1940 = vpop.f32.mrb[0].mxu0
  %1941 = vmatprep.mubr.f32.mxu0 0.0
  %1942 = vmatmul.mubr.f32.gmra.mrb[0].mxu0 %v580
  %v1943 = vpop.f32.mrb[0].mxu0
  %v1944 = vadd.f32 %v429, %v1943
  %v1945 = vpop.f32.mrb[0].mxu0
  %1946 = vmatprep.mubr.f32.mxu0 0.0
  %1947 = vmatmul.mubr.f32.gmra.mrb[0].mxu0 %v583
  %v1948 = vpop.f32.mrb[0].mxu0
  %v1949 = vadd.f32 %v429, %v1948
  %v1950 = vpop.f32.mrb[0].mxu0
  %1951 = vmatprep.mubr.f32.mxu0 0.0
  %1952 = vmatmul.mubr.f32.gmra.mrb[0].mxu0 %v586
  %v1953 = vpop.f32.mrb[0].mxu0
  %v1954 = vadd.f32 %v429, %v1953
  %v1955 = vpop.f32.mrb[0].mxu0
  %1956 = vmatprep.mubr.f32.mxu0 0.0
  %1957 = vmatmul.mubr.f32.gmra.mrb[0].mxu0 %v589
  %v1958 = vpop.f32.mrb[0].mxu0
  %v1959 = vadd.f32 %v429, %v1958
  %v1960 = vpop.f32.mrb[0].mxu0
  %1961 = vmatprep.mubr.f32.mxu0 0.0
  %1962 = vmatmul.mubr.f32.gmra.mrb[0].mxu0 %v592
  %v1963 = vpop.f32.mrb[0].mxu0
  %v1964 = vadd.f32 %v429, %v1963
  %v1965 = vpop.f32.mrb[0].mxu0
  %1966 = vmatprep.mubr.f32.mxu0 0.0
  %1967 = vmatmul.mubr.f32.gmra.mrb[0].mxu0 %v595
  %v1968 = vpop.f32.mrb[0].mxu0
  %v1969 = vadd.f32 %v429, %v1968
  %v1970 = vpop.f32.mrb[0].mxu0
  %1971 = vmatprep.mubr.f32.mxu0 0.0
  %1972 = vmatmul.mubr.f32.gmra.mrb[0].mxu0 %v598
  %v1973 = vpop.f32.mrb[0].mxu0
  %v1974 = vadd.f32 %v429, %v1973
  %v1975 = vpop.f32.mrb[0].mxu0
  %1976 = vmatprep.mubr.f32.mxu0 0.0
  %1977 = vmatmul.mubr.f32.gmra.mrb[0].mxu0 %v601
  %v1978 = vpop.f32.mrb[0].mxu0
  %v1979 = vadd.f32 %v429, %v1978
  %v1980 = vpop.f32.mrb[0].mxu0
  %1981 = vmatprep.mubr.f32.mxu0 0.0
  %1982 = vmatmul.mubr.f32.gmra.mrb[0].mxu0 %v604
  %v1983 = vpop.f32.mrb[0].mxu0
  %v1984 = vadd.f32 %v429, %v1983
  %v1985 = vpop.f32.mrb[0].mxu0
  %1986 = vmatprep.mubr.f32.mxu0 0.0
  %1987 = vmatmul.mubr.f32.gmra.mrb[0].mxu0 %v607
  %v1988 = vpop.f32.mrb[0].mxu0
  %v1989 = vadd.f32 %v429, %v1988
  %v1990 = vpop.f32.mrb[0].mxu0
  %1991 = vmatprep.mubr.f32.mxu0 0.0
  %1992 = vmatmul.mubr.f32.gmra.mrb[0].mxu0 %v610
  %v1993 = vpop.f32.mrb[0].mxu0
  %v1994 = vadd.f32 %v429, %v1993
  %v1995 = vpop.f32.mrb[0].mxu0
  %1996 = vmatprep.mubr.f32.mxu0 0.0
  %1997 = vmatmul.mubr.f32.gmra.mrb[0].mxu0 %v613
  %v1998 = vpop.f32.mrb[0].mxu0
  %v1999 = vadd.f32 %v429, %v1998
  %v2000 = vpop.f32.mrb[0].mxu0
  %2001 = vmatprep.mubr.f32.mxu0 0.0
  %2002 = vmatmul.mubr.f32.gmra.mrb[0].mxu0 %v616
  %v2003 = vpop.f32.mrb[0].mxu0
  %v2004 = vadd.f32 %v429, %v2003
  %v2005 = vpop.f32.mrb[0].mxu0
  %2006 = vmatprep.mubr.f32.mxu0 0.0
  %2007 = vmatmul.mubr.f32.gmra.mrb[0].mxu0 %v619
  %v2008 = vpop.f32.mrb[0].mxu0
  %v2009 = vadd.f32 %v429, %v2008
  %v2010 = vpop.f32.mrb[0].mxu0
  %2011 = vmatprep.mubr.f32.mxu0 0.0
  %2012 = vmatmul.mubr.f32.gmra.mrb[0].mxu0 %v622
  %v2013 = vpop.f32.mrb[0].mxu0
  %v2014 = vadd.f32 %v429, %v2013
  %v2015 = vpop.f32.mrb[0].mxu0
  %2016 = vmatprep.mubr.f32.mxu0 0.0
  %2017 = vmatmul.mubr.f32.gmra.mrb[0].mxu0 %v625
  %v2018 = vpop.f32.mrb[0].mxu0
  %v2019 = vadd.f32 %v429, %v2018
  %v2020 = vpop.f32.mrb[0].mxu0
  %2021 = vmatprep.mubr.f32.mxu0 0.0
  %2022 = vmatmul.mubr.f32.gmra.mrb[0].mxu0 %v628
  %v2023 = vpop.f32.mrb[0].mxu0
  %v2024 = vadd.f32 %v429, %v2023
  %v2025 = vpop.f32.mrb[0].mxu0
  %2026 = vmatprep.mubr.f32.mxu0 0.0
  %2027 = vmatmul.mubr.f32.gmra.mrb[0].mxu0 %v631
  %v2028 = vpop.f32.mrb[0].mxu0
  %v2029 = vadd.f32 %v429, %v2028
  %v2030 = vpop.f32.mrb[0].mxu0
  %2031 = vmatprep.mubr.f32.mxu0 0.0
  %2032 = vmatmul.mubr.f32.gmra.mrb[0].mxu0 %v634
  %v2033 = vpop.f32.mrb[0].mxu0
  %v2034 = vadd.f32 %v429, %v2033
  %v2035 = vpop.f32.mrb[0].mxu0
  %2036 = vmatprep.mubr.f32.mxu0 0.0
  %2037 = vmatmul.mubr.f32.gmra.mrb[0].mxu0 %v637
  %v2038 = vpop.f32.mrb[0].mxu0
  %v2039 = vadd.f32 %v429, %v2038
  %v2040 = vpop.f32.mrb[0].mxu0
  %2041 = vmatprep.mubr.f32.mxu0 0.0
  %2042 = vmatmul.mubr.f32.gmra.mrb[0].mxu0 %v640
  %v2043 = vpop.f32.mrb[0].mxu0
  %v2044 = vadd.f32 %v429, %v2043
  %v2045 = vpop.f32.mrb[0].mxu0
  %2046 = vmatprep.mubr.f32.mxu0 0.0
  %2047 = vmatmul.mubr.f32.gmra.mrb[0].mxu0 %v643
  %v2048 = vpop.f32.mrb[0].mxu0
  %v2049 = vadd.f32 %v429, %v2048
  %v2050 = vpop.f32.mrb[0].mxu0
  %2051 = vmatprep.mubr.f32.mxu0 0.0
  %2052 = vmatmul.mubr.f32.gmra.mrb[0].mxu0 %v646
  %v2053 = vpop.f32.mrb[0].mxu0
  %v2054 = vadd.f32 %v429, %v2053
  %v2055 = vpop.f32.mrb[0].mxu0
  %2056 = vmatprep.mubr.f32.mxu0 0.0
  %2057 = vmatmul.mubr.f32.gmra.mrb[0].mxu0 %v649
  %v2058 = vpop.f32.mrb[0].mxu0
  %v2059 = vadd.f32 %v429, %v2058
  %v2060 = vpop.f32.mrb[0].mxu0
  %2061 = vmatprep.mubr.f32.mxu0 0.0
  %2062 = vmatmul.mubr.f32.gmra.mrb[0].mxu0 %v652
  %v2063 = vpop.f32.mrb[0].mxu0
  %v2064 = vadd.f32 %v429, %v2063
  %v2065 = vpop.f32.mrb[0].mxu0
  %2066 = vmatprep.mubr.f32.mxu0 0.0
  %2067 = vmatmul.mubr.f32.gmra.mrb[0].mxu0 %v655
  %v2068 = vpop.f32.mrb[0].mxu0
  %v2069 = vadd.f32 %v429, %v2068
  %v2070 = vpop.f32.mrb[0].mxu0
  %2071 = vmatprep.mubr.f32.mxu0 0.0
  %2072 = vmatmul.mubr.f32.gmra.mrb[0].mxu0 %v658
  %v2073 = vpop.f32.mrb[0].mxu0
  %v2074 = vadd.f32 %v429, %v2073
  %v2075 = vpop.f32.mrb[0].mxu0
  %2076 = vmatprep.mubr.f32.mxu0 0.0
  %2077 = vmatmul.mubr.f32.gmra.mrb[0].mxu0 %v661
  %v2078 = vpop.f32.mrb[0].mxu0
  %v2079 = vadd.f32 %v429, %v2078
  %v2080 = vpop.f32.mrb[0].mxu0
  %2081 = vmatprep.mubr.f32.mxu0 0.0
  %2082 = vmatmul.mubr.f32.gmra.mrb[0].mxu0 %v664
  %v2083 = vpop.f32.mrb[0].mxu0
  %v2084 = vadd.f32 %v429, %v2083
  %v2085 = vpop.f32.mrb[0].mxu0
  %2086 = vmatprep.mubr.f32.mxu0 0.0
  %2087 = vmatmul.mubr.f32.gmra.mrb[0].mxu0 %v667
  %v2088 = vpop.f32.mrb[0].mxu0
  %v2089 = vadd.f32 %v429, %v2088
  %v2090 = vpop.f32.mrb[0].mxu0
  %2091 = vmatprep.mubr.f32.mxu0 0.0
  %2092 = vmatmul.mubr.f32.gmra.mrb[0].mxu0 %v670
  %v2093 = vpop.f32.mrb[0].mxu0
  %v2094 = vadd.f32 %v429, %v2093
  %v2095 = vpop.f32.mrb[0].mxu0
  %2096 = vmatprep.mubr.f32.mxu0 0.0
  %2097 = vmatmul.mubr.f32.gmra.mrb[0].mxu0 %v673
  %v2098 = vpop.f32.mrb[0].mxu0
  %v2099 = vadd.f32 %v429, %v2098
  %v2100 = vpop.f32.mrb[0].mxu0
  %2101 = vmatprep.mubr.f32.mxu0 0.0
  %2102 = vmatmul.mubr.f32.gmra.mrb[0].mxu0 %v676
  %v2103 = vpop.f32.mrb[0].mxu0
  %v2104 = vadd.f32 %v429, %v2103
  %v2105 = vpop.f32.mrb[0].mxu0
  %2106 = vmatprep.mubr.f32.mxu0 0.0
  %2107 = vmatmul.mubr.f32.gmra.mrb[0].mxu0 %v679
  %v2108 = vpop.f32.mrb[0].mxu0
  %v2109 = vadd.f32 %v429, %v2108
  %v2110 = vpop.f32.mrb[0].mxu0
  %2111 = vmatprep.mubr.f32.mxu0 0.0
  %2112 = vmatmul.mubr.f32.gmra.mrb[0].mxu0 %v682
  %v2113 = vpop.f32.mrb[0].mxu0
  %v2114 = vadd.f32 %v429, %v2113
  %v2115 = vpop.f32.mrb[0].mxu0
  %2116 = vmatprep.mubr.f32.mxu0 0.0
  %2117 = vmatmul.mubr.f32.gmra.mrb[0].mxu0 %v685
  %v2118 = vpop.f32.mrb[0].mxu0
  %v2119 = vadd.f32 %v429, %v2118
  %v2120 = vpop.f32.mrb[0].mxu0
  %2121 = vmatprep.mubr.f32.mxu0 0.0
  %2122 = vmatmul.mubr.f32.gmra.mrb[0].mxu0 %v688
  %v2123 = vpop.f32.mrb[0].mxu0
  %v2124 = vadd.f32 %v429, %v2123
  %v2125 = vpop.f32.mrb[0].mxu0
  %2126 = vmatprep.mubr.f32.mxu0 0.0
  %2127 = vmatmul.mubr.f32.gmra.mrb[0].mxu0 %v691
  %v2128 = vpop.f32.mrb[0].mxu0
  %v2129 = vadd.f32 %v429, %v2128
  %v2130 = vpop.f32.mrb[0].mxu0
  %2131 = vmatprep.mubr.f32.mxu0 0.0
  %2132 = vmatmul.mubr.f32.gmra.mrb[0].mxu0 %v694
  %v2133 = vpop.f32.mrb[0].mxu0
  %v2134 = vadd.f32 %v429, %v2133
  %v2135 = vpop.f32.mrb[0].mxu0
  %2136 = vmatprep.mubr.f32.mxu0 0.0
  %2137 = vmatmul.mubr.f32.gmra.mrb[0].mxu0 %v697
  %v2138 = vpop.f32.mrb[0].mxu0
  %v2139 = vadd.f32 %v429, %v2138
  %v2140 = vpop.f32.mrb[0].mxu0
  %2141 = vmatprep.mubr.f32.mxu0 0.0
  %2142 = vmatmul.mubr.f32.gmra.mrb[0].mxu0 %v700
  %v2143 = vpop.f32.mrb[0].mxu0
  %v2144 = vadd.f32 %v429, %v2143
  %v2145 = vpop.f32.mrb[0].mxu0
  %2146 = vmatprep.mubr.f32.mxu0 0.0
  %2147 = vmatmul.mubr.f32.gmra.mrb[0].mxu0 %v703
  %v2148 = vpop.f32.mrb[0].mxu0
  %v2149 = vadd.f32 %v429, %v2148
  %v2150 = vpop.f32.mrb[0].mxu0
  %2151 = vmatprep.mubr.f32.mxu0 0.0
  %2152 = vmatmul.mubr.f32.gmra.mrb[0].mxu0 %v706
  %v2153 = vpop.f32.mrb[0].mxu0
  %v2154 = vadd.f32 %v429, %v2153
  %v2155 = vpop.f32.mrb[0].mxu0
  %2156 = vmatprep.mubr.f32.mxu0 0.0
  %2157 = vmatmul.mubr.f32.gmra.mrb[0].mxu0 %v709
  %v2158 = vpop.f32.mrb[0].mxu0
  %v2159 = vadd.f32 %v429, %v2158
  %v2160 = vpop.f32.mrb[0].mxu0
  %2161 = vmatprep.mubr.f32.mxu0 0.0
  %2162 = vmatmul.mubr.f32.gmra.mrb[0].mxu0 %v712
  %v2163 = vpop.f32.mrb[0].mxu0
  %v2164 = vadd.f32 %v429, %v2163
  %v2165 = vpop.f32.mrb[0].mxu0
  %2166 = vmatprep.mubr.f32.mxu0 0.0
  %2167 = vmatmul.mubr.f32.gmra.mrb[0].mxu0 %v715
  %v2168 = vpop.f32.mrb[0].mxu0
  %v2169 = vadd.f32 %v429, %v2168
  %v2170 = vpop.f32.mrb[0].mxu0
  %2171 = vmatprep.mubr.f32.mxu0 0.0
  %2172 = vmatmul.mubr.f32.gmra.mrb[0].mxu0 %v718
  %v2173 = vpop.f32.mrb[0].mxu0
  %v2174 = vadd.f32 %v429, %v2173
  %v2175 = vpop.f32.mrb[0].mxu0
  %2176 = vmatprep.mubr.f32.mxu0 0.0
  %2177 = vmatmul.mubr.f32.gmra.mrb[0].mxu0 %v721
  %v2178 = vpop.f32.mrb[0].mxu0
  %v2179 = vadd.f32 %v429, %v2178
  %v2180 = vpop.f32.mrb[0].mxu0
  %2181 = vmatprep.mubr.f32.mxu0 0.0
  %2182 = vmatmul.mubr.f32.gmra.mrb[0].mxu0 %v724
  %v2183 = vpop.f32.mrb[0].mxu0
  %v2184 = vadd.f32 %v429, %v2183
  %v2185 = vpop.f32.mrb[0].mxu0
  %2186 = vmatprep.mubr.f32.mxu0 0.0
  %2187 = vmatmul.mubr.f32.gmra.mrb[0].mxu0 %v727
  %v2188 = vpop.f32.mrb[0].mxu0
  %v2189 = vadd.f32 %v429, %v2188
  %v2190 = vpop.f32.mrb[0].mxu0
  %2191 = vmatprep.mubr.f32.mxu0 0.0
  %2192 = vmatmul.mubr.f32.gmra.mrb[0].mxu0 %v730
  %v2193 = vpop.f32.mrb[0].mxu0
  %v2194 = vadd.f32 %v429, %v2193
  %v2195 = vpop.f32.mrb[0].mxu0
  %2196 = vmatprep.mubr.f32.mxu0 0.0
  %2197 = vmatmul.mubr.f32.gmra.mrb[0].mxu0 %v733
  %v2198 = vpop.f32.mrb[0].mxu0
  %v2199 = vadd.f32 %v429, %v2198
  %v2200 = vpop.f32.mrb[0].mxu0
  %2201 = vmatprep.mubr.f32.mxu0 0.0
  %2202 = vmatmul.mubr.f32.gmra.mrb[0].mxu0 %v736
  %v2203 = vpop.f32.mrb[0].mxu0
  %v2204 = vadd.f32 %v429, %v2203
  %v2205 = vpop.f32.mrb[0].mxu0
  %2206 = vmatprep.mubr.f32.mxu0 0.0
  %2207 = vmatmul.mubr.f32.gmra.mrb[0].mxu0 %v739
  %v2208 = vpop.f32.mrb[0].mxu0
  %v2209 = vadd.f32 %v429, %v2208
  %v2210 = vpop.f32.mrb[0].mxu0
  %2211 = vmatprep.mubr.f32.mxu0 0.0
  %2212 = vmatmul.mubr.f32.gmra.mrb[0].mxu0 %v742
  %v2213 = vpop.f32.mrb[0].mxu0
  %v2214 = vadd.f32 %v429, %v2213
  %v2215 = vpop.f32.mrb[0].mxu0
  %2216 = vmatprep.mubr.f32.mxu0 0.0
  %2217 = vmatmul.mubr.f32.gmra.mrb[0].mxu0 %v745
  %v2218 = vpop.f32.mrb[0].mxu0
  %v2219 = vadd.f32 %v429, %v2218
  %v2220 = vpop.f32.mrb[0].mxu0
  %2221 = vmatprep.mubr.f32.mxu0 0.0
  %2222 = vmatmul.mubr.f32.gmra.mrb[0].mxu0 %v748
  %v2223 = vpop.f32.mrb[0].mxu0
  %v2224 = vadd.f32 %v429, %v2223
  %v2225 = vpop.f32.mrb[0].mxu0
  %2226 = vmatprep.mubr.f32.mxu0 0.0
  %2227 = vmatmul.mubr.f32.gmra.mrb[0].mxu0 %v751
  %v2228 = vpop.f32.mrb[0].mxu0
  %v2229 = vadd.f32 %v429, %v2228
  %v2230 = vpop.f32.mrb[0].mxu0
  %2231 = vmatprep.mubr.f32.mxu0 0.0
  %2232 = vmatmul.mubr.f32.gmra.mrb[0].mxu0 %v754
  %v2233 = vpop.f32.mrb[0].mxu0
  %v2234 = vadd.f32 %v429, %v2233
  %v2235 = vpop.f32.mrb[0].mxu0
  %2236 = vmatprep.mubr.f32.mxu0 0.0
  %2237 = vmatmul.mubr.f32.gmra.mrb[0].mxu0 %v757
  %v2238 = vpop.f32.mrb[0].mxu0
  %v2239 = vadd.f32 %v429, %v2238
  %v2240 = vpop.f32.mrb[0].mxu0
  %2241 = vmatprep.mubr.f32.mxu0 0.0
  %2242 = vmatmul.mubr.f32.gmra.mrb[0].mxu0 %v760
  %v2243 = vpop.f32.mrb[0].mxu0
  %v2244 = vadd.f32 %v429, %v2243
  %v2245 = vpop.f32.mrb[0].mxu0
  %2246 = vmatprep.mubr.f32.mxu0 0.0
  %2247 = vmatmul.mubr.f32.gmra.mrb[0].mxu0 %v763
  %v2248 = vpop.f32.mrb[0].mxu0
  %v2249 = vadd.f32 %v429, %v2248
  %v2250 = vpop.f32.mrb[0].mxu0
  %2251 = vmatprep.mubr.f32.mxu0 0.0
  %2252 = vmatmul.mubr.f32.gmra.mrb[0].mxu0 %v766
  %v2253 = vpop.f32.mrb[0].mxu0
  %v2254 = vadd.f32 %v429, %v2253
  %v2255 = vpop.f32.mrb[0].mxu0
  %2256 = vmatprep.mubr.f32.mxu0 0.0
  %2257 = vmatmul.mubr.f32.gmra.mrb[0].mxu0 %v769
  %v2258 = vpop.f32.mrb[0].mxu0
  %v2259 = vadd.f32 %v429, %v2258
  %v2260 = vpop.f32.mrb[0].mxu0
  %2261 = vmatprep.mubr.f32.mxu0 0.0
  %2262 = vmatmul.mubr.f32.gmra.mrb[0].mxu0 %v772
  %v2263 = vpop.f32.mrb[0].mxu0
  %v2264 = vadd.f32 %v429, %v2263
  %v2265 = vpop.f32.mrb[0].mxu0
  %2266 = vmatprep.mubr.f32.mxu0 0.0
  %2267 = vmatmul.mubr.f32.gmra.mrb[0].mxu0 %v775
  %v2268 = vpop.f32.mrb[0].mxu0
  %v2269 = vadd.f32 %v429, %v2268
  %v2270 = vpop.f32.mrb[0].mxu0
  %2271 = vmatprep.mubr.f32.mxu0 0.0
  %2272 = vmatmul.mubr.f32.gmra.mrb[0].mxu0 %v778
  %v2273 = vpop.f32.mrb[0].mxu0
  %v2274 = vadd.f32 %v429, %v2273
  %v2275 = vpop.f32.mrb[0].mxu0
  %2276 = vmatprep.mubr.f32.mxu0 0.0
  %2277 = vmatmul.mubr.f32.gmra.mrb[0].mxu0 %v781
  %v2278 = vpop.f32.mrb[0].mxu0
  %v2279 = vadd.f32 %v429, %v2278
  %v2280 = vpop.f32.mrb[0].mxu0
  %2281 = vmatprep.mubr.f32.mxu0 0.0
  %2282 = vmatmul.mubr.f32.gmra.mrb[0].mxu0 %v784
  %v2283 = vpop.f32.mrb[0].mxu0
  %v2284 = vadd.f32 %v429, %v2283
  %v2285 = vpop.f32.mrb[0].mxu0
  %2286 = vmatprep.mubr.f32.mxu0 0.0
  %2287 = vmatmul.mubr.f32.gmra.mrb[0].mxu0 %v787
  %v2288 = vpop.f32.mrb[0].mxu0
  %v2289 = vadd.f32 %v429, %v2288
  %v2290 = vpop.f32.mrb[0].mxu0
  %2291 = vmatprep.mubr.f32.mxu0 0.0
  %2292 = vmatmul.mubr.f32.gmra.mrb[0].mxu0 %v790
  %v2293 = vpop.f32.mrb[0].mxu0
  %v2294 = vadd.f32 %v429, %v2293
  %v2295 = vpop.f32.mrb[0].mxu0
  %2296 = vmatprep.mubr.f32.mxu0 0.0
  %2297 = vmatmul.mubr.f32.gmra.mrb[0].mxu0 %v793
  %v2298 = vpop.f32.mrb[0].mxu0
  %v2299 = vadd.f32 %v429, %v2298
  %v2300 = vpop.f32.mrb[0].mxu0
  %2301 = vmatprep.mubr.f32.mxu0 0.0
  %2302 = vmatmul.mubr.f32.gmra.mrb[0].mxu0 %v796
  %v2303 = vpop.f32.mrb[0].mxu0
  %v2304 = vadd.f32 %v429, %v2303
  %v2305 = vpop.f32.mrb[0].mxu0
  %2306 = vmatprep.mubr.f32.mxu0 0.0
  %2307 = vmatmul.mubr.f32.gmra.mrb[0].mxu0 %v799
  %v2308 = vpop.f32.mrb[0].mxu0
  %v2309 = vadd.f32 %v429, %v2308
  %v2310 = vpop.f32.mrb[0].mxu0
  %2311 = vmatprep.mubr.f32.mxu0 0.0
  %2312 = vmatmul.mubr.f32.gmra.mrb[0].mxu0 %v802
  %v2313 = vpop.f32.mrb[0].mxu0
  %v2314 = vadd.f32 %v429, %v2313
  %v2315 = vpop.f32.mrb[0].mxu0
  %2316 = vmatprep.mubr.f32.mxu0 0.0
  %2317 = vmatmul.mubr.f32.gmra.mrb[0].mxu0 %v805
  %v2318 = vpop.f32.mrb[0].mxu0
  %v2319 = vadd.f32 %v429, %v2318
  %v2320 = vpop.f32.mrb[0].mxu0
  %2321 = vmatprep.mubr.f32.mxu0 0.0
  %2322 = vmatmul.mubr.f32.gmra.mrb[0].mxu0 %v808
  %v2323 = vpop.f32.mrb[0].mxu0
  %v2324 = vadd.f32 %v429, %v2323
  %v2325 = vpop.f32.mrb[0].mxu0
  %2326 = vmatprep.mubr.f32.mxu0 0.0
  %2327 = vmatmul.mubr.f32.gmra.mrb[0].mxu0 %v811
  %v2328 = vpop.f32.mrb[0].mxu0
  %v2329 = vadd.f32 %v429, %v2328
  %v2330 = vpop.f32.mrb[0].mxu0
  %2331 = vmatprep.mubr.f32.mxu0 0.0
  %2332 = vmatmul.mubr.f32.gmra.mrb[0].mxu0 %v814
  %v2333 = vpop.f32.mrb[0].mxu0
  %v2334 = vadd.f32 %v429, %v2333
  %v2335 = vpop.f32.mrb[0].mxu0
  %2336 = vmatprep.mubr.f32.mxu0 0.0
  %2337 = vmatmul.mubr.f32.gmra.mrb[0].mxu0 %v817
  %v2338 = vpop.f32.mrb[0].mxu0
  %v2339 = vadd.f32 %v429, %v2338
  %v2340 = vpop.f32.mrb[0].mxu0
  %2341 = vmatprep.mubr.f32.mxu0 0.0
  %2342 = vmatmul.mubr.f32.gmra.mrb[0].mxu0 %v820
  %v2343 = vpop.f32.mrb[0].mxu0
  %v2344 = vadd.f32 %v429, %v2343
  %v2345 = vpop.f32.mrb[0].mxu0
  %2346 = vmatprep.mubr.f32.mxu0 0.0
  %2347 = vmatmul.mubr.f32.gmra.mrb[0].mxu0 %v823
  %v2348 = vpop.f32.mrb[0].mxu0
  %v2349 = vadd.f32 %v429, %v2348
  %v2350 = vpop.f32.mrb[0].mxu0
  %2351 = vmatprep.mubr.f32.mxu0 0.0
  %2352 = vmatmul.mubr.f32.gmra.mrb[0].mxu0 %v826
  %v2353 = vpop.f32.mrb[0].mxu0
  %v2354 = vadd.f32 %v429, %v2353
  %v2355 = vpop.f32.mrb[0].mxu0
  %2356 = vmatprep.mubr.f32.mxu0 0.0
  %2357 = vmatmul.mubr.f32.gmra.mrb[0].mxu0 %v829
  %v2358 = vpop.f32.mrb[0].mxu0
  %v2359 = vadd.f32 %v429, %v2358
  %v2360 = vpop.f32.mrb[0].mxu0
  %2361 = vmatprep.mubr.f32.mxu0 0.0
  %2362 = vmatmul.mubr.f32.gmra.mrb[0].mxu0 %v832
  %v2363 = vpop.f32.mrb[0].mxu0
  %v2364 = vadd.f32 %v429, %v2363
  %v2365 = vpop.f32.mrb[0].mxu0
  %2366 = vmatprep.mubr.f32.mxu0 0.0
  %2367 = vmatmul.mubr.f32.gmra.mrb[0].mxu0 %v835
  %v2368 = vpop.f32.mrb[0].mxu0
  %v2369 = vadd.f32 %v429, %v2368
  %v2370 = vpop.f32.mrb[0].mxu0
  %2371 = vmatprep.mubr.f32.mxu0 0.0
  %2372 = vmatmul.mubr.f32.gmra.mrb[0].mxu0 %v838
  %v2373 = vpop.f32.mrb[0].mxu0
  %v2374 = vadd.f32 %v429, %v2373
  %v2375 = vpop.f32.mrb[0].mxu0
  %2376 = vmatprep.mubr.f32.mxu0 0.0
  %2377 = vmatmul.mubr.f32.gmra.mrb[0].mxu0 %v841
  %v2378 = vpop.f32.mrb[0].mxu0
  %v2379 = vadd.f32 %v429, %v2378
  %v2380 = vpop.f32.mrb[0].mxu0
  %2381 = vmatprep.mubr.f32.mxu0 0.0
  %2382 = vmatmul.mubr.f32.gmra.mrb[0].mxu0 %v844
  %v2383 = vpop.f32.mrb[0].mxu0
  %v2384 = vadd.f32 %v429, %v2383
  %v2385 = vpop.f32.mrb[0].mxu0
  %2386 = vmatprep.mubr.f32.mxu0 0.0
  %2387 = vmatmul.mubr.f32.gmra.mrb[0].mxu0 %v847
  %v2388 = vpop.f32.mrb[0].mxu0
  %v2389 = vadd.f32 %v429, %v2388
  %v2390 = vpop.f32.mrb[0].mxu0
  %2391 = vmatprep.mubr.f32.mxu0 0.0
  %2392 = vmatmul.mubr.f32.gmra.mrb[0].mxu0 %v850
  %v2393 = vpop.f32.mrb[0].mxu0
  %v2394 = vadd.f32 %v429, %v2393
  %v2395 = vpop.f32.mrb[0].mxu0
  %2396 = vmatprep.mubr.f32.mxu0 0.0
  %2397 = vmatmul.mubr.f32.gmra.mrb[0].mxu0 %v853
  %v2398 = vpop.f32.mrb[0].mxu0
  %v2399 = vadd.f32 %v429, %v2398
  %v2400 = vpop.f32.mrb[0].mxu0
  %2401 = vmatprep.mubr.f32.mxu0 0.0
  %2402 = vmatmul.mubr.f32.gmra.mrb[0].mxu0 %v856
  %v2403 = vpop.f32.mrb[0].mxu0
  %v2404 = vadd.f32 %v429, %v2403
  %v2405 = vpop.f32.mrb[0].mxu0
  %2406 = vmatprep.mubr.f32.mxu0 0.0
  %2407 = vmatmul.mubr.f32.gmra.mrb[0].mxu0 %v859
  %v2408 = vpop.f32.mrb[0].mxu0
  %v2409 = vadd.f32 %v429, %v2408
  %v2410 = vpop.f32.mrb[0].mxu0
  %2411 = vmatprep.mubr.f32.mxu0 0.0
  %2412 = vmatmul.mubr.f32.gmra.mrb[0].mxu0 %v862
  %v2413 = vpop.f32.mrb[0].mxu0
  %v2414 = vadd.f32 %v429, %v2413
  %v2415 = vpop.f32.mrb[0].mxu0
  %2416 = vmatprep.mubr.f32.mxu0 0.0
  %2417 = vmatmul.mubr.f32.gmra.mrb[0].mxu0 %v865
  %v2418 = vpop.f32.mrb[0].mxu0
  %v2419 = vadd.f32 %v429, %v2418
  %v2420 = vpop.f32.mrb[0].mxu0
  %2421 = vmatprep.mubr.f32.mxu0 0.0
  %2422 = vmatmul.mubr.f32.gmra.mrb[0].mxu0 %v868
  %v2423 = vpop.f32.mrb[0].mxu0
  %v2424 = vadd.f32 %v429, %v2423
  %v2425 = vpop.f32.mrb[0].mxu0
  %2426 = vmatprep.mubr.f32.mxu0 0.0
  %2427 = vmatmul.mubr.f32.gmra.mrb[0].mxu0 %v871
  %v2428 = vpop.f32.mrb[0].mxu0
  %v2429 = vadd.f32 %v429, %v2428
  %v2430 = vpop.f32.mrb[0].mxu0
  %2431 = vmatprep.mubr.f32.mxu0 0.0
  %2432 = vmatmul.mubr.f32.gmra.mrb[0].mxu0 %v874
  %v2433 = vpop.f32.mrb[0].mxu0
  %v2434 = vadd.f32 %v429, %v2433
  %v2435 = vpop.f32.mrb[0].mxu0
  %2436 = vmatprep.mubr.f32.mxu0 0.0
  %2437 = vmatmul.mubr.f32.gmra.mrb[0].mxu0 %v877
  %v2438 = vpop.f32.mrb[0].mxu0
  %v2439 = vadd.f32 %v429, %v2438
  %v2440 = vpop.f32.mrb[0].mxu0
  %2441 = vmatprep.mubr.f32.mxu0 0.0
  %2442 = vmatmul.mubr.f32.gmra.mrb[0].mxu0 %v880
  %v2443 = vpop.f32.mrb[0].mxu0
  %v2444 = vadd.f32 %v429, %v2443
  %v2445 = vpop.f32.mrb[0].mxu0
  %2446 = vmatprep.mubr.f32.mxu0 0.0
  %2447 = vmatmul.mubr.f32.gmra.mrb[0].mxu0 %v883
  %v2448 = vpop.f32.mrb[0].mxu0
  %v2449 = vadd.f32 %v429, %v2448
  %v2450 = vpop.f32.mrb[0].mxu0
  %2451 = vmatprep.mubr.f32.mxu0 0.0
  %2452 = vmatmul.mubr.f32.gmra.mrb[0].mxu0 %v886
  %v2453 = vpop.f32.mrb[0].mxu0
  %v2454 = vadd.f32 %v429, %v2453
  %v2455 = vpop.f32.mrb[0].mxu0
  %2456 = vmatprep.mubr.f32.mxu0 0.0
  %2457 = vmatmul.mubr.f32.gmra.mrb[0].mxu0 %v889
  %v2458 = vpop.f32.mrb[0].mxu0
  %v2459 = vadd.f32 %v429, %v2458
  %v2460 = vpop.f32.mrb[0].mxu0
  %2461 = vmatprep.mubr.f32.mxu0 0.0
  %2462 = vmatmul.mubr.f32.gmra.mrb[0].mxu0 %v892
  %v2463 = vpop.f32.mrb[0].mxu0
  %v2464 = vadd.f32 %v429, %v2463
  %v2465 = vpop.f32.mrb[0].mxu0
  %2466 = vmatprep.mubr.f32.mxu0 0.0
  %2467 = vmatmul.mubr.f32.gmra.mrb[0].mxu0 %v895
  %v2468 = vpop.f32.mrb[0].mxu0
  %v2469 = vadd.f32 %v429, %v2468
  %v2470 = vpop.f32.mrb[0].mxu0
  %2471 = vmatprep.mubr.f32.mxu0 0.0
  %2472 = vmatmul.mubr.f32.gmra.mrb[0].mxu0 %v898
  %v2473 = vpop.f32.mrb[0].mxu0
  %v2474 = vadd.f32 %v429, %v2473
  %v2475 = vpop.f32.mrb[0].mxu0
  %2476 = vmatprep.mubr.f32.mxu0 0.0
  %2477 = vmatmul.mubr.f32.gmra.mrb[0].mxu0 %v901
  %v2478 = vpop.f32.mrb[0].mxu0
  %v2479 = vadd.f32 %v429, %v2478
  %v2480 = vpop.f32.mrb[0].mxu0
  %2481 = vmatprep.mubr.f32.mxu0 0.0
  %2482 = vmatmul.mubr.f32.gmra.mrb[0].mxu0 %v904
  %v2483 = vpop.f32.mrb[0].mxu0
  %v2484 = vadd.f32 %v429, %v2483
  %v2485 = vpop.f32.mrb[0].mxu0
  %2486 = vmatprep.mubr.f32.mxu0 0.0
  %2487 = vmatmul.mubr.f32.gmra.mrb[0].mxu0 %v907
  %v2488 = vpop.f32.mrb[0].mxu0
  %v2489 = vadd.f32 %v429, %v2488
  %v2490 = vpop.f32.mrb[0].mxu0
  %2491 = vmatprep.mubr.f32.mxu0 0.0
  %2492 = vmatmul.mubr.f32.gmra.mrb[0].mxu0 %v910
  %v2493 = vpop.f32.mrb[0].mxu0
  %v2494 = vadd.f32 %v429, %v2493
  %v2495 = vpop.f32.mrb[0].mxu0
  %2496 = vmatprep.mubr.f32.mxu0 0.0
  %2497 = vmatmul.mubr.f32.gmra.mrb[0].mxu0 %v913
  %v2498 = vpop.f32.mrb[0].mxu0
  %v2499 = vadd.f32 %v429, %v2498
  %v2500 = vpop.f32.mrb[0].mxu0
  %2501 = vmatprep.mubr.f32.mxu0 0.0
  %2502 = vmatmul.mubr.f32.gmra.mrb[0].mxu0 %v916
  %v2503 = vpop.f32.mrb[0].mxu0
  %v2504 = vadd.f32 %v429, %v2503
  %v2505 = vpop.f32.mrb[0].mxu0
  %2506 = vmatprep.mubr.f32.mxu0 0.0
  %2507 = vmatmul.mubr.f32.gmra.mrb[0].mxu0 %v919
  %v2508 = vpop.f32.mrb[0].mxu0
  %v2509 = vadd.f32 %v429, %v2508
  %v2510 = vpop.f32.mrb[0].mxu0
  %2511 = vmatprep.mubr.f32.mxu0 0.0
  %2512 = vmatmul.mubr.f32.gmra.mrb[0].mxu0 %v922
  %v2513 = vpop.f32.mrb[0].mxu0
  %v2514 = vadd.f32 %v429, %v2513
  %v2515 = vpop.f32.mrb[0].mxu0
  %2516 = vmatprep.mubr.f32.mxu0 0.0
  %2517 = vmatmul.mubr.f32.gmra.mrb[0].mxu0 %v925
  %v2518 = vpop.f32.mrb[0].mxu0
  %v2519 = vadd.f32 %v429, %v2518
  %v2520 = vpop.f32.mrb[0].mxu0
  %2521 = vmatprep.mubr.f32.mxu0 0.0
  %2522 = vmatmul.mubr.f32.gmra.mrb[0].mxu0 %v928
  %v2523 = vpop.f32.mrb[0].mxu0
  %v2524 = vadd.f32 %v429, %v2523
  %v2525 = vpop.f32.mrb[0].mxu0
  %2526 = vmatprep.mubr.f32.mxu0 0.0
  %2527 = vmatmul.mubr.f32.gmra.mrb[0].mxu0 %v931
  %v2528 = vpop.f32.mrb[0].mxu0
  %v2529 = vadd.f32 %v429, %v2528
  %v2530 = vpop.f32.mrb[0].mxu0
  %2531 = vmatprep.mubr.f32.mxu0 0.0
  %2532 = vmatmul.mubr.f32.gmra.mrb[0].mxu0 %v934
  %v2533 = vpop.f32.mrb[0].mxu0
  %v2534 = vadd.f32 %v429, %v2533
  %v2535 = vpop.f32.mrb[0].mxu0
  %2536 = vmatprep.mubr.f32.mxu0 0.0
  %2537 = vmatmul.mubr.f32.gmra.mrb[0].mxu0 %v937
  %v2538 = vpop.f32.mrb[0].mxu0
  %v2539 = vadd.f32 %v429, %v2538
  %v2540 = vpop.f32.mrb[0].mxu0
  %2541 = vmatprep.mubr.f32.mxu0 0.0
  %2542 = vmatmul.mubr.f32.gmra.mrb[0].mxu0 %v940
  %v2543 = vpop.f32.mrb[0].mxu0
  %v2544 = vadd.f32 %v429, %v2543
  %v2545 = vpop.f32.mrb[0].mxu0
  %2546 = vmatprep.mubr.f32.mxu0 0.0
  %2547 = vmatmul.mubr.f32.gmra.mrb[0].mxu0 %v943
  %v2548 = vpop.f32.mrb[0].mxu0
  %v2549 = vadd.f32 %v429, %v2548
  %v2550 = vpop.f32.mrb[0].mxu0
  %2551 = vmatprep.mubr.f32.mxu0 0.0
  %2552 = vmatmul.mubr.f32.gmra.mrb[0].mxu0 %v946
  %v2553 = vpop.f32.mrb[0].mxu0
  %v2554 = vadd.f32 %v429, %v2553
  %v2555 = vpop.f32.mrb[0].mxu0
  %2556 = vmatprep.mubr.f32.mxu0 0.0
  %2557 = vmatmul.mubr.f32.gmra.mrb[0].mxu0 %v949
  %v2558 = vpop.f32.mrb[0].mxu0
  %v2559 = vadd.f32 %v429, %v2558
  %v2560 = vpop.f32.mrb[0].mxu0
  %2561 = vmatprep.mubr.f32.mxu0 0.0
  %2562 = vmatmul.mubr.f32.gmra.mrb[0].mxu0 %v952
  %v2563 = vpop.f32.mrb[0].mxu0
  %v2564 = vadd.f32 %v429, %v2563
  %v2565 = vpop.f32.mrb[0].mxu0
  %2566 = vmatprep.mubr.f32.mxu0 0.0
  %2567 = vmatmul.mubr.f32.gmra.mrb[0].mxu0 %v955
  %v2568 = vpop.f32.mrb[0].mxu0
  %v2569 = vadd.f32 %v429, %v2568
  %v2570 = vpop.f32.mrb[0].mxu0
  %2571 = vmatprep.mubr.f32.mxu0 0.0
  %2572 = vmatmul.mubr.f32.gmra.mrb[0].mxu0 %v958
  %v2573 = vpop.f32.mrb[0].mxu0
  %v2574 = vadd.f32 %v429, %v2573
  %v2575 = vpop.f32.mrb[0].mxu0
  %2576 = vmatprep.mubr.f32.mxu0 0.0
  %2577 = vmatmul.mubr.f32.gmra.mrb[0].mxu0 %v961
  %v2578 = vpop.f32.mrb[0].mxu0
  %v2579 = vadd.f32 %v429, %v2578
  %v2580 = vpop.f32.mrb[0].mxu0
  %2581 = vmatprep.mubr.f32.mxu0 0.0
  %2582 = vmatmul.mubr.f32.gmra.mrb[0].mxu0 %v964
  %v2583 = vpop.f32.mrb[0].mxu0
  %v2584 = vadd.f32 %v429, %v2583
  %v2585 = vpop.f32.mrb[0].mxu0
  %2586 = vmatprep.mubr.f32.mxu0 0.0
  %2587 = vmatmul.mubr.f32.gmra.mrb[0].mxu0 %v967
  %v2588 = vpop.f32.mrb[0].mxu0
  %v2589 = vadd.f32 %v429, %v2588
  %v2590 = vpop.f32.mrb[0].mxu0
  %2591 = vmatprep.mubr.f32.mxu0 0.0
  %2592 = vmatmul.mubr.f32.gmra.mrb[0].mxu0 %v970
  %v2593 = vpop.f32.mrb[0].mxu0
  %v2594 = vadd.f32 %v429, %v2593
  %v2595 = vpop.f32.mrb[0].mxu0
  %2596 = vmatprep.mubr.f32.mxu0 0.0
  %2597 = vmatmul.mubr.f32.gmra.mrb[0].mxu0 %v973
  %v2598 = vpop.f32.mrb[0].mxu0
  %v2599 = vadd.f32 %v429, %v2598
  %v2600 = vpop.f32.mrb[0].mxu0
  %2601 = vmatprep.mubr.f32.mxu0 0.0
  %2602 = vmatmul.mubr.f32.gmra.mrb[0].mxu0 %v976
  %v2603 = vpop.f32.mrb[0].mxu0
  %v2604 = vadd.f32 %v429, %v2603
  %v2605 = vpop.f32.mrb[0].mxu0
  %2606 = vmatprep.mubr.f32.mxu0 0.0
  %2607 = vmatmul.mubr.f32.gmra.mrb[0].mxu0 %v979
  %v2608 = vpop.f32.mrb[0].mxu0
  %v2609 = vadd.f32 %v429, %v2608
  %v2610 = vpop.f32.mrb[0].mxu0
  %2611 = vmatprep.mubr.f32.mxu0 0.0
  %2612 = vmatmul.mubr.f32.gmra.mrb[0].mxu0 %v982
  %v2613 = vpop.f32.mrb[0].mxu0
  %v2614 = vadd.f32 %v429, %v2613
  %v2615 = vpop.f32.mrb[0].mxu0
  %2616 = vmatprep.mubr.f32.mxu0 0.0
  %2617 = vmatmul.mubr.f32.gmra.mrb[0].mxu0 %v985
  %v2618 = vpop.f32.mrb[0].mxu0
  %v2619 = vadd.f32 %v429, %v2618
  %v2620 = vpop.f32.mrb[0].mxu0
  %2621 = vmatprep.mubr.f32.mxu0 0.0
  %2622 = vmatmul.mubr.f32.gmra.mrb[0].mxu0 %v988
  %v2623 = vpop.f32.mrb[0].mxu0
  %v2624 = vadd.f32 %v429, %v2623
  %v2625 = vpop.f32.mrb[0].mxu0
  %2626 = vmatprep.mubr.f32.mxu0 0.0
  %2627 = vmatmul.mubr.f32.gmra.mrb[0].mxu0 %v991
  %v2628 = vpop.f32.mrb[0].mxu0
  %v2629 = vadd.f32 %v429, %v2628
  %v2630 = vpop.f32.mrb[0].mxu0
  %2631 = vmatprep.mubr.f32.mxu0 0.0
  %2632 = vmatmul.mubr.f32.gmra.mrb[0].mxu0 %v994
  %v2633 = vpop.f32.mrb[0].mxu0
  %v2634 = vadd.f32 %v429, %v2633
  %v2635 = vpop.f32.mrb[0].mxu0
  %2636 = vmatprep.mubr.f32.mxu0 0.0
  %2637 = vmatmul.mubr.f32.gmra.mrb[0].mxu0 %v997
  %v2638 = vpop.f32.mrb[0].mxu0
  %v2639 = vadd.f32 %v429, %v2638
  %v2640 = vpop.f32.mrb[0].mxu0
  %2641 = vmatprep.mubr.f32.mxu0 0.0
  %2642 = vmatmul.mubr.f32.gmra.mrb[0].mxu0 %v1000
  %v2643 = vpop.f32.mrb[0].mxu0
  %v2644 = vadd.f32 %v429, %v2643
  %v2645 = vpop.f32.mrb[0].mxu0
  %2646 = vmatprep.mubr.f32.mxu0 0.0
  %2647 = vmatmul.mubr.f32.gmra.mrb[0].mxu0 %v1003
  %v2648 = vpop.f32.mrb[0].mxu0
  %v2649 = vadd.f32 %v429, %v2648
  %v2650 = vpop.f32.mrb[0].mxu0
  %2651 = vmatprep.mubr.f32.mxu0 0.0
  %2652 = vmatmul.mubr.f32.gmra.mrb[0].mxu0 %v1006
  %v2653 = vpop.f32.mrb[0].mxu0
  %v2654 = vadd.f32 %v429, %v2653
  %v2655 = vpop.f32.mrb[0].mxu0
  %2656 = vmatprep.mubr.f32.mxu0 0.0
  %2657 = vmatmul.mubr.f32.gmra.mrb[0].mxu0 %v1009
  %v2658 = vpop.f32.mrb[0].mxu0
  %v2659 = vadd.f32 %v429, %v2658
  %v2660 = vpop.f32.mrb[0].mxu0
  %2661 = vmatprep.mubr.f32.mxu0 0.0
  %2662 = vmatmul.mubr.f32.gmra.mrb[0].mxu0 %v1012
  %v2663 = vpop.f32.mrb[0].mxu0
  %v2664 = vadd.f32 %v429, %v2663
  %v2665 = vpop.f32.mrb[0].mxu0
  %2666 = vmatprep.mubr.f32.mxu0 0.0
  %2667 = vmatmul.mubr.f32.gmra.mrb[0].mxu0 %v1015
  %v2668 = vpop.f32.mrb[0].mxu0
  %v2669 = vadd.f32 %v429, %v2668
  %v2670 = vpop.f32.mrb[0].mxu0
  %2671 = vmatprep.mubr.f32.mxu0 0.0
  %2672 = vmatmul.mubr.f32.gmra.mrb[0].mxu0 %v1018
  %v2673 = vpop.f32.mrb[0].mxu0
  %v2674 = vadd.f32 %v429, %v2673
  %v2675 = vpop.f32.mrb[0].mxu0
  %2676 = vmatprep.mubr.f32.mxu0 0.0
  %2677 = vmatmul.mubr.f32.gmra.mrb[0].mxu0 %v1021
  %v2678 = vpop.f32.mrb[0].mxu0
  %v2679 = vadd.f32 %v429, %v2678
  %v2680 = vpop.f32.mrb[0].mxu0
  %2681 = vmatprep.mubr.f32.mxu0 0.0
  %2682 = vmatmul.mubr.f32.gmra.mrb[0].mxu0 %v1024
  %v2683 = vpop.f32.mrb[0].mxu0
  %v2684 = vadd.f32 %v429, %v2683
  %v2685 = vpop.f32.mrb[0].mxu0
  %2686 = vmatprep.mubr.f32.mxu0 0.0
  %2687 = vmatmul.mubr.f32.gmra.mrb[0].mxu0 %v1027
  %v2688 = vpop.f32.mrb[0].mxu0
  %v2689 = vadd.f32 %v429, %v2688
  %v2690 = vpop.f32.mrb[0].mxu0
  %2691 = vmatprep.mubr.f32.mxu0 0.0
  %2692 = vmatmul.mubr.f32.gmra.mrb[0].mxu0 %v1030
  %v2693 = vpop.f32.mrb[0].mxu0
  %v2694 = vadd.f32 %v429, %v2693
  %v2695 = vpop.f32.mrb[0].mxu0
  %2696 = vmatprep.mubr.f32.mxu0 0.0
  %2697 = vmatmul.mubr.f32.gmra.mrb[0].mxu0 %v1033
  %v2698 = vpop.f32.mrb[0].mxu0
  %v2699 = vadd.f32 %v429, %v2698
  %v2700 = vpop.f32.mrb[0].mxu0
  %2701 = vmatprep.mubr.f32.mxu0 0.0
  %2702 = vmatmul.mubr.f32.gmra.mrb[0].mxu0 %v1036
  %v2703 = vpop.f32.mrb[0].mxu0
  %v2704 = vadd.f32 %v429, %v2703
  %v2705 = vpop.f32.mrb[0].mxu0
  %2706 = vmatprep.mubr.f32.mxu0 0.0
  %2707 = vmatmul.mubr.f32.gmra.mrb[0].mxu0 %v1039
  %v2708 = vpop.f32.mrb[0].mxu0
  %v2709 = vadd.f32 %v429, %v2708
  %v2710 = vpop.f32.mrb[0].mxu0
  %2711 = vmatprep.mubr.f32.mxu0 0.0
  %2712 = vmatmul.mubr.f32.gmra.mrb[0].mxu0 %v1042
  %v2713 = vpop.f32.mrb[0].mxu0
  %v2714 = vadd.f32 %v429, %v2713
  %v2715 = vpop.f32.mrb[0].mxu0
  %2716 = vmatprep.mubr.f32.mxu0 0.0
  %2717 = vmatmul.mubr.f32.gmra.mrb[0].mxu0 %v1045
  %v2718 = vpop.f32.mrb[0].mxu0
  %v2719 = vadd.f32 %v429, %v2718
  %v2720 = vpop.f32.mrb[0].mxu0
  %2721 = vmatprep.mubr.f32.mxu0 0.0
  %2722 = vmatmul.mubr.f32.gmra.mrb[0].mxu0 %v1048
  %v2723 = vpop.f32.mrb[0].mxu0
  %v2724 = vadd.f32 %v429, %v2723
  %v2725 = vpop.f32.mrb[0].mxu0
  %2726 = vmatprep.mubr.f32.mxu0 0.0
  %2727 = vmatmul.mubr.f32.gmra.mrb[0].mxu0 %v1051
  %v2728 = vpop.f32.mrb[0].mxu0
  %v2729 = vadd.f32 %v429, %v2728
  %v2730 = vpop.f32.mrb[0].mxu0
  %2731 = vmatprep.mubr.f32.mxu0 0.0
  %2732 = vmatmul.mubr.f32.gmra.mrb[0].mxu0 %v1054
  %v2733 = vpop.f32.mrb[0].mxu0
  %v2734 = vadd.f32 %v429, %v2733
  %v2735 = vpop.f32.mrb[0].mxu0
  %2736 = vmatprep.mubr.f32.mxu0 0.0
  %2737 = vmatmul.mubr.f32.gmra.mrb[0].mxu0 %v1057
  %v2738 = vpop.f32.mrb[0].mxu0
  %v2739 = vadd.f32 %v429, %v2738
  %v2740 = vpop.f32.mrb[0].mxu0
  %2741 = vmatprep.mubr.f32.mxu0 0.0
  %2742 = vmatmul.mubr.f32.gmra.mrb[0].mxu0 %v1060
  %v2743 = vpop.f32.mrb[0].mxu0
  %v2744 = vadd.f32 %v429, %v2743
  %v2745 = vpop.f32.mrb[0].mxu0
  %2746 = vmatprep.mubr.f32.mxu0 0.0
  %2747 = vmatmul.mubr.f32.gmra.mrb[0].mxu0 %v1063
  %v2748 = vpop.f32.mrb[0].mxu0
  %v2749 = vadd.f32 %v429, %v2748
  %v2750 = vpop.f32.mrb[0].mxu0
  %2751 = vmatprep.mubr.f32.mxu0 0.0
  %2752 = vmatmul.mubr.f32.gmra.mrb[0].mxu0 %v1066
  %v2753 = vpop.f32.mrb[0].mxu0
  %v2754 = vadd.f32 %v429, %v2753
  %v2755 = vpop.f32.mrb[0].mxu0
  %2756 = vmatprep.mubr.f32.mxu0 0.0
  %2757 = vmatmul.mubr.f32.gmra.mrb[0].mxu0 %v1069
  %v2758 = vpop.f32.mrb[0].mxu0
  %v2759 = vadd.f32 %v429, %v2758
  %v2760 = vpop.f32.mrb[0].mxu0
  %2761 = vmatprep.mubr.f32.mxu0 0.0
  %2762 = vmatmul.mubr.f32.gmra.mrb[0].mxu0 %v1072
  %v2763 = vpop.f32.mrb[0].mxu0
  %v2764 = vadd.f32 %v429, %v2763
  %v2765 = vpop.f32.mrb[0].mxu0
  %2766 = vmatprep.mubr.f32.mxu0 0.0
  %2767 = vmatmul.mubr.f32.gmra.mrb[0].mxu0 %v1075
  %v2768 = vpop.f32.mrb[0].mxu0
  %v2769 = vadd.f32 %v429, %v2768
  %v2770 = vpop.f32.mrb[0].mxu0
  %2771 = vmatprep.mubr.f32.mxu0 0.0
  %2772 = vmatmul.mubr.f32.gmra.mrb[0].mxu0 %v1078
  %v2773 = vpop.f32.mrb[0].mxu0
  %v2774 = vadd.f32 %v429, %v2773
  %v2775 = vpop.f32.mrb[0].mxu0
  %2776 = vmatprep.mubr.f32.mxu0 0.0
  %2777 = vmatmul.mubr.f32.gmra.mrb[0].mxu0 %v1081
  %v2778 = vpop.f32.mrb[0].mxu0
  %v2779 = vadd.f32 %v429, %v2778
  %v2780 = vpop.f32.mrb[0].mxu0
  %2781 = vmatprep.mubr.f32.mxu0 0.0
  %2782 = vmatmul.mubr.f32.gmra.mrb[0].mxu0 %v1084
  %v2783 = vpop.f32.mrb[0].mxu0
  %v2784 = vadd.f32 %v429, %v2783
  %v2785 = vpop.f32.mrb[0].mxu0
  %2786 = vmatprep.mubr.f32.mxu0 0.0
  %2787 = vmatmul.mubr.f32.gmra.mrb[0].mxu0 %v1087
  %v2788 = vpop.f32.mrb[0].mxu0
  %v2789 = vadd.f32 %v429, %v2788
  %v2790 = vpop.f32.mrb[0].mxu0
  %2791 = vmatprep.mubr.f32.mxu0 0.0
  %2792 = vmatmul.mubr.f32.gmra.mrb[0].mxu0 %v1090
  %v2793 = vpop.f32.mrb[0].mxu0
  %v2794 = vadd.f32 %v429, %v2793
  %v2795 = vpop.f32.mrb[0].mxu0
  %2796 = vmatprep.mubr.f32.mxu0 0.0
  %2797 = vmatmul.mubr.f32.gmra.mrb[0].mxu0 %v1093
  %v2798 = vpop.f32.mrb[0].mxu0
  %v2799 = vadd.f32 %v429, %v2798
  %v2800 = vpop.f32.mrb[0].mxu0
  %2801 = vmatprep.mubr.f32.mxu0 0.0
  %2802 = vmatmul.mubr.f32.gmra.mrb[0].mxu0 %v1096
  %v2803 = vpop.f32.mrb[0].mxu0
  %v2804 = vadd.f32 %v429, %v2803
  %v2805 = vpop.f32.mrb[0].mxu0
  %2806 = vmatprep.mubr.f32.mxu0 0.0
  %2807 = vmatmul.mubr.f32.gmra.mrb[0].mxu0 %v1099
  %v2808 = vpop.f32.mrb[0].mxu0
  %v2809 = vadd.f32 %v429, %v2808
  %v2810 = vpop.f32.mrb[0].mxu0
  %2811 = vmatprep.mubr.f32.mxu0 0.0
  %2812 = vmatmul.mubr.f32.gmra.mrb[0].mxu0 %v1102
  %v2813 = vpop.f32.mrb[0].mxu0
  %v2814 = vadd.f32 %v429, %v2813
  %v2815 = vpop.f32.mrb[0].mxu0
  %2816 = vmatprep.mubr.f32.mxu0 0.0
  %2817 = vmatmul.mubr.f32.gmra.mrb[0].mxu0 %v1105
  %v2818 = vpop.f32.mrb[0].mxu0
  %v2819 = vadd.f32 %v429, %v2818
  %v2820 = vpop.f32.mrb[0].mxu0
  %2821 = vmatprep.mubr.f32.mxu0 0.0
  %2822 = vmatmul.mubr.f32.gmra.mrb[0].mxu0 %v1108
  %v2823 = vpop.f32.mrb[0].mxu0
  %v2824 = vadd.f32 %v429, %v2823
  %v2825 = vpop.f32.mrb[0].mxu0
  %2826 = vmatprep.mubr.f32.mxu0 0.0
  %2827 = vmatmul.mubr.f32.gmra.mrb[0].mxu0 %v1111
  %v2828 = vpop.f32.mrb[0].mxu0
  %v2829 = vadd.f32 %v429, %v2828
  %v2830 = vpop.f32.mrb[0].mxu0
  %2831 = vmatprep.mubr.f32.mxu0 0.0
  %2832 = vmatmul.mubr.f32.gmra.mrb[0].mxu0 %v1114
  %v2833 = vpop.f32.mrb[0].mxu0
  %v2834 = vadd.f32 %v429, %v2833
  %v2835 = vpop.f32.mrb[0].mxu0
  %2836 = vmatprep.mubr.f32.mxu0 0.0
  %2837 = vmatmul.mubr.f32.gmra.mrb[0].mxu0 %v1117
  %v2838 = vpop.f32.mrb[0].mxu0
  %v2839 = vadd.f32 %v429, %v2838
  %v2840 = vpop.f32.mrb[0].mxu0
  %2841 = vmatprep.mubr.f32.mxu0 0.0
  %2842 = vmatmul.mubr.f32.gmra.mrb[0].mxu0 %v1120
  %v2843 = vpop.f32.mrb[0].mxu0
  %v2844 = vadd.f32 %v429, %v2843
  %v2845 = vpop.f32.mrb[0].mxu0
  %2846 = vmatprep.mubr.f32.mxu0 0.0
  %2847 = vmatmul.mubr.f32.gmra.mrb[0].mxu0 %v1123
  %v2848 = vpop.f32.mrb[0].mxu0
  %v2849 = vadd.f32 %v429, %v2848
  %v2850 = vpop.f32.mrb[0].mxu0
  %2851 = vmatprep.mubr.f32.mxu0 0.0
  %2852 = vmatmul.mubr.f32.gmra.mrb[0].mxu0 %v1126
  %v2853 = vpop.f32.mrb[0].mxu0
  %v2854 = vadd.f32 %v429, %v2853
  %v2855 = vpop.f32.mrb[0].mxu0
  %2856 = vmatprep.mubr.f32.mxu0 0.0
  %2857 = vmatmul.mubr.f32.gmra.mrb[0].mxu0 %v1129
  %v2858 = vpop.f32.mrb[0].mxu0
  %v2859 = vadd.f32 %v429, %v2858
  %v2860 = vpop.f32.mrb[0].mxu0
  %2861 = vmatprep.mubr.f32.mxu0 0.0
  %2862 = vmatmul.mubr.f32.gmra.mrb[0].mxu0 %v1132
  %v2863 = vpop.f32.mrb[0].mxu0
  %v2864 = vadd.f32 %v429, %v2863
  %v2865 = vpop.f32.mrb[0].mxu0
  %2866 = vmatprep.mubr.f32.mxu0 0.0
  %2867 = vmatmul.mubr.f32.gmra.mrb[0].mxu0 %v1135
  %v2868 = vpop.f32.mrb[0].mxu0
  %v2869 = vadd.f32 %v429, %v2868
  %v2870 = vpop.f32.mrb[0].mxu0
  %2871 = vmatprep.mubr.f32.mxu0 0.0
  %2872 = vmatmul.mubr.f32.gmra.mrb[0].mxu0 %v1138
  %v2873 = vpop.f32.mrb[0].mxu0
  %v2874 = vadd.f32 %v429, %v2873
  %v2875 = vpop.f32.mrb[0].mxu0
  %2876 = vmatprep.mubr.f32.mxu0 0.0
  %2877 = vmatmul.mubr.f32.gmra.mrb[0].mxu0 %v1141
  %v2878 = vpop.f32.mrb[0].mxu0
  %v2879 = vadd.f32 %v429, %v2878
  %v2880 = vpop.f32.mrb[0].mxu0
  %2881 = vmatprep.mubr.f32.mxu0 0.0
  %2882 = vmatmul.mubr.f32.gmra.mrb[0].mxu0 %v1144
  %v2883 = vpop.f32.mrb[0].mxu0
  %v2884 = vadd.f32 %v429, %v2883
  %v2885 = vpop.f32.mrb[0].mxu0
  %2886 = vmatprep.mubr.f32.mxu0 0.0
  %2887 = vmatmul.mubr.f32.gmra.mrb[0].mxu0 %v1147
  %v2888 = vpop.f32.mrb[0].mxu0
  %v2889 = vadd.f32 %v429, %v2888
  %v2890 = vpop.f32.mrb[0].mxu0
  %2891 = vmatprep.mubr.f32.mxu0 0.0
  %2892 = vmatmul.mubr.f32.gmra.mrb[0].mxu0 %v1150
  %v2893 = vpop.f32.mrb[0].mxu0
  %v2894 = vadd.f32 %v429, %v2893
  %v2895 = vpop.f32.mrb[0].mxu0
  %2896 = vmatprep.mubr.f32.mxu0 0.0
  %2897 = vmatmul.mubr.f32.gmra.mrb[0].mxu0 %v1153
  %v2898 = vpop.f32.mrb[0].mxu0
  %v2899 = vadd.f32 %v429, %v2898
  %v2900 = vpop.f32.mrb[0].mxu0
  %2901 = vmatprep.mubr.f32.mxu0 0.0
  %2902 = vmatmul.mubr.f32.gmra.mrb[0].mxu0 %v1156
  %v2903 = vpop.f32.mrb[0].mxu0
  %v2904 = vadd.f32 %v429, %v2903
  %v2905 = vpop.f32.mrb[0].mxu0
  %2906 = vmatprep.mubr.f32.mxu0 0.0
  %2907 = vmatmul.mubr.f32.gmra.mrb[0].mxu0 %v1159
  %v2908 = vpop.f32.mrb[0].mxu0
  %v2909 = vadd.f32 %v429, %v2908
  %v2910 = vpop.f32.mrb[0].mxu0
  %2911 = vmatprep.mubr.f32.mxu0 0.0
  %2912 = vmatmul.mubr.f32.gmra.mrb[0].mxu0 %v1162
  %v2913 = vpop.f32.mrb[0].mxu0
  %v2914 = vadd.f32 %v429, %v2913
  %v2915 = vpop.f32.mrb[0].mxu0
  %2916 = vmatprep.mubr.f32.mxu0 0.0
  %2917 = vmatmul.mubr.f32.gmra.mrb[0].mxu0 %v1165
  %v2918 = vpop.f32.mrb[0].mxu0
  %v2919 = vadd.f32 %v429, %v2918
  %v2920 = vpop.f32.mrb[0].mxu0
  %2921 = vmatprep.mubr.f32.mxu0 0.0
  %2922 = vmatmul.mubr.f32.gmra.mrb[0].mxu0 %v1168
  %v2923 = vpop.f32.mrb[0].mxu0
  %v2924 = vadd.f32 %v429, %v2923
  %v2925 = vpop.f32.mrb[0].mxu0
  %2926 = vmatprep.mubr.f32.mxu0 0.0
  %2927 = vmatmul.mubr.f32.gmra.mrb[0].mxu0 %v1171
  %v2928 = vpop.f32.mrb[0].mxu0
  %v2929 = vadd.f32 %v429, %v2928
  %v2930 = vpop.f32.mrb[0].mxu0
  %2931 = vmatprep.mubr.f32.mxu0 0.0
  %2932 = vmatmul.mubr.f32.gmra.mrb[0].mxu0 %v1174
  %v2933 = vpop.f32.mrb[0].mxu0
  %v2934 = vadd.f32 %v429, %v2933
  %v2935 = vpop.f32.mrb[0].mxu0
  %2936 = vmatprep.mubr.f32.mxu0 0.0
  %2937 = vmatmul.mubr.f32.gmra.mrb[0].mxu0 %v1177
  %v2938 = vpop.f32.mrb[0].mxu0
  %v2939 = vadd.f32 %v429, %v2938
  %v2940 = vpop.f32.mrb[0].mxu0
  %2941 = vmatprep.mubr.f32.mxu0 0.0
  %2942 = vmatmul.mubr.f32.gmra.mrb[0].mxu0 %v1180
  %v2943 = vpop.f32.mrb[0].mxu0
  %v2944 = vadd.f32 %v429, %v2943
  %v2945 = vpop.f32.mrb[0].mxu0
  %2946 = vmatprep.mubr.f32.mxu0 0.0
  %2947 = vmatmul.mubr.f32.gmra.mrb[0].mxu0 %v1183
  %v2948 = vpop.f32.mrb[0].mxu0
  %v2949 = vadd.f32 %v429, %v2948
  %v2950 = vpop.f32.mrb[0].mxu0
  %2951 = vmatprep.mubr.f32.mxu0 0.0
  %2952 = vmatmul.mubr.f32.gmra.mrb[0].mxu0 %v1186
  %v2953 = vpop.f32.mrb[0].mxu0
  %v2954 = vadd.f32 %v429, %v2953
  %v2955 = vpop.f32.mrb[0].mxu0
  %2956 = vmatprep.mubr.f32.mxu0 0.0
  %2957 = vmatmul.mubr.f32.gmra.mrb[0].mxu0 %v1189
  %v2958 = vpop.f32.mrb[0].mxu0
  %v2959 = vadd.f32 %v429, %v2958
  %v2960 = vpop.f32.mrb[0].mxu0
  %2961 = vmatprep.mubr.f32.mxu0 0.0
  %2962 = vmatmul.mubr.f32.gmra.mrb[0].mxu0 %v1192
  %v2963 = vpop.f32.mrb[0].mxu0
  %v2964 = vadd.f32 %v429, %v2963
  %v2965 = vpop.f32.mrb[0].mxu0
  %2966 = vmatprep.mubr.f32.mxu0 0.0
  %2967 = vmatmul.mubr.f32.gmra.mrb[0].mxu0 %v1195
  %v2968 = vpop.f32.mrb[0].mxu0
  %v2969 = vadd.f32 %v429, %v2968
  %v2970 = vpop.f32.mrb[0].mxu0
  %2971 = vmatprep.mubr.f32.mxu0 0.0
  %2972 = vmatmul.mubr.f32.gmra.mrb[0].mxu0 %v1198
  %v2973 = vpop.f32.mrb[0].mxu0
  %v2974 = vadd.f32 %v429, %v2973
  %v2975 = vpop.f32.mrb[0].mxu0
  %2976 = vmatprep.mubr.f32.mxu0 0.0
  %2977 = vmatmul.mubr.f32.gmra.mrb[0].mxu0 %v1201
  %v2978 = vpop.f32.mrb[0].mxu0
  %v2979 = vadd.f32 %v429, %v2978
  %v2980 = vpop.f32.mrb[0].mxu0
  %2981 = vmatprep.mubr.f32.mxu0 0.0
  %2982 = vmatmul.mubr.f32.gmra.mrb[0].mxu0 %v1204
  %v2983 = vpop.f32.mrb[0].mxu0
  %v2984 = vadd.f32 %v429, %v2983
  %v2985 = vpop.f32.mrb[0].mxu0
  %2986 = vmatprep.mubr.f32.mxu0 0.0
  %2987 = vmatmul.mubr.f32.gmra.mrb[0].mxu0 %v1207
  %v2988 = vpop.f32.mrb[0].mxu0
  %v2989 = vadd.f32 %v429, %v2988
  %v2990 = vpop.f32.mrb[0].mxu0
  %2991 = vmatprep.mubr.f32.mxu0 0.0
  %2992 = vmatmul.mubr.f32.gmra.mrb[0].mxu0 %v1210
  %v2993 = vpop.f32.mrb[0].mxu0
  %v2994 = vadd.f32 %v429, %v2993
  %v2995 = vpop.f32.mrb[0].mxu0
  %2996 = vmatprep.mubr.f32.mxu0 0.0
  %2997 = vmatmul.mubr.f32.gmra.mrb[0].mxu0 %v1213
  %v2998 = vpop.f32.mrb[0].mxu0
  %v2999 = vadd.f32 %v429, %v2998
  %v3000 = vpop.f32.mrb[0].mxu0
  %3001 = vmatprep.mubr.f32.mxu0 0.0
  %3002 = vmatmul.mubr.f32.gmra.mrb[0].mxu0 %v1216
  %v3003 = vpop.f32.mrb[0].mxu0
  %v3004 = vadd.f32 %v429, %v3003
  %v3005 = vpop.f32.mrb[0].mxu0
  %3006 = vmatprep.mubr.f32.mxu0 0.0
  %3007 = vmatmul.mubr.f32.gmra.mrb[0].mxu0 %v1219
  %v3008 = vpop.f32.mrb[0].mxu0
  %v3009 = vadd.f32 %v429, %v3008
  %v3010 = vpop.f32.mrb[0].mxu0
  %3011 = vmatprep.mubr.f32.mxu0 0.0
  %3012 = vmatmul.mubr.f32.gmra.mrb[0].mxu0 %v1222
  %v3013 = vpop.f32.mrb[0].mxu0
  %v3014 = vadd.f32 %v429, %v3013
  %v3015 = vpop.f32.mrb[0].mxu0
  %3016 = vmatprep.mubr.f32.mxu0 0.0
  %3017 = vmatmul.mubr.f32.gmra.mrb[0].mxu0 %v1225
  %v3018 = vpop.f32.mrb[0].mxu0
  %v3019 = vadd.f32 %v429, %v3018
  %v3020 = vpop.f32.mrb[0].mxu0
  %3021 = vmatprep.mubr.f32.mxu0 0.0
  %3022 = vmatmul.mubr.f32.gmra.mrb[0].mxu0 %v1228
  %v3023 = vpop.f32.mrb[0].mxu0
  %v3024 = vadd.f32 %v429, %v3023
  %v3025 = vpop.f32.mrb[0].mxu0
  %3026 = vmatprep.mubr.f32.mxu0 0.0
  %3027 = vmatmul.mubr.f32.gmra.mrb[0].mxu0 %v1231
  %v3028 = vpop.f32.mrb[0].mxu0
  %v3029 = vadd.f32 %v429, %v3028
  %v3030 = vpop.f32.mrb[0].mxu0
  %3031 = vmatprep.mubr.f32.mxu0 0.0
  %3032 = vmatmul.mubr.f32.gmra.mrb[0].mxu0 %v1234
  %v3033 = vpop.f32.mrb[0].mxu0
  %v3034 = vadd.f32 %v429, %v3033
  %v3035 = vpop.f32.mrb[0].mxu0
  %3036 = vmatprep.mubr.f32.mxu0 0.0
  %3037 = vmatmul.mubr.f32.gmra.mrb[0].mxu0 %v1237
  %v3038 = vpop.f32.mrb[0].mxu0
  %v3039 = vadd.f32 %v429, %v3038
  %v3040 = vpop.f32.mrb[0].mxu0
  %3041 = vmatprep.mubr.f32.mxu0 0.0
  %3042 = vmatmul.mubr.f32.gmra.mrb[0].mxu0 %v1240
  %v3043 = vpop.f32.mrb[0].mxu0
  %v3044 = vadd.f32 %v429, %v3043
  %v3045 = vpop.f32.mrb[0].mxu0
  %3046 = vmatprep.mubr.f32.mxu0 0.0
  %3047 = vmatmul.mubr.f32.gmra.mrb[0].mxu0 %v1243
  %v3048 = vpop.f32.mrb[0].mxu0
  %v3049 = vadd.f32 %v429, %v3048
  %v3050 = vpop.f32.mrb[0].mxu0
  %3051 = vmatprep.mubr.f32.mxu0 0.0
  %3052 = vmatmul.mubr.f32.gmra.mrb[0].mxu0 %v1246
  %v3053 = vpop.f32.mrb[0].mxu0
  %v3054 = vadd.f32 %v429, %v3053
  %v3055 = vpop.f32.mrb[0].mxu0
  %3056 = vmatprep.mubr.f32.mxu0 0.0
  %3057 = vmatmul.mubr.f32.gmra.mrb[0].mxu0 %v1249
  %v3058 = vpop.f32.mrb[0].mxu0
  %v3059 = vadd.f32 %v429, %v3058
  %v3060 = vpop.f32.mrb[0].mxu0
  %3061 = vmatprep.mubr.f32.mxu0 0.0
  %3062 = vmatmul.mubr.f32.gmra.mrb[0].mxu0 %v1252
  %v3063 = vpop.f32.mrb[0].mxu0
  %v3064 = vadd.f32 %v429, %v3063
  %v3065 = vpop.f32.mrb[0].mxu0
  %3066 = vmatprep.mubr.f32.mxu0 0.0
  %3067 = vmatmul.mubr.f32.gmra.mrb[0].mxu0 %v1255
  %v3068 = vpop.f32.mrb[0].mxu0
  %v3069 = vadd.f32 %v429, %v3068
  %v3070 = vpop.f32.mrb[0].mxu0
  %3071 = vmatprep.mubr.f32.mxu0 0.0
  %3072 = vmatmul.mubr.f32.gmra.mrb[0].mxu0 %v1258
  %v3073 = vpop.f32.mrb[0].mxu0
  %v3074 = vadd.f32 %v429, %v3073
  %v3075 = vpop.f32.mrb[0].mxu0
  %3076 = vmatprep.mubr.f32.mxu0 0.0
  %3077 = vmatmul.mubr.f32.gmra.mrb[0].mxu0 %v1261
  %v3078 = vpop.f32.mrb[0].mxu0
  %v3079 = vadd.f32 %v429, %v3078
  %v3080 = vpop.f32.mrb[0].mxu0
  %3081 = vmatprep.mubr.f32.mxu0 0.0
  %3082 = vmatmul.mubr.f32.gmra.mrb[0].mxu0 %v1264
  %v3083 = vpop.f32.mrb[0].mxu0
  %v3084 = vadd.f32 %v429, %v3083
  %v3085 = vpop.f32.mrb[0].mxu0
  %3086 = vmatprep.mubr.f32.mxu0 0.0
  %3087 = vmatmul.mubr.f32.gmra.mrb[0].mxu0 %v1267
  %v3088 = vpop.f32.mrb[0].mxu0
  %v3089 = vadd.f32 %v429, %v3088
  %v3090 = vpop.f32.mrb[0].mxu0
  %3091 = vmatprep.mubr.f32.mxu0 0.0
  %3092 = vmatmul.mubr.f32.gmra.mrb[0].mxu0 %v1270
  %v3093 = vpop.f32.mrb[0].mxu0
  %v3094 = vadd.f32 %v429, %v3093
  %v3095 = vpop.f32.mrb[0].mxu0
  %3096 = vmatprep.mubr.f32.mxu0 0.0
  %3097 = vmatmul.mubr.f32.gmra.mrb[0].mxu0 %v1273
  %v3098 = vpop.f32.mrb[0].mxu0
  %v3099 = vadd.f32 %v429, %v3098
  %v3100 = vpop.f32.mrb[0].mxu0
  %3101 = vmatprep.mubr.f32.mxu0 0.0
  %3102 = vmatmul.mubr.f32.gmra.mrb[0].mxu0 %v1276
  %v3103 = vpop.f32.mrb[0].mxu0
  %v3104 = vadd.f32 %v429, %v3103
  %v3105 = vpop.f32.mrb[0].mxu0
  %3106 = vmatprep.mubr.f32.mxu0 0.0
  %3107 = vmatmul.mubr.f32.gmra.mrb[0].mxu0 %v1279
  %v3108 = vpop.f32.mrb[0].mxu0
  %v3109 = vadd.f32 %v429, %v3108
  %v3110 = vpop.f32.mrb[0].mxu0
  %3111 = vmatprep.mubr.f32.mxu0 0.0
  %3112 = vmatmul.mubr.f32.gmra.mrb[0].mxu0 %v1282
  %v3113 = vpop.f32.mrb[0].mxu0
  %v3114 = vadd.f32 %v429, %v3113
  %v3115 = vpop.f32.mrb[0].mxu0
  %3116 = vmatprep.mubr.f32.mxu0 0.0
  %3117 = vmatmul.mubr.f32.gmra.mrb[0].mxu0 %v1285
  %v3118 = vpop.f32.mrb[0].mxu0
  %v3119 = vadd.f32 %v429, %v3118
  %v3120 = vpop.f32.mrb[0].mxu0
  %3121 = vmatprep.mubr.f32.mxu0 0.0
  %3122 = vmatmul.mubr.f32.gmra.mrb[0].mxu0 %v1288
  %v3123 = vpop.f32.mrb[0].mxu0
  %v3124 = vadd.f32 %v429, %v3123
  %v3125 = vpop.f32.mrb[0].mxu0
  %3126 = vmatprep.mubr.f32.mxu0 0.0
  %3127 = vmatmul.mubr.f32.gmra.mrb[0].mxu0 %v1291
  %v3128 = vpop.f32.mrb[0].mxu0
  %v3129 = vadd.f32 %v429, %v3128
  %v3130 = vpop.f32.mrb[0].mxu0
  %3131 = vmatprep.mubr.f32.mxu0 0.0
  %3132 = vmatmul.mubr.f32.gmra.mrb[0].mxu0 %v1294
  %v3133 = vpop.f32.mrb[0].mxu0
  %v3134 = vadd.f32 %v429, %v3133
  %v3135 = vpop.f32.mrb[0].mxu0
  %3136 = vmatprep.mubr.f32.mxu0 0.0
  %3137 = vmatmul.mubr.f32.gmra.mrb[0].mxu0 %v1297
  %v3138 = vpop.f32.mrb[0].mxu0
  %v3139 = vadd.f32 %v429, %v3138
  %v3140 = vpop.f32.mrb[0].mxu0
  %3141 = vmatprep.mubr.f32.mxu0 0.0
  %3142 = vmatmul.mubr.f32.gmra.mrb[0].mxu0 %v1300
  %v3143 = vpop.f32.mrb[0].mxu0
  %v3144 = vadd.f32 %v429, %v3143
  %v3145 = vpop.f32.mrb[0].mxu0
  %3146 = vmatprep.mubr.f32.mxu0 0.0
  %3147 = vmatmul.mubr.f32.gmra.mrb[0].mxu0 %v1303
  %v3148 = vpop.f32.mrb[0].mxu0
  %v3149 = vadd.f32 %v429, %v3148
  %v3150 = vpop.f32.mrb[0].mxu0
  %3151 = vmatprep.mubr.f32.mxu0 0.0
  %3152 = vmatmul.mubr.f32.gmra.mrb[0].mxu0 %v1306
  %v3153 = vpop.f32.mrb[0].mxu0
  %v3154 = vadd.f32 %v429, %v3153
  %v3155 = vpop.f32.mrb[0].mxu0
  %3156 = vmatprep.mubr.f32.mxu0 0.0
  %3157 = vmatmul.mubr.f32.gmra.mrb[0].mxu0 %v1309
  %v3158 = vpop.f32.mrb[0].mxu0
  %v3159 = vadd.f32 %v429, %v3158
  %v3160 = vpop.f32.mrb[0].mxu0
  %3161 = vmatprep.mubr.f32.mxu0 0.0
  %3162 = vmatmul.mubr.f32.gmra.mrb[0].mxu0 %v1312
  %v3163 = vpop.f32.mrb[0].mxu0
  %v3164 = vadd.f32 %v429, %v3163
  %v3165 = vpop.f32.mrb[0].mxu0
  %3166 = vmatprep.mubr.f32.mxu0 0.0
  %3167 = vmatmul.mubr.f32.gmra.mrb[0].mxu0 %v1315
  %v3168 = vpop.f32.mrb[0].mxu0
  %v3169 = vadd.f32 %v429, %v3168
  %v3170 = vpop.f32.mrb[0].mxu0
  %3171 = vmatprep.mubr.f32.mxu0 0.0
  %3172 = vmatmul.mubr.f32.gmra.mrb[0].mxu0 %v1318
  %v3173 = vpop.f32.mrb[0].mxu0
  %v3174 = vadd.f32 %v429, %v3173
  %v3175 = vpop.f32.mrb[0].mxu0
  %3176 = vmatprep.mubr.f32.mxu0 0.0
  %3177 = vmatmul.mubr.f32.gmra.mrb[0].mxu0 %v1321
  %v3178 = vpop.f32.mrb[0].mxu0
  %v3179 = vadd.f32 %v429, %v3178
  %v3180 = vpop.f32.mrb[0].mxu0
  %3181 = vmatprep.mubr.f32.mxu0 0.0
  %3182 = vmatmul.mubr.f32.gmra.mrb[0].mxu0 %v1324
  %v3183 = vpop.f32.mrb[0].mxu0
  %v3184 = vadd.f32 %v429, %v3183
  %v3185 = vpop.f32.mrb[0].mxu0
  %3186 = vmatprep.mubr.f32.mxu0 0.0
  %3187 = vmatmul.mubr.f32.gmra.mrb[0].mxu0 %v1327
  %v3188 = vpop.f32.mrb[0].mxu0
  %v3189 = vadd.f32 %v429, %v3188
  %v3190 = vpop.f32.mrb[0].mxu0
  %3191 = vmatprep.mubr.f32.mxu0 0.0
  %3192 = vmatmul.mubr.f32.gmra.mrb[0].mxu0 %v1330
  %v3193 = vpop.f32.mrb[0].mxu0
  %v3194 = vadd.f32 %v429, %v3193
  %v3195 = vpop.f32.mrb[0].mxu0
  %3196 = vmatprep.mubr.f32.mxu0 0.0
  %3197 = vmatmul.mubr.f32.gmra.mrb[0].mxu0 %v1333
  %v3198 = vpop.f32.mrb[0].mxu0
  %v3199 = vadd.f32 %v429, %v3198
  %v3200 = vpop.f32.mrb[0].mxu0
  %3201 = vmatprep.mubr.f32.mxu0 0.0
  %3202 = vmatmul.mubr.f32.gmra.mrb[0].mxu0 %v1336
  %v3203 = vpop.f32.mrb[0].mxu0
  %v3204 = vadd.f32 %v429, %v3203
  %v3205 = vpop.f32.mrb[0].mxu0
  %3206 = vmatprep.mubr.f32.mxu0 0.0
  %3207 = vmatmul.mubr.f32.gmra.mrb[0].mxu0 %v1339
  %v3208 = vpop.f32.mrb[0].mxu0
  %v3209 = vadd.f32 %v429, %v3208
  %v3210 = vpop.f32.mrb[0].mxu0
  %3211 = vmatprep.mubr.f32.mxu0 0.0
  %3212 = vmatmul.mubr.f32.gmra.mrb[0].mxu0 %v1342
  %v3213 = vpop.f32.mrb[0].mxu0
  %v3214 = vadd.f32 %v429, %v3213
  %v3215 = vpop.f32.mrb[0].mxu0
  %3216 = vmatprep.mubr.f32.mxu0 0.0
  %3217 = vmatmul.mubr.f32.gmra.mrb[0].mxu0 %v1345
  %v3218 = vpop.f32.mrb[0].mxu0
  %v3219 = vadd.f32 %v429, %v3218
  %v3220 = vpop.f32.mrb[0].mxu0
  %3221 = vmatprep.mubr.f32.mxu0 0.0
  %3222 = vmatmul.mubr.f32.gmra.mrb[0].mxu0 %v1348
  %v3223 = vpop.f32.mrb[0].mxu0
  %v3224 = vadd.f32 %v429, %v3223
  %v3225 = vpop.f32.mrb[0].mxu0
  %3226 = vmatprep.mubr.f32.mxu0 0.0
  %3227 = vmatmul.mubr.f32.gmra.mrb[0].mxu0 %v1351
  %v3228 = vpop.f32.mrb[0].mxu0
  %v3229 = vadd.f32 %v429, %v3228
  %v3230 = vpop.f32.mrb[0].mxu0
  %3231 = vmatprep.mubr.f32.mxu0 0.0
  %3232 = vmatmul.mubr.f32.gmra.mrb[0].mxu0 %v1354
  %v3233 = vpop.f32.mrb[0].mxu0
  %v3234 = vadd.f32 %v429, %v3233
  %v3235 = vpop.f32.mrb[0].mxu0
  %3236 = vmatprep.mubr.f32.mxu0 0.0
  %3237 = vmatmul.mubr.f32.gmra.mrb[0].mxu0 %v1357
  %v3238 = vpop.f32.mrb[0].mxu0
  %v3239 = vadd.f32 %v429, %v3238
  %v3240 = vpop.f32.mrb[0].mxu0
  %3241 = vmatprep.mubr.f32.mxu0 0.0
  %3242 = vmatmul.mubr.f32.gmra.mrb[0].mxu0 %v1360
  %v3243 = vpop.f32.mrb[0].mxu0
  %v3244 = vadd.f32 %v429, %v3243
  %v3245 = vpop.f32.mrb[0].mxu0
  %3246 = vmatprep.mubr.f32.mxu0 0.0
  %3247 = vmatmul.mubr.f32.gmra.mrb[0].mxu0 %v1363
  %v3248 = vpop.f32.mrb[0].mxu0
  %v3249 = vadd.f32 %v429, %v3248
  %v3250 = vpop.f32.mrb[0].mxu0
  %3251 = vmatprep.mubr.f32.mxu0 0.0
  %3252 = vmatmul.mubr.f32.gmra.mrb[0].mxu0 %v1366
  %v3253 = vpop.f32.mrb[0].mxu0
  %v3254 = vadd.f32 %v429, %v3253
  %v3255 = vpop.f32.mrb[0].mxu0
  %3256 = vmatprep.mubr.f32.mxu0 0.0
  %3257 = vmatmul.mubr.f32.gmra.mrb[0].mxu0 %v1369
  %v3258 = vpop.f32.mrb[0].mxu0
  %v3259 = vadd.f32 %v429, %v3258
  %v3260 = vpop.f32.mrb[0].mxu0
  %3261 = vmatprep.mubr.f32.mxu0 0.0
  %3262 = vmatmul.mubr.f32.gmra.mrb[0].mxu0 %v1372
  %v3263 = vpop.f32.mrb[0].mxu0
  %v3264 = vadd.f32 %v429, %v3263
  %v3265 = vpop.f32.mrb[0].mxu0
  %3266 = vmatprep.mubr.f32.mxu0 0.0
  %3267 = vmatmul.mubr.f32.gmra.mrb[0].mxu0 %v1375
  %v3268 = vpop.f32.mrb[0].mxu0
  %v3269 = vadd.f32 %v429, %v3268
  %v3270 = vpop.f32.mrb[0].mxu0
  %3271 = vmatprep.mubr.f32.mxu0 0.0
  %3272 = vmatmul.mubr.f32.gmra.mrb[0].mxu0 %v1378
  %v3273 = vpop.f32.mrb[0].mxu0
  %v3274 = vadd.f32 %v429, %v3273
  %v3275 = vpop.f32.mrb[0].mxu0
  %3276 = vmatprep.mubr.f32.mxu0 0.0
  %3277 = vmatmul.mubr.f32.gmra.mrb[0].mxu0 %v1381
  %v3278 = vpop.f32.mrb[0].mxu0
  %v3279 = vadd.f32 %v429, %v3278
  %v3280 = vpop.f32.mrb[0].mxu0
  %3281 = vmatprep.mubr.f32.mxu0 0.0
  %3282 = vmatmul.mubr.f32.gmra.mrb[0].mxu0 %v1384
  %v3283 = vpop.f32.mrb[0].mxu0
  %v3284 = vadd.f32 %v429, %v3283
  %v3285 = vpop.f32.mrb[0].mxu0
  %3286 = vmatprep.mubr.f32.mxu0 0.0
  %3287 = vmatmul.mubr.f32.gmra.mrb[0].mxu0 %v1387
  %v3288 = vpop.f32.mrb[0].mxu0
  %v3289 = vadd.f32 %v429, %v3288
  %v3290 = vpop.f32.mrb[0].mxu0
  %3291 = vmatprep.mubr.f32.mxu0 0.0
  %3292 = vmatmul.mubr.f32.gmra.mrb[0].mxu0 %v1390
  %v3293 = vpop.f32.mrb[0].mxu0
  %v3294 = vadd.f32 %v429, %v3293
  %v3295 = vpop.f32.mrb[0].mxu0
  %3296 = vmatprep.mubr.f32.mxu0 0.0
  %3297 = vmatmul.mubr.f32.gmra.mrb[0].mxu0 %v1393
  %v3298 = vpop.f32.mrb[0].mxu0
  %v3299 = vadd.f32 %v429, %v3298
  %v3300 = vpop.f32.mrb[0].mxu0
  %3301 = vmatprep.mubr.f32.mxu0 0.0
  %3302 = vmatmul.mubr.f32.gmra.mrb[0].mxu0 %v1396
  %v3303 = vpop.f32.mrb[0].mxu0
  %v3304 = vadd.f32 %v429, %v3303
  %v3305 = vpop.f32.mrb[0].mxu0
  %3306 = vmatprep.mubr.f32.mxu0 0.0
  %3307 = vmatmul.mubr.f32.gmra.mrb[0].mxu0 %v1399
  %v3308 = vpop.f32.mrb[0].mxu0
  %v3309 = vadd.f32 %v429, %v3308
  %v3310 = vpop.f32.mrb[0].mxu0
  %3311 = vmatprep.mubr.f32.mxu0 0.0
  %3312 = vmatmul.mubr.f32.gmra.mrb[0].mxu0 %v1402
  %v3313 = vpop.f32.mrb[0].mxu0
  %v3314 = vadd.f32 %v429, %v3313
  %v3315 = vpop.f32.mrb[0].mxu0
  %3316 = vmatprep.mubr.f32.mxu0 0.0
  %3317 = vmatmul.mubr.f32.gmra.mrb[0].mxu0 %v1405
  %v3318 = vpop.f32.mrb[0].mxu0
  %v3319 = vadd.f32 %v429, %v3318
  %v3320 = vpop.f32.mrb[0].mxu0
  %3321 = vmatprep.mubr.f32.mxu0 0.0
  %3322 = vmatmul.mubr.f32.gmra.mrb[0].mxu0 %v1408
  %v3323 = vpop.f32.mrb[0].mxu0
  %v3324 = vadd.f32 %v429, %v3323
  %v3325 = vpop.f32.mrb[0].mxu0
  %3326 = vmatprep.mubr.f32.mxu0 0.0
  %3327 = vmatmul.mubr.f32.gmra.mrb[0].mxu0 %v1411
  %v3328 = vpop.f32.mrb[0].mxu0
  %v3329 = vadd.f32 %v429, %v3328
  %v3330 = vpop.f32.mrb[0].mxu0
  %3331 = vmatprep.mubr.f32.mxu0 0.0
  %3332 = vmatmul.mubr.f32.gmra.mrb[0].mxu0 %v1414
  %v3333 = vpop.f32.mrb[0].mxu0
  %v3334 = vadd.f32 %v429, %v3333
  %v3335 = vpop.f32.mrb[0].mxu0
  %3336 = vmatprep.mubr.f32.mxu0 0.0
  %3337 = vmatmul.mubr.f32.gmra.mrb[0].mxu0 %v1417
  %v3338 = vpop.f32.mrb[0].mxu0
  %v3339 = vadd.f32 %v429, %v3338
  %v3340 = vpop.f32.mrb[0].mxu0
  %3341 = vmatprep.mubr.f32.mxu0 0.0
  %3342 = vmatmul.mubr.f32.gmra.mrb[0].mxu0 %v1420
  %v3343 = vpop.f32.mrb[0].mxu0
  %v3344 = vadd.f32 %v429, %v3343
  %v3345 = vpop.f32.mrb[0].mxu0
  %3346 = vmatprep.mubr.f32.mxu0 0.0
  %3347 = vmatmul.mubr.f32.gmra.mrb[0].mxu0 %v1423
  %v3348 = vpop.f32.mrb[0].mxu0
  %v3349 = vadd.f32 %v429, %v3348
  %v3350 = vpop.f32.mrb[0].mxu0
  %3351 = vmatprep.mubr.f32.mxu0 0.0
  %3352 = vmatmul.mubr.f32.gmra.mrb[0].mxu0 %v1426
  %v3353 = vpop.f32.mrb[0].mxu0
  %v3354 = vadd.f32 %v429, %v3353
  %v3355 = vpop.f32.mrb[0].mxu0
  %3356 = vmatprep.mubr.f32.mxu0 0.0
  %3357 = vmatmul.mubr.f32.gmra.mrb[0].mxu0 %v1429
  %v3358 = vpop.f32.mrb[0].mxu0
  %v3359 = vadd.f32 %v429, %v3358
  %v3360 = vpop.f32.mrb[0].mxu0
  %3361 = vmatprep.mubr.f32.mxu0 0.0
  %3362 = vmatmul.mubr.f32.gmra.mrb[0].mxu0 %v1432
  %v3363 = vpop.f32.mrb[0].mxu0
  %v3364 = vadd.f32 %v429, %v3363
  %v3365 = vpop.f32.mrb[0].mxu0
  %3366 = vmatprep.mubr.f32.mxu0 0.0
  %3367 = vmatmul.mubr.f32.gmra.mrb[0].mxu0 %v1435
  %v3368 = vpop.f32.mrb[0].mxu0
  %v3369 = vadd.f32 %v429, %v3368
  %v3370 = vpop.f32.mrb[0].mxu0
  %3371 = vmatprep.mubr.f32.mxu0 0.0
  %3372 = vmatmul.mubr.f32.gmra.mrb[0].mxu0 %v1438
  %v3373 = vpop.f32.mrb[0].mxu0
  %v3374 = vadd.f32 %v429, %v3373
  %v3375 = vpop.f32.mrb[0].mxu0
  %3376 = vmatprep.mubr.f32.mxu0 0.0
  %3377 = vmatmul.mubr.f32.gmra.mrb[0].mxu0 %v1441
  %v3378 = vpop.f32.mrb[0].mxu0
  %v3379 = vadd.f32 %v429, %v3378
  %v3380 = vpop.f32.mrb[0].mxu0
  %3381 = vmatprep.mubr.f32.mxu0 0.0
  %3382 = vmatmul.mubr.f32.gmra.mrb[0].mxu0 %v1444
  %v3383 = vpop.f32.mrb[0].mxu0
  %v3384 = vadd.f32 %v429, %v3383
  %v3385 = vpop.f32.mrb[0].mxu0
  %3386 = vmatprep.mubr.f32.mxu0 0.0
  %3387 = vmatmul.mubr.f32.gmra.mrb[0].mxu0 %v1447
  %v3388 = vpop.f32.mrb[0].mxu0
  %v3389 = vadd.f32 %v429, %v3388
  %v3390 = vpop.f32.mrb[0].mxu0
  %3391 = vmatprep.mubr.f32.mxu0 0.0
  %3392 = vmatmul.mubr.f32.gmra.mrb[0].mxu0 %v1450
  %v3393 = vpop.f32.mrb[0].mxu0
  %v3394 = vadd.f32 %v429, %v3393
  %v3395 = vpop.f32.mrb[0].mxu0
  %3396 = vmatprep.mubr.f32.mxu0 0.0
  %3397 = vmatmul.mubr.f32.gmra.mrb[0].mxu0 %v1453
  %v3398 = vpop.f32.mrb[0].mxu0
  %v3399 = vadd.f32 %v429, %v3398
  %v3400 = vpop.f32.mrb[0].mxu0
  %3401 = vmatprep.mubr.f32.mxu0 0.0
  %3402 = vmatmul.mubr.f32.gmra.mrb[0].mxu0 %v1456
  %v3403 = vpop.f32.mrb[0].mxu0
  %v3404 = vadd.f32 %v429, %v3403
  %v3405 = vpop.f32.mrb[0].mxu0
  %3406 = vmatprep.mubr.f32.mxu0 0.0
  %3407 = vmatmul.mubr.f32.gmra.mrb[0].mxu0 %v1459
  %v3408 = vpop.f32.mrb[0].mxu0
  %v3409 = vadd.f32 %v429, %v3408
  %v3410 = vpop.f32.mrb[0].mxu0
  %3411 = vmatprep.mubr.f32.mxu0 0.0
  %3412 = vmatmul.mubr.f32.gmra.mrb[0].mxu0 %v1462
  %v3413 = vpop.f32.mrb[0].mxu0
  %v3414 = vadd.f32 %v429, %v3413
  %v3415 = vpop.f32.mrb[0].mxu0
  %3416 = vmatprep.mubr.f32.mxu0 0.0
  %3417 = vmatmul.mubr.f32.gmra.mrb[0].mxu0 %v1465
  %v3418 = vpop.f32.mrb[0].mxu0
  %v3419 = vadd.f32 %v429, %v3418
  %v3420 = vpop.f32.mrb[0].mxu0
  %3421 = vmatprep.mubr.f32.mxu0 0.0
  %3422 = vmatmul.mubr.f32.gmra.mrb[0].mxu0 %v1468
  %v3423 = vpop.f32.mrb[0].mxu0
  %v3424 = vadd.f32 %v429, %v3423
  %v3425 = vpop.f32.mrb[0].mxu0
  %3426 = vmatprep.mubr.f32.mxu0 0.0
  %3427 = vmatmul.mubr.f32.gmra.mrb[0].mxu0 %v1471
  %v3428 = vpop.f32.mrb[0].mxu0
  %v3429 = vadd.f32 %v429, %v3428
  %v3430 = vpop.f32.mrb[0].mxu0
  %3431 = vmatprep.mubr.f32.mxu0 0.0
  %3432 = vmatmul.mubr.f32.gmra.mrb[0].mxu0 %v1474
  %v3433 = vpop.f32.mrb[0].mxu0
  %v3434 = vadd.f32 %v429, %v3433
  %v3435 = vpop.f32.mrb[0].mxu0
  %3436 = vmatprep.mubr.f32.mxu0 0.0
  %3437 = vmatmul.mubr.f32.gmra.mrb[0].mxu0 %v1477
  %v3438 = vpop.f32.mrb[0].mxu0
  %v3439 = vadd.f32 %v429, %v3438
  %v3440 = vpop.f32.mrb[0].mxu0
  %3441 = vmatprep.mubr.f32.mxu0 0.0
  %3442 = vmatmul.mubr.f32.gmra.mrb[0].mxu0 %v1480
  %v3443 = vpop.f32.mrb[0].mxu0
  %v3444 = vadd.f32 %v429, %v3443
  %v3445 = vpop.f32.mrb[0].mxu0
  %3446 = vmatprep.mubr.f32.mxu0 0.0
  %3447 = vmatmul.mubr.f32.gmra.mrb[0].mxu0 %v1483
  %v3448 = vpop.f32.mrb[0].mxu0
  %v3449 = vadd.f32 %v429, %v3448
  %v3450 = vpop.f32.mrb[0].mxu0
  %3451 = vmatprep.mubr.f32.mxu0 0.0
  %3452 = vmatmul.mubr.f32.gmra.mrb[0].mxu0 %v1486
  %v3453 = vpop.f32.mrb[0].mxu0
  %v3454 = vadd.f32 %v429, %v3453
  %v3455 = vpop.f32.mrb[0].mxu0
  %3456 = vmatprep.mubr.f32.mxu0 0.0
  %3457 = vmatmul.mubr.f32.gmra.mrb[0].mxu0 %v1489
  %v3458 = vpop.f32.mrb[0].mxu0
  %v3459 = vadd.f32 %v429, %v3458
  %v3460 = vpop.f32.mrb[0].mxu0
  %3461 = vmatprep.mubr.f32.mxu0 0.0
  %3462 = vmatmul.mubr.f32.gmra.mrb[0].mxu0 %v1492
  %v3463 = vpop.f32.mrb[0].mxu0
  %v3464 = vadd.f32 %v429, %v3463
  %v3465 = vpop.f32.mrb[0].mxu0
  %3466 = vmatprep.mubr.f32.mxu0 0.0
  %3467 = vmatmul.mubr.f32.gmra.mrb[0].mxu0 %v1495
  %v3468 = vpop.f32.mrb[0].mxu0
  %v3469 = vadd.f32 %v429, %v3468
  %v3470 = vpop.f32.mrb[0].mxu0
  %3471 = vmatprep.mubr.f32.mxu0 0.0
  %3472 = vmatmul.mubr.f32.gmra.mrb[0].mxu0 %v1498
  %v3473 = vpop.f32.mrb[0].mxu0
  %v3474 = vadd.f32 %v429, %v3473
  %v3475 = vpop.f32.mrb[0].mxu0
  %3476 = vmatprep.mubr.f32.mxu0 0.0
  %3477 = vmatmul.mubr.f32.gmra.mrb[0].mxu0 %v1501
  %v3478 = vpop.f32.mrb[0].mxu0
  %v3479 = vadd.f32 %v429, %v3478
  %v3480 = vpop.f32.mrb[0].mxu0
  %3481 = vmatprep.mubr.f32.mxu0 0.0
  %3482 = vmatmul.mubr.f32.gmra.mrb[0].mxu0 %v1504
  %v3483 = vpop.f32.mrb[0].mxu0
  %v3484 = vadd.f32 %v429, %v3483
  %v3485 = vpop.f32.mrb[0].mxu0
  %3486 = vmatprep.mubr.f32.mxu0 0.0
  %3487 = vmatmul.mubr.f32.gmra.mrb[0].mxu0 %v1507
  %v3488 = vpop.f32.mrb[0].mxu0
  %v3489 = vadd.f32 %v429, %v3488
  %v3490 = vpop.f32.mrb[0].mxu0
  %3491 = vmatprep.mubr.f32.mxu0 0.0
  %3492 = vmatmul.mubr.f32.gmra.mrb[0].mxu0 %v1510
  %v3493 = vpop.f32.mrb[0].mxu0
  %v3494 = vadd.f32 %v429, %v3493
  %v3495 = vpop.f32.mrb[0].mxu0
  %3496 = vmatprep.mubr.f32.mxu0 0.0
  %3497 = vmatmul.mubr.f32.gmra.mrb[0].mxu0 %v1513
  %v3498 = vpop.f32.mrb[0].mxu0
  %v3499 = vadd.f32 %v429, %v3498
  %v3500 = vpop.f32.mrb[0].mxu0
  %3501 = vmatprep.mubr.f32.mxu0 0.0
  %3502 = vmatmul.mubr.f32.gmra.mrb[0].mxu0 %v1516
  %v3503 = vpop.f32.mrb[0].mxu0
  %v3504 = vadd.f32 %v429, %v3503
  %v3505 = vpop.f32.mrb[0].mxu0
  %3506 = vmatprep.mubr.f32.mxu0 0.0
  %3507 = vmatmul.mubr.f32.gmra.mrb[0].mxu0 %v1519
  %v3508 = vpop.f32.mrb[0].mxu0
  %v3509 = vadd.f32 %v429, %v3508
  %v3510 = vpop.f32.mrb[0].mxu0
  %3511 = vmatprep.mubr.f32.mxu0 0.0
  %3512 = vmatmul.mubr.f32.gmra.mrb[0].mxu0 %v1522
  %v3513 = vpop.f32.mrb[0].mxu0
  %v3514 = vadd.f32 %v429, %v3513
  %v3515 = vpop.f32.mrb[0].mxu0
  %3516 = vmatprep.mubr.f32.mxu0 0.0
  %3517 = vmatmul.mubr.f32.gmra.mrb[0].mxu0 %v1525
  %v3518 = vpop.f32.mrb[0].mxu0
  %v3519 = vadd.f32 %v429, %v3518
  %v3520 = vpop.f32.mrb[0].mxu0
  %3521 = vmatprep.mubr.f32.mxu0 0.0
  %3522 = vmatmul.mubr.f32.gmra.mrb[0].mxu0 %v1528
  %v3523 = vpop.f32.mrb[0].mxu0
  %v3524 = vadd.f32 %v429, %v3523
  %v3525 = vpop.f32.mrb[0].mxu0
  %3526 = vmatprep.mubr.f32.mxu0 0.0
  %3527 = vmatmul.mubr.f32.gmra.mrb[0].mxu0 %v1531
  %v3528 = vpop.f32.mrb[0].mxu0
  %v3529 = vadd.f32 %v429, %v3528
  %v3530 = vpop.f32.mrb[0].mxu0
  %3531 = vmatprep.mubr.f32.mxu0 0.0
  %3532 = vmatmul.mubr.f32.gmra.mrb[0].mxu0 %v1534
  %v3533 = vpop.f32.mrb[0].mxu0
  %v3534 = vadd.f32 %v429, %v3533
  %v3535 = vpop.f32.mrb[0].mxu0
  %3536 = vmatprep.mubr.f32.mxu0 0.0
  %3537 = vmatmul.mubr.f32.gmra.mrb[0].mxu0 %v1537
  %v3538 = vpop.f32.mrb[0].mxu0
  %v3539 = vadd.f32 %v429, %v3538
  %v3540 = vpop.f32.mrb[0].mxu0
  %3541 = vmatprep.mubr.f32.mxu0 0.0
  %3542 = vmatmul.mubr.f32.gmra.mrb[0].mxu0 %v1540
  %v3543 = vpop.f32.mrb[0].mxu0
  %v3544 = vadd.f32 %v429, %v3543
  %v3545 = vpop.f32.mrb[0].mxu0
  %3546 = vmatprep.mubr.f32.mxu0 0.0
  %3547 = vmatmul.mubr.f32.gmra.mrb[0].mxu0 %v1543
  %v3548 = vpop.f32.mrb[0].mxu0
  %v3549 = vadd.f32 %v429, %v3548
  %v3550 = vpop.f32.mrb[0].mxu0
  %3551 = vmatprep.mubr.f32.mxu0 0.0
  %3552 = vmatmul.mubr.f32.gmra.mrb[0].mxu0 %v1546
  %v3553 = vpop.f32.mrb[0].mxu0
  %v3554 = vadd.f32 %v429, %v3553
  %v3555 = vpop.f32.mrb[0].mxu0
  %3556 = vmatprep.mubr.f32.mxu0 0.0
  %3557 = vmatmul.mubr.f32.gmra.mrb[0].mxu0 %v1549
  %v3558 = vpop.f32.mrb[0].mxu0
  %v3559 = vadd.f32 %v429, %v3558
  %v3560 = vpop.f32.mrb[0].mxu0
  %3561 = vmatprep.mubr.f32.mxu0 0.0
  %3562 = vmatmul.mubr.f32.gmra.mrb[0].mxu0 %v1552
  %v3563 = vpop.f32.mrb[0].mxu0
  %v3564 = vadd.f32 %v429, %v3563
  %v3565 = vpop.f32.mrb[0].mxu0
  %3566 = vmatprep.mubr.f32.mxu0 0.0
  %3567 = vmatmul.mubr.f32.gmra.mrb[0].mxu0 %v1555
  %v3568 = vpop.f32.mrb[0].mxu0
  %v3569 = vadd.f32 %v429, %v3568
  %v3570 = vpop.f32.mrb[0].mxu0
  %3571 = vmatprep.mubr.f32.mxu0 0.0
  %3572 = vmatmul.mubr.f32.gmra.mrb[0].mxu0 %v1558
  %v3573 = vpop.f32.mrb[0].mxu0
  %v3574 = vadd.f32 %v429, %v3573
  %v3575 = vpop.f32.mrb[0].mxu0
  %3576 = vmatprep.mubr.f32.mxu0 0.0
  %3577 = vmatmul.mubr.f32.gmra.mrb[0].mxu0 %v1561
  %v3578 = vpop.f32.mrb[0].mxu0
  %v3579 = vadd.f32 %v429, %v3578
  %v3580 = vpop.f32.mrb[0].mxu0
  %3581 = vmatprep.mubr.f32.mxu0 0.0
  %3582 = vmatmul.mubr.f32.gmra.mrb[0].mxu0 %v1564
  %v3583 = vpop.f32.mrb[0].mxu0
  %v3584 = vadd.f32 %v429, %v3583
  %v3585 = vpop.f32.mrb[0].mxu0
  %3586 = vmatprep.mubr.f32.mxu0 0.0
  %3587 = vmatmul.mubr.f32.gmra.mrb[0].mxu0 %v1567
  %v3588 = vpop.f32.mrb[0].mxu0
  %v3589 = vadd.f32 %v429, %v3588
  %v3590 = vpop.f32.mrb[0].mxu0
  %3591 = vmatprep.mubr.f32.mxu0 0.0
  %3592 = vmatmul.mubr.f32.gmra.mrb[0].mxu0 %v1570
  %v3593 = vpop.f32.mrb[0].mxu0
  %v3594 = vadd.f32 %v429, %v3593
  %v3595 = vpop.f32.mrb[0].mxu0
  %3596 = vmatprep.mubr.f32.mxu0 0.0
  %3597 = vmatmul.mubr.f32.gmra.mrb[0].mxu0 %v1573
  %v3598 = vpop.f32.mrb[0].mxu0
  %v3599 = vadd.f32 %v429, %v3598
  %v3600 = vpop.f32.mrb[0].mxu0
  %3601 = vmatprep.mubr.f32.mxu0 0.0
  %3602 = vmatmul.mubr.f32.gmra.mrb[0].mxu0 %v1576
  %v3603 = vpop.f32.mrb[0].mxu0
  %v3604 = vadd.f32 %v429, %v3603
  %v3605 = vpop.f32.mrb[0].mxu0
  %3606 = vmatprep.mubr.f32.mxu0 0.0
  %3607 = vmatmul.mubr.f32.gmra.mrb[0].mxu0 %v1579
  %v3608 = vpop.f32.mrb[0].mxu0
  %v3609 = vadd.f32 %v429, %v3608
  %v3610 = vpop.f32.mrb[0].mxu0
  %3611 = vmatprep.mubr.f32.mxu0 0.0
  %3612 = vmatmul.mubr.f32.gmra.mrb[0].mxu0 %v1582
  %v3613 = vpop.f32.mrb[0].mxu0
  %v3614 = vadd.f32 %v429, %v3613
  %v3615 = vpop.f32.mrb[0].mxu0
  %3616 = vmatprep.mubr.f32.mxu0 0.0
  %3617 = vmatmul.mubr.f32.gmra.mrb[0].mxu0 %v1585
  %v3618 = vpop.f32.mrb[0].mxu0
  %v3619 = vadd.f32 %v429, %v3618
  %v3620 = vpop.f32.mrb[0].mxu0
  %3621 = vmatprep.mubr.f32.mxu0 0.0
  %3622 = vmatmul.mubr.f32.gmra.mrb[0].mxu0 %v1588
  %v3623 = vpop.f32.mrb[0].mxu0
  %v3624 = vadd.f32 %v429, %v3623
  %v3625 = vpop.f32.mrb[0].mxu0
  %3626 = vmatprep.mubr.f32.mxu0 0.0
  %3627 = vmatmul.mubr.f32.gmra.mrb[0].mxu0 %v1591
  %v3628 = vpop.f32.mrb[0].mxu0
  %v3629 = vadd.f32 %v429, %v3628
  %v3630 = vpop.f32.mrb[0].mxu0
  %3631 = vmatprep.mubr.f32.mxu0 0.0
  %3632 = vmatmul.mubr.f32.gmra.mrb[0].mxu0 %v1594
  %v3633 = vpop.f32.mrb[0].mxu0
  %v3634 = vadd.f32 %v429, %v3633
  %v3635 = vpop.f32.mrb[0].mxu0
  %3636 = vmatprep.mubr.f32.mxu0 0.0
  %3637 = vmatmul.mubr.f32.gmra.mrb[0].mxu0 %v1597
  %v3638 = vpop.f32.mrb[0].mxu0
  %v3639 = vadd.f32 %v429, %v3638
  %v3640 = vpop.f32.mrb[0].mxu0
  %3641 = vmatprep.mubr.f32.mxu0 0.0
  %3642 = vmatmul.mubr.f32.gmra.mrb[0].mxu0 %v1600
  %v3643 = vpop.f32.mrb[0].mxu0
  %v3644 = vadd.f32 %v429, %v3643
  %v3645 = vpop.f32.mrb[0].mxu0
  %3646 = vmatprep.mubr.f32.mxu0 0.0
  %3647 = vmatmul.mubr.f32.gmra.mrb[0].mxu0 %v1603
  %v3648 = vpop.f32.mrb[0].mxu0
  %v3649 = vadd.f32 %v429, %v3648
  %v3650 = vpop.f32.mrb[0].mxu0
  %3651 = vmatprep.mubr.f32.mxu0 0.0
  %3652 = vmatmul.mubr.f32.gmra.mrb[0].mxu0 %v1606
  %v3653 = vpop.f32.mrb[0].mxu0
  %v3654 = vadd.f32 %v429, %v3653
  %v3655 = vpop.f32.mrb[0].mxu0
  %3656 = vmatprep.mubr.f32.mxu0 0.0
  %3657 = vmatmul.mubr.f32.gmra.mrb[0].mxu0 %v1609
  %v3658 = vpop.f32.mrb[0].mxu0
  %v3659 = vadd.f32 %v429, %v3658
  %v3660 = vpop.f32.mrb[0].mxu0
  %3661 = vmatprep.mubr.f32.mxu0 0.0
  %3662 = vmatmul.mubr.f32.gmra.mrb[0].mxu0 %v1612
  %v3663 = vpop.f32.mrb[0].mxu0
  %v3664 = vadd.f32 %v429, %v3663
  %v3665 = vpop.f32.mrb[0].mxu0
  %3666 = vmatprep.mubr.f32.mxu0 0.0
  %3667 = vmatmul.mubr.f32.gmra.mrb[0].mxu0 %v1615
  %v3668 = vpop.f32.mrb[0].mxu0
  %v3669 = vadd.f32 %v429, %v3668
  %v3670 = vpop.f32.mrb[0].mxu0
  %3671 = vmatprep.mubr.f32.mxu0 0.0
  %3672 = vmatmul.mubr.f32.gmra.mrb[0].mxu0 %v1618
  %v3673 = vpop.f32.mrb[0].mxu0
  %v3674 = vadd.f32 %v429, %v3673
  %v3675 = vpop.f32.mrb[0].mxu0
  %3676 = vmatprep.mubr.f32.mxu0 0.0
  %3677 = vmatmul.mubr.f32.gmra.mrb[0].mxu0 %v1621
  %v3678 = vpop.f32.mrb[0].mxu0
  %v3679 = vadd.f32 %v429, %v3678
  %v3680 = vpop.f32.mrb[0].mxu0
  %3681 = vmatprep.mubr.f32.mxu0 0.0
  %3682 = vmatmul.mubr.f32.gmra.mrb[0].mxu0 %v1624
  %v3683 = vpop.f32.mrb[0].mxu0
  %v3684 = vadd.f32 %v429, %v3683
  %v3685 = vpop.f32.mrb[0].mxu0
  %3686 = vmatprep.mubr.f32.mxu0 0.0
  %3687 = vmatmul.mubr.f32.gmra.mrb[0].mxu0 %v1627
  %v3688 = vpop.f32.mrb[0].mxu0
  %v3689 = vadd.f32 %v429, %v3688
  %v3690 = vpop.f32.mrb[0].mxu0
  %3691 = vmatprep.mubr.f32.mxu0 0.0
  %3692 = vmatmul.mubr.f32.gmra.mrb[0].mxu0 %v1630
  %v3693 = vpop.f32.mrb[0].mxu0
  %v3694 = vadd.f32 %v429, %v3693
  %v3695 = vpop.f32.mrb[0].mxu0
  %3696 = vdwg.mxu0
  %v3697 = vadd.f32 %v1699, %v1704
  %v3698 = vadd.f32 %v3697, %v1709
  %v3699 = vadd.f32 %v3698, %v1714
  %v3700 = vadd.f32 %v3699, %v1719
  %v3701 = vadd.f32 %v3700, %v1724
  %v3702 = vadd.f32 %v3701, %v1729
  %v3703 = vadd.f32 %v3702, %v1734
  %v3704 = vadd.f32 %v3703, %v1739
  %v3705 = vadd.f32 %v3704, %v1744
  %v3706 = vadd.f32 %v3705, %v1749
  %v3707 = vadd.f32 %v3706, %v1754
  %v3708 = vadd.f32 %v3707, %v1759
  %v3709 = vadd.f32 %v3708, %v1764
  %v3710 = vadd.f32 %v3709, %v1769
  %v3711 = vadd.f32 %v3710, %v1774
  %v3712 = vadd.f32 %v3711, %v1779
  %v3713 = vadd.f32 %v3712, %v1784
  %v3714 = vadd.f32 %v3713, %v1789
  %v3715 = vadd.f32 %v3714, %v1794
  %v3716 = vadd.f32 %v3715, %v1799
  %v3717 = vadd.f32 %v3716, %v1804
  %v3718 = vadd.f32 %v3717, %v1809
  %v3719 = vadd.f32 %v3718, %v1814
  %v3720 = vadd.f32 %v3719, %v1819
  %v3721 = vadd.f32 %v3720, %v1824
  %v3722 = vadd.f32 %v3721, %v1829
  %v3723 = vadd.f32 %v3722, %v1834
  %v3724 = vadd.f32 %v3723, %v1839
  %v3725 = vadd.f32 %v3724, %v1844
  %v3726 = vadd.f32 %v3725, %v1849
  %v3727 = vadd.f32 %v3726, %v1854
  %v3728 = vadd.f32 %v3727, %v1859
  %v3729 = vadd.f32 %v3728, %v1864
  %v3730 = vadd.f32 %v3729, %v1869
  %v3731 = vadd.f32 %v3730, %v1874
  %v3732 = vadd.f32 %v3731, %v1879
  %v3733 = vadd.f32 %v3732, %v1884
  %v3734 = vadd.f32 %v3733, %v1889
  %v3735 = vadd.f32 %v3734, %v1894
  %v3736 = vadd.f32 %v3735, %v1899
  %v3737 = vadd.f32 %v3736, %v1904
  %v3738 = vadd.f32 %v3737, %v1909
  %v3739 = vadd.f32 %v3738, %v1914
  %v3740 = vadd.f32 %v3739, %v1919
  %v3741 = vadd.f32 %v3740, %v1924
  %v3742 = vadd.f32 %v3741, %v1929
  %v3743 = vadd.f32 %v3742, %v1934
  %v3744 = vadd.f32 %v3743, %v1939
  %v3745 = vadd.f32 %v3744, %v1944
  %v3746 = vadd.f32 %v3745, %v1949
  %v3747 = vadd.f32 %v3746, %v1954
  %v3748 = vadd.f32 %v3747, %v1959
  %v3749 = vadd.f32 %v3748, %v1964
  %v3750 = vadd.f32 %v3749, %v1969
  %v3751 = vadd.f32 %v3750, %v1974
  %v3752 = vadd.f32 %v3751, %v1979
  %v3753 = vadd.f32 %v3752, %v1984
  %v3754 = vadd.f32 %v3753, %v1989
  %v3755 = vadd.f32 %v3754, %v1994
  %v3756 = vadd.f32 %v3755, %v1999
  %v3757 = vadd.f32 %v3756, %v2004
  %v3758 = vadd.f32 %v3757, %v2009
  %v3759 = vadd.f32 %v3758, %v2014
  %v3760 = vadd.f32 %v3759, %v2019
  %v3761 = vadd.f32 %v3760, %v2024
  %v3762 = vadd.f32 %v3761, %v2029
  %v3763 = vadd.f32 %v3762, %v2034
  %v3764 = vadd.f32 %v3763, %v2039
  %v3765 = vadd.f32 %v3764, %v2044
  %v3766 = vadd.f32 %v3765, %v2049
  %v3767 = vadd.f32 %v3766, %v2054
  %v3768 = vadd.f32 %v3767, %v2059
  %v3769 = vadd.f32 %v3768, %v2064
  %v3770 = vadd.f32 %v3769, %v2069
  %v3771 = vadd.f32 %v3770, %v2074
  %v3772 = vadd.f32 %v3771, %v2079
  %v3773 = vadd.f32 %v3772, %v2084
  %v3774 = vadd.f32 %v3773, %v2089
  %v3775 = vadd.f32 %v3774, %v2094
  %v3776 = vadd.f32 %v3775, %v2099
  %v3777 = vadd.f32 %v3776, %v2104
  %v3778 = vadd.f32 %v3777, %v2109
  %v3779 = vadd.f32 %v3778, %v2114
  %v3780 = vadd.f32 %v3779, %v2119
  %v3781 = vadd.f32 %v3780, %v2124
  %v3782 = vadd.f32 %v3781, %v2129
  %v3783 = vadd.f32 %v3782, %v2134
  %v3784 = vadd.f32 %v3783, %v2139
  %v3785 = vadd.f32 %v3784, %v2144
  %v3786 = vadd.f32 %v3785, %v2149
  %v3787 = vadd.f32 %v3786, %v2154
  %v3788 = vadd.f32 %v3787, %v2159
  %v3789 = vadd.f32 %v3788, %v2164
  %v3790 = vadd.f32 %v3789, %v2169
  %v3791 = vadd.f32 %v3790, %v2174
  %v3792 = vadd.f32 %v3791, %v2179
  %v3793 = vadd.f32 %v3792, %v2184
  %v3794 = vadd.f32 %v3793, %v2189
  %v3795 = vadd.f32 %v3794, %v2194
  %v3796 = vadd.f32 %v3795, %v2199
  %v3797 = vadd.f32 %v3796, %v2204
  %v3798 = vadd.f32 %v3797, %v2209
  %v3799 = vadd.f32 %v3798, %v2214
  %v3800 = vadd.f32 %v3799, %v2219
  %v3801 = vadd.f32 %v3800, %v2224
  %v3802 = vadd.f32 %v3801, %v2229
  %v3803 = vadd.f32 %v3802, %v2234
  %v3804 = vadd.f32 %v3803, %v2239
  %v3805 = vadd.f32 %v3804, %v2244
  %v3806 = vadd.f32 %v3805, %v2249
  %v3807 = vadd.f32 %v3806, %v2254
  %v3808 = vadd.f32 %v3807, %v2259
  %v3809 = vadd.f32 %v3808, %v2264
  %v3810 = vadd.f32 %v3809, %v2269
  %v3811 = vadd.f32 %v3810, %v2274
  %v3812 = vadd.f32 %v3811, %v2279
  %v3813 = vadd.f32 %v3812, %v2284
  %v3814 = vadd.f32 %v3813, %v2289
  %v3815 = vadd.f32 %v3814, %v2294
  %v3816 = vadd.f32 %v3815, %v2299
  %v3817 = vadd.f32 %v3816, %v2304
  %v3818 = vadd.f32 %v3817, %v2309
  %v3819 = vadd.f32 %v3818, %v2314
  %v3820 = vadd.f32 %v3819, %v2319
  %v3821 = vadd.f32 %v3820, %v2324
  %v3822 = vadd.f32 %v3821, %v2329
  %v3823 = vadd.f32 %v3822, %v2334
  %v3824 = vadd.f32 %v3823, %v2339
  %v3825 = vadd.f32 %v3824, %v2344
  %v3826 = vadd.f32 %v3825, %v2349
  %v3827 = vadd.f32 %v3826, %v2354
  %v3828 = vadd.f32 %v3827, %v2359
  %v3829 = vadd.f32 %v3828, %v2364
  %v3830 = vadd.f32 %v3829, %v2369
  %v3831 = vadd.f32 %v3830, %v2374
  %v3832 = vadd.f32 %v3831, %v2379
  %v3833 = vadd.f32 %v3832, %v2384
  %v3834 = vadd.f32 %v3833, %v2389
  %v3835 = vadd.f32 %v3834, %v2394
  %v3836 = vadd.f32 %v3835, %v2399
  %v3837 = vadd.f32 %v3836, %v2404
  %v3838 = vadd.f32 %v3837, %v2409
  %v3839 = vadd.f32 %v3838, %v2414
  %v3840 = vadd.f32 %v3839, %v2419
  %v3841 = vadd.f32 %v3840, %v2424
  %v3842 = vadd.f32 %v3841, %v2429
  %v3843 = vadd.f32 %v3842, %v2434
  %v3844 = vadd.f32 %v3843, %v2439
  %v3845 = vadd.f32 %v3844, %v2444
  %v3846 = vadd.f32 %v3845, %v2449
  %v3847 = vadd.f32 %v3846, %v2454
  %v3848 = vadd.f32 %v3847, %v2459
  %v3849 = vadd.f32 %v3848, %v2464
  %v3850 = vadd.f32 %v3849, %v2469
  %v3851 = vadd.f32 %v3850, %v2474
  %v3852 = vadd.f32 %v3851, %v2479
  %v3853 = vadd.f32 %v3852, %v2484
  %v3854 = vadd.f32 %v3853, %v2489
  %v3855 = vadd.f32 %v3854, %v2494
  %v3856 = vadd.f32 %v3855, %v2499
  %v3857 = vadd.f32 %v3856, %v2504
  %v3858 = vadd.f32 %v3857, %v2509
  %v3859 = vadd.f32 %v3858, %v2514
  %v3860 = vadd.f32 %v3859, %v2519
  %v3861 = vadd.f32 %v3860, %v2524
  %v3862 = vadd.f32 %v3861, %v2529
  %v3863 = vadd.f32 %v3862, %v2534
  %v3864 = vadd.f32 %v3863, %v2539
  %v3865 = vadd.f32 %v3864, %v2544
  %v3866 = vadd.f32 %v3865, %v2549
  %v3867 = vadd.f32 %v3866, %v2554
  %v3868 = vadd.f32 %v3867, %v2559
  %v3869 = vadd.f32 %v3868, %v2564
  %v3870 = vadd.f32 %v3869, %v2569
  %v3871 = vadd.f32 %v3870, %v2574
  %v3872 = vadd.f32 %v3871, %v2579
  %v3873 = vadd.f32 %v3872, %v2584
  %v3874 = vadd.f32 %v3873, %v2589
  %v3875 = vadd.f32 %v3874, %v2594
  %v3876 = vadd.f32 %v3875, %v2599
  %v3877 = vadd.f32 %v3876, %v2604
  %v3878 = vadd.f32 %v3877, %v2609
  %v3879 = vadd.f32 %v3878, %v2614
  %v3880 = vadd.f32 %v3879, %v2619
  %v3881 = vadd.f32 %v3880, %v2624
  %v3882 = vadd.f32 %v3881, %v2629
  %v3883 = vadd.f32 %v3882, %v2634
  %v3884 = vadd.f32 %v3883, %v2639
  %v3885 = vadd.f32 %v3884, %v2644
  %v3886 = vadd.f32 %v3885, %v2649
  %v3887 = vadd.f32 %v3886, %v2654
  %v3888 = vadd.f32 %v3887, %v2659
  %v3889 = vadd.f32 %v3888, %v2664
  %v3890 = vadd.f32 %v3889, %v2669
  %v3891 = vadd.f32 %v3890, %v2674
  %v3892 = vadd.f32 %v3891, %v2679
  %v3893 = vadd.f32 %v3892, %v2684
  %v3894 = vadd.f32 %v3893, %v2689
  %v3895 = vadd.f32 %v3894, %v2694
  %v3896 = vadd.f32 %v3895, %v2699
  %v3897 = vadd.f32 %v3896, %v2704
  %v3898 = vadd.f32 %v3897, %v2709
  %v3899 = vadd.f32 %v3898, %v2714
  %v3900 = vadd.f32 %v3899, %v2719
  %v3901 = vadd.f32 %v3900, %v2724
  %v3902 = vadd.f32 %v3901, %v2729
  %v3903 = vadd.f32 %v3902, %v2734
  %v3904 = vadd.f32 %v3903, %v2739
  %v3905 = vadd.f32 %v3904, %v2744
  %v3906 = vadd.f32 %v3905, %v2749
  %v3907 = vadd.f32 %v3906, %v2754
  %v3908 = vadd.f32 %v3907, %v2759
  %v3909 = vadd.f32 %v3908, %v2764
  %v3910 = vadd.f32 %v3909, %v2769
  %v3911 = vadd.f32 %v3910, %v2774
  %v3912 = vadd.f32 %v3911, %v2779
  %v3913 = vadd.f32 %v3912, %v2784
  %v3914 = vadd.f32 %v3913, %v2789
  %v3915 = vadd.f32 %v3914, %v2794
  %v3916 = vadd.f32 %v3915, %v2799
  %v3917 = vadd.f32 %v3916, %v2804
  %v3918 = vadd.f32 %v3917, %v2809
  %v3919 = vadd.f32 %v3918, %v2814
  %v3920 = vadd.f32 %v3919, %v2819
  %v3921 = vadd.f32 %v3920, %v2824
  %v3922 = vadd.f32 %v3921, %v2829
  %v3923 = vadd.f32 %v3922, %v2834
  %v3924 = vadd.f32 %v3923, %v2839
  %v3925 = vadd.f32 %v3924, %v2844
  %v3926 = vadd.f32 %v3925, %v2849
  %v3927 = vadd.f32 %v3926, %v2854
  %v3928 = vadd.f32 %v3927, %v2859
  %v3929 = vadd.f32 %v3928, %v2864
  %v3930 = vadd.f32 %v3929, %v2869
  %v3931 = vadd.f32 %v3930, %v2874
  %v3932 = vadd.f32 %v3931, %v2879
  %v3933 = vadd.f32 %v3932, %v2884
  %v3934 = vadd.f32 %v3933, %v2889
  %v3935 = vadd.f32 %v3934, %v2894
  %v3936 = vadd.f32 %v3935, %v2899
  %v3937 = vadd.f32 %v3936, %v2904
  %v3938 = vadd.f32 %v3937, %v2909
  %v3939 = vadd.f32 %v3938, %v2914
  %v3940 = vadd.f32 %v3939, %v2919
  %v3941 = vadd.f32 %v3940, %v2924
  %v3942 = vadd.f32 %v3941, %v2929
  %v3943 = vadd.f32 %v3942, %v2934
  %v3944 = vadd.f32 %v3943, %v2939
  %v3945 = vadd.f32 %v3944, %v2944
  %v3946 = vadd.f32 %v3945, %v2949
  %v3947 = vadd.f32 %v3946, %v2954
  %v3948 = vadd.f32 %v3947, %v2959
  %v3949 = vadd.f32 %v3948, %v2964
  %v3950 = vadd.f32 %v3949, %v2969
  %v3951 = vadd.f32 %v3950, %v2974
  %v3952 = vadd.f32 %v3951, %v2979
  %v3953 = vadd.f32 %v3952, %v2984
  %v3954 = vadd.f32 %v3953, %v2989
  %v3955 = vadd.f32 %v3954, %v2994
  %v3956 = vadd.f32 %v3955, %v2999
  %v3957 = vadd.f32 %v3956, %v3004
  %v3958 = vadd.f32 %v3957, %v3009
  %v3959 = vadd.f32 %v3958, %v3014
  %v3960 = vadd.f32 %v3959, %v3019
  %v3961 = vadd.f32 %v3960, %v3024
  %v3962 = vadd.f32 %v3961, %v3029
  %v3963 = vadd.f32 %v3962, %v3034
  %v3964 = vadd.f32 %v3963, %v3039
  %v3965 = vadd.f32 %v3964, %v3044
  %v3966 = vadd.f32 %v3965, %v3049
  %v3967 = vadd.f32 %v3966, %v3054
  %v3968 = vadd.f32 %v3967, %v3059
  %v3969 = vadd.f32 %v3968, %v3064
  %v3970 = vadd.f32 %v3969, %v3069
  %v3971 = vadd.f32 %v3970, %v3074
  %v3972 = vadd.f32 %v3971, %v3079
  %v3973 = vadd.f32 %v3972, %v3084
  %v3974 = vadd.f32 %v3973, %v3089
  %v3975 = vadd.f32 %v3974, %v3094
  %v3976 = vadd.f32 %v3975, %v3099
  %v3977 = vadd.f32 %v3976, %v3104
  %v3978 = vadd.f32 %v3977, %v3109
  %v3979 = vadd.f32 %v3978, %v3114
  %v3980 = vadd.f32 %v3979, %v3119
  %v3981 = vadd.f32 %v3980, %v3124
  %v3982 = vadd.f32 %v3981, %v3129
  %v3983 = vadd.f32 %v3982, %v3134
  %v3984 = vadd.f32 %v3983, %v3139
  %v3985 = vadd.f32 %v3984, %v3144
  %v3986 = vadd.f32 %v3985, %v3149
  %v3987 = vadd.f32 %v3986, %v3154
  %v3988 = vadd.f32 %v3987, %v3159
  %v3989 = vadd.f32 %v3988, %v3164
  %v3990 = vadd.f32 %v3989, %v3169
  %v3991 = vadd.f32 %v3990, %v3174
  %v3992 = vadd.f32 %v3991, %v3179
  %v3993 = vadd.f32 %v3992, %v3184
  %v3994 = vadd.f32 %v3993, %v3189
  %v3995 = vadd.f32 %v3994, %v3194
  %v3996 = vadd.f32 %v3995, %v3199
  %v3997 = vadd.f32 %v3996, %v3204
  %v3998 = vadd.f32 %v3997, %v3209
  %v3999 = vadd.f32 %v3998, %v3214
  %v4000 = vadd.f32 %v3999, %v3219
  %v4001 = vadd.f32 %v4000, %v3224
  %v4002 = vadd.f32 %v4001, %v3229
  %v4003 = vadd.f32 %v4002, %v3234
  %v4004 = vadd.f32 %v4003, %v3239
  %v4005 = vadd.f32 %v4004, %v3244
  %v4006 = vadd.f32 %v4005, %v3249
  %v4007 = vadd.f32 %v4006, %v3254
  %v4008 = vadd.f32 %v4007, %v3259
  %v4009 = vadd.f32 %v4008, %v3264
  %v4010 = vadd.f32 %v4009, %v3269
  %v4011 = vadd.f32 %v4010, %v3274
  %v4012 = vadd.f32 %v4011, %v3279
  %v4013 = vadd.f32 %v4012, %v3284
  %v4014 = vadd.f32 %v4013, %v3289
  %v4015 = vadd.f32 %v4014, %v3294
  %v4016 = vadd.f32 %v4015, %v3299
  %v4017 = vadd.f32 %v4016, %v3304
  %v4018 = vadd.f32 %v4017, %v3309
  %v4019 = vadd.f32 %v4018, %v3314
  %v4020 = vadd.f32 %v4019, %v3319
  %v4021 = vadd.f32 %v4020, %v3324
  %v4022 = vadd.f32 %v4021, %v3329
  %v4023 = vadd.f32 %v4022, %v3334
  %v4024 = vadd.f32 %v4023, %v3339
  %v4025 = vadd.f32 %v4024, %v3344
  %v4026 = vadd.f32 %v4025, %v3349
  %v4027 = vadd.f32 %v4026, %v3354
  %v4028 = vadd.f32 %v4027, %v3359
  %v4029 = vadd.f32 %v4028, %v3364
  %v4030 = vadd.f32 %v4029, %v3369
  %v4031 = vadd.f32 %v4030, %v3374
  %v4032 = vadd.f32 %v4031, %v3379
  %v4033 = vadd.f32 %v4032, %v3384
  %v4034 = vadd.f32 %v4033, %v3389
  %v4035 = vadd.f32 %v4034, %v3394
  %v4036 = vadd.f32 %v4035, %v3399
  %v4037 = vadd.f32 %v4036, %v3404
  %v4038 = vadd.f32 %v4037, %v3409
  %v4039 = vadd.f32 %v4038, %v3414
  %v4040 = vadd.f32 %v4039, %v3419
  %v4041 = vadd.f32 %v4040, %v3424
  %v4042 = vadd.f32 %v4041, %v3429
  %v4043 = vadd.f32 %v4042, %v3434
  %v4044 = vadd.f32 %v4043, %v3439
  %v4045 = vadd.f32 %v4044, %v3444
  %v4046 = vadd.f32 %v4045, %v3449
  %v4047 = vadd.f32 %v4046, %v3454
  %v4048 = vadd.f32 %v4047, %v3459
  %v4049 = vadd.f32 %v4048, %v3464
  %v4050 = vadd.f32 %v4049, %v3469
  %v4051 = vadd.f32 %v4050, %v3474
  %v4052 = vadd.f32 %v4051, %v3479
  %v4053 = vadd.f32 %v4052, %v3484
  %v4054 = vadd.f32 %v4053, %v3489
  %v4055 = vadd.f32 %v4054, %v3494
  %v4056 = vadd.f32 %v4055, %v3499
  %v4057 = vadd.f32 %v4056, %v3504
  %v4058 = vadd.f32 %v4057, %v3509
  %v4059 = vadd.f32 %v4058, %v3514
  %v4060 = vadd.f32 %v4059, %v3519
  %v4061 = vadd.f32 %v4060, %v3524
  %v4062 = vadd.f32 %v4061, %v3529
  %v4063 = vadd.f32 %v4062, %v3534
  %v4064 = vadd.f32 %v4063, %v3539
  %v4065 = vadd.f32 %v4064, %v3544
  %v4066 = vadd.f32 %v4065, %v3549
  %v4067 = vadd.f32 %v4066, %v3554
  %v4068 = vadd.f32 %v4067, %v3559
  %v4069 = vadd.f32 %v4068, %v3564
  %v4070 = vadd.f32 %v4069, %v3569
  %v4071 = vadd.f32 %v4070, %v3574
  %v4072 = vadd.f32 %v4071, %v3579
  %v4073 = vadd.f32 %v4072, %v3584
  %v4074 = vadd.f32 %v4073, %v3589
  %v4075 = vadd.f32 %v4074, %v3594
  %v4076 = vadd.f32 %v4075, %v3599
  %v4077 = vadd.f32 %v4076, %v3604
  %v4078 = vadd.f32 %v4077, %v3609
  %v4079 = vadd.f32 %v4078, %v3614
  %v4080 = vadd.f32 %v4079, %v3619
  %v4081 = vadd.f32 %v4080, %v3624
  %v4082 = vadd.f32 %v4081, %v3629
  %v4083 = vadd.f32 %v4082, %v3634
  %v4084 = vadd.f32 %v4083, %v3639
  %v4085 = vadd.f32 %v4084, %v3644
  %v4086 = vadd.f32 %v4085, %v3649
  %v4087 = vadd.f32 %v4086, %v3654
  %v4088 = vadd.f32 %v4087, %v3659
  %v4089 = vadd.f32 %v4088, %v3664
  %v4090 = vadd.f32 %v4089, %v3669
  %v4091 = vadd.f32 %v4090, %v3674
  %v4092 = vadd.f32 %v4091, %v3679
  %v4093 = vadd.f32 %v4092, %v3684
  %v4094 = vadd.f32 %v4093, %v3689
  %v4095 = vadd.f32 %v4094, %v3694
  %v4096 = vrot.slane %v4095, 4
  %v4097 = vadd.f32 %v4095, %v4096
  %v4098 = vrot.slane %v4097, 2
  %v4099 = vadd.f32 %v4097, %v4098
  %v4100 = vrot.slane %v4099, 1
  %v4101 = vadd.f32 %v4099, %v4100
  %v4102 = vrcp.pop 3200.0
  %v4103 = vmul.f32 %v4101, %v4102
  %v4104 = vsub.f32 %v1699, %v4103
  %v4105 = vsub.f32 %v1704, %v4103
  %v4106 = vsub.f32 %v1709, %v4103
  %v4107 = vsub.f32 %v1714, %v4103
  %v4108 = vsub.f32 %v1719, %v4103
  %v4109 = vsub.f32 %v1724, %v4103
  %v4110 = vsub.f32 %v1729, %v4103
  %v4111 = vsub.f32 %v1734, %v4103
  %v4112 = vsub.f32 %v1739, %v4103
  %v4113 = vsub.f32 %v1744, %v4103
  %v4114 = vsub.f32 %v1749, %v4103
  %v4115 = vsub.f32 %v1754, %v4103
  %v4116 = vsub.f32 %v1759, %v4103
  %v4117 = vsub.f32 %v1764, %v4103
  %v4118 = vsub.f32 %v1769, %v4103
  %v4119 = vsub.f32 %v1774, %v4103
  %v4120 = vsub.f32 %v1779, %v4103
  %v4121 = vsub.f32 %v1784, %v4103
  %v4122 = vsub.f32 %v1789, %v4103
  %v4123 = vsub.f32 %v1794, %v4103
  %v4124 = vsub.f32 %v1799, %v4103
  %v4125 = vsub.f32 %v1804, %v4103
  %v4126 = vsub.f32 %v1809, %v4103
  %v4127 = vsub.f32 %v1814, %v4103
  %v4128 = vsub.f32 %v1819, %v4103
  %v4129 = vsub.f32 %v1824, %v4103
  %v4130 = vsub.f32 %v1829, %v4103
  %v4131 = vsub.f32 %v1834, %v4103
  %v4132 = vsub.f32 %v1839, %v4103
  %v4133 = vsub.f32 %v1844, %v4103
  %v4134 = vsub.f32 %v1849, %v4103
  %v4135 = vsub.f32 %v1854, %v4103
  %v4136 = vsub.f32 %v1859, %v4103
  %v4137 = vsub.f32 %v1864, %v4103
  %v4138 = vsub.f32 %v1869, %v4103
  %v4139 = vsub.f32 %v1874, %v4103
  %v4140 = vsub.f32 %v1879, %v4103
  %v4141 = vsub.f32 %v1884, %v4103
  %v4142 = vsub.f32 %v1889, %v4103
  %v4143 = vsub.f32 %v1894, %v4103
  %v4144 = vsub.f32 %v1899, %v4103
  %v4145 = vsub.f32 %v1904, %v4103
  %v4146 = vsub.f32 %v1909, %v4103
  %v4147 = vsub.f32 %v1914, %v4103
  %v4148 = vsub.f32 %v1919, %v4103
  %v4149 = vsub.f32 %v1924, %v4103
  %v4150 = vsub.f32 %v1929, %v4103
  %v4151 = vsub.f32 %v1934, %v4103
  %v4152 = vsub.f32 %v1939, %v4103
  %v4153 = vsub.f32 %v1944, %v4103
  %v4154 = vsub.f32 %v1949, %v4103
  %v4155 = vsub.f32 %v1954, %v4103
  %v4156 = vsub.f32 %v1959, %v4103
  %v4157 = vsub.f32 %v1964, %v4103
  %v4158 = vsub.f32 %v1969, %v4103
  %v4159 = vsub.f32 %v1974, %v4103
  %v4160 = vsub.f32 %v1979, %v4103
  %v4161 = vsub.f32 %v1984, %v4103
  %v4162 = vsub.f32 %v1989, %v4103
  %v4163 = vsub.f32 %v1994, %v4103
  %v4164 = vsub.f32 %v1999, %v4103
  %v4165 = vsub.f32 %v2004, %v4103
  %v4166 = vsub.f32 %v2009, %v4103
  %v4167 = vsub.f32 %v2014, %v4103
  %v4168 = vsub.f32 %v2019, %v4103
  %v4169 = vsub.f32 %v2024, %v4103
  %v4170 = vsub.f32 %v2029, %v4103
  %v4171 = vsub.f32 %v2034, %v4103
  %v4172 = vsub.f32 %v2039, %v4103
  %v4173 = vsub.f32 %v2044, %v4103
  %v4174 = vsub.f32 %v2049, %v4103
  %v4175 = vsub.f32 %v2054, %v4103
  %v4176 = vsub.f32 %v2059, %v4103
  %v4177 = vsub.f32 %v2064, %v4103
  %v4178 = vsub.f32 %v2069, %v4103
  %v4179 = vsub.f32 %v2074, %v4103
  %v4180 = vsub.f32 %v2079, %v4103
  %v4181 = vsub.f32 %v2084, %v4103
  %v4182 = vsub.f32 %v2089, %v4103
  %v4183 = vsub.f32 %v2094, %v4103
  %v4184 = vsub.f32 %v2099, %v4103
  %v4185 = vsub.f32 %v2104, %v4103
  %v4186 = vsub.f32 %v2109, %v4103
  %v4187 = vsub.f32 %v2114, %v4103
  %v4188 = vsub.f32 %v2119, %v4103
  %v4189 = vsub.f32 %v2124, %v4103
  %v4190 = vsub.f32 %v2129, %v4103
  %v4191 = vsub.f32 %v2134, %v4103
  %v4192 = vsub.f32 %v2139, %v4103
  %v4193 = vsub.f32 %v2144, %v4103
  %v4194 = vsub.f32 %v2149, %v4103
  %v4195 = vsub.f32 %v2154, %v4103
  %v4196 = vsub.f32 %v2159, %v4103
  %v4197 = vsub.f32 %v2164, %v4103
  %v4198 = vsub.f32 %v2169, %v4103
  %v4199 = vsub.f32 %v2174, %v4103
  %v4200 = vsub.f32 %v2179, %v4103
  %v4201 = vsub.f32 %v2184, %v4103
  %v4202 = vsub.f32 %v2189, %v4103
  %v4203 = vsub.f32 %v2194, %v4103
  %v4204 = vsub.f32 %v2199, %v4103
  %v4205 = vsub.f32 %v2204, %v4103
  %v4206 = vsub.f32 %v2209, %v4103
  %v4207 = vsub.f32 %v2214, %v4103
  %v4208 = vsub.f32 %v2219, %v4103
  %v4209 = vsub.f32 %v2224, %v4103
  %v4210 = vsub.f32 %v2229, %v4103
  %v4211 = vsub.f32 %v2234, %v4103
  %v4212 = vsub.f32 %v2239, %v4103
  %v4213 = vsub.f32 %v2244, %v4103
  %v4214 = vsub.f32 %v2249, %v4103
  %v4215 = vsub.f32 %v2254, %v4103
  %v4216 = vsub.f32 %v2259, %v4103
  %v4217 = vsub.f32 %v2264, %v4103
  %v4218 = vsub.f32 %v2269, %v4103
  %v4219 = vsub.f32 %v2274, %v4103
  %v4220 = vsub.f32 %v2279, %v4103
  %v4221 = vsub.f32 %v2284, %v4103
  %v4222 = vsub.f32 %v2289, %v4103
  %v4223 = vsub.f32 %v2294, %v4103
  %v4224 = vsub.f32 %v2299, %v4103
  %v4225 = vsub.f32 %v2304, %v4103
  %v4226 = vsub.f32 %v2309, %v4103
  %v4227 = vsub.f32 %v2314, %v4103
  %v4228 = vsub.f32 %v2319, %v4103
  %v4229 = vsub.f32 %v2324, %v4103
  %v4230 = vsub.f32 %v2329, %v4103
  %v4231 = vsub.f32 %v2334, %v4103
  %v4232 = vsub.f32 %v2339, %v4103
  %v4233 = vsub.f32 %v2344, %v4103
  %v4234 = vsub.f32 %v2349, %v4103
  %v4235 = vsub.f32 %v2354, %v4103
  %v4236 = vsub.f32 %v2359, %v4103
  %v4237 = vsub.f32 %v2364, %v4103
  %v4238 = vsub.f32 %v2369, %v4103
  %v4239 = vsub.f32 %v2374, %v4103
  %v4240 = vsub.f32 %v2379, %v4103
  %v4241 = vsub.f32 %v2384, %v4103
  %v4242 = vsub.f32 %v2389, %v4103
  %v4243 = vsub.f32 %v2394, %v4103
  %v4244 = vsub.f32 %v2399, %v4103
  %v4245 = vsub.f32 %v2404, %v4103
  %v4246 = vsub.f32 %v2409, %v4103
  %v4247 = vsub.f32 %v2414, %v4103
  %v4248 = vsub.f32 %v2419, %v4103
  %v4249 = vsub.f32 %v2424, %v4103
  %v4250 = vsub.f32 %v2429, %v4103
  %v4251 = vsub.f32 %v2434, %v4103
  %v4252 = vsub.f32 %v2439, %v4103
  %v4253 = vsub.f32 %v2444, %v4103
  %v4254 = vsub.f32 %v2449, %v4103
  %v4255 = vsub.f32 %v2454, %v4103
  %v4256 = vsub.f32 %v2459, %v4103
  %v4257 = vsub.f32 %v2464, %v4103
  %v4258 = vsub.f32 %v2469, %v4103
  %v4259 = vsub.f32 %v2474, %v4103
  %v4260 = vsub.f32 %v2479, %v4103
  %v4261 = vsub.f32 %v2484, %v4103
  %v4262 = vsub.f32 %v2489, %v4103
  %v4263 = vsub.f32 %v2494, %v4103
  %v4264 = vsub.f32 %v2499, %v4103
  %v4265 = vsub.f32 %v2504, %v4103
  %v4266 = vsub.f32 %v2509, %v4103
  %v4267 = vsub.f32 %v2514, %v4103
  %v4268 = vsub.f32 %v2519, %v4103
  %v4269 = vsub.f32 %v2524, %v4103
  %v4270 = vsub.f32 %v2529, %v4103
  %v4271 = vsub.f32 %v2534, %v4103
  %v4272 = vsub.f32 %v2539, %v4103
  %v4273 = vsub.f32 %v2544, %v4103
  %v4274 = vsub.f32 %v2549, %v4103
  %v4275 = vsub.f32 %v2554, %v4103
  %v4276 = vsub.f32 %v2559, %v4103
  %v4277 = vsub.f32 %v2564, %v4103
  %v4278 = vsub.f32 %v2569, %v4103
  %v4279 = vsub.f32 %v2574, %v4103
  %v4280 = vsub.f32 %v2579, %v4103
  %v4281 = vsub.f32 %v2584, %v4103
  %v4282 = vsub.f32 %v2589, %v4103
  %v4283 = vsub.f32 %v2594, %v4103
  %v4284 = vsub.f32 %v2599, %v4103
  %v4285 = vsub.f32 %v2604, %v4103
  %v4286 = vsub.f32 %v2609, %v4103
  %v4287 = vsub.f32 %v2614, %v4103
  %v4288 = vsub.f32 %v2619, %v4103
  %v4289 = vsub.f32 %v2624, %v4103
  %v4290 = vsub.f32 %v2629, %v4103
  %v4291 = vsub.f32 %v2634, %v4103
  %v4292 = vsub.f32 %v2639, %v4103
  %v4293 = vsub.f32 %v2644, %v4103
  %v4294 = vsub.f32 %v2649, %v4103
  %v4295 = vsub.f32 %v2654, %v4103
  %v4296 = vsub.f32 %v2659, %v4103
  %v4297 = vsub.f32 %v2664, %v4103
  %v4298 = vsub.f32 %v2669, %v4103
  %v4299 = vsub.f32 %v2674, %v4103
  %v4300 = vsub.f32 %v2679, %v4103
  %v4301 = vsub.f32 %v2684, %v4103
  %v4302 = vsub.f32 %v2689, %v4103
  %v4303 = vsub.f32 %v2694, %v4103
  %v4304 = vsub.f32 %v2699, %v4103
  %v4305 = vsub.f32 %v2704, %v4103
  %v4306 = vsub.f32 %v2709, %v4103
  %v4307 = vsub.f32 %v2714, %v4103
  %v4308 = vsub.f32 %v2719, %v4103
  %v4309 = vsub.f32 %v2724, %v4103
  %v4310 = vsub.f32 %v2729, %v4103
  %v4311 = vsub.f32 %v2734, %v4103
  %v4312 = vsub.f32 %v2739, %v4103
  %v4313 = vsub.f32 %v2744, %v4103
  %v4314 = vsub.f32 %v2749, %v4103
  %v4315 = vsub.f32 %v2754, %v4103
  %v4316 = vsub.f32 %v2759, %v4103
  %v4317 = vsub.f32 %v2764, %v4103
  %v4318 = vsub.f32 %v2769, %v4103
  %v4319 = vsub.f32 %v2774, %v4103
  %v4320 = vsub.f32 %v2779, %v4103
  %v4321 = vsub.f32 %v2784, %v4103
  %v4322 = vsub.f32 %v2789, %v4103
  %v4323 = vsub.f32 %v2794, %v4103
  %v4324 = vsub.f32 %v2799, %v4103
  %v4325 = vsub.f32 %v2804, %v4103
  %v4326 = vsub.f32 %v2809, %v4103
  %v4327 = vsub.f32 %v2814, %v4103
  %v4328 = vsub.f32 %v2819, %v4103
  %v4329 = vsub.f32 %v2824, %v4103
  %v4330 = vsub.f32 %v2829, %v4103
  %v4331 = vsub.f32 %v2834, %v4103
  %v4332 = vsub.f32 %v2839, %v4103
  %v4333 = vsub.f32 %v2844, %v4103
  %v4334 = vsub.f32 %v2849, %v4103
  %v4335 = vsub.f32 %v2854, %v4103
  %v4336 = vsub.f32 %v2859, %v4103
  %v4337 = vsub.f32 %v2864, %v4103
  %v4338 = vsub.f32 %v2869, %v4103
  %v4339 = vsub.f32 %v2874, %v4103
  %v4340 = vsub.f32 %v2879, %v4103
  %v4341 = vsub.f32 %v2884, %v4103
  %v4342 = vsub.f32 %v2889, %v4103
  %v4343 = vsub.f32 %v2894, %v4103
  %v4344 = vsub.f32 %v2899, %v4103
  %v4345 = vsub.f32 %v2904, %v4103
  %v4346 = vsub.f32 %v2909, %v4103
  %v4347 = vsub.f32 %v2914, %v4103
  %v4348 = vsub.f32 %v2919, %v4103
  %v4349 = vsub.f32 %v2924, %v4103
  %v4350 = vsub.f32 %v2929, %v4103
  %v4351 = vsub.f32 %v2934, %v4103
  %v4352 = vsub.f32 %v2939, %v4103
  %v4353 = vsub.f32 %v2944, %v4103
  %v4354 = vsub.f32 %v2949, %v4103
  %v4355 = vsub.f32 %v2954, %v4103
  %v4356 = vsub.f32 %v2959, %v4103
  %v4357 = vsub.f32 %v2964, %v4103
  %v4358 = vsub.f32 %v2969, %v4103
  %v4359 = vsub.f32 %v2974, %v4103
  %v4360 = vsub.f32 %v2979, %v4103
  %v4361 = vsub.f32 %v2984, %v4103
  %v4362 = vsub.f32 %v2989, %v4103
  %v4363 = vsub.f32 %v2994, %v4103
  %v4364 = vsub.f32 %v2999, %v4103
  %v4365 = vsub.f32 %v3004, %v4103
  %v4366 = vsub.f32 %v3009, %v4103
  %v4367 = vsub.f32 %v3014, %v4103
  %v4368 = vsub.f32 %v3019, %v4103
  %v4369 = vsub.f32 %v3024, %v4103
  %v4370 = vsub.f32 %v3029, %v4103
  %v4371 = vsub.f32 %v3034, %v4103
  %v4372 = vsub.f32 %v3039, %v4103
  %v4373 = vsub.f32 %v3044, %v4103
  %v4374 = vsub.f32 %v3049, %v4103
  %v4375 = vsub.f32 %v3054, %v4103
  %v4376 = vsub.f32 %v3059, %v4103
  %v4377 = vsub.f32 %v3064, %v4103
  %v4378 = vsub.f32 %v3069, %v4103
  %v4379 = vsub.f32 %v3074, %v4103
  %v4380 = vsub.f32 %v3079, %v4103
  %v4381 = vsub.f32 %v3084, %v4103
  %v4382 = vsub.f32 %v3089, %v4103
  %v4383 = vsub.f32 %v3094, %v4103
  %v4384 = vsub.f32 %v3099, %v4103
  %v4385 = vsub.f32 %v3104, %v4103
  %v4386 = vsub.f32 %v3109, %v4103
  %v4387 = vsub.f32 %v3114, %v4103
  %v4388 = vsub.f32 %v3119, %v4103
  %v4389 = vsub.f32 %v3124, %v4103
  %v4390 = vsub.f32 %v3129, %v4103
  %v4391 = vsub.f32 %v3134, %v4103
  %v4392 = vsub.f32 %v3139, %v4103
  %v4393 = vsub.f32 %v3144, %v4103
  %v4394 = vsub.f32 %v3149, %v4103
  %v4395 = vsub.f32 %v3154, %v4103
  %v4396 = vsub.f32 %v3159, %v4103
  %v4397 = vsub.f32 %v3164, %v4103
  %v4398 = vsub.f32 %v3169, %v4103
  %v4399 = vsub.f32 %v3174, %v4103
  %v4400 = vsub.f32 %v3179, %v4103
  %v4401 = vsub.f32 %v3184, %v4103
  %v4402 = vsub.f32 %v3189, %v4103
  %v4403 = vsub.f32 %v3194, %v4103
  %v4404 = vsub.f32 %v3199, %v4103
  %v4405 = vsub.f32 %v3204, %v4103
  %v4406 = vsub.f32 %v3209, %v4103
  %v4407 = vsub.f32 %v3214, %v4103
  %v4408 = vsub.f32 %v3219, %v4103
  %v4409 = vsub.f32 %v3224, %v4103
  %v4410 = vsub.f32 %v3229, %v4103
  %v4411 = vsub.f32 %v3234, %v4103
  %v4412 = vsub.f32 %v3239, %v4103
  %v4413 = vsub.f32 %v3244, %v4103
  %v4414 = vsub.f32 %v3249, %v4103
  %v4415 = vsub.f32 %v3254, %v4103
  %v4416 = vsub.f32 %v3259, %v4103
  %v4417 = vsub.f32 %v3264, %v4103
  %v4418 = vsub.f32 %v3269, %v4103
  %v4419 = vsub.f32 %v3274, %v4103
  %v4420 = vsub.f32 %v3279, %v4103
  %v4421 = vsub.f32 %v3284, %v4103
  %v4422 = vsub.f32 %v3289, %v4103
  %v4423 = vsub.f32 %v3294, %v4103
  %v4424 = vsub.f32 %v3299, %v4103
  %v4425 = vsub.f32 %v3304, %v4103
  %v4426 = vsub.f32 %v3309, %v4103
  %v4427 = vsub.f32 %v3314, %v4103
  %v4428 = vsub.f32 %v3319, %v4103
  %v4429 = vsub.f32 %v3324, %v4103
  %v4430 = vsub.f32 %v3329, %v4103
  %v4431 = vsub.f32 %v3334, %v4103
  %v4432 = vsub.f32 %v3339, %v4103
  %v4433 = vsub.f32 %v3344, %v4103
  %v4434 = vsub.f32 %v3349, %v4103
  %v4435 = vsub.f32 %v3354, %v4103
  %v4436 = vsub.f32 %v3359, %v4103
  %v4437 = vsub.f32 %v3364, %v4103
  %v4438 = vsub.f32 %v3369, %v4103
  %v4439 = vsub.f32 %v3374, %v4103
  %v4440 = vsub.f32 %v3379, %v4103
  %v4441 = vsub.f32 %v3384, %v4103
  %v4442 = vsub.f32 %v3389, %v4103
  %v4443 = vsub.f32 %v3394, %v4103
  %v4444 = vsub.f32 %v3399, %v4103
  %v4445 = vsub.f32 %v3404, %v4103
  %v4446 = vsub.f32 %v3409, %v4103
  %v4447 = vsub.f32 %v3414, %v4103
  %v4448 = vsub.f32 %v3419, %v4103
  %v4449 = vsub.f32 %v3424, %v4103
  %v4450 = vsub.f32 %v3429, %v4103
  %v4451 = vsub.f32 %v3434, %v4103
  %v4452 = vsub.f32 %v3439, %v4103
  %v4453 = vsub.f32 %v3444, %v4103
  %v4454 = vsub.f32 %v3449, %v4103
  %v4455 = vsub.f32 %v3454, %v4103
  %v4456 = vsub.f32 %v3459, %v4103
  %v4457 = vsub.f32 %v3464, %v4103
  %v4458 = vsub.f32 %v3469, %v4103
  %v4459 = vsub.f32 %v3474, %v4103
  %v4460 = vsub.f32 %v3479, %v4103
  %v4461 = vsub.f32 %v3484, %v4103
  %v4462 = vsub.f32 %v3489, %v4103
  %v4463 = vsub.f32 %v3494, %v4103
  %v4464 = vsub.f32 %v3499, %v4103
  %v4465 = vsub.f32 %v3504, %v4103
  %v4466 = vsub.f32 %v3509, %v4103
  %v4467 = vsub.f32 %v3514, %v4103
  %v4468 = vsub.f32 %v3519, %v4103
  %v4469 = vsub.f32 %v3524, %v4103
  %v4470 = vsub.f32 %v3529, %v4103
  %v4471 = vsub.f32 %v3534, %v4103
  %v4472 = vsub.f32 %v3539, %v4103
  %v4473 = vsub.f32 %v3544, %v4103
  %v4474 = vsub.f32 %v3549, %v4103
  %v4475 = vsub.f32 %v3554, %v4103
  %v4476 = vsub.f32 %v3559, %v4103
  %v4477 = vsub.f32 %v3564, %v4103
  %v4478 = vsub.f32 %v3569, %v4103
  %v4479 = vsub.f32 %v3574, %v4103
  %v4480 = vsub.f32 %v3579, %v4103
  %v4481 = vsub.f32 %v3584, %v4103
  %v4482 = vsub.f32 %v3589, %v4103
  %v4483 = vsub.f32 %v3594, %v4103
  %v4484 = vsub.f32 %v3599, %v4103
  %v4485 = vsub.f32 %v3604, %v4103
  %v4486 = vsub.f32 %v3609, %v4103
  %v4487 = vsub.f32 %v3614, %v4103
  %v4488 = vsub.f32 %v3619, %v4103
  %v4489 = vsub.f32 %v3624, %v4103
  %v4490 = vsub.f32 %v3629, %v4103
  %v4491 = vsub.f32 %v3634, %v4103
  %v4492 = vsub.f32 %v3639, %v4103
  %v4493 = vsub.f32 %v3644, %v4103
  %v4494 = vsub.f32 %v3649, %v4103
  %v4495 = vsub.f32 %v3654, %v4103
  %v4496 = vsub.f32 %v3659, %v4103
  %v4497 = vsub.f32 %v3664, %v4103
  %v4498 = vsub.f32 %v3669, %v4103
  %v4499 = vsub.f32 %v3674, %v4103
  %v4500 = vsub.f32 %v3679, %v4103
  %v4501 = vsub.f32 %v3684, %v4103
  %v4502 = vsub.f32 %v3689, %v4103
  %v4503 = vsub.f32 %v3694, %v4103
  %v4504 = vmul.f32 %v4104, %v4104
  %v4505 = vmul.f32 %v4105, %v4105
  %v4506 = vmul.f32 %v4106, %v4106
  %v4507 = vmul.f32 %v4107, %v4107
  %v4508 = vmul.f32 %v4108, %v4108
  %v4509 = vmul.f32 %v4109, %v4109
  %v4510 = vmul.f32 %v4110, %v4110
  %v4511 = vmul.f32 %v4111, %v4111
  %v4512 = vmul.f32 %v4112, %v4112
  %v4513 = vmul.f32 %v4113, %v4113
  %v4514 = vmul.f32 %v4114, %v4114
  %v4515 = vmul.f32 %v4115, %v4115
  %v4516 = vmul.f32 %v4116, %v4116
  %v4517 = vmul.f32 %v4117, %v4117
  %v4518 = vmul.f32 %v4118, %v4118
  %v4519 = vmul.f32 %v4119, %v4119
  %v4520 = vmul.f32 %v4120, %v4120
  %v4521 = vmul.f32 %v4121, %v4121
  %v4522 = vmul.f32 %v4122, %v4122
  %v4523 = vmul.f32 %v4123, %v4123
  %v4524 = vmul.f32 %v4124, %v4124
  %v4525 = vmul.f32 %v4125, %v4125
  %v4526 = vmul.f32 %v4126, %v4126
  %v4527 = vmul.f32 %v4127, %v4127
  %v4528 = vmul.f32 %v4128, %v4128
  %v4529 = vmul.f32 %v4129, %v4129
  %v4530 = vmul.f32 %v4130, %v4130
  %v4531 = vmul.f32 %v4131, %v4131
  %v4532 = vmul.f32 %v4132, %v4132
  %v4533 = vmul.f32 %v4133, %v4133
  %v4534 = vmul.f32 %v4134, %v4134
  %v4535 = vmul.f32 %v4135, %v4135
  %v4536 = vmul.f32 %v4136, %v4136
  %v4537 = vmul.f32 %v4137, %v4137
  %v4538 = vmul.f32 %v4138, %v4138
  %v4539 = vmul.f32 %v4139, %v4139
  %v4540 = vmul.f32 %v4140, %v4140
  %v4541 = vmul.f32 %v4141, %v4141
  %v4542 = vmul.f32 %v4142, %v4142
  %v4543 = vmul.f32 %v4143, %v4143
  %v4544 = vmul.f32 %v4144, %v4144
  %v4545 = vmul.f32 %v4145, %v4145
  %v4546 = vmul.f32 %v4146, %v4146
  %v4547 = vmul.f32 %v4147, %v4147
  %v4548 = vmul.f32 %v4148, %v4148
  %v4549 = vmul.f32 %v4149, %v4149
  %v4550 = vmul.f32 %v4150, %v4150
  %v4551 = vmul.f32 %v4151, %v4151
  %v4552 = vmul.f32 %v4152, %v4152
  %v4553 = vmul.f32 %v4153, %v4153
  %v4554 = vmul.f32 %v4154, %v4154
  %v4555 = vmul.f32 %v4155, %v4155
  %v4556 = vmul.f32 %v4156, %v4156
  %v4557 = vmul.f32 %v4157, %v4157
  %v4558 = vmul.f32 %v4158, %v4158
  %v4559 = vmul.f32 %v4159, %v4159
  %v4560 = vmul.f32 %v4160, %v4160
  %v4561 = vmul.f32 %v4161, %v4161
  %v4562 = vmul.f32 %v4162, %v4162
  %v4563 = vmul.f32 %v4163, %v4163
  %v4564 = vmul.f32 %v4164, %v4164
  %v4565 = vmul.f32 %v4165, %v4165
  %v4566 = vmul.f32 %v4166, %v4166
  %v4567 = vmul.f32 %v4167, %v4167
  %v4568 = vmul.f32 %v4168, %v4168
  %v4569 = vmul.f32 %v4169, %v4169
  %v4570 = vmul.f32 %v4170, %v4170
  %v4571 = vmul.f32 %v4171, %v4171
  %v4572 = vmul.f32 %v4172, %v4172
  %v4573 = vmul.f32 %v4173, %v4173
  %v4574 = vmul.f32 %v4174, %v4174
  %v4575 = vmul.f32 %v4175, %v4175
  %v4576 = vmul.f32 %v4176, %v4176
  %v4577 = vmul.f32 %v4177, %v4177
  %v4578 = vmul.f32 %v4178, %v4178
  %v4579 = vmul.f32 %v4179, %v4179
  %v4580 = vmul.f32 %v4180, %v4180
  %v4581 = vmul.f32 %v4181, %v4181
  %v4582 = vmul.f32 %v4182, %v4182
  %v4583 = vmul.f32 %v4183, %v4183
  %v4584 = vmul.f32 %v4184, %v4184
  %v4585 = vmul.f32 %v4185, %v4185
  %v4586 = vmul.f32 %v4186, %v4186
  %v4587 = vmul.f32 %v4187, %v4187
  %v4588 = vmul.f32 %v4188, %v4188
  %v4589 = vmul.f32 %v4189, %v4189
  %v4590 = vmul.f32 %v4190, %v4190
  %v4591 = vmul.f32 %v4191, %v4191
  %v4592 = vmul.f32 %v4192, %v4192
  %v4593 = vmul.f32 %v4193, %v4193
  %v4594 = vmul.f32 %v4194, %v4194
  %v4595 = vmul.f32 %v4195, %v4195
  %v4596 = vmul.f32 %v4196, %v4196
  %v4597 = vmul.f32 %v4197, %v4197
  %v4598 = vmul.f32 %v4198, %v4198
  %v4599 = vmul.f32 %v4199, %v4199
  %v4600 = vmul.f32 %v4200, %v4200
  %v4601 = vmul.f32 %v4201, %v4201
  %v4602 = vmul.f32 %v4202, %v4202
  %v4603 = vmul.f32 %v4203, %v4203
  %v4604 = vmul.f32 %v4204, %v4204
  %v4605 = vmul.f32 %v4205, %v4205
  %v4606 = vmul.f32 %v4206, %v4206
  %v4607 = vmul.f32 %v4207, %v4207
  %v4608 = vmul.f32 %v4208, %v4208
  %v4609 = vmul.f32 %v4209, %v4209
  %v4610 = vmul.f32 %v4210, %v4210
  %v4611 = vmul.f32 %v4211, %v4211
  %v4612 = vmul.f32 %v4212, %v4212
  %v4613 = vmul.f32 %v4213, %v4213
  %v4614 = vmul.f32 %v4214, %v4214
  %v4615 = vmul.f32 %v4215, %v4215
  %v4616 = vmul.f32 %v4216, %v4216
  %v4617 = vmul.f32 %v4217, %v4217
  %v4618 = vmul.f32 %v4218, %v4218
  %v4619 = vmul.f32 %v4219, %v4219
  %v4620 = vmul.f32 %v4220, %v4220
  %v4621 = vmul.f32 %v4221, %v4221
  %v4622 = vmul.f32 %v4222, %v4222
  %v4623 = vmul.f32 %v4223, %v4223
  %v4624 = vmul.f32 %v4224, %v4224
  %v4625 = vmul.f32 %v4225, %v4225
  %v4626 = vmul.f32 %v4226, %v4226
  %v4627 = vmul.f32 %v4227, %v4227
  %v4628 = vmul.f32 %v4228, %v4228
  %v4629 = vmul.f32 %v4229, %v4229
  %v4630 = vmul.f32 %v4230, %v4230
  %v4631 = vmul.f32 %v4231, %v4231
  %v4632 = vmul.f32 %v4232, %v4232
  %v4633 = vmul.f32 %v4233, %v4233
  %v4634 = vmul.f32 %v4234, %v4234
  %v4635 = vmul.f32 %v4235, %v4235
  %v4636 = vmul.f32 %v4236, %v4236
  %v4637 = vmul.f32 %v4237, %v4237
  %v4638 = vmul.f32 %v4238, %v4238
  %v4639 = vmul.f32 %v4239, %v4239
  %v4640 = vmul.f32 %v4240, %v4240
  %v4641 = vmul.f32 %v4241, %v4241
  %v4642 = vmul.f32 %v4242, %v4242
  %v4643 = vmul.f32 %v4243, %v4243
  %v4644 = vmul.f32 %v4244, %v4244
  %v4645 = vmul.f32 %v4245, %v4245
  %v4646 = vmul.f32 %v4246, %v4246
  %v4647 = vmul.f32 %v4247, %v4247
  %v4648 = vmul.f32 %v4248, %v4248
  %v4649 = vmul.f32 %v4249, %v4249
  %v4650 = vmul.f32 %v4250, %v4250
  %v4651 = vmul.f32 %v4251, %v4251
  %v4652 = vmul.f32 %v4252, %v4252
  %v4653 = vmul.f32 %v4253, %v4253
  %v4654 = vmul.f32 %v4254, %v4254
  %v4655 = vmul.f32 %v4255, %v4255
  %v4656 = vmul.f32 %v4256, %v4256
  %v4657 = vmul.f32 %v4257, %v4257
  %v4658 = vmul.f32 %v4258, %v4258
  %v4659 = vmul.f32 %v4259, %v4259
  %v4660 = vmul.f32 %v4260, %v4260
  %v4661 = vmul.f32 %v4261, %v4261
  %v4662 = vmul.f32 %v4262, %v4262
  %v4663 = vmul.f32 %v4263, %v4263
  %v4664 = vmul.f32 %v4264, %v4264
  %v4665 = vmul.f32 %v4265, %v4265
  %v4666 = vmul.f32 %v4266, %v4266
  %v4667 = vmul.f32 %v4267, %v4267
  %v4668 = vmul.f32 %v4268, %v4268
  %v4669 = vmul.f32 %v4269, %v4269
  %v4670 = vmul.f32 %v4270, %v4270
  %v4671 = vmul.f32 %v4271, %v4271
  %v4672 = vmul.f32 %v4272, %v4272
  %v4673 = vmul.f32 %v4273, %v4273
  %v4674 = vmul.f32 %v4274, %v4274
  %v4675 = vmul.f32 %v4275, %v4275
  %v4676 = vmul.f32 %v4276, %v4276
  %v4677 = vmul.f32 %v4277, %v4277
  %v4678 = vmul.f32 %v4278, %v4278
  %v4679 = vmul.f32 %v4279, %v4279
  %v4680 = vmul.f32 %v4280, %v4280
  %v4681 = vmul.f32 %v4281, %v4281
  %v4682 = vmul.f32 %v4282, %v4282
  %v4683 = vmul.f32 %v4283, %v4283
  %v4684 = vmul.f32 %v4284, %v4284
  %v4685 = vmul.f32 %v4285, %v4285
  %v4686 = vmul.f32 %v4286, %v4286
  %v4687 = vmul.f32 %v4287, %v4287
  %v4688 = vmul.f32 %v4288, %v4288
  %v4689 = vmul.f32 %v4289, %v4289
  %v4690 = vmul.f32 %v4290, %v4290
  %v4691 = vmul.f32 %v4291, %v4291
  %v4692 = vmul.f32 %v4292, %v4292
  %v4693 = vmul.f32 %v4293, %v4293
  %v4694 = vmul.f32 %v4294, %v4294
  %v4695 = vmul.f32 %v4295, %v4295
  %v4696 = vmul.f32 %v4296, %v4296
  %v4697 = vmul.f32 %v4297, %v4297
  %v4698 = vmul.f32 %v4298, %v4298
  %v4699 = vmul.f32 %v4299, %v4299
  %v4700 = vmul.f32 %v4300, %v4300
  %v4701 = vmul.f32 %v4301, %v4301
  %v4702 = vmul.f32 %v4302, %v4302
  %v4703 = vmul.f32 %v4303, %v4303
  %v4704 = vmul.f32 %v4304, %v4304
  %v4705 = vmul.f32 %v4305, %v4305
  %v4706 = vmul.f32 %v4306, %v4306
  %v4707 = vmul.f32 %v4307, %v4307
  %v4708 = vmul.f32 %v4308, %v4308
  %v4709 = vmul.f32 %v4309, %v4309
  %v4710 = vmul.f32 %v4310, %v4310
  %v4711 = vmul.f32 %v4311, %v4311
  %v4712 = vmul.f32 %v4312, %v4312
  %v4713 = vmul.f32 %v4313, %v4313
  %v4714 = vmul.f32 %v4314, %v4314
  %v4715 = vmul.f32 %v4315, %v4315
  %v4716 = vmul.f32 %v4316, %v4316
  %v4717 = vmul.f32 %v4317, %v4317
  %v4718 = vmul.f32 %v4318, %v4318
  %v4719 = vmul.f32 %v4319, %v4319
  %v4720 = vmul.f32 %v4320, %v4320
  %v4721 = vmul.f32 %v4321, %v4321
  %v4722 = vmul.f32 %v4322, %v4322
  %v4723 = vmul.f32 %v4323, %v4323
  %v4724 = vmul.f32 %v4324, %v4324
  %v4725 = vmul.f32 %v4325, %v4325
  %v4726 = vmul.f32 %v4326, %v4326
  %v4727 = vmul.f32 %v4327, %v4327
  %v4728 = vmul.f32 %v4328, %v4328
  %v4729 = vmul.f32 %v4329, %v4329
  %v4730 = vmul.f32 %v4330, %v4330
  %v4731 = vmul.f32 %v4331, %v4331
  %v4732 = vmul.f32 %v4332, %v4332
  %v4733 = vmul.f32 %v4333, %v4333
  %v4734 = vmul.f32 %v4334, %v4334
  %v4735 = vmul.f32 %v4335, %v4335
  %v4736 = vmul.f32 %v4336, %v4336
  %v4737 = vmul.f32 %v4337, %v4337
  %v4738 = vmul.f32 %v4338, %v4338
  %v4739 = vmul.f32 %v4339, %v4339
  %v4740 = vmul.f32 %v4340, %v4340
  %v4741 = vmul.f32 %v4341, %v4341
  %v4742 = vmul.f32 %v4342, %v4342
  %v4743 = vmul.f32 %v4343, %v4343
  %v4744 = vmul.f32 %v4344, %v4344
  %v4745 = vmul.f32 %v4345, %v4345
  %v4746 = vmul.f32 %v4346, %v4346
  %v4747 = vmul.f32 %v4347, %v4347
  %v4748 = vmul.f32 %v4348, %v4348
  %v4749 = vmul.f32 %v4349, %v4349
  %v4750 = vmul.f32 %v4350, %v4350
  %v4751 = vmul.f32 %v4351, %v4351
  %v4752 = vmul.f32 %v4352, %v4352
  %v4753 = vmul.f32 %v4353, %v4353
  %v4754 = vmul.f32 %v4354, %v4354
  %v4755 = vmul.f32 %v4355, %v4355
  %v4756 = vmul.f32 %v4356, %v4356
  %v4757 = vmul.f32 %v4357, %v4357
  %v4758 = vmul.f32 %v4358, %v4358
  %v4759 = vmul.f32 %v4359, %v4359
  %v4760 = vmul.f32 %v4360, %v4360
  %v4761 = vmul.f32 %v4361, %v4361
  %v4762 = vmul.f32 %v4362, %v4362
  %v4763 = vmul.f32 %v4363, %v4363
  %v4764 = vmul.f32 %v4364, %v4364
  %v4765 = vmul.f32 %v4365, %v4365
  %v4766 = vmul.f32 %v4366, %v4366
  %v4767 = vmul.f32 %v4367, %v4367
  %v4768 = vmul.f32 %v4368, %v4368
  %v4769 = vmul.f32 %v4369, %v4369
  %v4770 = vmul.f32 %v4370, %v4370
  %v4771 = vmul.f32 %v4371, %v4371
  %v4772 = vmul.f32 %v4372, %v4372
  %v4773 = vmul.f32 %v4373, %v4373
  %v4774 = vmul.f32 %v4374, %v4374
  %v4775 = vmul.f32 %v4375, %v4375
  %v4776 = vmul.f32 %v4376, %v4376
  %v4777 = vmul.f32 %v4377, %v4377
  %v4778 = vmul.f32 %v4378, %v4378
  %v4779 = vmul.f32 %v4379, %v4379
  %v4780 = vmul.f32 %v4380, %v4380
  %v4781 = vmul.f32 %v4381, %v4381
  %v4782 = vmul.f32 %v4382, %v4382
  %v4783 = vmul.f32 %v4383, %v4383
  %v4784 = vmul.f32 %v4384, %v4384
  %v4785 = vmul.f32 %v4385, %v4385
  %v4786 = vmul.f32 %v4386, %v4386
  %v4787 = vmul.f32 %v4387, %v4387
  %v4788 = vmul.f32 %v4388, %v4388
  %v4789 = vmul.f32 %v4389, %v4389
  %v4790 = vmul.f32 %v4390, %v4390
  %v4791 = vmul.f32 %v4391, %v4391
  %v4792 = vmul.f32 %v4392, %v4392
  %v4793 = vmul.f32 %v4393, %v4393
  %v4794 = vmul.f32 %v4394, %v4394
  %v4795 = vmul.f32 %v4395, %v4395
  %v4796 = vmul.f32 %v4396, %v4396
  %v4797 = vmul.f32 %v4397, %v4397
  %v4798 = vmul.f32 %v4398, %v4398
  %v4799 = vmul.f32 %v4399, %v4399
  %v4800 = vmul.f32 %v4400, %v4400
  %v4801 = vmul.f32 %v4401, %v4401
  %v4802 = vmul.f32 %v4402, %v4402
  %v4803 = vmul.f32 %v4403, %v4403
  %v4804 = vmul.f32 %v4404, %v4404
  %v4805 = vmul.f32 %v4405, %v4405
  %v4806 = vmul.f32 %v4406, %v4406
  %v4807 = vmul.f32 %v4407, %v4407
  %v4808 = vmul.f32 %v4408, %v4408
  %v4809 = vmul.f32 %v4409, %v4409
  %v4810 = vmul.f32 %v4410, %v4410
  %v4811 = vmul.f32 %v4411, %v4411
  %v4812 = vmul.f32 %v4412, %v4412
  %v4813 = vmul.f32 %v4413, %v4413
  %v4814 = vmul.f32 %v4414, %v4414
  %v4815 = vmul.f32 %v4415, %v4415
  %v4816 = vmul.f32 %v4416, %v4416
  %v4817 = vmul.f32 %v4417, %v4417
  %v4818 = vmul.f32 %v4418, %v4418
  %v4819 = vmul.f32 %v4419, %v4419
  %v4820 = vmul.f32 %v4420, %v4420
  %v4821 = vmul.f32 %v4421, %v4421
  %v4822 = vmul.f32 %v4422, %v4422
  %v4823 = vmul.f32 %v4423, %v4423
  %v4824 = vmul.f32 %v4424, %v4424
  %v4825 = vmul.f32 %v4425, %v4425
  %v4826 = vmul.f32 %v4426, %v4426
  %v4827 = vmul.f32 %v4427, %v4427
  %v4828 = vmul.f32 %v4428, %v4428
  %v4829 = vmul.f32 %v4429, %v4429
  %v4830 = vmul.f32 %v4430, %v4430
  %v4831 = vmul.f32 %v4431, %v4431
  %v4832 = vmul.f32 %v4432, %v4432
  %v4833 = vmul.f32 %v4433, %v4433
  %v4834 = vmul.f32 %v4434, %v4434
  %v4835 = vmul.f32 %v4435, %v4435
  %v4836 = vmul.f32 %v4436, %v4436
  %v4837 = vmul.f32 %v4437, %v4437
  %v4838 = vmul.f32 %v4438, %v4438
  %v4839 = vmul.f32 %v4439, %v4439
  %v4840 = vmul.f32 %v4440, %v4440
  %v4841 = vmul.f32 %v4441, %v4441
  %v4842 = vmul.f32 %v4442, %v4442
  %v4843 = vmul.f32 %v4443, %v4443
  %v4844 = vmul.f32 %v4444, %v4444
  %v4845 = vmul.f32 %v4445, %v4445
  %v4846 = vmul.f32 %v4446, %v4446
  %v4847 = vmul.f32 %v4447, %v4447
  %v4848 = vmul.f32 %v4448, %v4448
  %v4849 = vmul.f32 %v4449, %v4449
  %v4850 = vmul.f32 %v4450, %v4450
  %v4851 = vmul.f32 %v4451, %v4451
  %v4852 = vmul.f32 %v4452, %v4452
  %v4853 = vmul.f32 %v4453, %v4453
  %v4854 = vmul.f32 %v4454, %v4454
  %v4855 = vmul.f32 %v4455, %v4455
  %v4856 = vmul.f32 %v4456, %v4456
  %v4857 = vmul.f32 %v4457, %v4457
  %v4858 = vmul.f32 %v4458, %v4458
  %v4859 = vmul.f32 %v4459, %v4459
  %v4860 = vmul.f32 %v4460, %v4460
  %v4861 = vmul.f32 %v4461, %v4461
  %v4862 = vmul.f32 %v4462, %v4462
  %v4863 = vmul.f32 %v4463, %v4463
  %v4864 = vmul.f32 %v4464, %v4464
  %v4865 = vmul.f32 %v4465, %v4465
  %v4866 = vmul.f32 %v4466, %v4466
  %v4867 = vmul.f32 %v4467, %v4467
  %v4868 = vmul.f32 %v4468, %v4468
  %v4869 = vmul.f32 %v4469, %v4469
  %v4870 = vmul.f32 %v4470, %v4470
  %v4871 = vmul.f32 %v4471, %v4471
  %v4872 = vmul.f32 %v4472, %v4472
  %v4873 = vmul.f32 %v4473, %v4473
  %v4874 = vmul.f32 %v4474, %v4474
  %v4875 = vmul.f32 %v4475, %v4475
  %v4876 = vmul.f32 %v4476, %v4476
  %v4877 = vmul.f32 %v4477, %v4477
  %v4878 = vmul.f32 %v4478, %v4478
  %v4879 = vmul.f32 %v4479, %v4479
  %v4880 = vmul.f32 %v4480, %v4480
  %v4881 = vmul.f32 %v4481, %v4481
  %v4882 = vmul.f32 %v4482, %v4482
  %v4883 = vmul.f32 %v4483, %v4483
  %v4884 = vmul.f32 %v4484, %v4484
  %v4885 = vmul.f32 %v4485, %v4485
  %v4886 = vmul.f32 %v4486, %v4486
  %v4887 = vmul.f32 %v4487, %v4487
  %v4888 = vmul.f32 %v4488, %v4488
  %v4889 = vmul.f32 %v4489, %v4489
  %v4890 = vmul.f32 %v4490, %v4490
  %v4891 = vmul.f32 %v4491, %v4491
  %v4892 = vmul.f32 %v4492, %v4492
  %v4893 = vmul.f32 %v4493, %v4493
  %v4894 = vmul.f32 %v4494, %v4494
  %v4895 = vmul.f32 %v4495, %v4495
  %v4896 = vmul.f32 %v4496, %v4496
  %v4897 = vmul.f32 %v4497, %v4497
  %v4898 = vmul.f32 %v4498, %v4498
  %v4899 = vmul.f32 %v4499, %v4499
  %v4900 = vmul.f32 %v4500, %v4500
  %v4901 = vmul.f32 %v4501, %v4501
  %v4902 = vmul.f32 %v4502, %v4502
  %v4903 = vmul.f32 %v4503, %v4503
  %v4904 = vadd.f32 %v4504, %v4505
  %v4905 = vadd.f32 %v4904, %v4506
  %v4906 = vadd.f32 %v4905, %v4507
  %v4907 = vadd.f32 %v4906, %v4508
  %v4908 = vadd.f32 %v4907, %v4509
  %v4909 = vadd.f32 %v4908, %v4510
  %v4910 = vadd.f32 %v4909, %v4511
  %v4911 = vadd.f32 %v4910, %v4512
  %v4912 = vadd.f32 %v4911, %v4513
  %v4913 = vadd.f32 %v4912, %v4514
  %v4914 = vadd.f32 %v4913, %v4515
  %v4915 = vadd.f32 %v4914, %v4516
  %v4916 = vadd.f32 %v4915, %v4517
  %v4917 = vadd.f32 %v4916, %v4518
  %v4918 = vadd.f32 %v4917, %v4519
  %v4919 = vadd.f32 %v4918, %v4520
  %v4920 = vadd.f32 %v4919, %v4521
  %v4921 = vadd.f32 %v4920, %v4522
  %v4922 = vadd.f32 %v4921, %v4523
  %v4923 = vadd.f32 %v4922, %v4524
  %v4924 = vadd.f32 %v4923, %v4525
  %v4925 = vadd.f32 %v4924, %v4526
  %v4926 = vadd.f32 %v4925, %v4527
  %v4927 = vadd.f32 %v4926, %v4528
  %v4928 = vadd.f32 %v4927, %v4529
  %v4929 = vadd.f32 %v4928, %v4530
  %v4930 = vadd.f32 %v4929, %v4531
  %v4931 = vadd.f32 %v4930, %v4532
  %v4932 = vadd.f32 %v4931, %v4533
  %v4933 = vadd.f32 %v4932, %v4534
  %v4934 = vadd.f32 %v4933, %v4535
  %v4935 = vadd.f32 %v4934, %v4536
  %v4936 = vadd.f32 %v4935, %v4537
  %v4937 = vadd.f32 %v4936, %v4538
  %v4938 = vadd.f32 %v4937, %v4539
  %v4939 = vadd.f32 %v4938, %v4540
  %v4940 = vadd.f32 %v4939, %v4541
  %v4941 = vadd.f32 %v4940, %v4542
  %v4942 = vadd.f32 %v4941, %v4543
  %v4943 = vadd.f32 %v4942, %v4544
  %v4944 = vadd.f32 %v4943, %v4545
  %v4945 = vadd.f32 %v4944, %v4546
  %v4946 = vadd.f32 %v4945, %v4547
  %v4947 = vadd.f32 %v4946, %v4548
  %v4948 = vadd.f32 %v4947, %v4549
  %v4949 = vadd.f32 %v4948, %v4550
  %v4950 = vadd.f32 %v4949, %v4551
  %v4951 = vadd.f32 %v4950, %v4552
  %v4952 = vadd.f32 %v4951, %v4553
  %v4953 = vadd.f32 %v4952, %v4554
  %v4954 = vadd.f32 %v4953, %v4555
  %v4955 = vadd.f32 %v4954, %v4556
  %v4956 = vadd.f32 %v4955, %v4557
  %v4957 = vadd.f32 %v4956, %v4558
  %v4958 = vadd.f32 %v4957, %v4559
  %v4959 = vadd.f32 %v4958, %v4560
  %v4960 = vadd.f32 %v4959, %v4561
  %v4961 = vadd.f32 %v4960, %v4562
  %v4962 = vadd.f32 %v4961, %v4563
  %v4963 = vadd.f32 %v4962, %v4564
  %v4964 = vadd.f32 %v4963, %v4565
  %v4965 = vadd.f32 %v4964, %v4566
  %v4966 = vadd.f32 %v4965, %v4567
  %v4967 = vadd.f32 %v4966, %v4568
  %v4968 = vadd.f32 %v4967, %v4569
  %v4969 = vadd.f32 %v4968, %v4570
  %v4970 = vadd.f32 %v4969, %v4571
  %v4971 = vadd.f32 %v4970, %v4572
  %v4972 = vadd.f32 %v4971, %v4573
  %v4973 = vadd.f32 %v4972, %v4574
  %v4974 = vadd.f32 %v4973, %v4575
  %v4975 = vadd.f32 %v4974, %v4576
  %v4976 = vadd.f32 %v4975, %v4577
  %v4977 = vadd.f32 %v4976, %v4578
  %v4978 = vadd.f32 %v4977, %v4579
  %v4979 = vadd.f32 %v4978, %v4580
  %v4980 = vadd.f32 %v4979, %v4581
  %v4981 = vadd.f32 %v4980, %v4582
  %v4982 = vadd.f32 %v4981, %v4583
  %v4983 = vadd.f32 %v4982, %v4584
  %v4984 = vadd.f32 %v4983, %v4585
  %v4985 = vadd.f32 %v4984, %v4586
  %v4986 = vadd.f32 %v4985, %v4587
  %v4987 = vadd.f32 %v4986, %v4588
  %v4988 = vadd.f32 %v4987, %v4589
  %v4989 = vadd.f32 %v4988, %v4590
  %v4990 = vadd.f32 %v4989, %v4591
  %v4991 = vadd.f32 %v4990, %v4592
  %v4992 = vadd.f32 %v4991, %v4593
  %v4993 = vadd.f32 %v4992, %v4594
  %v4994 = vadd.f32 %v4993, %v4595
  %v4995 = vadd.f32 %v4994, %v4596
  %v4996 = vadd.f32 %v4995, %v4597
  %v4997 = vadd.f32 %v4996, %v4598
  %v4998 = vadd.f32 %v4997, %v4599
  %v4999 = vadd.f32 %v4998, %v4600
  %v5000 = vadd.f32 %v4999, %v4601
  %v5001 = vadd.f32 %v5000, %v4602
  %v5002 = vadd.f32 %v5001, %v4603
  %v5003 = vadd.f32 %v5002, %v4604
  %v5004 = vadd.f32 %v5003, %v4605
  %v5005 = vadd.f32 %v5004, %v4606
  %v5006 = vadd.f32 %v5005, %v4607
  %v5007 = vadd.f32 %v5006, %v4608
  %v5008 = vadd.f32 %v5007, %v4609
  %v5009 = vadd.f32 %v5008, %v4610
  %v5010 = vadd.f32 %v5009, %v4611
  %v5011 = vadd.f32 %v5010, %v4612
  %v5012 = vadd.f32 %v5011, %v4613
  %v5013 = vadd.f32 %v5012, %v4614
  %v5014 = vadd.f32 %v5013, %v4615
  %v5015 = vadd.f32 %v5014, %v4616
  %v5016 = vadd.f32 %v5015, %v4617
  %v5017 = vadd.f32 %v5016, %v4618
  %v5018 = vadd.f32 %v5017, %v4619
  %v5019 = vadd.f32 %v5018, %v4620
  %v5020 = vadd.f32 %v5019, %v4621
  %v5021 = vadd.f32 %v5020, %v4622
  %v5022 = vadd.f32 %v5021, %v4623
  %v5023 = vadd.f32 %v5022, %v4624
  %v5024 = vadd.f32 %v5023, %v4625
  %v5025 = vadd.f32 %v5024, %v4626
  %v5026 = vadd.f32 %v5025, %v4627
  %v5027 = vadd.f32 %v5026, %v4628
  %v5028 = vadd.f32 %v5027, %v4629
  %v5029 = vadd.f32 %v5028, %v4630
  %v5030 = vadd.f32 %v5029, %v4631
  %v5031 = vadd.f32 %v5030, %v4632
  %v5032 = vadd.f32 %v5031, %v4633
  %v5033 = vadd.f32 %v5032, %v4634
  %v5034 = vadd.f32 %v5033, %v4635
  %v5035 = vadd.f32 %v5034, %v4636
  %v5036 = vadd.f32 %v5035, %v4637
  %v5037 = vadd.f32 %v5036, %v4638
  %v5038 = vadd.f32 %v5037, %v4639
  %v5039 = vadd.f32 %v5038, %v4640
  %v5040 = vadd.f32 %v5039, %v4641
  %v5041 = vadd.f32 %v5040, %v4642
  %v5042 = vadd.f32 %v5041, %v4643
  %v5043 = vadd.f32 %v5042, %v4644
  %v5044 = vadd.f32 %v5043, %v4645
  %v5045 = vadd.f32 %v5044, %v4646
  %v5046 = vadd.f32 %v5045, %v4647
  %v5047 = vadd.f32 %v5046, %v4648
  %v5048 = vadd.f32 %v5047, %v4649
  %v5049 = vadd.f32 %v5048, %v4650
  %v5050 = vadd.f32 %v5049, %v4651
  %v5051 = vadd.f32 %v5050, %v4652
  %v5052 = vadd.f32 %v5051, %v4653
  %v5053 = vadd.f32 %v5052, %v4654
  %v5054 = vadd.f32 %v5053, %v4655
  %v5055 = vadd.f32 %v5054, %v4656
  %v5056 = vadd.f32 %v5055, %v4657
  %v5057 = vadd.f32 %v5056, %v4658
  %v5058 = vadd.f32 %v5057, %v4659
  %v5059 = vadd.f32 %v5058, %v4660
  %v5060 = vadd.f32 %v5059, %v4661
  %v5061 = vadd.f32 %v5060, %v4662
  %v5062 = vadd.f32 %v5061, %v4663
  %v5063 = vadd.f32 %v5062, %v4664
  %v5064 = vadd.f32 %v5063, %v4665
  %v5065 = vadd.f32 %v5064, %v4666
  %v5066 = vadd.f32 %v5065, %v4667
  %v5067 = vadd.f32 %v5066, %v4668
  %v5068 = vadd.f32 %v5067, %v4669
  %v5069 = vadd.f32 %v5068, %v4670
  %v5070 = vadd.f32 %v5069, %v4671
  %v5071 = vadd.f32 %v5070, %v4672
  %v5072 = vadd.f32 %v5071, %v4673
  %v5073 = vadd.f32 %v5072, %v4674
  %v5074 = vadd.f32 %v5073, %v4675
  %v5075 = vadd.f32 %v5074, %v4676
  %v5076 = vadd.f32 %v5075, %v4677
  %v5077 = vadd.f32 %v5076, %v4678
  %v5078 = vadd.f32 %v5077, %v4679
  %v5079 = vadd.f32 %v5078, %v4680
  %v5080 = vadd.f32 %v5079, %v4681
  %v5081 = vadd.f32 %v5080, %v4682
  %v5082 = vadd.f32 %v5081, %v4683
  %v5083 = vadd.f32 %v5082, %v4684
  %v5084 = vadd.f32 %v5083, %v4685
  %v5085 = vadd.f32 %v5084, %v4686
  %v5086 = vadd.f32 %v5085, %v4687
  %v5087 = vadd.f32 %v5086, %v4688
  %v5088 = vadd.f32 %v5087, %v4689
  %v5089 = vadd.f32 %v5088, %v4690
  %v5090 = vadd.f32 %v5089, %v4691
  %v5091 = vadd.f32 %v5090, %v4692
  %v5092 = vadd.f32 %v5091, %v4693
  %v5093 = vadd.f32 %v5092, %v4694
  %v5094 = vadd.f32 %v5093, %v4695
  %v5095 = vadd.f32 %v5094, %v4696
  %v5096 = vadd.f32 %v5095, %v4697
  %v5097 = vadd.f32 %v5096, %v4698
  %v5098 = vadd.f32 %v5097, %v4699
  %v5099 = vadd.f32 %v5098, %v4700
  %v5100 = vadd.f32 %v5099, %v4701
  %v5101 = vadd.f32 %v5100, %v4702
  %v5102 = vadd.f32 %v5101, %v4703
  %v5103 = vadd.f32 %v5102, %v4704
  %v5104 = vadd.f32 %v5103, %v4705
  %v5105 = vadd.f32 %v5104, %v4706
  %v5106 = vadd.f32 %v5105, %v4707
  %v5107 = vadd.f32 %v5106, %v4708
  %v5108 = vadd.f32 %v5107, %v4709
  %v5109 = vadd.f32 %v5108, %v4710
  %v5110 = vadd.f32 %v5109, %v4711
  %v5111 = vadd.f32 %v5110, %v4712
  %v5112 = vadd.f32 %v5111, %v4713
  %v5113 = vadd.f32 %v5112, %v4714
  %v5114 = vadd.f32 %v5113, %v4715
  %v5115 = vadd.f32 %v5114, %v4716
  %v5116 = vadd.f32 %v5115, %v4717
  %v5117 = vadd.f32 %v5116, %v4718
  %v5118 = vadd.f32 %v5117, %v4719
  %v5119 = vadd.f32 %v5118, %v4720
  %v5120 = vadd.f32 %v5119, %v4721
  %v5121 = vadd.f32 %v5120, %v4722
  %v5122 = vadd.f32 %v5121, %v4723
  %v5123 = vadd.f32 %v5122, %v4724
  %v5124 = vadd.f32 %v5123, %v4725
  %v5125 = vadd.f32 %v5124, %v4726
  %v5126 = vadd.f32 %v5125, %v4727
  %v5127 = vadd.f32 %v5126, %v4728
  %v5128 = vadd.f32 %v5127, %v4729
  %v5129 = vadd.f32 %v5128, %v4730
  %v5130 = vadd.f32 %v5129, %v4731
  %v5131 = vadd.f32 %v5130, %v4732
  %v5132 = vadd.f32 %v5131, %v4733
  %v5133 = vadd.f32 %v5132, %v4734
  %v5134 = vadd.f32 %v5133, %v4735
  %v5135 = vadd.f32 %v5134, %v4736
  %v5136 = vadd.f32 %v5135, %v4737
  %v5137 = vadd.f32 %v5136, %v4738
  %v5138 = vadd.f32 %v5137, %v4739
  %v5139 = vadd.f32 %v5138, %v4740
  %v5140 = vadd.f32 %v5139, %v4741
  %v5141 = vadd.f32 %v5140, %v4742
  %v5142 = vadd.f32 %v5141, %v4743
  %v5143 = vadd.f32 %v5142, %v4744
  %v5144 = vadd.f32 %v5143, %v4745
  %v5145 = vadd.f32 %v5144, %v4746
  %v5146 = vadd.f32 %v5145, %v4747
  %v5147 = vadd.f32 %v5146, %v4748
  %v5148 = vadd.f32 %v5147, %v4749
  %v5149 = vadd.f32 %v5148, %v4750
  %v5150 = vadd.f32 %v5149, %v4751
  %v5151 = vadd.f32 %v5150, %v4752
  %v5152 = vadd.f32 %v5151, %v4753
  %v5153 = vadd.f32 %v5152, %v4754
  %v5154 = vadd.f32 %v5153, %v4755
  %v5155 = vadd.f32 %v5154, %v4756
  %v5156 = vadd.f32 %v5155, %v4757
  %v5157 = vadd.f32 %v5156, %v4758
  %v5158 = vadd.f32 %v5157, %v4759
  %v5159 = vadd.f32 %v5158, %v4760
  %v5160 = vadd.f32 %v5159, %v4761
  %v5161 = vadd.f32 %v5160, %v4762
  %v5162 = vadd.f32 %v5161, %v4763
  %v5163 = vadd.f32 %v5162, %v4764
  %v5164 = vadd.f32 %v5163, %v4765
  %v5165 = vadd.f32 %v5164, %v4766
  %v5166 = vadd.f32 %v5165, %v4767
  %v5167 = vadd.f32 %v5166, %v4768
  %v5168 = vadd.f32 %v5167, %v4769
  %v5169 = vadd.f32 %v5168, %v4770
  %v5170 = vadd.f32 %v5169, %v4771
  %v5171 = vadd.f32 %v5170, %v4772
  %v5172 = vadd.f32 %v5171, %v4773
  %v5173 = vadd.f32 %v5172, %v4774
  %v5174 = vadd.f32 %v5173, %v4775
  %v5175 = vadd.f32 %v5174, %v4776
  %v5176 = vadd.f32 %v5175, %v4777
  %v5177 = vadd.f32 %v5176, %v4778
  %v5178 = vadd.f32 %v5177, %v4779
  %v5179 = vadd.f32 %v5178, %v4780
  %v5180 = vadd.f32 %v5179, %v4781
  %v5181 = vadd.f32 %v5180, %v4782
  %v5182 = vadd.f32 %v5181, %v4783
  %v5183 = vadd.f32 %v5182, %v4784
  %v5184 = vadd.f32 %v5183, %v4785
  %v5185 = vadd.f32 %v5184, %v4786
  %v5186 = vadd.f32 %v5185, %v4787
  %v5187 = vadd.f32 %v5186, %v4788
  %v5188 = vadd.f32 %v5187, %v4789
  %v5189 = vadd.f32 %v5188, %v4790
  %v5190 = vadd.f32 %v5189, %v4791
  %v5191 = vadd.f32 %v5190, %v4792
  %v5192 = vadd.f32 %v5191, %v4793
  %v5193 = vadd.f32 %v5192, %v4794
  %v5194 = vadd.f32 %v5193, %v4795
  %v5195 = vadd.f32 %v5194, %v4796
  %v5196 = vadd.f32 %v5195, %v4797
  %v5197 = vadd.f32 %v5196, %v4798
  %v5198 = vadd.f32 %v5197, %v4799
  %v5199 = vadd.f32 %v5198, %v4800
  %v5200 = vadd.f32 %v5199, %v4801
  %v5201 = vadd.f32 %v5200, %v4802
  %v5202 = vadd.f32 %v5201, %v4803
  %v5203 = vadd.f32 %v5202, %v4804
  %v5204 = vadd.f32 %v5203, %v4805
  %v5205 = vadd.f32 %v5204, %v4806
  %v5206 = vadd.f32 %v5205, %v4807
  %v5207 = vadd.f32 %v5206, %v4808
  %v5208 = vadd.f32 %v5207, %v4809
  %v5209 = vadd.f32 %v5208, %v4810
  %v5210 = vadd.f32 %v5209, %v4811
  %v5211 = vadd.f32 %v5210, %v4812
  %v5212 = vadd.f32 %v5211, %v4813
  %v5213 = vadd.f32 %v5212, %v4814
  %v5214 = vadd.f32 %v5213, %v4815
  %v5215 = vadd.f32 %v5214, %v4816
  %v5216 = vadd.f32 %v5215, %v4817
  %v5217 = vadd.f32 %v5216, %v4818
  %v5218 = vadd.f32 %v5217, %v4819
  %v5219 = vadd.f32 %v5218, %v4820
  %v5220 = vadd.f32 %v5219, %v4821
  %v5221 = vadd.f32 %v5220, %v4822
  %v5222 = vadd.f32 %v5221, %v4823
  %v5223 = vadd.f32 %v5222, %v4824
  %v5224 = vadd.f32 %v5223, %v4825
  %v5225 = vadd.f32 %v5224, %v4826
  %v5226 = vadd.f32 %v5225, %v4827
  %v5227 = vadd.f32 %v5226, %v4828
  %v5228 = vadd.f32 %v5227, %v4829
  %v5229 = vadd.f32 %v5228, %v4830
  %v5230 = vadd.f32 %v5229, %v4831
  %v5231 = vadd.f32 %v5230, %v4832
  %v5232 = vadd.f32 %v5231, %v4833
  %v5233 = vadd.f32 %v5232, %v4834
  %v5234 = vadd.f32 %v5233, %v4835
  %v5235 = vadd.f32 %v5234, %v4836
  %v5236 = vadd.f32 %v5235, %v4837
  %v5237 = vadd.f32 %v5236, %v4838
  %v5238 = vadd.f32 %v5237, %v4839
  %v5239 = vadd.f32 %v5238, %v4840
  %v5240 = vadd.f32 %v5239, %v4841
  %v5241 = vadd.f32 %v5240, %v4842
  %v5242 = vadd.f32 %v5241, %v4843
  %v5243 = vadd.f32 %v5242, %v4844
  %v5244 = vadd.f32 %v5243, %v4845
  %v5245 = vadd.f32 %v5244, %v4846
  %v5246 = vadd.f32 %v5245, %v4847
  %v5247 = vadd.f32 %v5246, %v4848
  %v5248 = vadd.f32 %v5247, %v4849
  %v5249 = vadd.f32 %v5248, %v4850
  %v5250 = vadd.f32 %v5249, %v4851
  %v5251 = vadd.f32 %v5250, %v4852
  %v5252 = vadd.f32 %v5251, %v4853
  %v5253 = vadd.f32 %v5252, %v4854
  %v5254 = vadd.f32 %v5253, %v4855
  %v5255 = vadd.f32 %v5254, %v4856
  %v5256 = vadd.f32 %v5255, %v4857
  %v5257 = vadd.f32 %v5256, %v4858
  %v5258 = vadd.f32 %v5257, %v4859
  %v5259 = vadd.f32 %v5258, %v4860
  %v5260 = vadd.f32 %v5259, %v4861
  %v5261 = vadd.f32 %v5260, %v4862
  %v5262 = vadd.f32 %v5261, %v4863
  %v5263 = vadd.f32 %v5262, %v4864
  %v5264 = vadd.f32 %v5263, %v4865
  %v5265 = vadd.f32 %v5264, %v4866
  %v5266 = vadd.f32 %v5265, %v4867
  %v5267 = vadd.f32 %v5266, %v4868
  %v5268 = vadd.f32 %v5267, %v4869
  %v5269 = vadd.f32 %v5268, %v4870
  %v5270 = vadd.f32 %v5269, %v4871
  %v5271 = vadd.f32 %v5270, %v4872
  %v5272 = vadd.f32 %v5271, %v4873
  %v5273 = vadd.f32 %v5272, %v4874
  %v5274 = vadd.f32 %v5273, %v4875
  %v5275 = vadd.f32 %v5274, %v4876
  %v5276 = vadd.f32 %v5275, %v4877
  %v5277 = vadd.f32 %v5276, %v4878
  %v5278 = vadd.f32 %v5277, %v4879
  %v5279 = vadd.f32 %v5278, %v4880
  %v5280 = vadd.f32 %v5279, %v4881
  %v5281 = vadd.f32 %v5280, %v4882
  %v5282 = vadd.f32 %v5281, %v4883
  %v5283 = vadd.f32 %v5282, %v4884
  %v5284 = vadd.f32 %v5283, %v4885
  %v5285 = vadd.f32 %v5284, %v4886
  %v5286 = vadd.f32 %v5285, %v4887
  %v5287 = vadd.f32 %v5286, %v4888
  %v5288 = vadd.f32 %v5287, %v4889
  %v5289 = vadd.f32 %v5288, %v4890
  %v5290 = vadd.f32 %v5289, %v4891
  %v5291 = vadd.f32 %v5290, %v4892
  %v5292 = vadd.f32 %v5291, %v4893
  %v5293 = vadd.f32 %v5292, %v4894
  %v5294 = vadd.f32 %v5293, %v4895
  %v5295 = vadd.f32 %v5294, %v4896
  %v5296 = vadd.f32 %v5295, %v4897
  %v5297 = vadd.f32 %v5296, %v4898
  %v5298 = vadd.f32 %v5297, %v4899
  %v5299 = vadd.f32 %v5298, %v4900
  %v5300 = vadd.f32 %v5299, %v4901
  %v5301 = vadd.f32 %v5300, %v4902
  %v5302 = vadd.f32 %v5301, %v4903
  %v5303 = vrot.slane %v5302, 4
  %v5304 = vadd.f32 %v5302, %v5303
  %v5305 = vrot.slane %v5304, 2
  %v5306 = vadd.f32 %v5304, %v5305
  %v5307 = vrot.slane %v5306, 1
  %v5308 = vadd.f32 %v5306, %v5307
  %v5309 = vmul.f32 %v5308, %v4102
  %v5310 = vadd.f32 %v5309, 1e-05
  %v5311 = vrsqrt.pop %v5310
  %v5312 = vmul.f32 %v4104, %v5311
  %v5313 = vmul.f32 %v4105, %v5311
  %v5314 = vmul.f32 %v4106, %v5311
  %v5315 = vmul.f32 %v4107, %v5311
  %v5316 = vmul.f32 %v4108, %v5311
  %v5317 = vmul.f32 %v4109, %v5311
  %v5318 = vmul.f32 %v4110, %v5311
  %v5319 = vmul.f32 %v4111, %v5311
  %v5320 = vmul.f32 %v4112, %v5311
  %v5321 = vmul.f32 %v4113, %v5311
  %v5322 = vmul.f32 %v4114, %v5311
  %v5323 = vmul.f32 %v4115, %v5311
  %v5324 = vmul.f32 %v4116, %v5311
  %v5325 = vmul.f32 %v4117, %v5311
  %v5326 = vmul.f32 %v4118, %v5311
  %v5327 = vmul.f32 %v4119, %v5311
  %v5328 = vmul.f32 %v4120, %v5311
  %v5329 = vmul.f32 %v4121, %v5311
  %v5330 = vmul.f32 %v4122, %v5311
  %v5331 = vmul.f32 %v4123, %v5311
  %v5332 = vmul.f32 %v4124, %v5311
  %v5333 = vmul.f32 %v4125, %v5311
  %v5334 = vmul.f32 %v4126, %v5311
  %v5335 = vmul.f32 %v4127, %v5311
  %v5336 = vmul.f32 %v4128, %v5311
  %v5337 = vmul.f32 %v4129, %v5311
  %v5338 = vmul.f32 %v4130, %v5311
  %v5339 = vmul.f32 %v4131, %v5311
  %v5340 = vmul.f32 %v4132, %v5311
  %v5341 = vmul.f32 %v4133, %v5311
  %v5342 = vmul.f32 %v4134, %v5311
  %v5343 = vmul.f32 %v4135, %v5311
  %v5344 = vmul.f32 %v4136, %v5311
  %v5345 = vmul.f32 %v4137, %v5311
  %v5346 = vmul.f32 %v4138, %v5311
  %v5347 = vmul.f32 %v4139, %v5311
  %v5348 = vmul.f32 %v4140, %v5311
  %v5349 = vmul.f32 %v4141, %v5311
  %v5350 = vmul.f32 %v4142, %v5311
  %v5351 = vmul.f32 %v4143, %v5311
  %v5352 = vmul.f32 %v4144, %v5311
  %v5353 = vmul.f32 %v4145, %v5311
  %v5354 = vmul.f32 %v4146, %v5311
  %v5355 = vmul.f32 %v4147, %v5311
  %v5356 = vmul.f32 %v4148, %v5311
  %v5357 = vmul.f32 %v4149, %v5311
  %v5358 = vmul.f32 %v4150, %v5311
  %v5359 = vmul.f32 %v4151, %v5311
  %v5360 = vmul.f32 %v4152, %v5311
  %v5361 = vmul.f32 %v4153, %v5311
  %v5362 = vmul.f32 %v4154, %v5311
  %v5363 = vmul.f32 %v4155, %v5311
  %v5364 = vmul.f32 %v4156, %v5311
  %v5365 = vmul.f32 %v4157, %v5311
  %v5366 = vmul.f32 %v4158, %v5311
  %v5367 = vmul.f32 %v4159, %v5311
  %v5368 = vmul.f32 %v4160, %v5311
  %v5369 = vmul.f32 %v4161, %v5311
  %v5370 = vmul.f32 %v4162, %v5311
  %v5371 = vmul.f32 %v4163, %v5311
  %v5372 = vmul.f32 %v4164, %v5311
  %v5373 = vmul.f32 %v4165, %v5311
  %v5374 = vmul.f32 %v4166, %v5311
  %v5375 = vmul.f32 %v4167, %v5311
  %v5376 = vmul.f32 %v4168, %v5311
  %v5377 = vmul.f32 %v4169, %v5311
  %v5378 = vmul.f32 %v4170, %v5311
  %v5379 = vmul.f32 %v4171, %v5311
  %v5380 = vmul.f32 %v4172, %v5311
  %v5381 = vmul.f32 %v4173, %v5311
  %v5382 = vmul.f32 %v4174, %v5311
  %v5383 = vmul.f32 %v4175, %v5311
  %v5384 = vmul.f32 %v4176, %v5311
  %v5385 = vmul.f32 %v4177, %v5311
  %v5386 = vmul.f32 %v4178, %v5311
  %v5387 = vmul.f32 %v4179, %v5311
  %v5388 = vmul.f32 %v4180, %v5311
  %v5389 = vmul.f32 %v4181, %v5311
  %v5390 = vmul.f32 %v4182, %v5311
  %v5391 = vmul.f32 %v4183, %v5311
  %v5392 = vmul.f32 %v4184, %v5311
  %v5393 = vmul.f32 %v4185, %v5311
  %v5394 = vmul.f32 %v4186, %v5311
  %v5395 = vmul.f32 %v4187, %v5311
  %v5396 = vmul.f32 %v4188, %v5311
  %v5397 = vmul.f32 %v4189, %v5311
  %v5398 = vmul.f32 %v4190, %v5311
  %v5399 = vmul.f32 %v4191, %v5311
  %v5400 = vmul.f32 %v4192, %v5311
  %v5401 = vmul.f32 %v4193, %v5311
  %v5402 = vmul.f32 %v4194, %v5311
  %v5403 = vmul.f32 %v4195, %v5311
  %v5404 = vmul.f32 %v4196, %v5311
  %v5405 = vmul.f32 %v4197, %v5311
  %v5406 = vmul.f32 %v4198, %v5311
  %v5407 = vmul.f32 %v4199, %v5311
  %v5408 = vmul.f32 %v4200, %v5311
  %v5409 = vmul.f32 %v4201, %v5311
  %v5410 = vmul.f32 %v4202, %v5311
  %v5411 = vmul.f32 %v4203, %v5311
  %v5412 = vmul.f32 %v4204, %v5311
  %v5413 = vmul.f32 %v4205, %v5311
  %v5414 = vmul.f32 %v4206, %v5311
  %v5415 = vmul.f32 %v4207, %v5311
  %v5416 = vmul.f32 %v4208, %v5311
  %v5417 = vmul.f32 %v4209, %v5311
  %v5418 = vmul.f32 %v4210, %v5311
  %v5419 = vmul.f32 %v4211, %v5311
  %v5420 = vmul.f32 %v4212, %v5311
  %v5421 = vmul.f32 %v4213, %v5311
  %v5422 = vmul.f32 %v4214, %v5311
  %v5423 = vmul.f32 %v4215, %v5311
  %v5424 = vmul.f32 %v4216, %v5311
  %v5425 = vmul.f32 %v4217, %v5311
  %v5426 = vmul.f32 %v4218, %v5311
  %v5427 = vmul.f32 %v4219, %v5311
  %v5428 = vmul.f32 %v4220, %v5311
  %v5429 = vmul.f32 %v4221, %v5311
  %v5430 = vmul.f32 %v4222, %v5311
  %v5431 = vmul.f32 %v4223, %v5311
  %v5432 = vmul.f32 %v4224, %v5311
  %v5433 = vmul.f32 %v4225, %v5311
  %v5434 = vmul.f32 %v4226, %v5311
  %v5435 = vmul.f32 %v4227, %v5311
  %v5436 = vmul.f32 %v4228, %v5311
  %v5437 = vmul.f32 %v4229, %v5311
  %v5438 = vmul.f32 %v4230, %v5311
  %v5439 = vmul.f32 %v4231, %v5311
  %v5440 = vmul.f32 %v4232, %v5311
  %v5441 = vmul.f32 %v4233, %v5311
  %v5442 = vmul.f32 %v4234, %v5311
  %v5443 = vmul.f32 %v4235, %v5311
  %v5444 = vmul.f32 %v4236, %v5311
  %v5445 = vmul.f32 %v4237, %v5311
  %v5446 = vmul.f32 %v4238, %v5311
  %v5447 = vmul.f32 %v4239, %v5311
  %v5448 = vmul.f32 %v4240, %v5311
  %v5449 = vmul.f32 %v4241, %v5311
  %v5450 = vmul.f32 %v4242, %v5311
  %v5451 = vmul.f32 %v4243, %v5311
  %v5452 = vmul.f32 %v4244, %v5311
  %v5453 = vmul.f32 %v4245, %v5311
  %v5454 = vmul.f32 %v4246, %v5311
  %v5455 = vmul.f32 %v4247, %v5311
  %v5456 = vmul.f32 %v4248, %v5311
  %v5457 = vmul.f32 %v4249, %v5311
  %v5458 = vmul.f32 %v4250, %v5311
  %v5459 = vmul.f32 %v4251, %v5311
  %v5460 = vmul.f32 %v4252, %v5311
  %v5461 = vmul.f32 %v4253, %v5311
  %v5462 = vmul.f32 %v4254, %v5311
  %v5463 = vmul.f32 %v4255, %v5311
  %v5464 = vmul.f32 %v4256, %v5311
  %v5465 = vmul.f32 %v4257, %v5311
  %v5466 = vmul.f32 %v4258, %v5311
  %v5467 = vmul.f32 %v4259, %v5311
  %v5468 = vmul.f32 %v4260, %v5311
  %v5469 = vmul.f32 %v4261, %v5311
  %v5470 = vmul.f32 %v4262, %v5311
  %v5471 = vmul.f32 %v4263, %v5311
  %v5472 = vmul.f32 %v4264, %v5311
  %v5473 = vmul.f32 %v4265, %v5311
  %v5474 = vmul.f32 %v4266, %v5311
  %v5475 = vmul.f32 %v4267, %v5311
  %v5476 = vmul.f32 %v4268, %v5311
  %v5477 = vmul.f32 %v4269, %v5311
  %v5478 = vmul.f32 %v4270, %v5311
  %v5479 = vmul.f32 %v4271, %v5311
  %v5480 = vmul.f32 %v4272, %v5311
  %v5481 = vmul.f32 %v4273, %v5311
  %v5482 = vmul.f32 %v4274, %v5311
  %v5483 = vmul.f32 %v4275, %v5311
  %v5484 = vmul.f32 %v4276, %v5311
  %v5485 = vmul.f32 %v4277, %v5311
  %v5486 = vmul.f32 %v4278, %v5311
  %v5487 = vmul.f32 %v4279, %v5311
  %v5488 = vmul.f32 %v4280, %v5311
  %v5489 = vmul.f32 %v4281, %v5311
  %v5490 = vmul.f32 %v4282, %v5311
  %v5491 = vmul.f32 %v4283, %v5311
  %v5492 = vmul.f32 %v4284, %v5311
  %v5493 = vmul.f32 %v4285, %v5311
  %v5494 = vmul.f32 %v4286, %v5311
  %v5495 = vmul.f32 %v4287, %v5311
  %v5496 = vmul.f32 %v4288, %v5311
  %v5497 = vmul.f32 %v4289, %v5311
  %v5498 = vmul.f32 %v4290, %v5311
  %v5499 = vmul.f32 %v4291, %v5311
  %v5500 = vmul.f32 %v4292, %v5311
  %v5501 = vmul.f32 %v4293, %v5311
  %v5502 = vmul.f32 %v4294, %v5311
  %v5503 = vmul.f32 %v4295, %v5311
  %v5504 = vmul.f32 %v4296, %v5311
  %v5505 = vmul.f32 %v4297, %v5311
  %v5506 = vmul.f32 %v4298, %v5311
  %v5507 = vmul.f32 %v4299, %v5311
  %v5508 = vmul.f32 %v4300, %v5311
  %v5509 = vmul.f32 %v4301, %v5311
  %v5510 = vmul.f32 %v4302, %v5311
  %v5511 = vmul.f32 %v4303, %v5311
  %v5512 = vmul.f32 %v4304, %v5311
  %v5513 = vmul.f32 %v4305, %v5311
  %v5514 = vmul.f32 %v4306, %v5311
  %v5515 = vmul.f32 %v4307, %v5311
  %v5516 = vmul.f32 %v4308, %v5311
  %v5517 = vmul.f32 %v4309, %v5311
  %v5518 = vmul.f32 %v4310, %v5311
  %v5519 = vmul.f32 %v4311, %v5311
  %v5520 = vmul.f32 %v4312, %v5311
  %v5521 = vmul.f32 %v4313, %v5311
  %v5522 = vmul.f32 %v4314, %v5311
  %v5523 = vmul.f32 %v4315, %v5311
  %v5524 = vmul.f32 %v4316, %v5311
  %v5525 = vmul.f32 %v4317, %v5311
  %v5526 = vmul.f32 %v4318, %v5311
  %v5527 = vmul.f32 %v4319, %v5311
  %v5528 = vmul.f32 %v4320, %v5311
  %v5529 = vmul.f32 %v4321, %v5311
  %v5530 = vmul.f32 %v4322, %v5311
  %v5531 = vmul.f32 %v4323, %v5311
  %v5532 = vmul.f32 %v4324, %v5311
  %v5533 = vmul.f32 %v4325, %v5311
  %v5534 = vmul.f32 %v4326, %v5311
  %v5535 = vmul.f32 %v4327, %v5311
  %v5536 = vmul.f32 %v4328, %v5311
  %v5537 = vmul.f32 %v4329, %v5311
  %v5538 = vmul.f32 %v4330, %v5311
  %v5539 = vmul.f32 %v4331, %v5311
  %v5540 = vmul.f32 %v4332, %v5311
  %v5541 = vmul.f32 %v4333, %v5311
  %v5542 = vmul.f32 %v4334, %v5311
  %v5543 = vmul.f32 %v4335, %v5311
  %v5544 = vmul.f32 %v4336, %v5311
  %v5545 = vmul.f32 %v4337, %v5311
  %v5546 = vmul.f32 %v4338, %v5311
  %v5547 = vmul.f32 %v4339, %v5311
  %v5548 = vmul.f32 %v4340, %v5311
  %v5549 = vmul.f32 %v4341, %v5311
  %v5550 = vmul.f32 %v4342, %v5311
  %v5551 = vmul.f32 %v4343, %v5311
  %v5552 = vmul.f32 %v4344, %v5311
  %v5553 = vmul.f32 %v4345, %v5311
  %v5554 = vmul.f32 %v4346, %v5311
  %v5555 = vmul.f32 %v4347, %v5311
  %v5556 = vmul.f32 %v4348, %v5311
  %v5557 = vmul.f32 %v4349, %v5311
  %v5558 = vmul.f32 %v4350, %v5311
  %v5559 = vmul.f32 %v4351, %v5311
  %v5560 = vmul.f32 %v4352, %v5311
  %v5561 = vmul.f32 %v4353, %v5311
  %v5562 = vmul.f32 %v4354, %v5311
  %v5563 = vmul.f32 %v4355, %v5311
  %v5564 = vmul.f32 %v4356, %v5311
  %v5565 = vmul.f32 %v4357, %v5311
  %v5566 = vmul.f32 %v4358, %v5311
  %v5567 = vmul.f32 %v4359, %v5311
  %v5568 = vmul.f32 %v4360, %v5311
  %v5569 = vmul.f32 %v4361, %v5311
  %v5570 = vmul.f32 %v4362, %v5311
  %v5571 = vmul.f32 %v4363, %v5311
  %v5572 = vmul.f32 %v4364, %v5311
  %v5573 = vmul.f32 %v4365, %v5311
  %v5574 = vmul.f32 %v4366, %v5311
  %v5575 = vmul.f32 %v4367, %v5311
  %v5576 = vmul.f32 %v4368, %v5311
  %v5577 = vmul.f32 %v4369, %v5311
  %v5578 = vmul.f32 %v4370, %v5311
  %v5579 = vmul.f32 %v4371, %v5311
  %v5580 = vmul.f32 %v4372, %v5311
  %v5581 = vmul.f32 %v4373, %v5311
  %v5582 = vmul.f32 %v4374, %v5311
  %v5583 = vmul.f32 %v4375, %v5311
  %v5584 = vmul.f32 %v4376, %v5311
  %v5585 = vmul.f32 %v4377, %v5311
  %v5586 = vmul.f32 %v4378, %v5311
  %v5587 = vmul.f32 %v4379, %v5311
  %v5588 = vmul.f32 %v4380, %v5311
  %v5589 = vmul.f32 %v4381, %v5311
  %v5590 = vmul.f32 %v4382, %v5311
  %v5591 = vmul.f32 %v4383, %v5311
  %v5592 = vmul.f32 %v4384, %v5311
  %v5593 = vmul.f32 %v4385, %v5311
  %v5594 = vmul.f32 %v4386, %v5311
  %v5595 = vmul.f32 %v4387, %v5311
  %v5596 = vmul.f32 %v4388, %v5311
  %v5597 = vmul.f32 %v4389, %v5311
  %v5598 = vmul.f32 %v4390, %v5311
  %v5599 = vmul.f32 %v4391, %v5311
  %v5600 = vmul.f32 %v4392, %v5311
  %v5601 = vmul.f32 %v4393, %v5311
  %v5602 = vmul.f32 %v4394, %v5311
  %v5603 = vmul.f32 %v4395, %v5311
  %v5604 = vmul.f32 %v4396, %v5311
  %v5605 = vmul.f32 %v4397, %v5311
  %v5606 = vmul.f32 %v4398, %v5311
  %v5607 = vmul.f32 %v4399, %v5311
  %v5608 = vmul.f32 %v4400, %v5311
  %v5609 = vmul.f32 %v4401, %v5311
  %v5610 = vmul.f32 %v4402, %v5311
  %v5611 = vmul.f32 %v4403, %v5311
  %v5612 = vmul.f32 %v4404, %v5311
  %v5613 = vmul.f32 %v4405, %v5311
  %v5614 = vmul.f32 %v4406, %v5311
  %v5615 = vmul.f32 %v4407, %v5311
  %v5616 = vmul.f32 %v4408, %v5311
  %v5617 = vmul.f32 %v4409, %v5311
  %v5618 = vmul.f32 %v4410, %v5311
  %v5619 = vmul.f32 %v4411, %v5311
  %v5620 = vmul.f32 %v4412, %v5311
  %v5621 = vmul.f32 %v4413, %v5311
  %v5622 = vmul.f32 %v4414, %v5311
  %v5623 = vmul.f32 %v4415, %v5311
  %v5624 = vmul.f32 %v4416, %v5311
  %v5625 = vmul.f32 %v4417, %v5311
  %v5626 = vmul.f32 %v4418, %v5311
  %v5627 = vmul.f32 %v4419, %v5311
  %v5628 = vmul.f32 %v4420, %v5311
  %v5629 = vmul.f32 %v4421, %v5311
  %v5630 = vmul.f32 %v4422, %v5311
  %v5631 = vmul.f32 %v4423, %v5311
  %v5632 = vmul.f32 %v4424, %v5311
  %v5633 = vmul.f32 %v4425, %v5311
  %v5634 = vmul.f32 %v4426, %v5311
  %v5635 = vmul.f32 %v4427, %v5311
  %v5636 = vmul.f32 %v4428, %v5311
  %v5637 = vmul.f32 %v4429, %v5311
  %v5638 = vmul.f32 %v4430, %v5311
  %v5639 = vmul.f32 %v4431, %v5311
  %v5640 = vmul.f32 %v4432, %v5311
  %v5641 = vmul.f32 %v4433, %v5311
  %v5642 = vmul.f32 %v4434, %v5311
  %v5643 = vmul.f32 %v4435, %v5311
  %v5644 = vmul.f32 %v4436, %v5311
  %v5645 = vmul.f32 %v4437, %v5311
  %v5646 = vmul.f32 %v4438, %v5311
  %v5647 = vmul.f32 %v4439, %v5311
  %v5648 = vmul.f32 %v4440, %v5311
  %v5649 = vmul.f32 %v4441, %v5311
  %v5650 = vmul.f32 %v4442, %v5311
  %v5651 = vmul.f32 %v4443, %v5311
  %v5652 = vmul.f32 %v4444, %v5311
  %v5653 = vmul.f32 %v4445, %v5311
  %v5654 = vmul.f32 %v4446, %v5311
  %v5655 = vmul.f32 %v4447, %v5311
  %v5656 = vmul.f32 %v4448, %v5311
  %v5657 = vmul.f32 %v4449, %v5311
  %v5658 = vmul.f32 %v4450, %v5311
  %v5659 = vmul.f32 %v4451, %v5311
  %v5660 = vmul.f32 %v4452, %v5311
  %v5661 = vmul.f32 %v4453, %v5311
  %v5662 = vmul.f32 %v4454, %v5311
  %v5663 = vmul.f32 %v4455, %v5311
  %v5664 = vmul.f32 %v4456, %v5311
  %v5665 = vmul.f32 %v4457, %v5311
  %v5666 = vmul.f32 %v4458, %v5311
  %v5667 = vmul.f32 %v4459, %v5311
  %v5668 = vmul.f32 %v4460, %v5311
  %v5669 = vmul.f32 %v4461, %v5311
  %v5670 = vmul.f32 %v4462, %v5311
  %v5671 = vmul.f32 %v4463, %v5311
  %v5672 = vmul.f32 %v4464, %v5311
  %v5673 = vmul.f32 %v4465, %v5311
  %v5674 = vmul.f32 %v4466, %v5311
  %v5675 = vmul.f32 %v4467, %v5311
  %v5676 = vmul.f32 %v4468, %v5311
  %v5677 = vmul.f32 %v4469, %v5311
  %v5678 = vmul.f32 %v4470, %v5311
  %v5679 = vmul.f32 %v4471, %v5311
  %v5680 = vmul.f32 %v4472, %v5311
  %v5681 = vmul.f32 %v4473, %v5311
  %v5682 = vmul.f32 %v4474, %v5311
  %v5683 = vmul.f32 %v4475, %v5311
  %v5684 = vmul.f32 %v4476, %v5311
  %v5685 = vmul.f32 %v4477, %v5311
  %v5686 = vmul.f32 %v4478, %v5311
  %v5687 = vmul.f32 %v4479, %v5311
  %v5688 = vmul.f32 %v4480, %v5311
  %v5689 = vmul.f32 %v4481, %v5311
  %v5690 = vmul.f32 %v4482, %v5311
  %v5691 = vmul.f32 %v4483, %v5311
  %v5692 = vmul.f32 %v4484, %v5311
  %v5693 = vmul.f32 %v4485, %v5311
  %v5694 = vmul.f32 %v4486, %v5311
  %v5695 = vmul.f32 %v4487, %v5311
  %v5696 = vmul.f32 %v4488, %v5311
  %v5697 = vmul.f32 %v4489, %v5311
  %v5698 = vmul.f32 %v4490, %v5311
  %v5699 = vmul.f32 %v4491, %v5311
  %v5700 = vmul.f32 %v4492, %v5311
  %v5701 = vmul.f32 %v4493, %v5311
  %v5702 = vmul.f32 %v4494, %v5311
  %v5703 = vmul.f32 %v4495, %v5311
  %v5704 = vmul.f32 %v4496, %v5311
  %v5705 = vmul.f32 %v4497, %v5311
  %v5706 = vmul.f32 %v4498, %v5311
  %v5707 = vmul.f32 %v4499, %v5311
  %v5708 = vmul.f32 %v4500, %v5311
  %v5709 = vmul.f32 %v4501, %v5311
  %v5710 = vmul.f32 %v4502, %v5311
  %v5711 = vmul.f32 %v4503, %v5311
  %v5712 = vld [vmem:[%s3] sm:$0x1]
  %v5714 = vlaneseq
  %v5715 = vshrl.u32 %v5714, 7
  %v5716 = vsub.s32 0, %v5715
  %v5717 = vrot.slane %v5712, %v5716
  %v5719 = vmul.f32 %v5312, %v5717
  %v5720 = vmul.f32 %v5313, %v5717
  %v5721 = vmul.f32 %v5314, %v5717
  %v5722 = vmul.f32 %v5315, %v5717
  %v5723 = vmul.f32 %v5316, %v5717
  %v5724 = vmul.f32 %v5317, %v5717
  %v5725 = vmul.f32 %v5318, %v5717
  %v5726 = vmul.f32 %v5319, %v5717
  %v5727 = vmul.f32 %v5320, %v5717
  %v5728 = vmul.f32 %v5321, %v5717
  %v5729 = vmul.f32 %v5322, %v5717
  %v5730 = vmul.f32 %v5323, %v5717
  %v5731 = vmul.f32 %v5324, %v5717
  %v5732 = vmul.f32 %v5325, %v5717
  %v5733 = vmul.f32 %v5326, %v5717
  %v5734 = vmul.f32 %v5327, %v5717
  %v5735 = vmul.f32 %v5328, %v5717
  %v5736 = vmul.f32 %v5329, %v5717
  %v5737 = vmul.f32 %v5330, %v5717
  %v5738 = vmul.f32 %v5331, %v5717
  %v5739 = vmul.f32 %v5332, %v5717
  %v5740 = vmul.f32 %v5333, %v5717
  %v5741 = vmul.f32 %v5334, %v5717
  %v5742 = vmul.f32 %v5335, %v5717
  %v5743 = vmul.f32 %v5336, %v5717
  %v5744 = vmul.f32 %v5337, %v5717
  %v5745 = vmul.f32 %v5338, %v5717
  %v5746 = vmul.f32 %v5339, %v5717
  %v5747 = vmul.f32 %v5340, %v5717
  %v5748 = vmul.f32 %v5341, %v5717
  %v5749 = vmul.f32 %v5342, %v5717
  %v5750 = vmul.f32 %v5343, %v5717
  %v5751 = vmul.f32 %v5344, %v5717
  %v5752 = vmul.f32 %v5345, %v5717
  %v5753 = vmul.f32 %v5346, %v5717
  %v5754 = vmul.f32 %v5347, %v5717
  %v5755 = vmul.f32 %v5348, %v5717
  %v5756 = vmul.f32 %v5349, %v5717
  %v5757 = vmul.f32 %v5350, %v5717
  %v5758 = vmul.f32 %v5351, %v5717
  %v5759 = vmul.f32 %v5352, %v5717
  %v5760 = vmul.f32 %v5353, %v5717
  %v5761 = vmul.f32 %v5354, %v5717
  %v5762 = vmul.f32 %v5355, %v5717
  %v5763 = vmul.f32 %v5356, %v5717
  %v5764 = vmul.f32 %v5357, %v5717
  %v5765 = vmul.f32 %v5358, %v5717
  %v5766 = vmul.f32 %v5359, %v5717
  %v5767 = vmul.f32 %v5360, %v5717
  %v5768 = vmul.f32 %v5361, %v5717
  %v5769 = vmul.f32 %v5362, %v5717
  %v5770 = vmul.f32 %v5363, %v5717
  %v5771 = vmul.f32 %v5364, %v5717
  %v5772 = vmul.f32 %v5365, %v5717
  %v5773 = vmul.f32 %v5366, %v5717
  %v5774 = vmul.f32 %v5367, %v5717
  %v5775 = vmul.f32 %v5368, %v5717
  %v5776 = vmul.f32 %v5369, %v5717
  %v5777 = vmul.f32 %v5370, %v5717
  %v5778 = vmul.f32 %v5371, %v5717
  %v5779 = vmul.f32 %v5372, %v5717
  %v5780 = vmul.f32 %v5373, %v5717
  %v5781 = vmul.f32 %v5374, %v5717
  %v5782 = vmul.f32 %v5375, %v5717
  %v5783 = vmul.f32 %v5376, %v5717
  %v5784 = vmul.f32 %v5377, %v5717
  %v5785 = vmul.f32 %v5378, %v5717
  %v5786 = vmul.f32 %v5379, %v5717
  %v5787 = vmul.f32 %v5380, %v5717
  %v5788 = vmul.f32 %v5381, %v5717
  %v5789 = vmul.f32 %v5382, %v5717
  %v5790 = vmul.f32 %v5383, %v5717
  %v5791 = vmul.f32 %v5384, %v5717
  %v5792 = vmul.f32 %v5385, %v5717
  %v5793 = vmul.f32 %v5386, %v5717
  %v5794 = vmul.f32 %v5387, %v5717
  %v5795 = vmul.f32 %v5388, %v5717
  %v5796 = vmul.f32 %v5389, %v5717
  %v5797 = vmul.f32 %v5390, %v5717
  %v5798 = vmul.f32 %v5391, %v5717
  %v5799 = vmul.f32 %v5392, %v5717
  %v5800 = vmul.f32 %v5393, %v5717
  %v5801 = vmul.f32 %v5394, %v5717
  %v5802 = vmul.f32 %v5395, %v5717
  %v5803 = vmul.f32 %v5396, %v5717
  %v5804 = vmul.f32 %v5397, %v5717
  %v5805 = vmul.f32 %v5398, %v5717
  %v5806 = vmul.f32 %v5399, %v5717
  %v5807 = vmul.f32 %v5400, %v5717
  %v5808 = vmul.f32 %v5401, %v5717
  %v5809 = vmul.f32 %v5402, %v5717
  %v5810 = vmul.f32 %v5403, %v5717
  %v5811 = vmul.f32 %v5404, %v5717
  %v5812 = vmul.f32 %v5405, %v5717
  %v5813 = vmul.f32 %v5406, %v5717
  %v5814 = vmul.f32 %v5407, %v5717
  %v5815 = vmul.f32 %v5408, %v5717
  %v5816 = vmul.f32 %v5409, %v5717
  %v5817 = vmul.f32 %v5410, %v5717
  %v5818 = vmul.f32 %v5411, %v5717
  %v5819 = vmul.f32 %v5412, %v5717
  %v5820 = vmul.f32 %v5413, %v5717
  %v5821 = vmul.f32 %v5414, %v5717
  %v5822 = vmul.f32 %v5415, %v5717
  %v5823 = vmul.f32 %v5416, %v5717
  %v5824 = vmul.f32 %v5417, %v5717
  %v5825 = vmul.f32 %v5418, %v5717
  %v5826 = vmul.f32 %v5419, %v5717
  %v5827 = vmul.f32 %v5420, %v5717
  %v5828 = vmul.f32 %v5421, %v5717
  %v5829 = vmul.f32 %v5422, %v5717
  %v5830 = vmul.f32 %v5423, %v5717
  %v5831 = vmul.f32 %v5424, %v5717
  %v5832 = vmul.f32 %v5425, %v5717
  %v5833 = vmul.f32 %v5426, %v5717
  %v5834 = vmul.f32 %v5427, %v5717
  %v5835 = vmul.f32 %v5428, %v5717
  %v5836 = vmul.f32 %v5429, %v5717
  %v5837 = vmul.f32 %v5430, %v5717
  %v5838 = vmul.f32 %v5431, %v5717
  %v5839 = vmul.f32 %v5432, %v5717
  %v5840 = vmul.f32 %v5433, %v5717
  %v5841 = vmul.f32 %v5434, %v5717
  %v5842 = vmul.f32 %v5435, %v5717
  %v5843 = vmul.f32 %v5436, %v5717
  %v5844 = vmul.f32 %v5437, %v5717
  %v5845 = vmul.f32 %v5438, %v5717
  %v5846 = vmul.f32 %v5439, %v5717
  %v5847 = vmul.f32 %v5440, %v5717
  %v5848 = vmul.f32 %v5441, %v5717
  %v5849 = vmul.f32 %v5442, %v5717
  %v5850 = vmul.f32 %v5443, %v5717
  %v5851 = vmul.f32 %v5444, %v5717
  %v5852 = vmul.f32 %v5445, %v5717
  %v5853 = vmul.f32 %v5446, %v5717
  %v5854 = vmul.f32 %v5447, %v5717
  %v5855 = vmul.f32 %v5448, %v5717
  %v5856 = vmul.f32 %v5449, %v5717
  %v5857 = vmul.f32 %v5450, %v5717
  %v5858 = vmul.f32 %v5451, %v5717
  %v5859 = vmul.f32 %v5452, %v5717
  %v5860 = vmul.f32 %v5453, %v5717
  %v5861 = vmul.f32 %v5454, %v5717
  %v5862 = vmul.f32 %v5455, %v5717
  %v5863 = vmul.f32 %v5456, %v5717
  %v5864 = vmul.f32 %v5457, %v5717
  %v5865 = vmul.f32 %v5458, %v5717
  %v5866 = vmul.f32 %v5459, %v5717
  %v5867 = vmul.f32 %v5460, %v5717
  %v5868 = vmul.f32 %v5461, %v5717
  %v5869 = vmul.f32 %v5462, %v5717
  %v5870 = vmul.f32 %v5463, %v5717
  %v5871 = vmul.f32 %v5464, %v5717
  %v5872 = vmul.f32 %v5465, %v5717
  %v5873 = vmul.f32 %v5466, %v5717
  %v5874 = vmul.f32 %v5467, %v5717
  %v5875 = vmul.f32 %v5468, %v5717
  %v5876 = vmul.f32 %v5469, %v5717
  %v5877 = vmul.f32 %v5470, %v5717
  %v5878 = vmul.f32 %v5471, %v5717
  %v5879 = vmul.f32 %v5472, %v5717
  %v5880 = vmul.f32 %v5473, %v5717
  %v5881 = vmul.f32 %v5474, %v5717
  %v5882 = vmul.f32 %v5475, %v5717
  %v5883 = vmul.f32 %v5476, %v5717
  %v5884 = vmul.f32 %v5477, %v5717
  %v5885 = vmul.f32 %v5478, %v5717
  %v5886 = vmul.f32 %v5479, %v5717
  %v5887 = vmul.f32 %v5480, %v5717
  %v5888 = vmul.f32 %v5481, %v5717
  %v5889 = vmul.f32 %v5482, %v5717
  %v5890 = vmul.f32 %v5483, %v5717
  %v5891 = vmul.f32 %v5484, %v5717
  %v5892 = vmul.f32 %v5485, %v5717
  %v5893 = vmul.f32 %v5486, %v5717
  %v5894 = vmul.f32 %v5487, %v5717
  %v5895 = vmul.f32 %v5488, %v5717
  %v5896 = vmul.f32 %v5489, %v5717
  %v5897 = vmul.f32 %v5490, %v5717
  %v5898 = vmul.f32 %v5491, %v5717
  %v5899 = vmul.f32 %v5492, %v5717
  %v5900 = vmul.f32 %v5493, %v5717
  %v5901 = vmul.f32 %v5494, %v5717
  %v5902 = vmul.f32 %v5495, %v5717
  %v5903 = vmul.f32 %v5496, %v5717
  %v5904 = vmul.f32 %v5497, %v5717
  %v5905 = vmul.f32 %v5498, %v5717
  %v5906 = vmul.f32 %v5499, %v5717
  %v5907 = vmul.f32 %v5500, %v5717
  %v5908 = vmul.f32 %v5501, %v5717
  %v5909 = vmul.f32 %v5502, %v5717
  %v5910 = vmul.f32 %v5503, %v5717
  %v5911 = vmul.f32 %v5504, %v5717
  %v5912 = vmul.f32 %v5505, %v5717
  %v5913 = vmul.f32 %v5506, %v5717
  %v5914 = vmul.f32 %v5507, %v5717
  %v5915 = vmul.f32 %v5508, %v5717
  %v5916 = vmul.f32 %v5509, %v5717
  %v5917 = vmul.f32 %v5510, %v5717
  %v5918 = vmul.f32 %v5511, %v5717
  %v5919 = vmul.f32 %v5512, %v5717
  %v5920 = vmul.f32 %v5513, %v5717
  %v5921 = vmul.f32 %v5514, %v5717
  %v5922 = vmul.f32 %v5515, %v5717
  %v5923 = vmul.f32 %v5516, %v5717
  %v5924 = vmul.f32 %v5517, %v5717
  %v5925 = vmul.f32 %v5518, %v5717
  %v5926 = vmul.f32 %v5519, %v5717
  %v5927 = vmul.f32 %v5520, %v5717
  %v5928 = vmul.f32 %v5521, %v5717
  %v5929 = vmul.f32 %v5522, %v5717
  %v5930 = vmul.f32 %v5523, %v5717
  %v5931 = vmul.f32 %v5524, %v5717
  %v5932 = vmul.f32 %v5525, %v5717
  %v5933 = vmul.f32 %v5526, %v5717
  %v5934 = vmul.f32 %v5527, %v5717
  %v5935 = vmul.f32 %v5528, %v5717
  %v5936 = vmul.f32 %v5529, %v5717
  %v5937 = vmul.f32 %v5530, %v5717
  %v5938 = vmul.f32 %v5531, %v5717
  %v5939 = vmul.f32 %v5532, %v5717
  %v5940 = vmul.f32 %v5533, %v5717
  %v5941 = vmul.f32 %v5534, %v5717
  %v5942 = vmul.f32 %v5535, %v5717
  %v5943 = vmul.f32 %v5536, %v5717
  %v5944 = vmul.f32 %v5537, %v5717
  %v5945 = vmul.f32 %v5538, %v5717
  %v5946 = vmul.f32 %v5539, %v5717
  %v5947 = vmul.f32 %v5540, %v5717
  %v5948 = vmul.f32 %v5541, %v5717
  %v5949 = vmul.f32 %v5542, %v5717
  %v5950 = vmul.f32 %v5543, %v5717
  %v5951 = vmul.f32 %v5544, %v5717
  %v5952 = vmul.f32 %v5545, %v5717
  %v5953 = vmul.f32 %v5546, %v5717
  %v5954 = vmul.f32 %v5547, %v5717
  %v5955 = vmul.f32 %v5548, %v5717
  %v5956 = vmul.f32 %v5549, %v5717
  %v5957 = vmul.f32 %v5550, %v5717
  %v5958 = vmul.f32 %v5551, %v5717
  %v5959 = vmul.f32 %v5552, %v5717
  %v5960 = vmul.f32 %v5553, %v5717
  %v5961 = vmul.f32 %v5554, %v5717
  %v5962 = vmul.f32 %v5555, %v5717
  %v5963 = vmul.f32 %v5556, %v5717
  %v5964 = vmul.f32 %v5557, %v5717
  %v5965 = vmul.f32 %v5558, %v5717
  %v5966 = vmul.f32 %v5559, %v5717
  %v5967 = vmul.f32 %v5560, %v5717
  %v5968 = vmul.f32 %v5561, %v5717
  %v5969 = vmul.f32 %v5562, %v5717
  %v5970 = vmul.f32 %v5563, %v5717
  %v5971 = vmul.f32 %v5564, %v5717
  %v5972 = vmul.f32 %v5565, %v5717
  %v5973 = vmul.f32 %v5566, %v5717
  %v5974 = vmul.f32 %v5567, %v5717
  %v5975 = vmul.f32 %v5568, %v5717
  %v5976 = vmul.f32 %v5569, %v5717
  %v5977 = vmul.f32 %v5570, %v5717
  %v5978 = vmul.f32 %v5571, %v5717
  %v5979 = vmul.f32 %v5572, %v5717
  %v5980 = vmul.f32 %v5573, %v5717
  %v5981 = vmul.f32 %v5574, %v5717
  %v5982 = vmul.f32 %v5575, %v5717
  %v5983 = vmul.f32 %v5576, %v5717
  %v5984 = vmul.f32 %v5577, %v5717
  %v5985 = vmul.f32 %v5578, %v5717
  %v5986 = vmul.f32 %v5579, %v5717
  %v5987 = vmul.f32 %v5580, %v5717
  %v5988 = vmul.f32 %v5581, %v5717
  %v5989 = vmul.f32 %v5582, %v5717
  %v5990 = vmul.f32 %v5583, %v5717
  %v5991 = vmul.f32 %v5584, %v5717
  %v5992 = vmul.f32 %v5585, %v5717
  %v5993 = vmul.f32 %v5586, %v5717
  %v5994 = vmul.f32 %v5587, %v5717
  %v5995 = vmul.f32 %v5588, %v5717
  %v5996 = vmul.f32 %v5589, %v5717
  %v5997 = vmul.f32 %v5590, %v5717
  %v5998 = vmul.f32 %v5591, %v5717
  %v5999 = vmul.f32 %v5592, %v5717
  %v6000 = vmul.f32 %v5593, %v5717
  %v6001 = vmul.f32 %v5594, %v5717
  %v6002 = vmul.f32 %v5595, %v5717
  %v6003 = vmul.f32 %v5596, %v5717
  %v6004 = vmul.f32 %v5597, %v5717
  %v6005 = vmul.f32 %v5598, %v5717
  %v6006 = vmul.f32 %v5599, %v5717
  %v6007 = vmul.f32 %v5600, %v5717
  %v6008 = vmul.f32 %v5601, %v5717
  %v6009 = vmul.f32 %v5602, %v5717
  %v6010 = vmul.f32 %v5603, %v5717
  %v6011 = vmul.f32 %v5604, %v5717
  %v6012 = vmul.f32 %v5605, %v5717
  %v6013 = vmul.f32 %v5606, %v5717
  %v6014 = vmul.f32 %v5607, %v5717
  %v6015 = vmul.f32 %v5608, %v5717
  %v6016 = vmul.f32 %v5609, %v5717
  %v6017 = vmul.f32 %v5610, %v5717
  %v6018 = vmul.f32 %v5611, %v5717
  %v6019 = vmul.f32 %v5612, %v5717
  %v6020 = vmul.f32 %v5613, %v5717
  %v6021 = vmul.f32 %v5614, %v5717
  %v6022 = vmul.f32 %v5615, %v5717
  %v6023 = vmul.f32 %v5616, %v5717
  %v6024 = vmul.f32 %v5617, %v5717
  %v6025 = vmul.f32 %v5618, %v5717
  %v6026 = vmul.f32 %v5619, %v5717
  %v6027 = vmul.f32 %v5620, %v5717
  %v6028 = vmul.f32 %v5621, %v5717
  %v6029 = vmul.f32 %v5622, %v5717
  %v6030 = vmul.f32 %v5623, %v5717
  %v6031 = vmul.f32 %v5624, %v5717
  %v6032 = vmul.f32 %v5625, %v5717
  %v6033 = vmul.f32 %v5626, %v5717
  %v6034 = vmul.f32 %v5627, %v5717
  %v6035 = vmul.f32 %v5628, %v5717
  %v6036 = vmul.f32 %v5629, %v5717
  %v6037 = vmul.f32 %v5630, %v5717
  %v6038 = vmul.f32 %v5631, %v5717
  %v6039 = vmul.f32 %v5632, %v5717
  %v6040 = vmul.f32 %v5633, %v5717
  %v6041 = vmul.f32 %v5634, %v5717
  %v6042 = vmul.f32 %v5635, %v5717
  %v6043 = vmul.f32 %v5636, %v5717
  %v6044 = vmul.f32 %v5637, %v5717
  %v6045 = vmul.f32 %v5638, %v5717
  %v6046 = vmul.f32 %v5639, %v5717
  %v6047 = vmul.f32 %v5640, %v5717
  %v6048 = vmul.f32 %v5641, %v5717
  %v6049 = vmul.f32 %v5642, %v5717
  %v6050 = vmul.f32 %v5643, %v5717
  %v6051 = vmul.f32 %v5644, %v5717
  %v6052 = vmul.f32 %v5645, %v5717
  %v6053 = vmul.f32 %v5646, %v5717
  %v6054 = vmul.f32 %v5647, %v5717
  %v6055 = vmul.f32 %v5648, %v5717
  %v6056 = vmul.f32 %v5649, %v5717
  %v6057 = vmul.f32 %v5650, %v5717
  %v6058 = vmul.f32 %v5651, %v5717
  %v6059 = vmul.f32 %v5652, %v5717
  %v6060 = vmul.f32 %v5653, %v5717
  %v6061 = vmul.f32 %v5654, %v5717
  %v6062 = vmul.f32 %v5655, %v5717
  %v6063 = vmul.f32 %v5656, %v5717
  %v6064 = vmul.f32 %v5657, %v5717
  %v6065 = vmul.f32 %v5658, %v5717
  %v6066 = vmul.f32 %v5659, %v5717
  %v6067 = vmul.f32 %v5660, %v5717
  %v6068 = vmul.f32 %v5661, %v5717
  %v6069 = vmul.f32 %v5662, %v5717
  %v6070 = vmul.f32 %v5663, %v5717
  %v6071 = vmul.f32 %v5664, %v5717
  %v6072 = vmul.f32 %v5665, %v5717
  %v6073 = vmul.f32 %v5666, %v5717
  %v6074 = vmul.f32 %v5667, %v5717
  %v6075 = vmul.f32 %v5668, %v5717
  %v6076 = vmul.f32 %v5669, %v5717
  %v6077 = vmul.f32 %v5670, %v5717
  %v6078 = vmul.f32 %v5671, %v5717
  %v6079 = vmul.f32 %v5672, %v5717
  %v6080 = vmul.f32 %v5673, %v5717
  %v6081 = vmul.f32 %v5674, %v5717
  %v6082 = vmul.f32 %v5675, %v5717
  %v6083 = vmul.f32 %v5676, %v5717
  %v6084 = vmul.f32 %v5677, %v5717
  %v6085 = vmul.f32 %v5678, %v5717
  %v6086 = vmul.f32 %v5679, %v5717
  %v6087 = vmul.f32 %v5680, %v5717
  %v6088 = vmul.f32 %v5681, %v5717
  %v6089 = vmul.f32 %v5682, %v5717
  %v6090 = vmul.f32 %v5683, %v5717
  %v6091 = vmul.f32 %v5684, %v5717
  %v6092 = vmul.f32 %v5685, %v5717
  %v6093 = vmul.f32 %v5686, %v5717
  %v6094 = vmul.f32 %v5687, %v5717
  %v6095 = vmul.f32 %v5688, %v5717
  %v6096 = vmul.f32 %v5689, %v5717
  %v6097 = vmul.f32 %v5690, %v5717
  %v6098 = vmul.f32 %v5691, %v5717
  %v6099 = vmul.f32 %v5692, %v5717
  %v6100 = vmul.f32 %v5693, %v5717
  %v6101 = vmul.f32 %v5694, %v5717
  %v6102 = vmul.f32 %v5695, %v5717
  %v6103 = vmul.f32 %v5696, %v5717
  %v6104 = vmul.f32 %v5697, %v5717
  %v6105 = vmul.f32 %v5698, %v5717
  %v6106 = vmul.f32 %v5699, %v5717
  %v6107 = vmul.f32 %v5700, %v5717
  %v6108 = vmul.f32 %v5701, %v5717
  %v6109 = vmul.f32 %v5702, %v5717
  %v6110 = vmul.f32 %v5703, %v5717
  %v6111 = vmul.f32 %v5704, %v5717
  %v6112 = vmul.f32 %v5705, %v5717
  %v6113 = vmul.f32 %v5706, %v5717
  %v6114 = vmul.f32 %v5707, %v5717
  %v6115 = vmul.f32 %v5708, %v5717
  %v6116 = vmul.f32 %v5709, %v5717
  %v6117 = vmul.f32 %v5710, %v5717
  %v6118 = vmul.f32 %v5711, %v5717
  %v6119 = vld [vmem:[%s4] sm:$0x1]
  %v6121 = vlaneseq
  %v6122 = vshrl.u32 %v6121, 7
  %v6123 = vsub.s32 0, %v6122
  %v6124 = vrot.slane %v6119, %v6123
  %v6126 = vadd.f32 %v5719, %v6124
  %v6127 = vadd.f32 %v5720, %v6124
  %v6128 = vadd.f32 %v5721, %v6124
  %v6129 = vadd.f32 %v5722, %v6124
  %v6130 = vadd.f32 %v5723, %v6124
  %v6131 = vadd.f32 %v5724, %v6124
  %v6132 = vadd.f32 %v5725, %v6124
  %v6133 = vadd.f32 %v5726, %v6124
  %v6134 = vadd.f32 %v5727, %v6124
  %v6135 = vadd.f32 %v5728, %v6124
  %v6136 = vadd.f32 %v5729, %v6124
  %v6137 = vadd.f32 %v5730, %v6124
  %v6138 = vadd.f32 %v5731, %v6124
  %v6139 = vadd.f32 %v5732, %v6124
  %v6140 = vadd.f32 %v5733, %v6124
  %v6141 = vadd.f32 %v5734, %v6124
  %v6142 = vadd.f32 %v5735, %v6124
  %v6143 = vadd.f32 %v5736, %v6124
  %v6144 = vadd.f32 %v5737, %v6124
  %v6145 = vadd.f32 %v5738, %v6124
  %v6146 = vadd.f32 %v5739, %v6124
  %v6147 = vadd.f32 %v5740, %v6124
  %v6148 = vadd.f32 %v5741, %v6124
  %v6149 = vadd.f32 %v5742, %v6124
  %v6150 = vadd.f32 %v5743, %v6124
  %v6151 = vadd.f32 %v5744, %v6124
  %v6152 = vadd.f32 %v5745, %v6124
  %v6153 = vadd.f32 %v5746, %v6124
  %v6154 = vadd.f32 %v5747, %v6124
  %v6155 = vadd.f32 %v5748, %v6124
  %v6156 = vadd.f32 %v5749, %v6124
  %v6157 = vadd.f32 %v5750, %v6124
  %v6158 = vadd.f32 %v5751, %v6124
  %v6159 = vadd.f32 %v5752, %v6124
  %v6160 = vadd.f32 %v5753, %v6124
  %v6161 = vadd.f32 %v5754, %v6124
  %v6162 = vadd.f32 %v5755, %v6124
  %v6163 = vadd.f32 %v5756, %v6124
  %v6164 = vadd.f32 %v5757, %v6124
  %v6165 = vadd.f32 %v5758, %v6124
  %v6166 = vadd.f32 %v5759, %v6124
  %v6167 = vadd.f32 %v5760, %v6124
  %v6168 = vadd.f32 %v5761, %v6124
  %v6169 = vadd.f32 %v5762, %v6124
  %v6170 = vadd.f32 %v5763, %v6124
  %v6171 = vadd.f32 %v5764, %v6124
  %v6172 = vadd.f32 %v5765, %v6124
  %v6173 = vadd.f32 %v5766, %v6124
  %v6174 = vadd.f32 %v5767, %v6124
  %v6175 = vadd.f32 %v5768, %v6124
  %v6176 = vadd.f32 %v5769, %v6124
  %v6177 = vadd.f32 %v5770, %v6124
  %v6178 = vadd.f32 %v5771, %v6124
  %v6179 = vadd.f32 %v5772, %v6124
  %v6180 = vadd.f32 %v5773, %v6124
  %v6181 = vadd.f32 %v5774, %v6124
  %v6182 = vadd.f32 %v5775, %v6124
  %v6183 = vadd.f32 %v5776, %v6124
  %v6184 = vadd.f32 %v5777, %v6124
  %v6185 = vadd.f32 %v5778, %v6124
  %v6186 = vadd.f32 %v5779, %v6124
  %v6187 = vadd.f32 %v5780, %v6124
  %v6188 = vadd.f32 %v5781, %v6124
  %v6189 = vadd.f32 %v5782, %v6124
  %v6190 = vadd.f32 %v5783, %v6124
  %v6191 = vadd.f32 %v5784, %v6124
  %v6192 = vadd.f32 %v5785, %v6124
  %v6193 = vadd.f32 %v5786, %v6124
  %v6194 = vadd.f32 %v5787, %v6124
  %v6195 = vadd.f32 %v5788, %v6124
  %v6196 = vadd.f32 %v5789, %v6124
  %v6197 = vadd.f32 %v5790, %v6124
  %v6198 = vadd.f32 %v5791, %v6124
  %v6199 = vadd.f32 %v5792, %v6124
  %v6200 = vadd.f32 %v5793, %v6124
  %v6201 = vadd.f32 %v5794, %v6124
  %v6202 = vadd.f32 %v5795, %v6124
  %v6203 = vadd.f32 %v5796, %v6124
  %v6204 = vadd.f32 %v5797, %v6124
  %v6205 = vadd.f32 %v5798, %v6124
  %v6206 = vadd.f32 %v5799, %v6124
  %v6207 = vadd.f32 %v5800, %v6124
  %v6208 = vadd.f32 %v5801, %v6124
  %v6209 = vadd.f32 %v5802, %v6124
  %v6210 = vadd.f32 %v5803, %v6124
  %v6211 = vadd.f32 %v5804, %v6124
  %v6212 = vadd.f32 %v5805, %v6124
  %v6213 = vadd.f32 %v5806, %v6124
  %v6214 = vadd.f32 %v5807, %v6124
  %v6215 = vadd.f32 %v5808, %v6124
  %v6216 = vadd.f32 %v5809, %v6124
  %v6217 = vadd.f32 %v5810, %v6124
  %v6218 = vadd.f32 %v5811, %v6124
  %v6219 = vadd.f32 %v5812, %v6124
  %v6220 = vadd.f32 %v5813, %v6124
  %v6221 = vadd.f32 %v5814, %v6124
  %v6222 = vadd.f32 %v5815, %v6124
  %v6223 = vadd.f32 %v5816, %v6124
  %v6224 = vadd.f32 %v5817, %v6124
  %v6225 = vadd.f32 %v5818, %v6124
  %v6226 = vadd.f32 %v5819, %v6124
  %v6227 = vadd.f32 %v5820, %v6124
  %v6228 = vadd.f32 %v5821, %v6124
  %v6229 = vadd.f32 %v5822, %v6124
  %v6230 = vadd.f32 %v5823, %v6124
  %v6231 = vadd.f32 %v5824, %v6124
  %v6232 = vadd.f32 %v5825, %v6124
  %v6233 = vadd.f32 %v5826, %v6124
  %v6234 = vadd.f32 %v5827, %v6124
  %v6235 = vadd.f32 %v5828, %v6124
  %v6236 = vadd.f32 %v5829, %v6124
  %v6237 = vadd.f32 %v5830, %v6124
  %v6238 = vadd.f32 %v5831, %v6124
  %v6239 = vadd.f32 %v5832, %v6124
  %v6240 = vadd.f32 %v5833, %v6124
  %v6241 = vadd.f32 %v5834, %v6124
  %v6242 = vadd.f32 %v5835, %v6124
  %v6243 = vadd.f32 %v5836, %v6124
  %v6244 = vadd.f32 %v5837, %v6124
  %v6245 = vadd.f32 %v5838, %v6124
  %v6246 = vadd.f32 %v5839, %v6124
  %v6247 = vadd.f32 %v5840, %v6124
  %v6248 = vadd.f32 %v5841, %v6124
  %v6249 = vadd.f32 %v5842, %v6124
  %v6250 = vadd.f32 %v5843, %v6124
  %v6251 = vadd.f32 %v5844, %v6124
  %v6252 = vadd.f32 %v5845, %v6124
  %v6253 = vadd.f32 %v5846, %v6124
  %v6254 = vadd.f32 %v5847, %v6124
  %v6255 = vadd.f32 %v5848, %v6124
  %v6256 = vadd.f32 %v5849, %v6124
  %v6257 = vadd.f32 %v5850, %v6124
  %v6258 = vadd.f32 %v5851, %v6124
  %v6259 = vadd.f32 %v5852, %v6124
  %v6260 = vadd.f32 %v5853, %v6124
  %v6261 = vadd.f32 %v5854, %v6124
  %v6262 = vadd.f32 %v5855, %v6124
  %v6263 = vadd.f32 %v5856, %v6124
  %v6264 = vadd.f32 %v5857, %v6124
  %v6265 = vadd.f32 %v5858, %v6124
  %v6266 = vadd.f32 %v5859, %v6124
  %v6267 = vadd.f32 %v5860, %v6124
  %v6268 = vadd.f32 %v5861, %v6124
  %v6269 = vadd.f32 %v5862, %v6124
  %v6270 = vadd.f32 %v5863, %v6124
  %v6271 = vadd.f32 %v5864, %v6124
  %v6272 = vadd.f32 %v5865, %v6124
  %v6273 = vadd.f32 %v5866, %v6124
  %v6274 = vadd.f32 %v5867, %v6124
  %v6275 = vadd.f32 %v5868, %v6124
  %v6276 = vadd.f32 %v5869, %v6124
  %v6277 = vadd.f32 %v5870, %v6124
  %v6278 = vadd.f32 %v5871, %v6124
  %v6279 = vadd.f32 %v5872, %v6124
  %v6280 = vadd.f32 %v5873, %v6124
  %v6281 = vadd.f32 %v5874, %v6124
  %v6282 = vadd.f32 %v5875, %v6124
  %v6283 = vadd.f32 %v5876, %v6124
  %v6284 = vadd.f32 %v5877, %v6124
  %v6285 = vadd.f32 %v5878, %v6124
  %v6286 = vadd.f32 %v5879, %v6124
  %v6287 = vadd.f32 %v5880, %v6124
  %v6288 = vadd.f32 %v5881, %v6124
  %v6289 = vadd.f32 %v5882, %v6124
  %v6290 = vadd.f32 %v5883, %v6124
  %v6291 = vadd.f32 %v5884, %v6124
  %v6292 = vadd.f32 %v5885, %v6124
  %v6293 = vadd.f32 %v5886, %v6124
  %v6294 = vadd.f32 %v5887, %v6124
  %v6295 = vadd.f32 %v5888, %v6124
  %v6296 = vadd.f32 %v5889, %v6124
  %v6297 = vadd.f32 %v5890, %v6124
  %v6298 = vadd.f32 %v5891, %v6124
  %v6299 = vadd.f32 %v5892, %v6124
  %v6300 = vadd.f32 %v5893, %v6124
  %v6301 = vadd.f32 %v5894, %v6124
  %v6302 = vadd.f32 %v5895, %v6124
  %v6303 = vadd.f32 %v5896, %v6124
  %v6304 = vadd.f32 %v5897, %v6124
  %v6305 = vadd.f32 %v5898, %v6124
  %v6306 = vadd.f32 %v5899, %v6124
  %v6307 = vadd.f32 %v5900, %v6124
  %v6308 = vadd.f32 %v5901, %v6124
  %v6309 = vadd.f32 %v5902, %v6124
  %v6310 = vadd.f32 %v5903, %v6124
  %v6311 = vadd.f32 %v5904, %v6124
  %v6312 = vadd.f32 %v5905, %v6124
  %v6313 = vadd.f32 %v5906, %v6124
  %v6314 = vadd.f32 %v5907, %v6124
  %v6315 = vadd.f32 %v5908, %v6124
  %v6316 = vadd.f32 %v5909, %v6124
  %v6317 = vadd.f32 %v5910, %v6124
  %v6318 = vadd.f32 %v5911, %v6124
  %v6319 = vadd.f32 %v5912, %v6124
  %v6320 = vadd.f32 %v5913, %v6124
  %v6321 = vadd.f32 %v5914, %v6124
  %v6322 = vadd.f32 %v5915, %v6124
  %v6323 = vadd.f32 %v5916, %v6124
  %v6324 = vadd.f32 %v5917, %v6124
  %v6325 = vadd.f32 %v5918, %v6124
  %v6326 = vadd.f32 %v5919, %v6124
  %v6327 = vadd.f32 %v5920, %v6124
  %v6328 = vadd.f32 %v5921, %v6124
  %v6329 = vadd.f32 %v5922, %v6124
  %v6330 = vadd.f32 %v5923, %v6124
  %v6331 = vadd.f32 %v5924, %v6124
  %v6332 = vadd.f32 %v5925, %v6124
  %v6333 = vadd.f32 %v5926, %v6124
  %v6334 = vadd.f32 %v5927, %v6124
  %v6335 = vadd.f32 %v5928, %v6124
  %v6336 = vadd.f32 %v5929, %v6124
  %v6337 = vadd.f32 %v5930, %v6124
  %v6338 = vadd.f32 %v5931, %v6124
  %v6339 = vadd.f32 %v5932, %v6124
  %v6340 = vadd.f32 %v5933, %v6124
  %v6341 = vadd.f32 %v5934, %v6124
  %v6342 = vadd.f32 %v5935, %v6124
  %v6343 = vadd.f32 %v5936, %v6124
  %v6344 = vadd.f32 %v5937, %v6124
  %v6345 = vadd.f32 %v5938, %v6124
  %v6346 = vadd.f32 %v5939, %v6124
  %v6347 = vadd.f32 %v5940, %v6124
  %v6348 = vadd.f32 %v5941, %v6124
  %v6349 = vadd.f32 %v5942, %v6124
  %v6350 = vadd.f32 %v5943, %v6124
  %v6351 = vadd.f32 %v5944, %v6124
  %v6352 = vadd.f32 %v5945, %v6124
  %v6353 = vadd.f32 %v5946, %v6124
  %v6354 = vadd.f32 %v5947, %v6124
  %v6355 = vadd.f32 %v5948, %v6124
  %v6356 = vadd.f32 %v5949, %v6124
  %v6357 = vadd.f32 %v5950, %v6124
  %v6358 = vadd.f32 %v5951, %v6124
  %v6359 = vadd.f32 %v5952, %v6124
  %v6360 = vadd.f32 %v5953, %v6124
  %v6361 = vadd.f32 %v5954, %v6124
  %v6362 = vadd.f32 %v5955, %v6124
  %v6363 = vadd.f32 %v5956, %v6124
  %v6364 = vadd.f32 %v5957, %v6124
  %v6365 = vadd.f32 %v5958, %v6124
  %v6366 = vadd.f32 %v5959, %v6124
  %v6367 = vadd.f32 %v5960, %v6124
  %v6368 = vadd.f32 %v5961, %v6124
  %v6369 = vadd.f32 %v5962, %v6124
  %v6370 = vadd.f32 %v5963, %v6124
  %v6371 = vadd.f32 %v5964, %v6124
  %v6372 = vadd.f32 %v5965, %v6124
  %v6373 = vadd.f32 %v5966, %v6124
  %v6374 = vadd.f32 %v5967, %v6124
  %v6375 = vadd.f32 %v5968, %v6124
  %v6376 = vadd.f32 %v5969, %v6124
  %v6377 = vadd.f32 %v5970, %v6124
  %v6378 = vadd.f32 %v5971, %v6124
  %v6379 = vadd.f32 %v5972, %v6124
  %v6380 = vadd.f32 %v5973, %v6124
  %v6381 = vadd.f32 %v5974, %v6124
  %v6382 = vadd.f32 %v5975, %v6124
  %v6383 = vadd.f32 %v5976, %v6124
  %v6384 = vadd.f32 %v5977, %v6124
  %v6385 = vadd.f32 %v5978, %v6124
  %v6386 = vadd.f32 %v5979, %v6124
  %v6387 = vadd.f32 %v5980, %v6124
  %v6388 = vadd.f32 %v5981, %v6124
  %v6389 = vadd.f32 %v5982, %v6124
  %v6390 = vadd.f32 %v5983, %v6124
  %v6391 = vadd.f32 %v5984, %v6124
  %v6392 = vadd.f32 %v5985, %v6124
  %v6393 = vadd.f32 %v5986, %v6124
  %v6394 = vadd.f32 %v5987, %v6124
  %v6395 = vadd.f32 %v5988, %v6124
  %v6396 = vadd.f32 %v5989, %v6124
  %v6397 = vadd.f32 %v5990, %v6124
  %v6398 = vadd.f32 %v5991, %v6124
  %v6399 = vadd.f32 %v5992, %v6124
  %v6400 = vadd.f32 %v5993, %v6124
  %v6401 = vadd.f32 %v5994, %v6124
  %v6402 = vadd.f32 %v5995, %v6124
  %v6403 = vadd.f32 %v5996, %v6124
  %v6404 = vadd.f32 %v5997, %v6124
  %v6405 = vadd.f32 %v5998, %v6124
  %v6406 = vadd.f32 %v5999, %v6124
  %v6407 = vadd.f32 %v6000, %v6124
  %v6408 = vadd.f32 %v6001, %v6124
  %v6409 = vadd.f32 %v6002, %v6124
  %v6410 = vadd.f32 %v6003, %v6124
  %v6411 = vadd.f32 %v6004, %v6124
  %v6412 = vadd.f32 %v6005, %v6124
  %v6413 = vadd.f32 %v6006, %v6124
  %v6414 = vadd.f32 %v6007, %v6124
  %v6415 = vadd.f32 %v6008, %v6124
  %v6416 = vadd.f32 %v6009, %v6124
  %v6417 = vadd.f32 %v6010, %v6124
  %v6418 = vadd.f32 %v6011, %v6124
  %v6419 = vadd.f32 %v6012, %v6124
  %v6420 = vadd.f32 %v6013, %v6124
  %v6421 = vadd.f32 %v6014, %v6124
  %v6422 = vadd.f32 %v6015, %v6124
  %v6423 = vadd.f32 %v6016, %v6124
  %v6424 = vadd.f32 %v6017, %v6124
  %v6425 = vadd.f32 %v6018, %v6124
  %v6426 = vadd.f32 %v6019, %v6124
  %v6427 = vadd.f32 %v6020, %v6124
  %v6428 = vadd.f32 %v6021, %v6124
  %v6429 = vadd.f32 %v6022, %v6124
  %v6430 = vadd.f32 %v6023, %v6124
  %v6431 = vadd.f32 %v6024, %v6124
  %v6432 = vadd.f32 %v6025, %v6124
  %v6433 = vadd.f32 %v6026, %v6124
  %v6434 = vadd.f32 %v6027, %v6124
  %v6435 = vadd.f32 %v6028, %v6124
  %v6436 = vadd.f32 %v6029, %v6124
  %v6437 = vadd.f32 %v6030, %v6124
  %v6438 = vadd.f32 %v6031, %v6124
  %v6439 = vadd.f32 %v6032, %v6124
  %v6440 = vadd.f32 %v6033, %v6124
  %v6441 = vadd.f32 %v6034, %v6124
  %v6442 = vadd.f32 %v6035, %v6124
  %v6443 = vadd.f32 %v6036, %v6124
  %v6444 = vadd.f32 %v6037, %v6124
  %v6445 = vadd.f32 %v6038, %v6124
  %v6446 = vadd.f32 %v6039, %v6124
  %v6447 = vadd.f32 %v6040, %v6124
  %v6448 = vadd.f32 %v6041, %v6124
  %v6449 = vadd.f32 %v6042, %v6124
  %v6450 = vadd.f32 %v6043, %v6124
  %v6451 = vadd.f32 %v6044, %v6124
  %v6452 = vadd.f32 %v6045, %v6124
  %v6453 = vadd.f32 %v6046, %v6124
  %v6454 = vadd.f32 %v6047, %v6124
  %v6455 = vadd.f32 %v6048, %v6124
  %v6456 = vadd.f32 %v6049, %v6124
  %v6457 = vadd.f32 %v6050, %v6124
  %v6458 = vadd.f32 %v6051, %v6124
  %v6459 = vadd.f32 %v6052, %v6124
  %v6460 = vadd.f32 %v6053, %v6124
  %v6461 = vadd.f32 %v6054, %v6124
  %v6462 = vadd.f32 %v6055, %v6124
  %v6463 = vadd.f32 %v6056, %v6124
  %v6464 = vadd.f32 %v6057, %v6124
  %v6465 = vadd.f32 %v6058, %v6124
  %v6466 = vadd.f32 %v6059, %v6124
  %v6467 = vadd.f32 %v6060, %v6124
  %v6468 = vadd.f32 %v6061, %v6124
  %v6469 = vadd.f32 %v6062, %v6124
  %v6470 = vadd.f32 %v6063, %v6124
  %v6471 = vadd.f32 %v6064, %v6124
  %v6472 = vadd.f32 %v6065, %v6124
  %v6473 = vadd.f32 %v6066, %v6124
  %v6474 = vadd.f32 %v6067, %v6124
  %v6475 = vadd.f32 %v6068, %v6124
  %v6476 = vadd.f32 %v6069, %v6124
  %v6477 = vadd.f32 %v6070, %v6124
  %v6478 = vadd.f32 %v6071, %v6124
  %v6479 = vadd.f32 %v6072, %v6124
  %v6480 = vadd.f32 %v6073, %v6124
  %v6481 = vadd.f32 %v6074, %v6124
  %v6482 = vadd.f32 %v6075, %v6124
  %v6483 = vadd.f32 %v6076, %v6124
  %v6484 = vadd.f32 %v6077, %v6124
  %v6485 = vadd.f32 %v6078, %v6124
  %v6486 = vadd.f32 %v6079, %v6124
  %v6487 = vadd.f32 %v6080, %v6124
  %v6488 = vadd.f32 %v6081, %v6124
  %v6489 = vadd.f32 %v6082, %v6124
  %v6490 = vadd.f32 %v6083, %v6124
  %v6491 = vadd.f32 %v6084, %v6124
  %v6492 = vadd.f32 %v6085, %v6124
  %v6493 = vadd.f32 %v6086, %v6124
  %v6494 = vadd.f32 %v6087, %v6124
  %v6495 = vadd.f32 %v6088, %v6124
  %v6496 = vadd.f32 %v6089, %v6124
  %v6497 = vadd.f32 %v6090, %v6124
  %v6498 = vadd.f32 %v6091, %v6124
  %v6499 = vadd.f32 %v6092, %v6124
  %v6500 = vadd.f32 %v6093, %v6124
  %v6501 = vadd.f32 %v6094, %v6124
  %v6502 = vadd.f32 %v6095, %v6124
  %v6503 = vadd.f32 %v6096, %v6124
  %v6504 = vadd.f32 %v6097, %v6124
  %v6505 = vadd.f32 %v6098, %v6124
  %v6506 = vadd.f32 %v6099, %v6124
  %v6507 = vadd.f32 %v6100, %v6124
  %v6508 = vadd.f32 %v6101, %v6124
  %v6509 = vadd.f32 %v6102, %v6124
  %v6510 = vadd.f32 %v6103, %v6124
  %v6511 = vadd.f32 %v6104, %v6124
  %v6512 = vadd.f32 %v6105, %v6124
  %v6513 = vadd.f32 %v6106, %v6124
  %v6514 = vadd.f32 %v6107, %v6124
  %v6515 = vadd.f32 %v6108, %v6124
  %v6516 = vadd.f32 %v6109, %v6124
  %v6517 = vadd.f32 %v6110, %v6124
  %v6518 = vadd.f32 %v6111, %v6124
  %v6519 = vadd.f32 %v6112, %v6124
  %v6520 = vadd.f32 %v6113, %v6124
  %v6521 = vadd.f32 %v6114, %v6124
  %v6522 = vadd.f32 %v6115, %v6124
  %v6523 = vadd.f32 %v6116, %v6124
  %v6524 = vadd.f32 %v6117, %v6124
  %v6525 = vadd.f32 %v6118, %v6124
  %v6526 = vtanh.pop %v6126
  %v6527 = vtanh.pop %v6127
  %v6528 = vtanh.pop %v6128
  %v6529 = vtanh.pop %v6129
  %v6530 = vtanh.pop %v6130
  %v6531 = vtanh.pop %v6131
  %v6532 = vtanh.pop %v6132
  %v6533 = vtanh.pop %v6133
  %v6534 = vtanh.pop %v6134
  %v6535 = vtanh.pop %v6135
  %v6536 = vtanh.pop %v6136
  %v6537 = vtanh.pop %v6137
  %v6538 = vtanh.pop %v6138
  %v6539 = vtanh.pop %v6139
  %v6540 = vtanh.pop %v6140
  %v6541 = vtanh.pop %v6141
  %v6542 = vtanh.pop %v6142
  %v6543 = vtanh.pop %v6143
  %v6544 = vtanh.pop %v6144
  %v6545 = vtanh.pop %v6145
  %v6546 = vtanh.pop %v6146
  %v6547 = vtanh.pop %v6147
  %v6548 = vtanh.pop %v6148
  %v6549 = vtanh.pop %v6149
  %v6550 = vtanh.pop %v6150
  %v6551 = vtanh.pop %v6151
  %v6552 = vtanh.pop %v6152
  %v6553 = vtanh.pop %v6153
  %v6554 = vtanh.pop %v6154
  %v6555 = vtanh.pop %v6155
  %v6556 = vtanh.pop %v6156
  %v6557 = vtanh.pop %v6157
  %v6558 = vtanh.pop %v6158
  %v6559 = vtanh.pop %v6159
  %v6560 = vtanh.pop %v6160
  %v6561 = vtanh.pop %v6161
  %v6562 = vtanh.pop %v6162
  %v6563 = vtanh.pop %v6163
  %v6564 = vtanh.pop %v6164
  %v6565 = vtanh.pop %v6165
  %v6566 = vtanh.pop %v6166
  %v6567 = vtanh.pop %v6167
  %v6568 = vtanh.pop %v6168
  %v6569 = vtanh.pop %v6169
  %v6570 = vtanh.pop %v6170
  %v6571 = vtanh.pop %v6171
  %v6572 = vtanh.pop %v6172
  %v6573 = vtanh.pop %v6173
  %v6574 = vtanh.pop %v6174
  %v6575 = vtanh.pop %v6175
  %v6576 = vtanh.pop %v6176
  %v6577 = vtanh.pop %v6177
  %v6578 = vtanh.pop %v6178
  %v6579 = vtanh.pop %v6179
  %v6580 = vtanh.pop %v6180
  %v6581 = vtanh.pop %v6181
  %v6582 = vtanh.pop %v6182
  %v6583 = vtanh.pop %v6183
  %v6584 = vtanh.pop %v6184
  %v6585 = vtanh.pop %v6185
  %v6586 = vtanh.pop %v6186
  %v6587 = vtanh.pop %v6187
  %v6588 = vtanh.pop %v6188
  %v6589 = vtanh.pop %v6189
  %v6590 = vtanh.pop %v6190
  %v6591 = vtanh.pop %v6191
  %v6592 = vtanh.pop %v6192
  %v6593 = vtanh.pop %v6193
  %v6594 = vtanh.pop %v6194
  %v6595 = vtanh.pop %v6195
  %v6596 = vtanh.pop %v6196
  %v6597 = vtanh.pop %v6197
  %v6598 = vtanh.pop %v6198
  %v6599 = vtanh.pop %v6199
  %v6600 = vtanh.pop %v6200
  %v6601 = vtanh.pop %v6201
  %v6602 = vtanh.pop %v6202
  %v6603 = vtanh.pop %v6203
  %v6604 = vtanh.pop %v6204
  %v6605 = vtanh.pop %v6205
  %v6606 = vtanh.pop %v6206
  %v6607 = vtanh.pop %v6207
  %v6608 = vtanh.pop %v6208
  %v6609 = vtanh.pop %v6209
  %v6610 = vtanh.pop %v6210
  %v6611 = vtanh.pop %v6211
  %v6612 = vtanh.pop %v6212
  %v6613 = vtanh.pop %v6213
  %v6614 = vtanh.pop %v6214
  %v6615 = vtanh.pop %v6215
  %v6616 = vtanh.pop %v6216
  %v6617 = vtanh.pop %v6217
  %v6618 = vtanh.pop %v6218
  %v6619 = vtanh.pop %v6219
  %v6620 = vtanh.pop %v6220
  %v6621 = vtanh.pop %v6221
  %v6622 = vtanh.pop %v6222
  %v6623 = vtanh.pop %v6223
  %v6624 = vtanh.pop %v6224
  %v6625 = vtanh.pop %v6225
  %v6626 = vtanh.pop %v6226
  %v6627 = vtanh.pop %v6227
  %v6628 = vtanh.pop %v6228
  %v6629 = vtanh.pop %v6229
  %v6630 = vtanh.pop %v6230
  %v6631 = vtanh.pop %v6231
  %v6632 = vtanh.pop %v6232
  %v6633 = vtanh.pop %v6233
  %v6634 = vtanh.pop %v6234
  %v6635 = vtanh.pop %v6235
  %v6636 = vtanh.pop %v6236
  %v6637 = vtanh.pop %v6237
  %v6638 = vtanh.pop %v6238
  %v6639 = vtanh.pop %v6239
  %v6640 = vtanh.pop %v6240
  %v6641 = vtanh.pop %v6241
  %v6642 = vtanh.pop %v6242
  %v6643 = vtanh.pop %v6243
  %v6644 = vtanh.pop %v6244
  %v6645 = vtanh.pop %v6245
  %v6646 = vtanh.pop %v6246
  %v6647 = vtanh.pop %v6247
  %v6648 = vtanh.pop %v6248
  %v6649 = vtanh.pop %v6249
  %v6650 = vtanh.pop %v6250
  %v6651 = vtanh.pop %v6251
  %v6652 = vtanh.pop %v6252
  %v6653 = vtanh.pop %v6253
  %v6654 = vtanh.pop %v6254
  %v6655 = vtanh.pop %v6255
  %v6656 = vtanh.pop %v6256
  %v6657 = vtanh.pop %v6257
  %v6658 = vtanh.pop %v6258
  %v6659 = vtanh.pop %v6259
  %v6660 = vtanh.pop %v6260
  %v6661 = vtanh.pop %v6261
  %v6662 = vtanh.pop %v6262
  %v6663 = vtanh.pop %v6263
  %v6664 = vtanh.pop %v6264
  %v6665 = vtanh.pop %v6265
  %v6666 = vtanh.pop %v6266
  %v6667 = vtanh.pop %v6267
  %v6668 = vtanh.pop %v6268
  %v6669 = vtanh.pop %v6269
  %v6670 = vtanh.pop %v6270
  %v6671 = vtanh.pop %v6271
  %v6672 = vtanh.pop %v6272
  %v6673 = vtanh.pop %v6273
  %v6674 = vtanh.pop %v6274
  %v6675 = vtanh.pop %v6275
  %v6676 = vtanh.pop %v6276
  %v6677 = vtanh.pop %v6277
  %v6678 = vtanh.pop %v6278
  %v6679 = vtanh.pop %v6279
  %v6680 = vtanh.pop %v6280
  %v6681 = vtanh.pop %v6281
  %v6682 = vtanh.pop %v6282
  %v6683 = vtanh.pop %v6283
  %v6684 = vtanh.pop %v6284
  %v6685 = vtanh.pop %v6285
  %v6686 = vtanh.pop %v6286
  %v6687 = vtanh.pop %v6287
  %v6688 = vtanh.pop %v6288
  %v6689 = vtanh.pop %v6289
  %v6690 = vtanh.pop %v6290
  %v6691 = vtanh.pop %v6291
  %v6692 = vtanh.pop %v6292
  %v6693 = vtanh.pop %v6293
  %v6694 = vtanh.pop %v6294
  %v6695 = vtanh.pop %v6295
  %v6696 = vtanh.pop %v6296
  %v6697 = vtanh.pop %v6297
  %v6698 = vtanh.pop %v6298
  %v6699 = vtanh.pop %v6299
  %v6700 = vtanh.pop %v6300
  %v6701 = vtanh.pop %v6301
  %v6702 = vtanh.pop %v6302
  %v6703 = vtanh.pop %v6303
  %v6704 = vtanh.pop %v6304
  %v6705 = vtanh.pop %v6305
  %v6706 = vtanh.pop %v6306
  %v6707 = vtanh.pop %v6307
  %v6708 = vtanh.pop %v6308
  %v6709 = vtanh.pop %v6309
  %v6710 = vtanh.pop %v6310
  %v6711 = vtanh.pop %v6311
  %v6712 = vtanh.pop %v6312
  %v6713 = vtanh.pop %v6313
  %v6714 = vtanh.pop %v6314
  %v6715 = vtanh.pop %v6315
  %v6716 = vtanh.pop %v6316
  %v6717 = vtanh.pop %v6317
  %v6718 = vtanh.pop %v6318
  %v6719 = vtanh.pop %v6319
  %v6720 = vtanh.pop %v6320
  %v6721 = vtanh.pop %v6321
  %v6722 = vtanh.pop %v6322
  %v6723 = vtanh.pop %v6323
  %v6724 = vtanh.pop %v6324
  %v6725 = vtanh.pop %v6325
  %v6726 = vtanh.pop %v6326
  %v6727 = vtanh.pop %v6327
  %v6728 = vtanh.pop %v6328
  %v6729 = vtanh.pop %v6329
  %v6730 = vtanh.pop %v6330
  %v6731 = vtanh.pop %v6331
  %v6732 = vtanh.pop %v6332
  %v6733 = vtanh.pop %v6333
  %v6734 = vtanh.pop %v6334
  %v6735 = vtanh.pop %v6335
  %v6736 = vtanh.pop %v6336
  %v6737 = vtanh.pop %v6337
  %v6738 = vtanh.pop %v6338
  %v6739 = vtanh.pop %v6339
  %v6740 = vtanh.pop %v6340
  %v6741 = vtanh.pop %v6341
  %v6742 = vtanh.pop %v6342
  %v6743 = vtanh.pop %v6343
  %v6744 = vtanh.pop %v6344
  %v6745 = vtanh.pop %v6345
  %v6746 = vtanh.pop %v6346
  %v6747 = vtanh.pop %v6347
  %v6748 = vtanh.pop %v6348
  %v6749 = vtanh.pop %v6349
  %v6750 = vtanh.pop %v6350
  %v6751 = vtanh.pop %v6351
  %v6752 = vtanh.pop %v6352
  %v6753 = vtanh.pop %v6353
  %v6754 = vtanh.pop %v6354
  %v6755 = vtanh.pop %v6355
  %v6756 = vtanh.pop %v6356
  %v6757 = vtanh.pop %v6357
  %v6758 = vtanh.pop %v6358
  %v6759 = vtanh.pop %v6359
  %v6760 = vtanh.pop %v6360
  %v6761 = vtanh.pop %v6361
  %v6762 = vtanh.pop %v6362
  %v6763 = vtanh.pop %v6363
  %v6764 = vtanh.pop %v6364
  %v6765 = vtanh.pop %v6365
  %v6766 = vtanh.pop %v6366
  %v6767 = vtanh.pop %v6367
  %v6768 = vtanh.pop %v6368
  %v6769 = vtanh.pop %v6369
  %v6770 = vtanh.pop %v6370
  %v6771 = vtanh.pop %v6371
  %v6772 = vtanh.pop %v6372
  %v6773 = vtanh.pop %v6373
  %v6774 = vtanh.pop %v6374
  %v6775 = vtanh.pop %v6375
  %v6776 = vtanh.pop %v6376
  %v6777 = vtanh.pop %v6377
  %v6778 = vtanh.pop %v6378
  %v6779 = vtanh.pop %v6379
  %v6780 = vtanh.pop %v6380
  %v6781 = vtanh.pop %v6381
  %v6782 = vtanh.pop %v6382
  %v6783 = vtanh.pop %v6383
  %v6784 = vtanh.pop %v6384
  %v6785 = vtanh.pop %v6385
  %v6786 = vtanh.pop %v6386
  %v6787 = vtanh.pop %v6387
  %v6788 = vtanh.pop %v6388
  %v6789 = vtanh.pop %v6389
  %v6790 = vtanh.pop %v6390
  %v6791 = vtanh.pop %v6391
  %v6792 = vtanh.pop %v6392
  %v6793 = vtanh.pop %v6393
  %v6794 = vtanh.pop %v6394
  %v6795 = vtanh.pop %v6395
  %v6796 = vtanh.pop %v6396
  %v6797 = vtanh.pop %v6397
  %v6798 = vtanh.pop %v6398
  %v6799 = vtanh.pop %v6399
  %v6800 = vtanh.pop %v6400
  %v6801 = vtanh.pop %v6401
  %v6802 = vtanh.pop %v6402
  %v6803 = vtanh.pop %v6403
  %v6804 = vtanh.pop %v6404
  %v6805 = vtanh.pop %v6405
  %v6806 = vtanh.pop %v6406
  %v6807 = vtanh.pop %v6407
  %v6808 = vtanh.pop %v6408
  %v6809 = vtanh.pop %v6409
  %v6810 = vtanh.pop %v6410
  %v6811 = vtanh.pop %v6411
  %v6812 = vtanh.pop %v6412
  %v6813 = vtanh.pop %v6413
  %v6814 = vtanh.pop %v6414
  %v6815 = vtanh.pop %v6415
  %v6816 = vtanh.pop %v6416
  %v6817 = vtanh.pop %v6417
  %v6818 = vtanh.pop %v6418
  %v6819 = vtanh.pop %v6419
  %v6820 = vtanh.pop %v6420
  %v6821 = vtanh.pop %v6421
  %v6822 = vtanh.pop %v6422
  %v6823 = vtanh.pop %v6423
  %v6824 = vtanh.pop %v6424
  %v6825 = vtanh.pop %v6425
  %v6826 = vtanh.pop %v6426
  %v6827 = vtanh.pop %v6427
  %v6828 = vtanh.pop %v6428
  %v6829 = vtanh.pop %v6429
  %v6830 = vtanh.pop %v6430
  %v6831 = vtanh.pop %v6431
  %v6832 = vtanh.pop %v6432
  %v6833 = vtanh.pop %v6433
  %v6834 = vtanh.pop %v6434
  %v6835 = vtanh.pop %v6435
  %v6836 = vtanh.pop %v6436
  %v6837 = vtanh.pop %v6437
  %v6838 = vtanh.pop %v6438
  %v6839 = vtanh.pop %v6439
  %v6840 = vtanh.pop %v6440
  %v6841 = vtanh.pop %v6441
  %v6842 = vtanh.pop %v6442
  %v6843 = vtanh.pop %v6443
  %v6844 = vtanh.pop %v6444
  %v6845 = vtanh.pop %v6445
  %v6846 = vtanh.pop %v6446
  %v6847 = vtanh.pop %v6447
  %v6848 = vtanh.pop %v6448
  %v6849 = vtanh.pop %v6449
  %v6850 = vtanh.pop %v6450
  %v6851 = vtanh.pop %v6451
  %v6852 = vtanh.pop %v6452
  %v6853 = vtanh.pop %v6453
  %v6854 = vtanh.pop %v6454
  %v6855 = vtanh.pop %v6455
  %v6856 = vtanh.pop %v6456
  %v6857 = vtanh.pop %v6457
  %v6858 = vtanh.pop %v6458
  %v6859 = vtanh.pop %v6459
  %v6860 = vtanh.pop %v6460
  %v6861 = vtanh.pop %v6461
  %v6862 = vtanh.pop %v6462
  %v6863 = vtanh.pop %v6463
  %v6864 = vtanh.pop %v6464
  %v6865 = vtanh.pop %v6465
  %v6866 = vtanh.pop %v6466
  %v6867 = vtanh.pop %v6467
  %v6868 = vtanh.pop %v6468
  %v6869 = vtanh.pop %v6469
  %v6870 = vtanh.pop %v6470
  %v6871 = vtanh.pop %v6471
  %v6872 = vtanh.pop %v6472
  %v6873 = vtanh.pop %v6473
  %v6874 = vtanh.pop %v6474
  %v6875 = vtanh.pop %v6475
  %v6876 = vtanh.pop %v6476
  %v6877 = vtanh.pop %v6477
  %v6878 = vtanh.pop %v6478
  %v6879 = vtanh.pop %v6479
  %v6880 = vtanh.pop %v6480
  %v6881 = vtanh.pop %v6481
  %v6882 = vtanh.pop %v6482
  %v6883 = vtanh.pop %v6483
  %v6884 = vtanh.pop %v6484
  %v6885 = vtanh.pop %v6485
  %v6886 = vtanh.pop %v6486
  %v6887 = vtanh.pop %v6487
  %v6888 = vtanh.pop %v6488
  %v6889 = vtanh.pop %v6489
  %v6890 = vtanh.pop %v6490
  %v6891 = vtanh.pop %v6491
  %v6892 = vtanh.pop %v6492
  %v6893 = vtanh.pop %v6493
  %v6894 = vtanh.pop %v6494
  %v6895 = vtanh.pop %v6495
  %v6896 = vtanh.pop %v6496
  %v6897 = vtanh.pop %v6497
  %v6898 = vtanh.pop %v6498
  %v6899 = vtanh.pop %v6499
  %v6900 = vtanh.pop %v6500
  %v6901 = vtanh.pop %v6501
  %v6902 = vtanh.pop %v6502
  %v6903 = vtanh.pop %v6503
  %v6904 = vtanh.pop %v6504
  %v6905 = vtanh.pop %v6505
  %v6906 = vtanh.pop %v6506
  %v6907 = vtanh.pop %v6507
  %v6908 = vtanh.pop %v6508
  %v6909 = vtanh.pop %v6509
  %v6910 = vtanh.pop %v6510
  %v6911 = vtanh.pop %v6511
  %v6912 = vtanh.pop %v6512
  %v6913 = vtanh.pop %v6513
  %v6914 = vtanh.pop %v6514
  %v6915 = vtanh.pop %v6515
  %v6916 = vtanh.pop %v6516
  %v6917 = vtanh.pop %v6517
  %v6918 = vtanh.pop %v6518
  %v6919 = vtanh.pop %v6519
  %v6920 = vtanh.pop %v6520
  %v6921 = vtanh.pop %v6521
  %v6922 = vtanh.pop %v6522
  %v6923 = vtanh.pop %v6523
  %v6924 = vtanh.pop %v6524
  %v6925 = vtanh.pop %v6525
  %6926 = vst [vmem:[%s5] sm:$0xff] %v6526
  %6927 = vst [vmem:[%s5 + $0x8] sm:$0xff] %v6527
  %6928 = vst [vmem:[%s5 + $0x10] sm:$0xff] %v6528
  %6929 = vst [vmem:[%s5 + $0x18] sm:$0xff] %v6529
  %6930 = vst [vmem:[%s5 + $0x20] sm:$0xff] %v6530
  %6931 = vst [vmem:[%s5 + $0x28] sm:$0xff] %v6531
  %6932 = vst [vmem:[%s5 + $0x30] sm:$0xff] %v6532
  %6933 = vst [vmem:[%s5 + $0x38] sm:$0xff] %v6533
  %6934 = vst [vmem:[%s5 + $0x40] sm:$0xff] %v6534
  %6935 = vst [vmem:[%s5 + $0x48] sm:$0xff] %v6535
  %6936 = vst [vmem:[%s5 + $0x50] sm:$0xff] %v6536
  %6937 = vst [vmem:[%s5 + $0x58] sm:$0xff] %v6537
  %6938 = vst [vmem:[%s5 + $0x60] sm:$0xff] %v6538
  %6939 = vst [vmem:[%s5 + $0x68] sm:$0xff] %v6539
  %6940 = vst [vmem:[%s5 + $0x70] sm:$0xff] %v6540
  %6941 = vst [vmem:[%s5 + $0x78] sm:$0xff] %v6541
  %6942 = vst [vmem:[%s5 + $0x80] sm:$0xff] %v6542
  %6943 = vst [vmem:[%s5 + $0x88] sm:$0xff] %v6543
  %6944 = vst [vmem:[%s5 + $0x90] sm:$0xff] %v6544
  %6945 = vst [vmem:[%s5 + $0x98] sm:$0xff] %v6545
  %6946 = vst [vmem:[%s5 + $0xa0] sm:$0xff] %v6546
  %6947 = vst [vmem:[%s5 + $0xa8] sm:$0xff] %v6547
  %6948 = vst [vmem:[%s5 + $0xb0] sm:$0xff] %v6548
  %6949 = vst [vmem:[%s5 + $0xb8] sm:$0xff] %v6549
  %6950 = vst [vmem:[%s5 + $0xc0] sm:$0xff] %v6550
  %6951 = vst [vmem:[%s5 + $0xc8] sm:$0xff] %v6551
  %6952 = vst [vmem:[%s5 + $0xd0] sm:$0xff] %v6552
  %6953 = vst [vmem:[%s5 + $0xd8] sm:$0xff] %v6553
  %6954 = vst [vmem:[%s5 + $0xe0] sm:$0xff] %v6554
  %6955 = vst [vmem:[%s5 + $0xe8] sm:$0xff] %v6555
  %6956 = vst [vmem:[%s5 + $0xf0] sm:$0xff] %v6556
  %6957 = vst [vmem:[%s5 + $0xf8] sm:$0xff] %v6557
  %6958 = vst [vmem:[%s5 + $0x100] sm:$0xff] %v6558
  %6959 = vst [vmem:[%s5 + $0x108] sm:$0xff] %v6559
  %6960 = vst [vmem:[%s5 + $0x110] sm:$0xff] %v6560
  %6961 = vst [vmem:[%s5 + $0x118] sm:$0xff] %v6561
  %6962 = vst [vmem:[%s5 + $0x120] sm:$0xff] %v6562
  %6963 = vst [vmem:[%s5 + $0x128] sm:$0xff] %v6563
  %6964 = vst [vmem:[%s5 + $0x130] sm:$0xff] %v6564
  %6965 = vst [vmem:[%s5 + $0x138] sm:$0xff] %v6565
  %6966 = vst [vmem:[%s5 + $0x140] sm:$0xff] %v6566
  %6967 = vst [vmem:[%s5 + $0x148] sm:$0xff] %v6567
  %6968 = vst [vmem:[%s5 + $0x150] sm:$0xff] %v6568
  %6969 = vst [vmem:[%s5 + $0x158] sm:$0xff] %v6569
  %6970 = vst [vmem:[%s5 + $0x160] sm:$0xff] %v6570
  %6971 = vst [vmem:[%s5 + $0x168] sm:$0xff] %v6571
  %6972 = vst [vmem:[%s5 + $0x170] sm:$0xff] %v6572
  %6973 = vst [vmem:[%s5 + $0x178] sm:$0xff] %v6573
  %6974 = vst [vmem:[%s5 + $0x180] sm:$0xff] %v6574
  %6975 = vst [vmem:[%s5 + $0x188] sm:$0xff] %v6575
  %6976 = vst [vmem:[%s5 + $0x190] sm:$0xff] %v6576
  %6977 = vst [vmem:[%s5 + $0x198] sm:$0xff] %v6577
  %6978 = vst [vmem:[%s5 + $0x1a0] sm:$0xff] %v6578
  %6979 = vst [vmem:[%s5 + $0x1a8] sm:$0xff] %v6579
  %6980 = vst [vmem:[%s5 + $0x1b0] sm:$0xff] %v6580
  %6981 = vst [vmem:[%s5 + $0x1b8] sm:$0xff] %v6581
  %6982 = vst [vmem:[%s5 + $0x1c0] sm:$0xff] %v6582
  %6983 = vst [vmem:[%s5 + $0x1c8] sm:$0xff] %v6583
  %6984 = vst [vmem:[%s5 + $0x1d0] sm:$0xff] %v6584
  %6985 = vst [vmem:[%s5 + $0x1d8] sm:$0xff] %v6585
  %6986 = vst [vmem:[%s5 + $0x1e0] sm:$0xff] %v6586
  %6987 = vst [vmem:[%s5 + $0x1e8] sm:$0xff] %v6587
  %6988 = vst [vmem:[%s5 + $0x1f0] sm:$0xff] %v6588
  %6989 = vst [vmem:[%s5 + $0x1f8] sm:$0xff] %v6589
  %6990 = vst [vmem:[%s5 + $0x200] sm:$0xff] %v6590
  %6991 = vst [vmem:[%s5 + $0x208] sm:$0xff] %v6591
  %6992 = vst [vmem:[%s5 + $0x210] sm:$0xff] %v6592
  %6993 = vst [vmem:[%s5 + $0x218] sm:$0xff] %v6593
  %6994 = vst [vmem:[%s5 + $0x220] sm:$0xff] %v6594
  %6995 = vst [vmem:[%s5 + $0x228] sm:$0xff] %v6595
  %6996 = vst [vmem:[%s5 + $0x230] sm:$0xff] %v6596
  %6997 = vst [vmem:[%s5 + $0x238] sm:$0xff] %v6597
  %6998 = vst [vmem:[%s5 + $0x240] sm:$0xff] %v6598
  %6999 = vst [vmem:[%s5 + $0x248] sm:$0xff] %v6599
  %7000 = vst [vmem:[%s5 + $0x250] sm:$0xff] %v6600
  %7001 = vst [vmem:[%s5 + $0x258] sm:$0xff] %v6601
  %7002 = vst [vmem:[%s5 + $0x260] sm:$0xff] %v6602
  %7003 = vst [vmem:[%s5 + $0x268] sm:$0xff] %v6603
  %7004 = vst [vmem:[%s5 + $0x270] sm:$0xff] %v6604
  %7005 = vst [vmem:[%s5 + $0x278] sm:$0xff] %v6605
  %7006 = vst [vmem:[%s5 + $0x280] sm:$0xff] %v6606
  %7007 = vst [vmem:[%s5 + $0x288] sm:$0xff] %v6607
  %7008 = vst [vmem:[%s5 + $0x290] sm:$0xff] %v6608
  %7009 = vst [vmem:[%s5 + $0x298] sm:$0xff] %v6609
  %7010 = vst [vmem:[%s5 + $0x2a0] sm:$0xff] %v6610
  %7011 = vst [vmem:[%s5 + $0x2a8] sm:$0xff] %v6611
  %7012 = vst [vmem:[%s5 + $0x2b0] sm:$0xff] %v6612
  %7013 = vst [vmem:[%s5 + $0x2b8] sm:$0xff] %v6613
  %7014 = vst [vmem:[%s5 + $0x2c0] sm:$0xff] %v6614
  %7015 = vst [vmem:[%s5 + $0x2c8] sm:$0xff] %v6615
  %7016 = vst [vmem:[%s5 + $0x2d0] sm:$0xff] %v6616
  %7017 = vst [vmem:[%s5 + $0x2d8] sm:$0xff] %v6617
  %7018 = vst [vmem:[%s5 + $0x2e0] sm:$0xff] %v6618
  %7019 = vst [vmem:[%s5 + $0x2e8] sm:$0xff] %v6619
  %7020 = vst [vmem:[%s5 + $0x2f0] sm:$0xff] %v6620
  %7021 = vst [vmem:[%s5 + $0x2f8] sm:$0xff] %v6621
  %7022 = vst [vmem:[%s5 + $0x300] sm:$0xff] %v6622
  %7023 = vst [vmem:[%s5 + $0x308] sm:$0xff] %v6623
  %7024 = vst [vmem:[%s5 + $0x310] sm:$0xff] %v6624
  %7025 = vst [vmem:[%s5 + $0x318] sm:$0xff] %v6625
  %7026 = vst [vmem:[%s5 + $0x320] sm:$0xff] %v6626
  %7027 = vst [vmem:[%s5 + $0x328] sm:$0xff] %v6627
  %7028 = vst [vmem:[%s5 + $0x330] sm:$0xff] %v6628
  %7029 = vst [vmem:[%s5 + $0x338] sm:$0xff] %v6629
  %7030 = vst [vmem:[%s5 + $0x340] sm:$0xff] %v6630
  %7031 = vst [vmem:[%s5 + $0x348] sm:$0xff] %v6631
  %7032 = vst [vmem:[%s5 + $0x350] sm:$0xff] %v6632
  %7033 = vst [vmem:[%s5 + $0x358] sm:$0xff] %v6633
  %7034 = vst [vmem:[%s5 + $0x360] sm:$0xff] %v6634
  %7035 = vst [vmem:[%s5 + $0x368] sm:$0xff] %v6635
  %7036 = vst [vmem:[%s5 + $0x370] sm:$0xff] %v6636
  %7037 = vst [vmem:[%s5 + $0x378] sm:$0xff] %v6637
  %7038 = vst [vmem:[%s5 + $0x380] sm:$0xff] %v6638
  %7039 = vst [vmem:[%s5 + $0x388] sm:$0xff] %v6639
  %7040 = vst [vmem:[%s5 + $0x390] sm:$0xff] %v6640
  %7041 = vst [vmem:[%s5 + $0x398] sm:$0xff] %v6641
  %7042 = vst [vmem:[%s5 + $0x3a0] sm:$0xff] %v6642
  %7043 = vst [vmem:[%s5 + $0x3a8] sm:$0xff] %v6643
  %7044 = vst [vmem:[%s5 + $0x3b0] sm:$0xff] %v6644
  %7045 = vst [vmem:[%s5 + $0x3b8] sm:$0xff] %v6645
  %7046 = vst [vmem:[%s5 + $0x3c0] sm:$0xff] %v6646
  %7047 = vst [vmem:[%s5 + $0x3c8] sm:$0xff] %v6647
  %7048 = vst [vmem:[%s5 + $0x3d0] sm:$0xff] %v6648
  %7049 = vst [vmem:[%s5 + $0x3d8] sm:$0xff] %v6649
  %7050 = vst [vmem:[%s5 + $0x3e0] sm:$0xff] %v6650
  %7051 = vst [vmem:[%s5 + $0x3e8] sm:$0xff] %v6651
  %7052 = vst [vmem:[%s5 + $0x3f0] sm:$0xff] %v6652
  %7053 = vst [vmem:[%s5 + $0x3f8] sm:$0xff] %v6653
  %7054 = vst [vmem:[%s5 + $0x400] sm:$0xff] %v6654
  %7055 = vst [vmem:[%s5 + $0x408] sm:$0xff] %v6655
  %7056 = vst [vmem:[%s5 + $0x410] sm:$0xff] %v6656
  %7057 = vst [vmem:[%s5 + $0x418] sm:$0xff] %v6657
  %7058 = vst [vmem:[%s5 + $0x420] sm:$0xff] %v6658
  %7059 = vst [vmem:[%s5 + $0x428] sm:$0xff] %v6659
  %7060 = vst [vmem:[%s5 + $0x430] sm:$0xff] %v6660
  %7061 = vst [vmem:[%s5 + $0x438] sm:$0xff] %v6661
  %7062 = vst [vmem:[%s5 + $0x440] sm:$0xff] %v6662
  %7063 = vst [vmem:[%s5 + $0x448] sm:$0xff] %v6663
  %7064 = vst [vmem:[%s5 + $0x450] sm:$0xff] %v6664
  %7065 = vst [vmem:[%s5 + $0x458] sm:$0xff] %v6665
  %7066 = vst [vmem:[%s5 + $0x460] sm:$0xff] %v6666
  %7067 = vst [vmem:[%s5 + $0x468] sm:$0xff] %v6667
  %7068 = vst [vmem:[%s5 + $0x470] sm:$0xff] %v6668
  %7069 = vst [vmem:[%s5 + $0x478] sm:$0xff] %v6669
  %7070 = vst [vmem:[%s5 + $0x480] sm:$0xff] %v6670
  %7071 = vst [vmem:[%s5 + $0x488] sm:$0xff] %v6671
  %7072 = vst [vmem:[%s5 + $0x490] sm:$0xff] %v6672
  %7073 = vst [vmem:[%s5 + $0x498] sm:$0xff] %v6673
  %7074 = vst [vmem:[%s5 + $0x4a0] sm:$0xff] %v6674
  %7075 = vst [vmem:[%s5 + $0x4a8] sm:$0xff] %v6675
  %7076 = vst [vmem:[%s5 + $0x4b0] sm:$0xff] %v6676
  %7077 = vst [vmem:[%s5 + $0x4b8] sm:$0xff] %v6677
  %7078 = vst [vmem:[%s5 + $0x4c0] sm:$0xff] %v6678
  %7079 = vst [vmem:[%s5 + $0x4c8] sm:$0xff] %v6679
  %7080 = vst [vmem:[%s5 + $0x4d0] sm:$0xff] %v6680
  %7081 = vst [vmem:[%s5 + $0x4d8] sm:$0xff] %v6681
  %7082 = vst [vmem:[%s5 + $0x4e0] sm:$0xff] %v6682
  %7083 = vst [vmem:[%s5 + $0x4e8] sm:$0xff] %v6683
  %7084 = vst [vmem:[%s5 + $0x4f0] sm:$0xff] %v6684
  %7085 = vst [vmem:[%s5 + $0x4f8] sm:$0xff] %v6685
  %7086 = vst [vmem:[%s5 + $0x500] sm:$0xff] %v6686
  %7087 = vst [vmem:[%s5 + $0x508] sm:$0xff] %v6687
  %7088 = vst [vmem:[%s5 + $0x510] sm:$0xff] %v6688
  %7089 = vst [vmem:[%s5 + $0x518] sm:$0xff] %v6689
  %7090 = vst [vmem:[%s5 + $0x520] sm:$0xff] %v6690
  %7091 = vst [vmem:[%s5 + $0x528] sm:$0xff] %v6691
  %7092 = vst [vmem:[%s5 + $0x530] sm:$0xff] %v6692
  %7093 = vst [vmem:[%s5 + $0x538] sm:$0xff] %v6693
  %7094 = vst [vmem:[%s5 + $0x540] sm:$0xff] %v6694
  %7095 = vst [vmem:[%s5 + $0x548] sm:$0xff] %v6695
  %7096 = vst [vmem:[%s5 + $0x550] sm:$0xff] %v6696
  %7097 = vst [vmem:[%s5 + $0x558] sm:$0xff] %v6697
  %7098 = vst [vmem:[%s5 + $0x560] sm:$0xff] %v6698
  %7099 = vst [vmem:[%s5 + $0x568] sm:$0xff] %v6699
  %7100 = vst [vmem:[%s5 + $0x570] sm:$0xff] %v6700
  %7101 = vst [vmem:[%s5 + $0x578] sm:$0xff] %v6701
  %7102 = vst [vmem:[%s5 + $0x580] sm:$0xff] %v6702
  %7103 = vst [vmem:[%s5 + $0x588] sm:$0xff] %v6703
  %7104 = vst [vmem:[%s5 + $0x590] sm:$0xff] %v6704
  %7105 = vst [vmem:[%s5 + $0x598] sm:$0xff] %v6705
  %7106 = vst [vmem:[%s5 + $0x5a0] sm:$0xff] %v6706
  %7107 = vst [vmem:[%s5 + $0x5a8] sm:$0xff] %v6707
  %7108 = vst [vmem:[%s5 + $0x5b0] sm:$0xff] %v6708
  %7109 = vst [vmem:[%s5 + $0x5b8] sm:$0xff] %v6709
  %7110 = vst [vmem:[%s5 + $0x5c0] sm:$0xff] %v6710
  %7111 = vst [vmem:[%s5 + $0x5c8] sm:$0xff] %v6711
  %7112 = vst [vmem:[%s5 + $0x5d0] sm:$0xff] %v6712
  %7113 = vst [vmem:[%s5 + $0x5d8] sm:$0xff] %v6713
  %7114 = vst [vmem:[%s5 + $0x5e0] sm:$0xff] %v6714
  %7115 = vst [vmem:[%s5 + $0x5e8] sm:$0xff] %v6715
  %7116 = vst [vmem:[%s5 + $0x5f0] sm:$0xff] %v6716
  %7117 = vst [vmem:[%s5 + $0x5f8] sm:$0xff] %v6717
  %7118 = vst [vmem:[%s5 + $0x600] sm:$0xff] %v6718
  %7119 = vst [vmem:[%s5 + $0x608] sm:$0xff] %v6719
  %7120 = vst [vmem:[%s5 + $0x610] sm:$0xff] %v6720
  %7121 = vst [vmem:[%s5 + $0x618] sm:$0xff] %v6721
  %7122 = vst [vmem:[%s5 + $0x620] sm:$0xff] %v6722
  %7123 = vst [vmem:[%s5 + $0x628] sm:$0xff] %v6723
  %7124 = vst [vmem:[%s5 + $0x630] sm:$0xff] %v6724
  %7125 = vst [vmem:[%s5 + $0x638] sm:$0xff] %v6725
  %7126 = vst [vmem:[%s5 + $0x640] sm:$0xff] %v6726
  %7127 = vst [vmem:[%s5 + $0x648] sm:$0xff] %v6727
  %7128 = vst [vmem:[%s5 + $0x650] sm:$0xff] %v6728
  %7129 = vst [vmem:[%s5 + $0x658] sm:$0xff] %v6729
  %7130 = vst [vmem:[%s5 + $0x660] sm:$0xff] %v6730
  %7131 = vst [vmem:[%s5 + $0x668] sm:$0xff] %v6731
  %7132 = vst [vmem:[%s5 + $0x670] sm:$0xff] %v6732
  %7133 = vst [vmem:[%s5 + $0x678] sm:$0xff] %v6733
  %7134 = vst [vmem:[%s5 + $0x680] sm:$0xff] %v6734
  %7135 = vst [vmem:[%s5 + $0x688] sm:$0xff] %v6735
  %7136 = vst [vmem:[%s5 + $0x690] sm:$0xff] %v6736
  %7137 = vst [vmem:[%s5 + $0x698] sm:$0xff] %v6737
  %7138 = vst [vmem:[%s5 + $0x6a0] sm:$0xff] %v6738
  %7139 = vst [vmem:[%s5 + $0x6a8] sm:$0xff] %v6739
  %7140 = vst [vmem:[%s5 + $0x6b0] sm:$0xff] %v6740
  %7141 = vst [vmem:[%s5 + $0x6b8] sm:$0xff] %v6741
  %7142 = vst [vmem:[%s5 + $0x6c0] sm:$0xff] %v6742
  %7143 = vst [vmem:[%s5 + $0x6c8] sm:$0xff] %v6743
  %7144 = vst [vmem:[%s5 + $0x6d0] sm:$0xff] %v6744
  %7145 = vst [vmem:[%s5 + $0x6d8] sm:$0xff] %v6745
  %7146 = vst [vmem:[%s5 + $0x6e0] sm:$0xff] %v6746
  %7147 = vst [vmem:[%s5 + $0x6e8] sm:$0xff] %v6747
  %7148 = vst [vmem:[%s5 + $0x6f0] sm:$0xff] %v6748
  %7149 = vst [vmem:[%s5 + $0x6f8] sm:$0xff] %v6749
  %7150 = vst [vmem:[%s5 + $0x700] sm:$0xff] %v6750
  %7151 = vst [vmem:[%s5 + $0x708] sm:$0xff] %v6751
  %7152 = vst [vmem:[%s5 + $0x710] sm:$0xff] %v6752
  %7153 = vst [vmem:[%s5 + $0x718] sm:$0xff] %v6753
  %7154 = vst [vmem:[%s5 + $0x720] sm:$0xff] %v6754
  %7155 = vst [vmem:[%s5 + $0x728] sm:$0xff] %v6755
  %7156 = vst [vmem:[%s5 + $0x730] sm:$0xff] %v6756
  %7157 = vst [vmem:[%s5 + $0x738] sm:$0xff] %v6757
  %7158 = vst [vmem:[%s5 + $0x740] sm:$0xff] %v6758
  %7159 = vst [vmem:[%s5 + $0x748] sm:$0xff] %v6759
  %7160 = vst [vmem:[%s5 + $0x750] sm:$0xff] %v6760
  %7161 = vst [vmem:[%s5 + $0x758] sm:$0xff] %v6761
  %7162 = vst [vmem:[%s5 + $0x760] sm:$0xff] %v6762
  %7163 = vst [vmem:[%s5 + $0x768] sm:$0xff] %v6763
  %7164 = vst [vmem:[%s5 + $0x770] sm:$0xff] %v6764
  %7165 = vst [vmem:[%s5 + $0x778] sm:$0xff] %v6765
  %7166 = vst [vmem:[%s5 + $0x780] sm:$0xff] %v6766
  %7167 = vst [vmem:[%s5 + $0x788] sm:$0xff] %v6767
  %7168 = vst [vmem:[%s5 + $0x790] sm:$0xff] %v6768
  %7169 = vst [vmem:[%s5 + $0x798] sm:$0xff] %v6769
  %7170 = vst [vmem:[%s5 + $0x7a0] sm:$0xff] %v6770
  %7171 = vst [vmem:[%s5 + $0x7a8] sm:$0xff] %v6771
  %7172 = vst [vmem:[%s5 + $0x7b0] sm:$0xff] %v6772
  %7173 = vst [vmem:[%s5 + $0x7b8] sm:$0xff] %v6773
  %7174 = vst [vmem:[%s5 + $0x7c0] sm:$0xff] %v6774
  %7175 = vst [vmem:[%s5 + $0x7c8] sm:$0xff] %v6775
  %7176 = vst [vmem:[%s5 + $0x7d0] sm:$0xff] %v6776
  %7177 = vst [vmem:[%s5 + $0x7d8] sm:$0xff] %v6777
  %7178 = vst [vmem:[%s5 + $0x7e0] sm:$0xff] %v6778
  %7179 = vst [vmem:[%s5 + $0x7e8] sm:$0xff] %v6779
  %7180 = vst [vmem:[%s5 + $0x7f0] sm:$0xff] %v6780
  %7181 = vst [vmem:[%s5 + $0x7f8] sm:$0xff] %v6781
  %7182 = vst [vmem:[%s5 + $0x800] sm:$0xff] %v6782
  %7183 = vst [vmem:[%s5 + $0x808] sm:$0xff] %v6783
  %7184 = vst [vmem:[%s5 + $0x810] sm:$0xff] %v6784
  %7185 = vst [vmem:[%s5 + $0x818] sm:$0xff] %v6785
  %7186 = vst [vmem:[%s5 + $0x820] sm:$0xff] %v6786
  %7187 = vst [vmem:[%s5 + $0x828] sm:$0xff] %v6787
  %7188 = vst [vmem:[%s5 + $0x830] sm:$0xff] %v6788
  %7189 = vst [vmem:[%s5 + $0x838] sm:$0xff] %v6789
  %7190 = vst [vmem:[%s5 + $0x840] sm:$0xff] %v6790
  %7191 = vst [vmem:[%s5 + $0x848] sm:$0xff] %v6791
  %7192 = vst [vmem:[%s5 + $0x850] sm:$0xff] %v6792
  %7193 = vst [vmem:[%s5 + $0x858] sm:$0xff] %v6793
  %7194 = vst [vmem:[%s5 + $0x860] sm:$0xff] %v6794
  %7195 = vst [vmem:[%s5 + $0x868] sm:$0xff] %v6795
  %7196 = vst [vmem:[%s5 + $0x870] sm:$0xff] %v6796
  %7197 = vst [vmem:[%s5 + $0x878] sm:$0xff] %v6797
  %7198 = vst [vmem:[%s5 + $0x880] sm:$0xff] %v6798
  %7199 = vst [vmem:[%s5 + $0x888] sm:$0xff] %v6799
  %7200 = vst [vmem:[%s5 + $0x890] sm:$0xff] %v6800
  %7201 = vst [vmem:[%s5 + $0x898] sm:$0xff] %v6801
  %7202 = vst [vmem:[%s5 + $0x8a0] sm:$0xff] %v6802
  %7203 = vst [vmem:[%s5 + $0x8a8] sm:$0xff] %v6803
  %7204 = vst [vmem:[%s5 + $0x8b0] sm:$0xff] %v6804
  %7205 = vst [vmem:[%s5 + $0x8b8] sm:$0xff] %v6805
  %7206 = vst [vmem:[%s5 + $0x8c0] sm:$0xff] %v6806
  %7207 = vst [vmem:[%s5 + $0x8c8] sm:$0xff] %v6807
  %7208 = vst [vmem:[%s5 + $0x8d0] sm:$0xff] %v6808
  %7209 = vst [vmem:[%s5 + $0x8d8] sm:$0xff] %v6809
  %7210 = vst [vmem:[%s5 + $0x8e0] sm:$0xff] %v6810
  %7211 = vst [vmem:[%s5 + $0x8e8] sm:$0xff] %v6811
  %7212 = vst [vmem:[%s5 + $0x8f0] sm:$0xff] %v6812
  %7213 = vst [vmem:[%s5 + $0x8f8] sm:$0xff] %v6813
  %7214 = vst [vmem:[%s5 + $0x900] sm:$0xff] %v6814
  %7215 = vst [vmem:[%s5 + $0x908] sm:$0xff] %v6815
  %7216 = vst [vmem:[%s5 + $0x910] sm:$0xff] %v6816
  %7217 = vst [vmem:[%s5 + $0x918] sm:$0xff] %v6817
  %7218 = vst [vmem:[%s5 + $0x920] sm:$0xff] %v6818
  %7219 = vst [vmem:[%s5 + $0x928] sm:$0xff] %v6819
  %7220 = vst [vmem:[%s5 + $0x930] sm:$0xff] %v6820
  %7221 = vst [vmem:[%s5 + $0x938] sm:$0xff] %v6821
  %7222 = vst [vmem:[%s5 + $0x940] sm:$0xff] %v6822
  %7223 = vst [vmem:[%s5 + $0x948] sm:$0xff] %v6823
  %7224 = vst [vmem:[%s5 + $0x950] sm:$0xff] %v6824
  %7225 = vst [vmem:[%s5 + $0x958] sm:$0xff] %v6825
  %7226 = vst [vmem:[%s5 + $0x960] sm:$0xff] %v6826
  %7227 = vst [vmem:[%s5 + $0x968] sm:$0xff] %v6827
  %7228 = vst [vmem:[%s5 + $0x970] sm:$0xff] %v6828
  %7229 = vst [vmem:[%s5 + $0x978] sm:$0xff] %v6829
  %7230 = vst [vmem:[%s5 + $0x980] sm:$0xff] %v6830
  %7231 = vst [vmem:[%s5 + $0x988] sm:$0xff] %v6831
  %7232 = vst [vmem:[%s5 + $0x990] sm:$0xff] %v6832
  %7233 = vst [vmem:[%s5 + $0x998] sm:$0xff] %v6833
  %7234 = vst [vmem:[%s5 + $0x9a0] sm:$0xff] %v6834
  %7235 = vst [vmem:[%s5 + $0x9a8] sm:$0xff] %v6835
  %7236 = vst [vmem:[%s5 + $0x9b0] sm:$0xff] %v6836
  %7237 = vst [vmem:[%s5 + $0x9b8] sm:$0xff] %v6837
  %7238 = vst [vmem:[%s5 + $0x9c0] sm:$0xff] %v6838
  %7239 = vst [vmem:[%s5 + $0x9c8] sm:$0xff] %v6839
  %7240 = vst [vmem:[%s5 + $0x9d0] sm:$0xff] %v6840
  %7241 = vst [vmem:[%s5 + $0x9d8] sm:$0xff] %v6841
  %7242 = vst [vmem:[%s5 + $0x9e0] sm:$0xff] %v6842
  %7243 = vst [vmem:[%s5 + $0x9e8] sm:$0xff] %v6843
  %7244 = vst [vmem:[%s5 + $0x9f0] sm:$0xff] %v6844
  %7245 = vst [vmem:[%s5 + $0x9f8] sm:$0xff] %v6845
  %7246 = vst [vmem:[%s5 + $0xa00] sm:$0xff] %v6846
  %7247 = vst [vmem:[%s5 + $0xa08] sm:$0xff] %v6847
  %7248 = vst [vmem:[%s5 + $0xa10] sm:$0xff] %v6848
  %7249 = vst [vmem:[%s5 + $0xa18] sm:$0xff] %v6849
  %7250 = vst [vmem:[%s5 + $0xa20] sm:$0xff] %v6850
  %7251 = vst [vmem:[%s5 + $0xa28] sm:$0xff] %v6851
  %7252 = vst [vmem:[%s5 + $0xa30] sm:$0xff] %v6852
  %7253 = vst [vmem:[%s5 + $0xa38] sm:$0xff] %v6853
  %7254 = vst [vmem:[%s5 + $0xa40] sm:$0xff] %v6854
  %7255 = vst [vmem:[%s5 + $0xa48] sm:$0xff] %v6855
  %7256 = vst [vmem:[%s5 + $0xa50] sm:$0xff] %v6856
  %7257 = vst [vmem:[%s5 + $0xa58] sm:$0xff] %v6857
  %7258 = vst [vmem:[%s5 + $0xa60] sm:$0xff] %v6858
  %7259 = vst [vmem:[%s5 + $0xa68] sm:$0xff] %v6859
  %7260 = vst [vmem:[%s5 + $0xa70] sm:$0xff] %v6860
  %7261 = vst [vmem:[%s5 + $0xa78] sm:$0xff] %v6861
  %7262 = vst [vmem:[%s5 + $0xa80] sm:$0xff] %v6862
  %7263 = vst [vmem:[%s5 + $0xa88] sm:$0xff] %v6863
  %7264 = vst [vmem:[%s5 + $0xa90] sm:$0xff] %v6864
  %7265 = vst [vmem:[%s5 + $0xa98] sm:$0xff] %v6865
  %7266 = vst [vmem:[%s5 + $0xaa0] sm:$0xff] %v6866
  %7267 = vst [vmem:[%s5 + $0xaa8] sm:$0xff] %v6867
  %7268 = vst [vmem:[%s5 + $0xab0] sm:$0xff] %v6868
  %7269 = vst [vmem:[%s5 + $0xab8] sm:$0xff] %v6869
  %7270 = vst [vmem:[%s5 + $0xac0] sm:$0xff] %v6870
  %7271 = vst [vmem:[%s5 + $0xac8] sm:$0xff] %v6871
  %7272 = vst [vmem:[%s5 + $0xad0] sm:$0xff] %v6872
  %7273 = vst [vmem:[%s5 + $0xad8] sm:$0xff] %v6873
  %7274 = vst [vmem:[%s5 + $0xae0] sm:$0xff] %v6874
  %7275 = vst [vmem:[%s5 + $0xae8] sm:$0xff] %v6875
  %7276 = vst [vmem:[%s5 + $0xaf0] sm:$0xff] %v6876
  %7277 = vst [vmem:[%s5 + $0xaf8] sm:$0xff] %v6877
  %7278 = vst [vmem:[%s5 + $0xb00] sm:$0xff] %v6878
  %7279 = vst [vmem:[%s5 + $0xb08] sm:$0xff] %v6879
  %7280 = vst [vmem:[%s5 + $0xb10] sm:$0xff] %v6880
  %7281 = vst [vmem:[%s5 + $0xb18] sm:$0xff] %v6881
  %7282 = vst [vmem:[%s5 + $0xb20] sm:$0xff] %v6882
  %7283 = vst [vmem:[%s5 + $0xb28] sm:$0xff] %v6883
  %7284 = vst [vmem:[%s5 + $0xb30] sm:$0xff] %v6884
  %7285 = vst [vmem:[%s5 + $0xb38] sm:$0xff] %v6885
  %7286 = vst [vmem:[%s5 + $0xb40] sm:$0xff] %v6886
  %7287 = vst [vmem:[%s5 + $0xb48] sm:$0xff] %v6887
  %7288 = vst [vmem:[%s5 + $0xb50] sm:$0xff] %v6888
  %7289 = vst [vmem:[%s5 + $0xb58] sm:$0xff] %v6889
  %7290 = vst [vmem:[%s5 + $0xb60] sm:$0xff] %v6890
  %7291 = vst [vmem:[%s5 + $0xb68] sm:$0xff] %v6891
  %7292 = vst [vmem:[%s5 + $0xb70] sm:$0xff] %v6892
  %7293 = vst [vmem:[%s5 + $0xb78] sm:$0xff] %v6893
  %7294 = vst [vmem:[%s5 + $0xb80] sm:$0xff] %v6894
  %7295 = vst [vmem:[%s5 + $0xb88] sm:$0xff] %v6895
  %7296 = vst [vmem:[%s5 + $0xb90] sm:$0xff] %v6896
  %7297 = vst [vmem:[%s5 + $0xb98] sm:$0xff] %v6897
  %7298 = vst [vmem:[%s5 + $0xba0] sm:$0xff] %v6898
  %7299 = vst [vmem:[%s5 + $0xba8] sm:$0xff] %v6899
  %7300 = vst [vmem:[%s5 + $0xbb0] sm:$0xff] %v6900
  %7301 = vst [vmem:[%s5 + $0xbb8] sm:$0xff] %v6901
  %7302 = vst [vmem:[%s5 + $0xbc0] sm:$0xff] %v6902
  %7303 = vst [vmem:[%s5 + $0xbc8] sm:$0xff] %v6903
  %7304 = vst [vmem:[%s5 + $0xbd0] sm:$0xff] %v6904
  %7305 = vst [vmem:[%s5 + $0xbd8] sm:$0xff] %v6905
  %7306 = vst [vmem:[%s5 + $0xbe0] sm:$0xff] %v6906
  %7307 = vst [vmem:[%s5 + $0xbe8] sm:$0xff] %v6907
  %7308 = vst [vmem:[%s5 + $0xbf0] sm:$0xff] %v6908
  %7309 = vst [vmem:[%s5 + $0xbf8] sm:$0xff] %v6909
  %7310 = vst [vmem:[%s5 + $0xc00] sm:$0xff] %v6910
  %7311 = vst [vmem:[%s5 + $0xc08] sm:$0xff] %v6911
  %7312 = vst [vmem:[%s5 + $0xc10] sm:$0xff] %v6912
  %7313 = vst [vmem:[%s5 + $0xc18] sm:$0xff] %v6913
  %7314 = vst [vmem:[%s5 + $0xc20] sm:$0xff] %v6914
  %7315 = vst [vmem:[%s5 + $0xc28] sm:$0xff] %v6915
  %7316 = vst [vmem:[%s5 + $0xc30] sm:$0xff] %v6916
  %7317 = vst [vmem:[%s5 + $0xc38] sm:$0xff] %v6917
  %7318 = vst [vmem:[%s5 + $0xc40] sm:$0xff] %v6918
  %7319 = vst [vmem:[%s5 + $0xc48] sm:$0xff] %v6919
  %7320 = vst [vmem:[%s5 + $0xc50] sm:$0xff] %v6920
  %7321 = vst [vmem:[%s5 + $0xc58] sm:$0xff] %v6921
  %7322 = vst [vmem:[%s5 + $0xc60] sm:$0xff] %v6922
  %7323 = vst [vmem:[%s5 + $0xc68] sm:$0xff] %v6923
  %7324 = vst [vmem:[%s5 + $0xc70] sm:$0xff] %v6924
  %7325 = vst [vmem:[%s5 + $0xc78] sm:$0xff] %v6925
  // Predicated region
  $region22: #{cnnae_forward.9} parent=0 // pred_check
    _
  $region23: #{cnnae_forward.9} parent=0 // pred_check_branch
    %7327 = sbr.rel (0) target = $region25
  $region24: #{cnnae_forward.9} parent=0 // pred_region
    _
  $region25: #{cnnae_forward.9} parent=0 // pred_fallthru
    _
  // Predicated region
  $region26: #{cnnae_forward.9} parent=0 // pred_check
    _
  $region27: #{cnnae_forward.9} parent=0 // pred_check_branch
    %7329 = sbr.rel (0) target = $region29
  $region28: #{cnnae_forward.9} parent=0 // pred_region
    _
  $region29: #{cnnae_forward.9} parent=0 // pred_fallthru
    _

</llo_original>
